<compile_context>
chip_gen: v7x
topology: tpu7x:2x2x1
jax: 0.10.0
libtpu: 0.0.40
codegen_flags: <defaults>
</compile_context>

<pallas_src>
import math
import numpy as np
import jax
import jax.numpy as jnp
from jax.experimental import pallas as pl
from jax.experimental.pallas import tpu as pltpu  # noqa: F401  (TPU backend)

# ----------------------------- configuration --------------------------------
B, C, H, W = 2, 4, 16, 16          # content/style: (B, C, H, W)
DF = 2                             # down_factor
NHEADS = 4
DFF = 64                           # dim_feedforward (kept small for the demo)
NUM_LAYERS = 3
E = 2 * C                          # transformer d_model = 2*C = 8
HD = E // NHEADS                   # head dim = 2
H2, W2 = H // DF, W // DF          # 8, 8
N = H2 * W2                        # sequence length = 64
BN = B * N                         # 128 (lane dimension inside the kernel)
EPS = 1e-5


# ------------------------------- kernel --------------------------------------
def _ln_feature_major(x, g, b):
    # x: (E, BN); normalize over feature axis 0 (biased variance, PyTorch LN)
    m = jnp.mean(x, axis=0, keepdims=True)
    v = jnp.mean((x - m) ** 2, axis=0, keepdims=True)
    return (x - m) * jax.lax.rsqrt(v + EPS) * g + b


def fused_forward_kernel(patches_ref, comb_ref, convw_ref,
                         wqkv_ref, bqkv_ref, wo_ref, bo_ref,
                         ln1g_ref, ln1b_ref, w1_ref, b1_ref,
                         w2_ref, b2_ref, ln2g_ref, ln2b_ref,
                         projw_ref, projb_ref, wupT_ref, lam_ref,
                         out_ref):
    f32 = jnp.float32

    # ---- patchify conv (kernel == stride == DF, no bias) as one MXU matmul ---
    # activation is feature-major: (E, B*N) = (8, 128), lane dim = 128
    x = jnp.dot(convw_ref[...], patches_ref[...], preferred_element_type=f32)

    scale = 1.0 / math.sqrt(HD)

    # ---- transformer encoder: weights resident in VMEM, static layer unroll --
    for l in range(NUM_LAYERS):
        qkv = jnp.dot(wqkv_ref[l], x, preferred_element_type=f32) + bqkv_ref[l]
        q, k, v = qkv[0:E], qkv[E:2 * E], qkv[2 * E:3 * E]        # (E, BN) each

        outs = []
        for b in range(B):                      # static loop, batch-independent
            sl = slice(b * N, (b + 1) * N)
            qb = q[:, sl].reshape(NHEADS, HD, N)
            kb = k[:, sl].reshape(NHEADS, HD, N)
            vb = v[:, sl].reshape(NHEADS, HD, N)
            # all heads in ONE batched contraction
            s = jnp.einsum("hdn,hdm->hnm", qb, kb,
                           preferred_element_type=f32) * scale    # (H, N, N)
            s = s - jnp.max(s, axis=-1, keepdims=True)
            p = jnp.exp(s)
            p = p * pl.reciprocal(jnp.sum(p, axis=-1, keepdims=True), approx=True)
            ob = jnp.einsum("hnm,hdm->hdn", p, vb,
                            preferred_element_type=f32)           # (H, HD, N)
            outs.append(ob.reshape(E, N))
        attn = jnp.concatenate(outs, axis=-1)                     # (E, BN)

        attn = jnp.dot(wo_ref[l], attn, preferred_element_type=f32) + bo_ref[l]
        x = _ln_feature_major(x + attn, ln1g_ref[l], ln1b_ref[l])

        ff = jnp.dot(w1_ref[l], x, preferred_element_type=f32) + b1_ref[l]
        ff = jnp.maximum(ff, 0.0)
        ff = jnp.dot(w2_ref[l], ff, preferred_element_type=f32) + b2_ref[l]
        x = _ln_feature_major(x + ff, ln2g_ref[l], ln2b_ref[l])

    # ---- attention projection + softmax over the feature axis (axis 0) -------
    y = jnp.dot(projw_ref[...], x, preferred_element_type=f32) + projb_ref[...]
    y = y - jnp.max(y, axis=0, keepdims=True)
    ey = jnp.exp(y)
    amap = ey * pl.reciprocal(jnp.sum(ey, axis=0, keepdims=True), approx=True)  # (E, BN)

    # ---- bilinear upsample as one Kronecker matmul + elementwise fuse --------
    lam = lam_ref[...]                                            # (1, 1)
    for b in range(B):
        a_b = amap[:, b * N:(b + 1) * N]                          # (E, 64)
        up = jnp.dot(a_b, wupT_ref[...], preferred_element_type=f32)   # (E, 256)
        out_ref[b] = comb_ref[b] * (1.0 + lam * up)


# ------------------------------ wrapper ---------------------------------------
@jax.jit
def forward(content, style, kp):
    combined = jnp.concatenate([content, style], axis=1)          # (B, E, H, W)
    comb_flat = combined.reshape(B, E, H * W)                     # (2, 8, 256)
    # im2col for the strided patchify conv: (E*DF*DF, B*N) = (32, 128)
    patches_T = (combined.reshape(B, E, H2, DF, W2, DF)
                 .transpose(1, 3, 5, 0, 2, 4)
                 .reshape(E * DF * DF, BN))

    fused_flat = pl.pallas_call(
        fused_forward_kernel,
        out_shape=jax.ShapeDtypeStruct((B, E, H * W), jnp.float32),
    )(patches_T, comb_flat, kp["conv_wf"],
      kp["wqkv"], kp["bqkv"], kp["wo"], kp["bo"],
      kp["ln1g"], kp["ln1b"], kp["w1"], kp["b1"],
      kp["w2"], kp["b2"], kp["ln2g"], kp["ln2b"],
      kp["proj_w"], kp["proj_b"], kp["wupT"], kp["lam"])
    return fused_flat.reshape(B, E, H, W)


# ----------------------- parameters / interpolation --------------------------
def bilinear_interp_matrix(out_size, in_size):
    # PyTorch nn.Upsample(mode='bilinear', align_corners=False) semantics.
    scale = in_size / out_size
    M = np.zeros((out_size, in_size), dtype=np.float32)
    for i in range(out_size):
        src = max((i + 0.5) * scale - 0.5, 0.0)
        i0 = min(int(np.floor(src)), in_size - 1)
        frac = src - i0
        i1 = min(i0 + 1, in_size - 1)
        M[i, i0] += 1.0 - frac
        M[i, i1] += frac
    return M


def init_params():
    key = jax.random.PRNGKey(42)
    keys = iter(jax.random.split(key, 64))

    def nrm(shape, scale=0.1):
        return scale * jax.random.normal(next(keys), shape, dtype=jnp.float32)

    conv_w = nrm((E, E, DF, DF))
    layers = []
    for _ in range(NUM_LAYERS):
        layers.append(dict(
            wqkv=nrm((3 * E, E)), bqkv=nrm((3 * E,), 0.02),
            wo=nrm((E, E)),       bo=nrm((E,), 0.02),
            w1=nrm((DFF, E)),     b1=nrm((DFF,), 0.02),
            w2=nrm((E, DFF)),     b2=nrm((E,), 0.02),
            ln1g=jnp.ones((E,), jnp.float32), ln1b=jnp.zeros((E,), jnp.float32),
            ln2g=jnp.ones((E,), jnp.float32), ln2b=jnp.zeros((E,), jnp.float32),
        ))
    proj_w = nrm((E, E)); proj_b = nrm((E,), 0.02)

    wr = bilinear_interp_matrix(H, H2)          # (16, 8)
    wc = bilinear_interp_matrix(W, W2)          # (16, 8)
    wup = np.kron(wr, wc)                       # (H*W, H2*W2) = (256, 64)

    def stack(name, col=False):
        a = jnp.stack([l[name] for l in layers])
        return a[..., None] if col else a

    kernel_params = dict(
        conv_wf=conv_w.reshape(E, E * DF * DF),                 # (8, 32)
        wqkv=stack("wqkv"), bqkv=stack("bqkv", True),
        wo=stack("wo"),     bo=stack("bo", True),
        ln1g=stack("ln1g", True), ln1b=stack("ln1b", True),
        w1=stack("w1"),     b1=stack("b1", True),
        w2=stack("w2"),     b2=stack("b2", True),
        ln2g=stack("ln2g", True), ln2b=stack("ln2b", True),
        proj_w=proj_w, proj_b=proj_b[:, None],
        wupT=jnp.asarray(wup.T),                                # (64, 256)
        lam=jnp.full((1, 1), 0.5, jnp.float32),                 # lambda_param
    )
    ref_params = dict(
        conv_w=conv_w, layers=layers, proj_w=proj_w, proj_b=proj_b,
        wr=jnp.asarray(wr), wc=jnp.asarray(wc), lam=jnp.float32(0.5),
    )
    return kernel_params, ref_params


# ------------------------- pure-JAX reference --------------------------------
def _ln_ref(x, g, b):
    m = jnp.mean(x, axis=-1, keepdims=True)
    v = jnp.mean((x - m) ** 2, axis=-1, keepdims=True)
    return (x - m) * jax.lax.rsqrt(v + EPS) * g + b


def reference_forward(content, style, rp):
    combined = jnp.concatenate([content, style], axis=1)
    patches = combined.reshape(B, E, H2, DF, W2, DF).transpose(0, 2, 4, 1, 3, 5)
    patches = patches.reshape(B * N, E * DF * DF)
    down = patches @ rp["conv_w"].reshape(E, -1).T
    x = down.reshape(B, N, E)                                    # token-major
    for lw in rp["layers"]:
        qkv = x @ lw["wqkv"].T + lw["bqkv"]
        q, k, v = qkv[..., :E], qkv[..., E:2 * E], qkv[..., 2 * E:]
        outs = []
        for h in range(NHEADS):
            qh, kh, vh = (t[..., h * HD:(h + 1) * HD] for t in (q, k, v))
            s = jnp.einsum("bnd,bmd->bnm", qh, kh) / math.sqrt(HD)
            p = jax.nn.softmax(s, axis=-1)
            outs.append(jnp.einsum("bnm,bmd->bnd", p, vh))
        attn = jnp.concatenate(outs, axis=-1) @ lw["wo"].T + lw["bo"]
        x = _ln_ref(x + attn, lw["ln1g"], lw["ln1b"])
        ff = jnp.maximum(x @ lw["w1"].T + lw["b1"], 0.0) @ lw["w2"].T + lw["b2"]
        x = _ln_ref(x + ff, lw["ln2g"], lw["ln2b"])
    y = x.reshape(B * N, E) @ rp["proj_w"].T + rp["proj_b"]
    y = jax.nn.softmax(y, axis=-1)
    attn_down = y.reshape(B, N, E).transpose(0, 2, 1).reshape(B, E, H2, W2)
    up = jnp.einsum("hk,bekl,wl->behw", rp["wr"], attn_down, rp["wc"])
    return combined * (1.0 + rp["lam"] * up)


# --------------------------------- main ---------------------------------------
if __name__ == "__main__":
    key = jax.random.PRNGKey(0)
    kc, ks = jax.random.split(key)
    content = jax.random.normal(kc, (B, C, H, W), dtype=jnp.float32)
    style = jax.random.normal(ks, (B, C, H, W), dtype=jnp.float32)

    kernel_params, ref_params = init_params()

    out = jax.block_until_ready(forward(content, style, kernel_params))
    ref = jax.block_until_ready(reference_forward(content, style, ref_params))

    assert out.shape == (B, 2 * C, H, W)
    # tolerance accounts for the EUP approx-reciprocal softmax denominators
    assert np.allclose(np.asarray(out), np.asarray(ref), rtol=1e-2, atol=1e-2), \
        "Pallas output mismatch vs JAX reference"

    print("KERNEL_OK")
</pallas_src>

<mosaic_0001>
module attributes {stable_mosaic.version = 11 : i64} {
  func.func @fused_forward_kernel(%arg0: memref<32x128xf32, #tpu.memory_space<vmem>>, %arg1: memref<2x8x256xf32, #tpu.memory_space<vmem>>, %arg2: memref<8x32xf32, #tpu.memory_space<vmem>>, %arg3: memref<3x24x8xf32, #tpu.memory_space<vmem>>, %arg4: memref<3x24x1xf32, #tpu.memory_space<vmem>>, %arg5: memref<3x8x8xf32, #tpu.memory_space<vmem>>, %arg6: memref<3x8x1xf32, #tpu.memory_space<vmem>>, %arg7: memref<3x8x1xf32, #tpu.memory_space<vmem>>, %arg8: memref<3x8x1xf32, #tpu.memory_space<vmem>>, %arg9: memref<3x64x8xf32, #tpu.memory_space<vmem>>, %arg10: memref<3x64x1xf32, #tpu.memory_space<vmem>>, %arg11: memref<3x8x64xf32, #tpu.memory_space<vmem>>, %arg12: memref<3x8x1xf32, #tpu.memory_space<vmem>>, %arg13: memref<3x8x1xf32, #tpu.memory_space<vmem>>, %arg14: memref<3x8x1xf32, #tpu.memory_space<vmem>>, %arg15: memref<8x8xf32, #tpu.memory_space<vmem>>, %arg16: memref<8x1xf32, #tpu.memory_space<vmem>>, %arg17: memref<64x256xf32, #tpu.memory_space<vmem>>, %arg18: memref<1x1xf32, #tpu.memory_space<vmem>>, %arg19: memref<2x8x256xf32, #tpu.memory_space<vmem>>) attributes {dimension_semantics = [], scalar_prefetch = 0 : i64, scratch_operands = 0 : i64, tpu.core_type = #tpu.core_type<tc>} {
    %c0 = arith.constant 0 : index
    %c0_0 = arith.constant 0 : index
    %0 = vector.load %arg2[%c0, %c0_0] : memref<8x32xf32, #tpu.memory_space<vmem>>, vector<8x32xf32>
    %c0_1 = arith.constant 0 : index
    %c0_2 = arith.constant 0 : index
    %1 = vector.load %arg0[%c0_1, %c0_2] : memref<32x128xf32, #tpu.memory_space<vmem>>, vector<32x128xf32>
    %cst = arith.constant dense<0.000000e+00> : vector<8x128xf32>
    %2 = tpu.matmul %0, %1, %cst {dimension_numbers = #tpu.dot_dimension_numbers<[1], [0], [0], [1], [0, 0, 1, 1], [], []>} : vector<8x32xf32>, vector<32x128xf32>, vector<8x128xf32> -> vector<8x128xf32>
    %c0_3 = arith.constant 0 : index
    %c0_4 = arith.constant 0 : index
    %c0_5 = arith.constant 0 : index
    %3 = vector.load %arg3[%c0_3, %c0_4, %c0_5] : memref<3x24x8xf32, #tpu.memory_space<vmem>>, vector<1x24x8xf32>
    %4 = vector.shape_cast %3 : vector<1x24x8xf32> to vector<24x8xf32>
    %cst_6 = arith.constant dense<0.000000e+00> : vector<24x128xf32>
    %5 = tpu.matmul %4, %2, %cst_6 {dimension_numbers = #tpu.dot_dimension_numbers<[1], [0], [0], [1], [0, 0, 1, 1], [], []>} : vector<24x8xf32>, vector<8x128xf32>, vector<24x128xf32> -> vector<24x128xf32>
    %c0_7 = arith.constant 0 : index
    %c0_8 = arith.constant 0 : index
    %c0_9 = arith.constant 0 : index
    %6 = vector.load %arg4[%c0_7, %c0_8, %c0_9] : memref<3x24x1xf32, #tpu.memory_space<vmem>>, vector<1x24x1xf32>
    %7 = vector.shape_cast %6 : vector<1x24x1xf32> to vector<24x1xf32>
    %8 = vector.broadcast %7 : vector<24x1xf32> to vector<24x128xf32>
    %9 = arith.addf %5, %8 : vector<24x128xf32>
    %10 = vector.extract_strided_slice %9 {offsets = [0, 0], sizes = [8, 128], strides = [1, 1]} : vector<24x128xf32> to vector<8x128xf32>
    %11 = vector.extract_strided_slice %9 {offsets = [8, 0], sizes = [8, 128], strides = [1, 1]} : vector<24x128xf32> to vector<8x128xf32>
    %12 = vector.extract_strided_slice %9 {offsets = [16, 0], sizes = [8, 128], strides = [1, 1]} : vector<24x128xf32> to vector<8x128xf32>
    %13 = vector.extract_strided_slice %10 {offsets = [0, 0], sizes = [8, 64], strides = [1, 1]} : vector<8x128xf32> to vector<8x64xf32>
    %14 = vector.shape_cast %13 : vector<8x64xf32> to vector<4x2x64xf32>
    %15 = vector.extract_strided_slice %11 {offsets = [0, 0], sizes = [8, 64], strides = [1, 1]} : vector<8x128xf32> to vector<8x64xf32>
    %16 = vector.shape_cast %15 : vector<8x64xf32> to vector<4x2x64xf32>
    %17 = vector.extract_strided_slice %12 {offsets = [0, 0], sizes = [8, 64], strides = [1, 1]} : vector<8x128xf32> to vector<8x64xf32>
    %18 = vector.shape_cast %17 : vector<8x64xf32> to vector<4x2x64xf32>
    "tpu.trace_start"() <{level = 10 : i32, message = "hdn,hdm->hnm"}> : () -> ()
    %cst_10 = arith.constant dense<0.000000e+00> : vector<4x64x64xf32>
    %19 = tpu.matmul %14, %16, %cst_10 {dimension_numbers = #tpu.dot_dimension_numbers<[1], [1], [2], [2], [0, 0, 0, 2, 1, 2], [0], [0]>} : vector<4x2x64xf32>, vector<4x2x64xf32>, vector<4x64x64xf32> -> vector<4x64x64xf32>
    "tpu.trace_stop"() : () -> ()
    %cst_11 = arith.constant 0.707106769 : f32
    %20 = vector.broadcast %cst_11 : f32 to vector<4x64x64xf32>
    %21 = arith.mulf %19, %20 : vector<4x64x64xf32>
    %cst_12 = arith.constant dense<0xFF800000> : vector<4x64xf32>
    %22 = vector.multi_reduction <maximumf>, %21, %cst_12 [2] : vector<4x64x64xf32> to vector<4x64xf32>
    %23 = vector.shape_cast %22 : vector<4x64xf32> to vector<4x64x1xf32>
    %24 = vector.broadcast %23 : vector<4x64x1xf32> to vector<4x64x64xf32>
    %25 = arith.subf %21, %24 : vector<4x64x64xf32>
    %26 = math.exp %25 : vector<4x64x64xf32>
    %cst_13 = arith.constant dense<0.000000e+00> : vector<4x64xf32>
    %27 = vector.multi_reduction <add>, %26, %cst_13 [2] : vector<4x64x64xf32> to vector<4x64xf32>
    %28 = vector.shape_cast %27 : vector<4x64xf32> to vector<4x64x1xf32>
    %29 = tpu.reciprocal %28 {approx = true} : vector<4x64x1xf32> -> vector<4x64x1xf32>
    %30 = vector.broadcast %29 : vector<4x64x1xf32> to vector<4x64x64xf32>
    %31 = arith.mulf %26, %30 : vector<4x64x64xf32>
    "tpu.trace_start"() <{level = 10 : i32, message = "hnm,hdm->hdn"}> : () -> ()
    %cst_14 = arith.constant dense<0.000000e+00> : vector<4x2x64xf32>
    %32 = tpu.matmul %18, %31, %cst_14 {dimension_numbers = #tpu.dot_dimension_numbers<[2], [2], [1], [1], [0, 0, 0, 1, 1, 1], [0], [0]>} : vector<4x2x64xf32>, vector<4x64x64xf32>, vector<4x2x64xf32> -> vector<4x2x64xf32>
    "tpu.trace_stop"() : () -> ()
    %33 = vector.shape_cast %32 : vector<4x2x64xf32> to vector<8x64xf32>
    %34 = vector.extract_strided_slice %10 {offsets = [0, 64], sizes = [8, 64], strides = [1, 1]} : vector<8x128xf32> to vector<8x64xf32>
    %35 = vector.shape_cast %34 : vector<8x64xf32> to vector<4x2x64xf32>
    %36 = vector.extract_strided_slice %11 {offsets = [0, 64], sizes = [8, 64], strides = [1, 1]} : vector<8x128xf32> to vector<8x64xf32>
    %37 = vector.shape_cast %36 : vector<8x64xf32> to vector<4x2x64xf32>
    %38 = vector.extract_strided_slice %12 {offsets = [0, 64], sizes = [8, 64], strides = [1, 1]} : vector<8x128xf32> to vector<8x64xf32>
    %39 = vector.shape_cast %38 : vector<8x64xf32> to vector<4x2x64xf32>
    "tpu.trace_start"() <{level = 10 : i32, message = "hdn,hdm->hnm"}> : () -> ()
    %cst_15 = arith.constant dense<0.000000e+00> : vector<4x64x64xf32>
    %40 = tpu.matmul %35, %37, %cst_15 {dimension_numbers = #tpu.dot_dimension_numbers<[1], [1], [2], [2], [0, 0, 0, 2, 1, 2], [0], [0]>} : vector<4x2x64xf32>, vector<4x2x64xf32>, vector<4x64x64xf32> -> vector<4x64x64xf32>
    "tpu.trace_stop"() : () -> ()
    %cst_16 = arith.constant 0.707106769 : f32
    %41 = vector.broadcast %cst_16 : f32 to vector<4x64x64xf32>
    %42 = arith.mulf %40, %41 : vector<4x64x64xf32>
    %cst_17 = arith.constant dense<0xFF800000> : vector<4x64xf32>
    %43 = vector.multi_reduction <maximumf>, %42, %cst_17 [2] : vector<4x64x64xf32> to vector<4x64xf32>
    %44 = vector.shape_cast %43 : vector<4x64xf32> to vector<4x64x1xf32>
    %45 = vector.broadcast %44 : vector<4x64x1xf32> to vector<4x64x64xf32>
    %46 = arith.subf %42, %45 : vector<4x64x64xf32>
    %47 = math.exp %46 : vector<4x64x64xf32>
    %cst_18 = arith.constant dense<0.000000e+00> : vector<4x64xf32>
    %48 = vector.multi_reduction <add>, %47, %cst_18 [2] : vector<4x64x64xf32> to vector<4x64xf32>
    %49 = vector.shape_cast %48 : vector<4x64xf32> to vector<4x64x1xf32>
    %50 = tpu.reciprocal %49 {approx = true} : vector<4x64x1xf32> -> vector<4x64x1xf32>
    %51 = vector.broadcast %50 : vector<4x64x1xf32> to vector<4x64x64xf32>
    %52 = arith.mulf %47, %51 : vector<4x64x64xf32>
    "tpu.trace_start"() <{level = 10 : i32, message = "hnm,hdm->hdn"}> : () -> ()
    %cst_19 = arith.constant dense<0.000000e+00> : vector<4x2x64xf32>
    %53 = tpu.matmul %39, %52, %cst_19 {dimension_numbers = #tpu.dot_dimension_numbers<[2], [2], [1], [1], [0, 0, 0, 1, 1, 1], [0], [0]>} : vector<4x2x64xf32>, vector<4x64x64xf32>, vector<4x2x64xf32> -> vector<4x2x64xf32>
    "tpu.trace_stop"() : () -> ()
    %54 = vector.shape_cast %53 : vector<4x2x64xf32> to vector<8x64xf32>
    %55 = tpu.concatenate %33, %54 in 1 : vector<8x64xf32>, vector<8x64xf32> -> vector<8x128xf32>
    %c0_20 = arith.constant 0 : index
    %c0_21 = arith.constant 0 : index
    %c0_22 = arith.constant 0 : index
    %56 = vector.load %arg5[%c0_20, %c0_21, %c0_22] : memref<3x8x8xf32, #tpu.memory_space<vmem>>, vector<1x8x8xf32>
    %57 = vector.shape_cast %56 : vector<1x8x8xf32> to vector<8x8xf32>
    %cst_23 = arith.constant dense<0.000000e+00> : vector<8x128xf32>
    %58 = tpu.matmul %57, %55, %cst_23 {dimension_numbers = #tpu.dot_dimension_numbers<[1], [0], [0], [1], [0, 0, 1, 1], [], []>} : vector<8x8xf32>, vector<8x128xf32>, vector<8x128xf32> -> vector<8x128xf32>
    %c0_24 = arith.constant 0 : index
    %c0_25 = arith.constant 0 : index
    %c0_26 = arith.constant 0 : index
    %59 = vector.load %arg6[%c0_24, %c0_25, %c0_26] : memref<3x8x1xf32, #tpu.memory_space<vmem>>, vector<1x8x1xf32>
    %60 = vector.shape_cast %59 : vector<1x8x1xf32> to vector<8x1xf32>
    %61 = vector.broadcast %60 : vector<8x1xf32> to vector<8x128xf32>
    %62 = arith.addf %58, %61 : vector<8x128xf32>
    %63 = arith.addf %2, %62 : vector<8x128xf32>
    %c0_27 = arith.constant 0 : index
    %c0_28 = arith.constant 0 : index
    %c0_29 = arith.constant 0 : index
    %64 = vector.load %arg7[%c0_27, %c0_28, %c0_29] : memref<3x8x1xf32, #tpu.memory_space<vmem>>, vector<1x8x1xf32>
    %65 = vector.shape_cast %64 : vector<1x8x1xf32> to vector<8x1xf32>
    %c0_30 = arith.constant 0 : index
    %c0_31 = arith.constant 0 : index
    %c0_32 = arith.constant 0 : index
    %66 = vector.load %arg8[%c0_30, %c0_31, %c0_32] : memref<3x8x1xf32, #tpu.memory_space<vmem>>, vector<1x8x1xf32>
    %67 = vector.shape_cast %66 : vector<1x8x1xf32> to vector<8x1xf32>
    %cst_33 = arith.constant dense<0.000000e+00> : vector<128xf32>
    %68 = vector.multi_reduction <add>, %63, %cst_33 [0] : vector<8x128xf32> to vector<128xf32>
    %69 = vector.shape_cast %68 : vector<128xf32> to vector<1x128xf32>
    %cst_34 = arith.constant 8.000000e+00 : f32
    %70 = vector.broadcast %cst_34 : f32 to vector<1x128xf32>
    %71 = arith.divf %69, %70 : vector<1x128xf32>
    %72 = vector.broadcast %71 : vector<1x128xf32> to vector<8x128xf32>
    %73 = arith.subf %63, %72 : vector<8x128xf32>
    %74 = arith.mulf %73, %73 : vector<8x128xf32>
    %cst_35 = arith.constant dense<0.000000e+00> : vector<128xf32>
    %75 = vector.multi_reduction <add>, %74, %cst_35 [0] : vector<8x128xf32> to vector<128xf32>
    %76 = vector.shape_cast %75 : vector<128xf32> to vector<1x128xf32>
    %cst_36 = arith.constant 8.000000e+00 : f32
    %77 = vector.broadcast %cst_36 : f32 to vector<1x128xf32>
    %78 = arith.divf %76, %77 : vector<1x128xf32>
    %79 = vector.broadcast %71 : vector<1x128xf32> to vector<8x128xf32>
    %80 = arith.subf %63, %79 : vector<8x128xf32>
    %cst_37 = arith.constant 9.99999974E-6 : f32
    %81 = vector.broadcast %cst_37 : f32 to vector<1x128xf32>
    %82 = arith.addf %78, %81 : vector<1x128xf32>
    %83 = math.rsqrt %82 : vector<1x128xf32>
    %84 = vector.broadcast %83 : vector<1x128xf32> to vector<8x128xf32>
    %85 = arith.mulf %80, %84 : vector<8x128xf32>
    %86 = vector.broadcast %65 : vector<8x1xf32> to vector<8x128xf32>
    %87 = arith.mulf %85, %86 : vector<8x128xf32>
    %88 = vector.broadcast %67 : vector<8x1xf32> to vector<8x128xf32>
    %89 = arith.addf %87, %88 : vector<8x128xf32>
    %c0_38 = arith.constant 0 : index
    %c0_39 = arith.constant 0 : index
    %c0_40 = arith.constant 0 : index
    %90 = vector.load %arg9[%c0_38, %c0_39, %c0_40] : memref<3x64x8xf32, #tpu.memory_space<vmem>>, vector<1x64x8xf32>
    %91 = vector.shape_cast %90 : vector<1x64x8xf32> to vector<64x8xf32>
    %cst_41 = arith.constant dense<0.000000e+00> : vector<64x128xf32>
    %92 = tpu.matmul %91, %89, %cst_41 {dimension_numbers = #tpu.dot_dimension_numbers<[1], [0], [0], [1], [0, 0, 1, 1], [], []>} : vector<64x8xf32>, vector<8x128xf32>, vector<64x128xf32> -> vector<64x128xf32>
    %c0_42 = arith.constant 0 : index
    %c0_43 = arith.constant 0 : index
    %c0_44 = arith.constant 0 : index
    %93 = vector.load %arg10[%c0_42, %c0_43, %c0_44] : memref<3x64x1xf32, #tpu.memory_space<vmem>>, vector<1x64x1xf32>
    %94 = vector.shape_cast %93 : vector<1x64x1xf32> to vector<64x1xf32>
    %95 = vector.broadcast %94 : vector<64x1xf32> to vector<64x128xf32>
    %96 = arith.addf %92, %95 : vector<64x128xf32>
    %cst_45 = arith.constant 0.000000e+00 : f32
    %97 = vector.broadcast %cst_45 : f32 to vector<64x128xf32>
    %98 = arith.maximumf %96, %97 : vector<64x128xf32>
    %c0_46 = arith.constant 0 : index
    %c0_47 = arith.constant 0 : index
    %c0_48 = arith.constant 0 : index
    %99 = vector.load %arg11[%c0_46, %c0_47, %c0_48] : memref<3x8x64xf32, #tpu.memory_space<vmem>>, vector<1x8x64xf32>
    %100 = vector.shape_cast %99 : vector<1x8x64xf32> to vector<8x64xf32>
    %cst_49 = arith.constant dense<0.000000e+00> : vector<8x128xf32>
    %101 = tpu.matmul %100, %98, %cst_49 {dimension_numbers = #tpu.dot_dimension_numbers<[1], [0], [0], [1], [0, 0, 1, 1], [], []>} : vector<8x64xf32>, vector<64x128xf32>, vector<8x128xf32> -> vector<8x128xf32>
    %c0_50 = arith.constant 0 : index
    %c0_51 = arith.constant 0 : index
    %c0_52 = arith.constant 0 : index
    %102 = vector.load %arg12[%c0_50, %c0_51, %c0_52] : memref<3x8x1xf32, #tpu.memory_space<vmem>>, vector<1x8x1xf32>
    %103 = vector.shape_cast %102 : vector<1x8x1xf32> to vector<8x1xf32>
    %104 = vector.broadcast %103 : vector<8x1xf32> to vector<8x128xf32>
    %105 = arith.addf %101, %104 : vector<8x128xf32>
    %106 = arith.addf %89, %105 : vector<8x128xf32>
    %c0_53 = arith.constant 0 : index
    %c0_54 = arith.constant 0 : index
    %c0_55 = arith.constant 0 : index
    %107 = vector.load %arg13[%c0_53, %c0_54, %c0_55] : memref<3x8x1xf32, #tpu.memory_space<vmem>>, vector<1x8x1xf32>
    %108 = vector.shape_cast %107 : vector<1x8x1xf32> to vector<8x1xf32>
    %c0_56 = arith.constant 0 : index
    %c0_57 = arith.constant 0 : index
    %c0_58 = arith.constant 0 : index
    %109 = vector.load %arg14[%c0_56, %c0_57, %c0_58] : memref<3x8x1xf32, #tpu.memory_space<vmem>>, vector<1x8x1xf32>
    %110 = vector.shape_cast %109 : vector<1x8x1xf32> to vector<8x1xf32>
    %cst_59 = arith.constant dense<0.000000e+00> : vector<128xf32>
    %111 = vector.multi_reduction <add>, %106, %cst_59 [0] : vector<8x128xf32> to vector<128xf32>
    %112 = vector.shape_cast %111 : vector<128xf32> to vector<1x128xf32>
    %cst_60 = arith.constant 8.000000e+00 : f32
    %113 = vector.broadcast %cst_60 : f32 to vector<1x128xf32>
    %114 = arith.divf %112, %113 : vector<1x128xf32>
    %115 = vector.broadcast %114 : vector<1x128xf32> to vector<8x128xf32>
    %116 = arith.subf %106, %115 : vector<8x128xf32>
    %117 = arith.mulf %116, %116 : vector<8x128xf32>
    %cst_61 = arith.constant dense<0.000000e+00> : vector<128xf32>
    %118 = vector.multi_reduction <add>, %117, %cst_61 [0] : vector<8x128xf32> to vector<128xf32>
    %119 = vector.shape_cast %118 : vector<128xf32> to vector<1x128xf32>
    %cst_62 = arith.constant 8.000000e+00 : f32
    %120 = vector.broadcast %cst_62 : f32 to vector<1x128xf32>
    %121 = arith.divf %119, %120 : vector<1x128xf32>
    %122 = vector.broadcast %114 : vector<1x128xf32> to vector<8x128xf32>
    %123 = arith.subf %106, %122 : vector<8x128xf32>
    %cst_63 = arith.constant 9.99999974E-6 : f32
    %124 = vector.broadcast %cst_63 : f32 to vector<1x128xf32>
    %125 = arith.addf %121, %124 : vector<1x128xf32>
    %126 = math.rsqrt %125 : vector<1x128xf32>
    %127 = vector.broadcast %126 : vector<1x128xf32> to vector<8x128xf32>
    %128 = arith.mulf %123, %127 : vector<8x128xf32>
    %129 = vector.broadcast %108 : vector<8x1xf32> to vector<8x128xf32>
    %130 = arith.mulf %128, %129 : vector<8x128xf32>
    %131 = vector.broadcast %110 : vector<8x1xf32> to vector<8x128xf32>
    %132 = arith.addf %130, %131 : vector<8x128xf32>
    %c1 = arith.constant 1 : index
    %c0_64 = arith.constant 0 : index
    %c0_65 = arith.constant 0 : index
    %133 = vector.load %arg3[%c1, %c0_64, %c0_65] : memref<3x24x8xf32, #tpu.memory_space<vmem>>, vector<1x24x8xf32>
    %134 = vector.shape_cast %133 : vector<1x24x8xf32> to vector<24x8xf32>
    %cst_66 = arith.constant dense<0.000000e+00> : vector<24x128xf32>
    %135 = tpu.matmul %134, %132, %cst_66 {dimension_numbers = #tpu.dot_dimension_numbers<[1], [0], [0], [1], [0, 0, 1, 1], [], []>} : vector<24x8xf32>, vector<8x128xf32>, vector<24x128xf32> -> vector<24x128xf32>
    %c1_67 = arith.constant 1 : index
    %c0_68 = arith.constant 0 : index
    %c0_69 = arith.constant 0 : index
    %136 = vector.load %arg4[%c1_67, %c0_68, %c0_69] : memref<3x24x1xf32, #tpu.memory_space<vmem>>, vector<1x24x1xf32>
    %137 = vector.shape_cast %136 : vector<1x24x1xf32> to vector<24x1xf32>
    %138 = vector.broadcast %137 : vector<24x1xf32> to vector<24x128xf32>
    %139 = arith.addf %135, %138 : vector<24x128xf32>
    %140 = vector.extract_strided_slice %139 {offsets = [0, 0], sizes = [8, 128], strides = [1, 1]} : vector<24x128xf32> to vector<8x128xf32>
    %141 = vector.extract_strided_slice %139 {offsets = [8, 0], sizes = [8, 128], strides = [1, 1]} : vector<24x128xf32> to vector<8x128xf32>
    %142 = vector.extract_strided_slice %139 {offsets = [16, 0], sizes = [8, 128], strides = [1, 1]} : vector<24x128xf32> to vector<8x128xf32>
    %143 = vector.extract_strided_slice %140 {offsets = [0, 0], sizes = [8, 64], strides = [1, 1]} : vector<8x128xf32> to vector<8x64xf32>
    %144 = vector.shape_cast %143 : vector<8x64xf32> to vector<4x2x64xf32>
    %145 = vector.extract_strided_slice %141 {offsets = [0, 0], sizes = [8, 64], strides = [1, 1]} : vector<8x128xf32> to vector<8x64xf32>
    %146 = vector.shape_cast %145 : vector<8x64xf32> to vector<4x2x64xf32>
    %147 = vector.extract_strided_slice %142 {offsets = [0, 0], sizes = [8, 64], strides = [1, 1]} : vector<8x128xf32> to vector<8x64xf32>
    %148 = vector.shape_cast %147 : vector<8x64xf32> to vector<4x2x64xf32>
    "tpu.trace_start"() <{level = 10 : i32, message = "hdn,hdm->hnm"}> : () -> ()
    %cst_70 = arith.constant dense<0.000000e+00> : vector<4x64x64xf32>
    %149 = tpu.matmul %144, %146, %cst_70 {dimension_numbers = #tpu.dot_dimension_numbers<[1], [1], [2], [2], [0, 0, 0, 2, 1, 2], [0], [0]>} : vector<4x2x64xf32>, vector<4x2x64xf32>, vector<4x64x64xf32> -> vector<4x64x64xf32>
    "tpu.trace_stop"() : () -> ()
    %cst_71 = arith.constant 0.707106769 : f32
    %150 = vector.broadcast %cst_71 : f32 to vector<4x64x64xf32>
    %151 = arith.mulf %149, %150 : vector<4x64x64xf32>
    %cst_72 = arith.constant dense<0xFF800000> : vector<4x64xf32>
    %152 = vector.multi_reduction <maximumf>, %151, %cst_72 [2] : vector<4x64x64xf32> to vector<4x64xf32>
    %153 = vector.shape_cast %152 : vector<4x64xf32> to vector<4x64x1xf32>
    %154 = vector.broadcast %153 : vector<4x64x1xf32> to vector<4x64x64xf32>
    %155 = arith.subf %151, %154 : vector<4x64x64xf32>
    %156 = math.exp %155 : vector<4x64x64xf32>
    %cst_73 = arith.constant dense<0.000000e+00> : vector<4x64xf32>
    %157 = vector.multi_reduction <add>, %156, %cst_73 [2] : vector<4x64x64xf32> to vector<4x64xf32>
    %158 = vector.shape_cast %157 : vector<4x64xf32> to vector<4x64x1xf32>
    %159 = tpu.reciprocal %158 {approx = true} : vector<4x64x1xf32> -> vector<4x64x1xf32>
    %160 = vector.broadcast %159 : vector<4x64x1xf32> to vector<4x64x64xf32>
    %161 = arith.mulf %156, %160 : vector<4x64x64xf32>
    "tpu.trace_start"() <{level = 10 : i32, message = "hnm,hdm->hdn"}> : () -> ()
    %cst_74 = arith.constant dense<0.000000e+00> : vector<4x2x64xf32>
    %162 = tpu.matmul %148, %161, %cst_74 {dimension_numbers = #tpu.dot_dimension_numbers<[2], [2], [1], [1], [0, 0, 0, 1, 1, 1], [0], [0]>} : vector<4x2x64xf32>, vector<4x64x64xf32>, vector<4x2x64xf32> -> vector<4x2x64xf32>
    "tpu.trace_stop"() : () -> ()
    %163 = vector.shape_cast %162 : vector<4x2x64xf32> to vector<8x64xf32>
    %164 = vector.extract_strided_slice %140 {offsets = [0, 64], sizes = [8, 64], strides = [1, 1]} : vector<8x128xf32> to vector<8x64xf32>
    %165 = vector.shape_cast %164 : vector<8x64xf32> to vector<4x2x64xf32>
    %166 = vector.extract_strided_slice %141 {offsets = [0, 64], sizes = [8, 64], strides = [1, 1]} : vector<8x128xf32> to vector<8x64xf32>
    %167 = vector.shape_cast %166 : vector<8x64xf32> to vector<4x2x64xf32>
    %168 = vector.extract_strided_slice %142 {offsets = [0, 64], sizes = [8, 64], strides = [1, 1]} : vector<8x128xf32> to vector<8x64xf32>
    %169 = vector.shape_cast %168 : vector<8x64xf32> to vector<4x2x64xf32>
    "tpu.trace_start"() <{level = 10 : i32, message = "hdn,hdm->hnm"}> : () -> ()
    %cst_75 = arith.constant dense<0.000000e+00> : vector<4x64x64xf32>
    %170 = tpu.matmul %165, %167, %cst_75 {dimension_numbers = #tpu.dot_dimension_numbers<[1], [1], [2], [2], [0, 0, 0, 2, 1, 2], [0], [0]>} : vector<4x2x64xf32>, vector<4x2x64xf32>, vector<4x64x64xf32> -> vector<4x64x64xf32>
    "tpu.trace_stop"() : () -> ()
    %cst_76 = arith.constant 0.707106769 : f32
    %171 = vector.broadcast %cst_76 : f32 to vector<4x64x64xf32>
    %172 = arith.mulf %170, %171 : vector<4x64x64xf32>
    %cst_77 = arith.constant dense<0xFF800000> : vector<4x64xf32>
    %173 = vector.multi_reduction <maximumf>, %172, %cst_77 [2] : vector<4x64x64xf32> to vector<4x64xf32>
    %174 = vector.shape_cast %173 : vector<4x64xf32> to vector<4x64x1xf32>
    %175 = vector.broadcast %174 : vector<4x64x1xf32> to vector<4x64x64xf32>
    %176 = arith.subf %172, %175 : vector<4x64x64xf32>
    %177 = math.exp %176 : vector<4x64x64xf32>
    %cst_78 = arith.constant dense<0.000000e+00> : vector<4x64xf32>
    %178 = vector.multi_reduction <add>, %177, %cst_78 [2] : vector<4x64x64xf32> to vector<4x64xf32>
    %179 = vector.shape_cast %178 : vector<4x64xf32> to vector<4x64x1xf32>
    %180 = tpu.reciprocal %179 {approx = true} : vector<4x64x1xf32> -> vector<4x64x1xf32>
    %181 = vector.broadcast %180 : vector<4x64x1xf32> to vector<4x64x64xf32>
    %182 = arith.mulf %177, %181 : vector<4x64x64xf32>
    "tpu.trace_start"() <{level = 10 : i32, message = "hnm,hdm->hdn"}> : () -> ()
    %cst_79 = arith.constant dense<0.000000e+00> : vector<4x2x64xf32>
    %183 = tpu.matmul %169, %182, %cst_79 {dimension_numbers = #tpu.dot_dimension_numbers<[2], [2], [1], [1], [0, 0, 0, 1, 1, 1], [0], [0]>} : vector<4x2x64xf32>, vector<4x64x64xf32>, vector<4x2x64xf32> -> vector<4x2x64xf32>
    "tpu.trace_stop"() : () -> ()
    %184 = vector.shape_cast %183 : vector<4x2x64xf32> to vector<8x64xf32>
    %185 = tpu.concatenate %163, %184 in 1 : vector<8x64xf32>, vector<8x64xf32> -> vector<8x128xf32>
    %c1_80 = arith.constant 1 : index
    %c0_81 = arith.constant 0 : index
    %c0_82 = arith.constant 0 : index
    %186 = vector.load %arg5[%c1_80, %c0_81, %c0_82] : memref<3x8x8xf32, #tpu.memory_space<vmem>>, vector<1x8x8xf32>
    %187 = vector.shape_cast %186 : vector<1x8x8xf32> to vector<8x8xf32>
    %cst_83 = arith.constant dense<0.000000e+00> : vector<8x128xf32>
    %188 = tpu.matmul %187, %185, %cst_83 {dimension_numbers = #tpu.dot_dimension_numbers<[1], [0], [0], [1], [0, 0, 1, 1], [], []>} : vector<8x8xf32>, vector<8x128xf32>, vector<8x128xf32> -> vector<8x128xf32>
    %c1_84 = arith.constant 1 : index
    %c0_85 = arith.constant 0 : index
    %c0_86 = arith.constant 0 : index
    %189 = vector.load %arg6[%c1_84, %c0_85, %c0_86] : memref<3x8x1xf32, #tpu.memory_space<vmem>>, vector<1x8x1xf32>
    %190 = vector.shape_cast %189 : vector<1x8x1xf32> to vector<8x1xf32>
    %191 = vector.broadcast %190 : vector<8x1xf32> to vector<8x128xf32>
    %192 = arith.addf %188, %191 : vector<8x128xf32>
    %193 = arith.addf %132, %192 : vector<8x128xf32>
    %c1_87 = arith.constant 1 : index
    %c0_88 = arith.constant 0 : index
    %c0_89 = arith.constant 0 : index
    %194 = vector.load %arg7[%c1_87, %c0_88, %c0_89] : memref<3x8x1xf32, #tpu.memory_space<vmem>>, vector<1x8x1xf32>
    %195 = vector.shape_cast %194 : vector<1x8x1xf32> to vector<8x1xf32>
    %c1_90 = arith.constant 1 : index
    %c0_91 = arith.constant 0 : index
    %c0_92 = arith.constant 0 : index
    %196 = vector.load %arg8[%c1_90, %c0_91, %c0_92] : memref<3x8x1xf32, #tpu.memory_space<vmem>>, vector<1x8x1xf32>
    %197 = vector.shape_cast %196 : vector<1x8x1xf32> to vector<8x1xf32>
    %cst_93 = arith.constant dense<0.000000e+00> : vector<128xf32>
    %198 = vector.multi_reduction <add>, %193, %cst_93 [0] : vector<8x128xf32> to vector<128xf32>
    %199 = vector.shape_cast %198 : vector<128xf32> to vector<1x128xf32>
    %cst_94 = arith.constant 8.000000e+00 : f32
    %200 = vector.broadcast %cst_94 : f32 to vector<1x128xf32>
    %201 = arith.divf %199, %200 : vector<1x128xf32>
    %202 = vector.broadcast %201 : vector<1x128xf32> to vector<8x128xf32>
    %203 = arith.subf %193, %202 : vector<8x128xf32>
    %204 = arith.mulf %203, %203 : vector<8x128xf32>
    %cst_95 = arith.constant dense<0.000000e+00> : vector<128xf32>
    %205 = vector.multi_reduction <add>, %204, %cst_95 [0] : vector<8x128xf32> to vector<128xf32>
    %206 = vector.shape_cast %205 : vector<128xf32> to vector<1x128xf32>
    %cst_96 = arith.constant 8.000000e+00 : f32
    %207 = vector.broadcast %cst_96 : f32 to vector<1x128xf32>
    %208 = arith.divf %206, %207 : vector<1x128xf32>
    %209 = vector.broadcast %201 : vector<1x128xf32> to vector<8x128xf32>
    %210 = arith.subf %193, %209 : vector<8x128xf32>
    %cst_97 = arith.constant 9.99999974E-6 : f32
    %211 = vector.broadcast %cst_97 : f32 to vector<1x128xf32>
    %212 = arith.addf %208, %211 : vector<1x128xf32>
    %213 = math.rsqrt %212 : vector<1x128xf32>
    %214 = vector.broadcast %213 : vector<1x128xf32> to vector<8x128xf32>
    %215 = arith.mulf %210, %214 : vector<8x128xf32>
    %216 = vector.broadcast %195 : vector<8x1xf32> to vector<8x128xf32>
    %217 = arith.mulf %215, %216 : vector<8x128xf32>
    %218 = vector.broadcast %197 : vector<8x1xf32> to vector<8x128xf32>
    %219 = arith.addf %217, %218 : vector<8x128xf32>
    %c1_98 = arith.constant 1 : index
    %c0_99 = arith.constant 0 : index
    %c0_100 = arith.constant 0 : index
    %220 = vector.load %arg9[%c1_98, %c0_99, %c0_100] : memref<3x64x8xf32, #tpu.memory_space<vmem>>, vector<1x64x8xf32>
    %221 = vector.shape_cast %220 : vector<1x64x8xf32> to vector<64x8xf32>
    %cst_101 = arith.constant dense<0.000000e+00> : vector<64x128xf32>
    %222 = tpu.matmul %221, %219, %cst_101 {dimension_numbers = #tpu.dot_dimension_numbers<[1], [0], [0], [1], [0, 0, 1, 1], [], []>} : vector<64x8xf32>, vector<8x128xf32>, vector<64x128xf32> -> vector<64x128xf32>
    %c1_102 = arith.constant 1 : index
    %c0_103 = arith.constant 0 : index
    %c0_104 = arith.constant 0 : index
    %223 = vector.load %arg10[%c1_102, %c0_103, %c0_104] : memref<3x64x1xf32, #tpu.memory_space<vmem>>, vector<1x64x1xf32>
    %224 = vector.shape_cast %223 : vector<1x64x1xf32> to vector<64x1xf32>
    %225 = vector.broadcast %224 : vector<64x1xf32> to vector<64x128xf32>
    %226 = arith.addf %222, %225 : vector<64x128xf32>
    %cst_105 = arith.constant 0.000000e+00 : f32
    %227 = vector.broadcast %cst_105 : f32 to vector<64x128xf32>
    %228 = arith.maximumf %226, %227 : vector<64x128xf32>
    %c1_106 = arith.constant 1 : index
    %c0_107 = arith.constant 0 : index
    %c0_108 = arith.constant 0 : index
    %229 = vector.load %arg11[%c1_106, %c0_107, %c0_108] : memref<3x8x64xf32, #tpu.memory_space<vmem>>, vector<1x8x64xf32>
    %230 = vector.shape_cast %229 : vector<1x8x64xf32> to vector<8x64xf32>
    %cst_109 = arith.constant dense<0.000000e+00> : vector<8x128xf32>
    %231 = tpu.matmul %230, %228, %cst_109 {dimension_numbers = #tpu.dot_dimension_numbers<[1], [0], [0], [1], [0, 0, 1, 1], [], []>} : vector<8x64xf32>, vector<64x128xf32>, vector<8x128xf32> -> vector<8x128xf32>
    %c1_110 = arith.constant 1 : index
    %c0_111 = arith.constant 0 : index
    %c0_112 = arith.constant 0 : index
    %232 = vector.load %arg12[%c1_110, %c0_111, %c0_112] : memref<3x8x1xf32, #tpu.memory_space<vmem>>, vector<1x8x1xf32>
    %233 = vector.shape_cast %232 : vector<1x8x1xf32> to vector<8x1xf32>
    %234 = vector.broadcast %233 : vector<8x1xf32> to vector<8x128xf32>
    %235 = arith.addf %231, %234 : vector<8x128xf32>
    %236 = arith.addf %219, %235 : vector<8x128xf32>
    %c1_113 = arith.constant 1 : index
    %c0_114 = arith.constant 0 : index
    %c0_115 = arith.constant 0 : index
    %237 = vector.load %arg13[%c1_113, %c0_114, %c0_115] : memref<3x8x1xf32, #tpu.memory_space<vmem>>, vector<1x8x1xf32>
    %238 = vector.shape_cast %237 : vector<1x8x1xf32> to vector<8x1xf32>
    %c1_116 = arith.constant 1 : index
    %c0_117 = arith.constant 0 : index
    %c0_118 = arith.constant 0 : index
    %239 = vector.load %arg14[%c1_116, %c0_117, %c0_118] : memref<3x8x1xf32, #tpu.memory_space<vmem>>, vector<1x8x1xf32>
    %240 = vector.shape_cast %239 : vector<1x8x1xf32> to vector<8x1xf32>
    %cst_119 = arith.constant dense<0.000000e+00> : vector<128xf32>
    %241 = vector.multi_reduction <add>, %236, %cst_119 [0] : vector<8x128xf32> to vector<128xf32>
    %242 = vector.shape_cast %241 : vector<128xf32> to vector<1x128xf32>
    %cst_120 = arith.constant 8.000000e+00 : f32
    %243 = vector.broadcast %cst_120 : f32 to vector<1x128xf32>
    %244 = arith.divf %242, %243 : vector<1x128xf32>
    %245 = vector.broadcast %244 : vector<1x128xf32> to vector<8x128xf32>
    %246 = arith.subf %236, %245 : vector<8x128xf32>
    %247 = arith.mulf %246, %246 : vector<8x128xf32>
    %cst_121 = arith.constant dense<0.000000e+00> : vector<128xf32>
    %248 = vector.multi_reduction <add>, %247, %cst_121 [0] : vector<8x128xf32> to vector<128xf32>
    %249 = vector.shape_cast %248 : vector<128xf32> to vector<1x128xf32>
    %cst_122 = arith.constant 8.000000e+00 : f32
    %250 = vector.broadcast %cst_122 : f32 to vector<1x128xf32>
    %251 = arith.divf %249, %250 : vector<1x128xf32>
    %252 = vector.broadcast %244 : vector<1x128xf32> to vector<8x128xf32>
    %253 = arith.subf %236, %252 : vector<8x128xf32>
    %cst_123 = arith.constant 9.99999974E-6 : f32
    %254 = vector.broadcast %cst_123 : f32 to vector<1x128xf32>
    %255 = arith.addf %251, %254 : vector<1x128xf32>
    %256 = math.rsqrt %255 : vector<1x128xf32>
    %257 = vector.broadcast %256 : vector<1x128xf32> to vector<8x128xf32>
    %258 = arith.mulf %253, %257 : vector<8x128xf32>
    %259 = vector.broadcast %238 : vector<8x1xf32> to vector<8x128xf32>
    %260 = arith.mulf %258, %259 : vector<8x128xf32>
    %261 = vector.broadcast %240 : vector<8x1xf32> to vector<8x128xf32>
    %262 = arith.addf %260, %261 : vector<8x128xf32>
    %c2 = arith.constant 2 : index
    %c0_124 = arith.constant 0 : index
    %c0_125 = arith.constant 0 : index
    %263 = vector.load %arg3[%c2, %c0_124, %c0_125] : memref<3x24x8xf32, #tpu.memory_space<vmem>>, vector<1x24x8xf32>
    %264 = vector.shape_cast %263 : vector<1x24x8xf32> to vector<24x8xf32>
    %cst_126 = arith.constant dense<0.000000e+00> : vector<24x128xf32>
    %265 = tpu.matmul %264, %262, %cst_126 {dimension_numbers = #tpu.dot_dimension_numbers<[1], [0], [0], [1], [0, 0, 1, 1], [], []>} : vector<24x8xf32>, vector<8x128xf32>, vector<24x128xf32> -> vector<24x128xf32>
    %c2_127 = arith.constant 2 : index
    %c0_128 = arith.constant 0 : index
    %c0_129 = arith.constant 0 : index
    %266 = vector.load %arg4[%c2_127, %c0_128, %c0_129] : memref<3x24x1xf32, #tpu.memory_space<vmem>>, vector<1x24x1xf32>
    %267 = vector.shape_cast %266 : vector<1x24x1xf32> to vector<24x1xf32>
    %268 = vector.broadcast %267 : vector<24x1xf32> to vector<24x128xf32>
    %269 = arith.addf %265, %268 : vector<24x128xf32>
    %270 = vector.extract_strided_slice %269 {offsets = [0, 0], sizes = [8, 128], strides = [1, 1]} : vector<24x128xf32> to vector<8x128xf32>
    %271 = vector.extract_strided_slice %269 {offsets = [8, 0], sizes = [8, 128], strides = [1, 1]} : vector<24x128xf32> to vector<8x128xf32>
    %272 = vector.extract_strided_slice %269 {offsets = [16, 0], sizes = [8, 128], strides = [1, 1]} : vector<24x128xf32> to vector<8x128xf32>
    %273 = vector.extract_strided_slice %270 {offsets = [0, 0], sizes = [8, 64], strides = [1, 1]} : vector<8x128xf32> to vector<8x64xf32>
    %274 = vector.shape_cast %273 : vector<8x64xf32> to vector<4x2x64xf32>
    %275 = vector.extract_strided_slice %271 {offsets = [0, 0], sizes = [8, 64], strides = [1, 1]} : vector<8x128xf32> to vector<8x64xf32>
    %276 = vector.shape_cast %275 : vector<8x64xf32> to vector<4x2x64xf32>
    %277 = vector.extract_strided_slice %272 {offsets = [0, 0], sizes = [8, 64], strides = [1, 1]} : vector<8x128xf32> to vector<8x64xf32>
    %278 = vector.shape_cast %277 : vector<8x64xf32> to vector<4x2x64xf32>
    "tpu.trace_start"() <{level = 10 : i32, message = "hdn,hdm->hnm"}> : () -> ()
    %cst_130 = arith.constant dense<0.000000e+00> : vector<4x64x64xf32>
    %279 = tpu.matmul %274, %276, %cst_130 {dimension_numbers = #tpu.dot_dimension_numbers<[1], [1], [2], [2], [0, 0, 0, 2, 1, 2], [0], [0]>} : vector<4x2x64xf32>, vector<4x2x64xf32>, vector<4x64x64xf32> -> vector<4x64x64xf32>
    "tpu.trace_stop"() : () -> ()
    %cst_131 = arith.constant 0.707106769 : f32
    %280 = vector.broadcast %cst_131 : f32 to vector<4x64x64xf32>
    %281 = arith.mulf %279, %280 : vector<4x64x64xf32>
    %cst_132 = arith.constant dense<0xFF800000> : vector<4x64xf32>
    %282 = vector.multi_reduction <maximumf>, %281, %cst_132 [2] : vector<4x64x64xf32> to vector<4x64xf32>
    %283 = vector.shape_cast %282 : vector<4x64xf32> to vector<4x64x1xf32>
    %284 = vector.broadcast %283 : vector<4x64x1xf32> to vector<4x64x64xf32>
    %285 = arith.subf %281, %284 : vector<4x64x64xf32>
    %286 = math.exp %285 : vector<4x64x64xf32>
    %cst_133 = arith.constant dense<0.000000e+00> : vector<4x64xf32>
    %287 = vector.multi_reduction <add>, %286, %cst_133 [2] : vector<4x64x64xf32> to vector<4x64xf32>
    %288 = vector.shape_cast %287 : vector<4x64xf32> to vector<4x64x1xf32>
    %289 = tpu.reciprocal %288 {approx = true} : vector<4x64x1xf32> -> vector<4x64x1xf32>
    %290 = vector.broadcast %289 : vector<4x64x1xf32> to vector<4x64x64xf32>
    %291 = arith.mulf %286, %290 : vector<4x64x64xf32>
    "tpu.trace_start"() <{level = 10 : i32, message = "hnm,hdm->hdn"}> : () -> ()
    %cst_134 = arith.constant dense<0.000000e+00> : vector<4x2x64xf32>
    %292 = tpu.matmul %278, %291, %cst_134 {dimension_numbers = #tpu.dot_dimension_numbers<[2], [2], [1], [1], [0, 0, 0, 1, 1, 1], [0], [0]>} : vector<4x2x64xf32>, vector<4x64x64xf32>, vector<4x2x64xf32> -> vector<4x2x64xf32>
    "tpu.trace_stop"() : () -> ()
    %293 = vector.shape_cast %292 : vector<4x2x64xf32> to vector<8x64xf32>
    %294 = vector.extract_strided_slice %270 {offsets = [0, 64], sizes = [8, 64], strides = [1, 1]} : vector<8x128xf32> to vector<8x64xf32>
    %295 = vector.shape_cast %294 : vector<8x64xf32> to vector<4x2x64xf32>
    %296 = vector.extract_strided_slice %271 {offsets = [0, 64], sizes = [8, 64], strides = [1, 1]} : vector<8x128xf32> to vector<8x64xf32>
    %297 = vector.shape_cast %296 : vector<8x64xf32> to vector<4x2x64xf32>
    %298 = vector.extract_strided_slice %272 {offsets = [0, 64], sizes = [8, 64], strides = [1, 1]} : vector<8x128xf32> to vector<8x64xf32>
    %299 = vector.shape_cast %298 : vector<8x64xf32> to vector<4x2x64xf32>
    "tpu.trace_start"() <{level = 10 : i32, message = "hdn,hdm->hnm"}> : () -> ()
    %cst_135 = arith.constant dense<0.000000e+00> : vector<4x64x64xf32>
    %300 = tpu.matmul %295, %297, %cst_135 {dimension_numbers = #tpu.dot_dimension_numbers<[1], [1], [2], [2], [0, 0, 0, 2, 1, 2], [0], [0]>} : vector<4x2x64xf32>, vector<4x2x64xf32>, vector<4x64x64xf32> -> vector<4x64x64xf32>
    "tpu.trace_stop"() : () -> ()
    %cst_136 = arith.constant 0.707106769 : f32
    %301 = vector.broadcast %cst_136 : f32 to vector<4x64x64xf32>
    %302 = arith.mulf %300, %301 : vector<4x64x64xf32>
    %cst_137 = arith.constant dense<0xFF800000> : vector<4x64xf32>
    %303 = vector.multi_reduction <maximumf>, %302, %cst_137 [2] : vector<4x64x64xf32> to vector<4x64xf32>
    %304 = vector.shape_cast %303 : vector<4x64xf32> to vector<4x64x1xf32>
    %305 = vector.broadcast %304 : vector<4x64x1xf32> to vector<4x64x64xf32>
    %306 = arith.subf %302, %305 : vector<4x64x64xf32>
    %307 = math.exp %306 : vector<4x64x64xf32>
    %cst_138 = arith.constant dense<0.000000e+00> : vector<4x64xf32>
    %308 = vector.multi_reduction <add>, %307, %cst_138 [2] : vector<4x64x64xf32> to vector<4x64xf32>
    %309 = vector.shape_cast %308 : vector<4x64xf32> to vector<4x64x1xf32>
    %310 = tpu.reciprocal %309 {approx = true} : vector<4x64x1xf32> -> vector<4x64x1xf32>
    %311 = vector.broadcast %310 : vector<4x64x1xf32> to vector<4x64x64xf32>
    %312 = arith.mulf %307, %311 : vector<4x64x64xf32>
    "tpu.trace_start"() <{level = 10 : i32, message = "hnm,hdm->hdn"}> : () -> ()
    %cst_139 = arith.constant dense<0.000000e+00> : vector<4x2x64xf32>
    %313 = tpu.matmul %299, %312, %cst_139 {dimension_numbers = #tpu.dot_dimension_numbers<[2], [2], [1], [1], [0, 0, 0, 1, 1, 1], [0], [0]>} : vector<4x2x64xf32>, vector<4x64x64xf32>, vector<4x2x64xf32> -> vector<4x2x64xf32>
    "tpu.trace_stop"() : () -> ()
    %314 = vector.shape_cast %313 : vector<4x2x64xf32> to vector<8x64xf32>
    %315 = tpu.concatenate %293, %314 in 1 : vector<8x64xf32>, vector<8x64xf32> -> vector<8x128xf32>
    %c2_140 = arith.constant 2 : index
    %c0_141 = arith.constant 0 : index
    %c0_142 = arith.constant 0 : index
    %316 = vector.load %arg5[%c2_140, %c0_141, %c0_142] : memref<3x8x8xf32, #tpu.memory_space<vmem>>, vector<1x8x8xf32>
    %317 = vector.shape_cast %316 : vector<1x8x8xf32> to vector<8x8xf32>
    %cst_143 = arith.constant dense<0.000000e+00> : vector<8x128xf32>
    %318 = tpu.matmul %317, %315, %cst_143 {dimension_numbers = #tpu.dot_dimension_numbers<[1], [0], [0], [1], [0, 0, 1, 1], [], []>} : vector<8x8xf32>, vector<8x128xf32>, vector<8x128xf32> -> vector<8x128xf32>
    %c2_144 = arith.constant 2 : index
    %c0_145 = arith.constant 0 : index
    %c0_146 = arith.constant 0 : index
    %319 = vector.load %arg6[%c2_144, %c0_145, %c0_146] : memref<3x8x1xf32, #tpu.memory_space<vmem>>, vector<1x8x1xf32>
    %320 = vector.shape_cast %319 : vector<1x8x1xf32> to vector<8x1xf32>
    %321 = vector.broadcast %320 : vector<8x1xf32> to vector<8x128xf32>
    %322 = arith.addf %318, %321 : vector<8x128xf32>
    %323 = arith.addf %262, %322 : vector<8x128xf32>
    %c2_147 = arith.constant 2 : index
    %c0_148 = arith.constant 0 : index
    %c0_149 = arith.constant 0 : index
    %324 = vector.load %arg7[%c2_147, %c0_148, %c0_149] : memref<3x8x1xf32, #tpu.memory_space<vmem>>, vector<1x8x1xf32>
    %325 = vector.shape_cast %324 : vector<1x8x1xf32> to vector<8x1xf32>
    %c2_150 = arith.constant 2 : index
    %c0_151 = arith.constant 0 : index
    %c0_152 = arith.constant 0 : index
    %326 = vector.load %arg8[%c2_150, %c0_151, %c0_152] : memref<3x8x1xf32, #tpu.memory_space<vmem>>, vector<1x8x1xf32>
    %327 = vector.shape_cast %326 : vector<1x8x1xf32> to vector<8x1xf32>
    %cst_153 = arith.constant dense<0.000000e+00> : vector<128xf32>
    %328 = vector.multi_reduction <add>, %323, %cst_153 [0] : vector<8x128xf32> to vector<128xf32>
    %329 = vector.shape_cast %328 : vector<128xf32> to vector<1x128xf32>
    %cst_154 = arith.constant 8.000000e+00 : f32
    %330 = vector.broadcast %cst_154 : f32 to vector<1x128xf32>
    %331 = arith.divf %329, %330 : vector<1x128xf32>
    %332 = vector.broadcast %331 : vector<1x128xf32> to vector<8x128xf32>
    %333 = arith.subf %323, %332 : vector<8x128xf32>
    %334 = arith.mulf %333, %333 : vector<8x128xf32>
    %cst_155 = arith.constant dense<0.000000e+00> : vector<128xf32>
    %335 = vector.multi_reduction <add>, %334, %cst_155 [0] : vector<8x128xf32> to vector<128xf32>
    %336 = vector.shape_cast %335 : vector<128xf32> to vector<1x128xf32>
    %cst_156 = arith.constant 8.000000e+00 : f32
    %337 = vector.broadcast %cst_156 : f32 to vector<1x128xf32>
    %338 = arith.divf %336, %337 : vector<1x128xf32>
    %339 = vector.broadcast %331 : vector<1x128xf32> to vector<8x128xf32>
    %340 = arith.subf %323, %339 : vector<8x128xf32>
    %cst_157 = arith.constant 9.99999974E-6 : f32
    %341 = vector.broadcast %cst_157 : f32 to vector<1x128xf32>
    %342 = arith.addf %338, %341 : vector<1x128xf32>
    %343 = math.rsqrt %342 : vector<1x128xf32>
    %344 = vector.broadcast %343 : vector<1x128xf32> to vector<8x128xf32>
    %345 = arith.mulf %340, %344 : vector<8x128xf32>
    %346 = vector.broadcast %325 : vector<8x1xf32> to vector<8x128xf32>
    %347 = arith.mulf %345, %346 : vector<8x128xf32>
    %348 = vector.broadcast %327 : vector<8x1xf32> to vector<8x128xf32>
    %349 = arith.addf %347, %348 : vector<8x128xf32>
    %c2_158 = arith.constant 2 : index
    %c0_159 = arith.constant 0 : index
    %c0_160 = arith.constant 0 : index
    %350 = vector.load %arg9[%c2_158, %c0_159, %c0_160] : memref<3x64x8xf32, #tpu.memory_space<vmem>>, vector<1x64x8xf32>
    %351 = vector.shape_cast %350 : vector<1x64x8xf32> to vector<64x8xf32>
    %cst_161 = arith.constant dense<0.000000e+00> : vector<64x128xf32>
    %352 = tpu.matmul %351, %349, %cst_161 {dimension_numbers = #tpu.dot_dimension_numbers<[1], [0], [0], [1], [0, 0, 1, 1], [], []>} : vector<64x8xf32>, vector<8x128xf32>, vector<64x128xf32> -> vector<64x128xf32>
    %c2_162 = arith.constant 2 : index
    %c0_163 = arith.constant 0 : index
    %c0_164 = arith.constant 0 : index
    %353 = vector.load %arg10[%c2_162, %c0_163, %c0_164] : memref<3x64x1xf32, #tpu.memory_space<vmem>>, vector<1x64x1xf32>
    %354 = vector.shape_cast %353 : vector<1x64x1xf32> to vector<64x1xf32>
    %355 = vector.broadcast %354 : vector<64x1xf32> to vector<64x128xf32>
    %356 = arith.addf %352, %355 : vector<64x128xf32>
    %cst_165 = arith.constant 0.000000e+00 : f32
    %357 = vector.broadcast %cst_165 : f32 to vector<64x128xf32>
    %358 = arith.maximumf %356, %357 : vector<64x128xf32>
    %c2_166 = arith.constant 2 : index
    %c0_167 = arith.constant 0 : index
    %c0_168 = arith.constant 0 : index
    %359 = vector.load %arg11[%c2_166, %c0_167, %c0_168] : memref<3x8x64xf32, #tpu.memory_space<vmem>>, vector<1x8x64xf32>
    %360 = vector.shape_cast %359 : vector<1x8x64xf32> to vector<8x64xf32>
    %cst_169 = arith.constant dense<0.000000e+00> : vector<8x128xf32>
    %361 = tpu.matmul %360, %358, %cst_169 {dimension_numbers = #tpu.dot_dimension_numbers<[1], [0], [0], [1], [0, 0, 1, 1], [], []>} : vector<8x64xf32>, vector<64x128xf32>, vector<8x128xf32> -> vector<8x128xf32>
    %c2_170 = arith.constant 2 : index
    %c0_171 = arith.constant 0 : index
    %c0_172 = arith.constant 0 : index
    %362 = vector.load %arg12[%c2_170, %c0_171, %c0_172] : memref<3x8x1xf32, #tpu.memory_space<vmem>>, vector<1x8x1xf32>
    %363 = vector.shape_cast %362 : vector<1x8x1xf32> to vector<8x1xf32>
    %364 = vector.broadcast %363 : vector<8x1xf32> to vector<8x128xf32>
    %365 = arith.addf %361, %364 : vector<8x128xf32>
    %366 = arith.addf %349, %365 : vector<8x128xf32>
    %c2_173 = arith.constant 2 : index
    %c0_174 = arith.constant 0 : index
    %c0_175 = arith.constant 0 : index
    %367 = vector.load %arg13[%c2_173, %c0_174, %c0_175] : memref<3x8x1xf32, #tpu.memory_space<vmem>>, vector<1x8x1xf32>
    %368 = vector.shape_cast %367 : vector<1x8x1xf32> to vector<8x1xf32>
    %c2_176 = arith.constant 2 : index
    %c0_177 = arith.constant 0 : index
    %c0_178 = arith.constant 0 : index
    %369 = vector.load %arg14[%c2_176, %c0_177, %c0_178] : memref<3x8x1xf32, #tpu.memory_space<vmem>>, vector<1x8x1xf32>
    %370 = vector.shape_cast %369 : vector<1x8x1xf32> to vector<8x1xf32>
    %cst_179 = arith.constant dense<0.000000e+00> : vector<128xf32>
    %371 = vector.multi_reduction <add>, %366, %cst_179 [0] : vector<8x128xf32> to vector<128xf32>
    %372 = vector.shape_cast %371 : vector<128xf32> to vector<1x128xf32>
    %cst_180 = arith.constant 8.000000e+00 : f32
    %373 = vector.broadcast %cst_180 : f32 to vector<1x128xf32>
    %374 = arith.divf %372, %373 : vector<1x128xf32>
    %375 = vector.broadcast %374 : vector<1x128xf32> to vector<8x128xf32>
    %376 = arith.subf %366, %375 : vector<8x128xf32>
    %377 = arith.mulf %376, %376 : vector<8x128xf32>
    %cst_181 = arith.constant dense<0.000000e+00> : vector<128xf32>
    %378 = vector.multi_reduction <add>, %377, %cst_181 [0] : vector<8x128xf32> to vector<128xf32>
    %379 = vector.shape_cast %378 : vector<128xf32> to vector<1x128xf32>
    %cst_182 = arith.constant 8.000000e+00 : f32
    %380 = vector.broadcast %cst_182 : f32 to vector<1x128xf32>
    %381 = arith.divf %379, %380 : vector<1x128xf32>
    %382 = vector.broadcast %374 : vector<1x128xf32> to vector<8x128xf32>
    %383 = arith.subf %366, %382 : vector<8x128xf32>
    %cst_183 = arith.constant 9.99999974E-6 : f32
    %384 = vector.broadcast %cst_183 : f32 to vector<1x128xf32>
    %385 = arith.addf %381, %384 : vector<1x128xf32>
    %386 = math.rsqrt %385 : vector<1x128xf32>
    %387 = vector.broadcast %386 : vector<1x128xf32> to vector<8x128xf32>
    %388 = arith.mulf %383, %387 : vector<8x128xf32>
    %389 = vector.broadcast %368 : vector<8x1xf32> to vector<8x128xf32>
    %390 = arith.mulf %388, %389 : vector<8x128xf32>
    %391 = vector.broadcast %370 : vector<8x1xf32> to vector<8x128xf32>
    %392 = arith.addf %390, %391 : vector<8x128xf32>
    %c0_184 = arith.constant 0 : index
    %c0_185 = arith.constant 0 : index
    %393 = vector.load %arg15[%c0_184, %c0_185] : memref<8x8xf32, #tpu.memory_space<vmem>>, vector<8x8xf32>
    %cst_186 = arith.constant dense<0.000000e+00> : vector<8x128xf32>
    %394 = tpu.matmul %393, %392, %cst_186 {dimension_numbers = #tpu.dot_dimension_numbers<[1], [0], [0], [1], [0, 0, 1, 1], [], []>} : vector<8x8xf32>, vector<8x128xf32>, vector<8x128xf32> -> vector<8x128xf32>
    %c0_187 = arith.constant 0 : index
    %c0_188 = arith.constant 0 : index
    %395 = vector.load %arg16[%c0_187, %c0_188] : memref<8x1xf32, #tpu.memory_space<vmem>>, vector<8x1xf32>
    %396 = vector.broadcast %395 : vector<8x1xf32> to vector<8x128xf32>
    %397 = arith.addf %394, %396 : vector<8x128xf32>
    %cst_189 = arith.constant dense<0xFF800000> : vector<128xf32>
    %398 = vector.multi_reduction <maximumf>, %397, %cst_189 [0] : vector<8x128xf32> to vector<128xf32>
    %399 = vector.shape_cast %398 : vector<128xf32> to vector<1x128xf32>
    %400 = vector.broadcast %399 : vector<1x128xf32> to vector<8x128xf32>
    %401 = arith.subf %397, %400 : vector<8x128xf32>
    %402 = math.exp %401 : vector<8x128xf32>
    %cst_190 = arith.constant dense<0.000000e+00> : vector<128xf32>
    %403 = vector.multi_reduction <add>, %402, %cst_190 [0] : vector<8x128xf32> to vector<128xf32>
    %404 = vector.shape_cast %403 : vector<128xf32> to vector<1x128xf32>
    %405 = tpu.reciprocal %404 {approx = true} : vector<1x128xf32> -> vector<1x128xf32>
    %406 = vector.broadcast %405 : vector<1x128xf32> to vector<8x128xf32>
    %407 = arith.mulf %402, %406 : vector<8x128xf32>
    %c0_191 = arith.constant 0 : index
    %c0_192 = arith.constant 0 : index
    %408 = vector.load %arg18[%c0_191, %c0_192] : memref<1x1xf32, #tpu.memory_space<vmem>>, vector<1x1xf32>
    %409 = vector.extract_strided_slice %407 {offsets = [0, 0], sizes = [8, 64], strides = [1, 1]} : vector<8x128xf32> to vector<8x64xf32>
    %c0_193 = arith.constant 0 : index
    %c0_194 = arith.constant 0 : index
    %410 = vector.load %arg17[%c0_193, %c0_194] : memref<64x256xf32, #tpu.memory_space<vmem>>, vector<64x256xf32>
    %cst_195 = arith.constant dense<0.000000e+00> : vector<8x256xf32>
    %411 = tpu.matmul %409, %410, %cst_195 {dimension_numbers = #tpu.dot_dimension_numbers<[1], [0], [0], [1], [0, 0, 1, 1], [], []>} : vector<8x64xf32>, vector<64x256xf32>, vector<8x256xf32> -> vector<8x256xf32>
    %c0_196 = arith.constant 0 : index
    %c0_197 = arith.constant 0 : index
    %c0_198 = arith.constant 0 : index
    %412 = vector.load %arg1[%c0_196, %c0_197, %c0_198] : memref<2x8x256xf32, #tpu.memory_space<vmem>>, vector<1x8x256xf32>
    %413 = vector.shape_cast %412 : vector<1x8x256xf32> to vector<8x256xf32>
    %414 = vector.broadcast %408 : vector<1x1xf32> to vector<8x256xf32>
    %415 = arith.mulf %414, %411 : vector<8x256xf32>
    %cst_199 = arith.constant 1.000000e+00 : f32
    %416 = vector.broadcast %cst_199 : f32 to vector<8x256xf32>
    %417 = arith.addf %416, %415 : vector<8x256xf32>
    %418 = arith.mulf %413, %417 : vector<8x256xf32>
    %c0_200 = arith.constant 0 : index
    %c0_201 = arith.constant 0 : index
    %c0_202 = arith.constant 0 : index
    %419 = vector.load %arg19[%c0_200, %c0_201, %c0_202] : memref<2x8x256xf32, #tpu.memory_space<vmem>>, vector<1x8x256xf32>
    %420 = vector.shape_cast %419 : vector<1x8x256xf32> to vector<8x256xf32>
    %421 = vector.shape_cast %418 : vector<8x256xf32> to vector<1x8x256xf32>
    tpu.vector_store %arg19[%c0_200, %c0_201, %c0_202], %421 {strides = array<i32>} : memref<2x8x256xf32, #tpu.memory_space<vmem>>, vector<1x8x256xf32>,
    %422 = vector.extract_strided_slice %407 {offsets = [0, 64], sizes = [8, 64], strides = [1, 1]} : vector<8x128xf32> to vector<8x64xf32>
    %c0_203 = arith.constant 0 : index
    %c0_204 = arith.constant 0 : index
    %423 = vector.load %arg17[%c0_203, %c0_204] : memref<64x256xf32, #tpu.memory_space<vmem>>, vector<64x256xf32>
    %cst_205 = arith.constant dense<0.000000e+00> : vector<8x256xf32>
    %424 = tpu.matmul %422, %423, %cst_205 {dimension_numbers = #tpu.dot_dimension_numbers<[1], [0], [0], [1], [0, 0, 1, 1], [], []>} : vector<8x64xf32>, vector<64x256xf32>, vector<8x256xf32> -> vector<8x256xf32>
    %c1_206 = arith.constant 1 : index
    %c0_207 = arith.constant 0 : index
    %c0_208 = arith.constant 0 : index
    %425 = vector.load %arg1[%c1_206, %c0_207, %c0_208] : memref<2x8x256xf32, #tpu.memory_space<vmem>>, vector<1x8x256xf32>
    %426 = vector.shape_cast %425 : vector<1x8x256xf32> to vector<8x256xf32>
    %427 = vector.broadcast %408 : vector<1x1xf32> to vector<8x256xf32>
    %428 = arith.mulf %427, %424 : vector<8x256xf32>
    %cst_209 = arith.constant 1.000000e+00 : f32
    %429 = vector.broadcast %cst_209 : f32 to vector<8x256xf32>
    %430 = arith.addf %429, %428 : vector<8x256xf32>
    %431 = arith.mulf %426, %430 : vector<8x256xf32>
    %c1_210 = arith.constant 1 : index
    %c0_211 = arith.constant 0 : index
    %c0_212 = arith.constant 0 : index
    %432 = vector.load %arg19[%c1_210, %c0_211, %c0_212] : memref<2x8x256xf32, #tpu.memory_space<vmem>>, vector<1x8x256xf32>
    %433 = vector.shape_cast %432 : vector<1x8x256xf32> to vector<8x256xf32>
    %434 = vector.shape_cast %431 : vector<8x256xf32> to vector<1x8x256xf32>
    tpu.vector_store %arg19[%c1_210, %c0_211, %c0_212], %434 {strides = array<i32>} : memref<2x8x256xf32, #tpu.memory_space<vmem>>, vector<1x8x256xf32>,
    return
  }
}

</mosaic_0001>

<llo_original>
// kernel: forward.1
$region0: #{forward.1}
  #allocation0 [shape = 'u32[]', space=smem, size = 0x4, offset = 0x4, fixed_abs, tag = 'smem constant byte address 0x4 - core index']
  #allocation1 [shape = 'u32[144,128]{1,0:T(1,128)}', space=vmem, size = 0x12000, scoped, tag = 'internal scratch']
  #allocation2 [shape = 'f32[1,1]{1,0:T(1,128)S(1)}', space=vmem, size = 0x200, scoped, tag = 'scoped memory for forward.1']
  %s0 = inlined_call_operand.vmem [shape: f32[32,128], index: 0, kind: input, shape index: {}]
  %s1 = inlined_call_operand.vmem [shape: f32[2,8,256], index: 1, kind: input, shape index: {}]
  %s2 = inlined_call_operand.vmem [shape: f32[8,32], index: 2, kind: input, shape index: {}]
  %s3 = inlined_call_operand.vmem [shape: f32[3,24,8], index: 3, kind: input, shape index: {}]
  %s4 = inlined_call_operand.vmem [shape: f32[3,24,1], index: 4, kind: input, shape index: {}]
  %s5 = inlined_call_operand.vmem [shape: f32[3,8,8], index: 5, kind: input, shape index: {}]
  %s6 = inlined_call_operand.vmem [shape: f32[3,8,1], index: 6, kind: input, shape index: {}]
  %s7 = inlined_call_operand.vmem [shape: f32[3,8,1], index: 7, kind: input, shape index: {}]
  %s8 = inlined_call_operand.vmem [shape: f32[3,8,1], index: 8, kind: input, shape index: {}]
  %s9 = inlined_call_operand.vmem [shape: f32[3,64,8], index: 9, kind: input, shape index: {}]
  %s10 = inlined_call_operand.vmem [shape: f32[3,64,1], index: 10, kind: input, shape index: {}]
  %s11 = inlined_call_operand.vmem [shape: f32[3,8,64], index: 11, kind: input, shape index: {}]
  %s12 = inlined_call_operand.vmem [shape: f32[3,8,1], index: 12, kind: input, shape index: {}]
  %s13 = inlined_call_operand.vmem [shape: f32[3,8,1], index: 13, kind: input, shape index: {}]
  %s14 = inlined_call_operand.vmem [shape: f32[3,8,1], index: 14, kind: input, shape index: {}]
  %s15 = inlined_call_operand.vmem [shape: f32[8,8], index: 15, kind: input, shape index: {}]
  %s16 = inlined_call_operand.vmem [shape: f32[8,1], index: 16, kind: input, shape index: {}]
  %s17 = inlined_call_operand.vmem [shape: f32[64,256], index: 17, kind: input, shape index: {}]
  %s18 = inlined_call_operand.<no memory space> [shape: f32[1,1], index: 18, kind: input, shape index: {}]
  %s19 = inlined_call_operand.vmem [shape: f32[2,8,256], index: 19, kind: output, shape index: {}]
  %s20 = sld [smem:[#allocation0]]
  $region86: #{forward.1} parent=0
    _
  %s22 = ssub.s32 1, %s20
  %s23 = scalar_select 0, %s22, %s20
  %v24 = vstv %s18
  %25 = vst [vmem:[#allocation2] sm:$0x1] %v24
  // Predicated region
  $region2: #{forward.1} parent=0 // pred_check
    _
  $region3: #{forward.1} parent=0 // pred_check_branch
    %27 = sbr.rel (0) target = $region5
  $region4: #{forward.1} parent=0 // pred_region
    _
  $region5: #{forward.1} parent=0 // pred_fallthru
    _
  // Predicated region
  $region6: #{forward.1} parent=0 // pred_check
    _
  $region7: #{forward.1} parent=0 // pred_check_branch
    %29 = sbr.rel (0) target = $region9
  $region8: #{forward.1} parent=0 // pred_region
    _
  $region9: #{forward.1} parent=0 // pred_fallthru
    _
  // Predicated region
  $region10: #{forward.1} parent=0 // pred_check
    _
  $region11: #{forward.1} parent=0 // pred_check_branch
    %31 = sbr.rel (0) target = $region13
  $region12: #{forward.1} parent=0 // pred_region
    _
  $region13: #{forward.1} parent=0 // pred_fallthru
    _
  // Predicated region
  $region14: #{forward.1} parent=0 // pred_check
    _
  $region15: #{forward.1} parent=0 // pred_check_branch
    %33 = sbr.rel (0) target = $region17
  $region16: #{forward.1} parent=0 // pred_region
    _
  $region17: #{forward.1} parent=0 // pred_fallthru
    _
  // Predicated region
  $region18: #{forward.1} parent=0 // pred_check
    _
  $region19: #{forward.1} parent=0 // pred_check_branch
    %35 = sbr.rel (0) target = $region21
  $region20: #{forward.1} parent=0 // pred_region
    _
  $region21: #{forward.1} parent=0 // pred_fallthru
    _
  // Predicated region
  $region22: #{forward.1} parent=0 // pred_check
    _
  $region23: #{forward.1} parent=0 // pred_check_branch
    %37 = sbr.rel (0) target = $region25
  $region24: #{forward.1} parent=0 // pred_region
    _
  $region25: #{forward.1} parent=0 // pred_fallthru
    _
  // Predicated region
  $region26: #{forward.1} parent=0 // pred_check
    _
  $region27: #{forward.1} parent=0 // pred_check_branch
    %39 = sbr.rel (0) target = $region29
  $region28: #{forward.1} parent=0 // pred_region
    _
  $region29: #{forward.1} parent=0 // pred_fallthru
    _
  // Predicated region
  $region30: #{forward.1} parent=0 // pred_check
    _
  $region31: #{forward.1} parent=0 // pred_check_branch
    %41 = sbr.rel (0) target = $region33
  $region32: #{forward.1} parent=0 // pred_region
    _
  $region33: #{forward.1} parent=0 // pred_fallthru
    _
  // Predicated region
  $region34: #{forward.1} parent=0 // pred_check
    _
  $region35: #{forward.1} parent=0 // pred_check_branch
    %43 = sbr.rel (0) target = $region37
  $region36: #{forward.1} parent=0 // pred_region
    _
  $region37: #{forward.1} parent=0 // pred_fallthru
    _
  // Predicated region
  $region38: #{forward.1} parent=0 // pred_check
    _
  $region39: #{forward.1} parent=0 // pred_check_branch
    %45 = sbr.rel (0) target = $region41
  $region40: #{forward.1} parent=0 // pred_region
    _
  $region41: #{forward.1} parent=0 // pred_fallthru
    _
  // Predicated region
  $region42: #{forward.1} parent=0 // pred_check
    _
  $region43: #{forward.1} parent=0 // pred_check_branch
    %47 = sbr.rel (0) target = $region45
  $region44: #{forward.1} parent=0 // pred_region
    _
  $region45: #{forward.1} parent=0 // pred_fallthru
    _
  // Predicated region
  $region46: #{forward.1} parent=0 // pred_check
    _
  $region47: #{forward.1} parent=0 // pred_check_branch
    %49 = sbr.rel (0) target = $region49
  $region48: #{forward.1} parent=0 // pred_region
    _
  $region49: #{forward.1} parent=0 // pred_fallthru
    _
  // Predicated region
  $region50: #{forward.1} parent=0 // pred_check
    _
  $region51: #{forward.1} parent=0 // pred_check_branch
    %51 = sbr.rel (0) target = $region53
  $region52: #{forward.1} parent=0 // pred_region
    _
  $region53: #{forward.1} parent=0 // pred_fallthru
    _
  // Predicated region
  $region54: #{forward.1} parent=0 // pred_check
    _
  $region55: #{forward.1} parent=0 // pred_check_branch
    %53 = sbr.rel (0) target = $region57
  $region56: #{forward.1} parent=0 // pred_region
    _
  $region57: #{forward.1} parent=0 // pred_fallthru
    _
  // Predicated region
  $region58: #{forward.1} parent=0 // pred_check
    _
  $region59: #{forward.1} parent=0 // pred_check_branch
    %55 = sbr.rel (0) target = $region61
  $region60: #{forward.1} parent=0 // pred_region
    _
  $region61: #{forward.1} parent=0 // pred_fallthru
    _
  // Predicated region
  $region62: #{forward.1} parent=0 // pred_check
    _
  $region63: #{forward.1} parent=0 // pred_check_branch
    %57 = sbr.rel (0) target = $region65
  $region64: #{forward.1} parent=0 // pred_region
    _
  $region65: #{forward.1} parent=0 // pred_fallthru
    _
  // Predicated region
  $region66: #{forward.1} parent=0 // pred_check
    _
  $region67: #{forward.1} parent=0 // pred_check_branch
    %59 = sbr.rel (0) target = $region69
  $region68: #{forward.1} parent=0 // pred_region
    _
  $region69: #{forward.1} parent=0 // pred_fallthru
    _
  // Predicated region
  $region70: #{forward.1} parent=0 // pred_check
    _
  $region71: #{forward.1} parent=0 // pred_check_branch
    %61 = sbr.rel (0) target = $region73
  $region72: #{forward.1} parent=0 // pred_region
    _
  $region73: #{forward.1} parent=0 // pred_fallthru
    _
  // Predicated region
  $region74: #{forward.1} parent=0 // pred_check
    _
  $region75: #{forward.1} parent=0 // pred_check_branch
    %63 = sbr.rel (0) target = $region77
  $region76: #{forward.1} parent=0 // pred_region
    _
  $region77: #{forward.1} parent=0 // pred_fallthru
    _
  %v64 = vld [vmem:[%s2] sm:$0xff]
  %v65 = vld [vmem:[%s0] sm:$0xff]
  %v66 = vld [vmem:[%s0 + $0x8] sm:$0xff]
  %v67 = vld [vmem:[%s0 + $0x10] sm:$0xff]
  %v68 = vld [vmem:[%s0 + $0x18] sm:$0xff]
  %vm69 = vcmask 261120
  %v71 = vsel %vm69, %v64, 0
  %73 = vmatprep.subr.mxu0 0.0
  %74 = vmatpush1.msra.mxu0 %v65
  %75 = vmatprep.subr.mxu0 0.0
  %76 = vmatpush1.msra.mxu0 %v66
  %77 = vmatprep.subr.mxu0 0.0
  %78 = vmatpush1.msra.mxu0 %v67
  %79 = vmatprep.subr.mxu0 0.0
  %80 = vmatpush1.msra.mxu0 %v68
  %81 = vmatprep.subr.mxu0 0.0
  %82 = vmatpush1.msra.mxu0 0.0
  %83 = vmatprep.subr.mxu0 0.0
  %84 = vmatpush1.msra.mxu0 0.0
  %85 = vmatprep.subr.mxu0 0.0
  %86 = vmatpush1.msra.mxu0 0.0
  %87 = vmatprep.subr.mxu0 0.0
  %88 = vmatpush1.msra.mxu0 0.0
  %89 = vmatprep.subr.mxu0 0.0
  %90 = vmatpush1.msra.mxu0 0.0
  %91 = vmatprep.subr.mxu0 0.0
  %92 = vmatpush1.msra.mxu0 0.0
  %93 = vmatprep.subr.mxu0 0.0
  %94 = vmatpush1.msra.mxu0 0.0
  %95 = vmatprep.subr.mxu0 0.0
  %96 = vmatpush1.msra.mxu0 0.0
  %97 = vmatprep.subr.mxu0 0.0
  %98 = vmatpush1.msra.mxu0 0.0
  %99 = vmatprep.subr.mxu0 0.0
  %100 = vmatpush1.msra.mxu0 0.0
  %101 = vmatprep.subr.mxu0 0.0
  %102 = vmatpush1.msra.mxu0 0.0
  %103 = vmatprep.subr.mxu0 0.0
  %104 = vmatpush1.msra.mxu0 0.0
  %105 = vmatprep.subr.mxu0 0.0
  %106 = vmatpush1.msra.mxu0 0.0
  %107 = vmatprep.subr.mxu0 0.0
  %108 = vmatpush1.msra.mxu0 0.0
  %109 = vmatprep.subr.mxu0 0.0
  %110 = vmatpush1.msra.mxu0 0.0
  %111 = vmatprep.subr.mxu0 0.0
  %112 = vmatpush1.msra.mxu0 0.0
  %113 = vmatprep.subr.mxu0 0.0
  %114 = vmatpush1.msra.mxu0 0.0
  %115 = vmatprep.subr.mxu0 0.0
  %116 = vmatpush1.msra.mxu0 0.0
  %117 = vmatprep.subr.mxu0 0.0
  %118 = vmatpush1.msra.mxu0 0.0
  %119 = vmatprep.subr.mxu0 0.0
  %120 = vmatpush1.msra.mxu0 0.0
  %121 = vmatprep.subr.mxu0 0.0
  %122 = vmatpush1.msra.mxu0 0.0
  %123 = vmatprep.subr.mxu0 0.0
  %124 = vmatpush1.msra.mxu0 0.0
  %125 = vmatprep.subr.mxu0 0.0
  %126 = vmatpush1.msra.mxu0 0.0
  %127 = vmatprep.subr.mxu0 0.0
  %128 = vmatpush1.msra.mxu0 0.0
  %129 = vmatprep.subr.mxu0 0.0
  %130 = vmatpush1.msra.mxu0 0.0
  %131 = vmatprep.subr.mxu0 0.0
  %132 = vmatpush1.msra.mxu0 0.0
  %133 = vmatprep.subr.mxu0 0.0
  %134 = vmatpush1.msra.mxu0 0.0
  %135 = vmatprep.subr.mxu0 0.0
  %136 = vmatpush1.msra.mxu0 0.0
  %137 = vmatprep.mubr.f32.mxu0 0.0
  %138 = vmatmul.mubr.f32.gmra.mrb[0].mxu0 %v71
  %v139 = vpop.f32.mrb[0].mxu0
  %v140 = vadd.f32 0.0, %v139
  %v141 = vpop.f32.mrb[0].mxu0
  %142 = vdwg.mxu0
  %v143 = vld [vmem:[%s3] sm:$0xff]
  %v144 = vld [vmem:[%s3 + $0x8] sm:$0xff]
  %v145 = vld [vmem:[%s3 + $0x10] sm:$0xff]
  %v146 = vld [vmem:[%s4] sm:$0xff]
  %v147 = vld [vmem:[%s4 + $0x8] sm:$0xff]
  %v148 = vld [vmem:[%s4 + $0x10] sm:$0xff]
  %150 = vset.pattern.permute.xlu0 0
  %151 = vperm.xlu0 %150, %v146
  %v152 = vpop.permute.xlu0 %151
  %155 = vset.pattern.permute.xlu0 0
  %156 = vperm.xlu0 %155, %v147
  %v157 = vpop.permute.xlu0 %156
  %160 = vset.pattern.permute.xlu0 0
  %161 = vperm.xlu0 %160, %v148
  %v162 = vpop.permute.xlu0 %161
  %vm164 = vcmask 64512
  %v166 = vsel %vm164, %v143, 0
  %v169 = vsel %vm164, %v144, 0
  %v172 = vsel %vm164, %v145, 0
  %174 = vmatprep.subr.mxu0 0.0
  %175 = vmatpush1.msra.mxu0 %v140
  %176 = vmatprep.subr.mxu0 0.0
  %177 = vmatpush1.msra.mxu0 0.0
  %178 = vmatprep.subr.mxu0 0.0
  %179 = vmatpush1.msra.mxu0 0.0
  %180 = vmatprep.subr.mxu0 0.0
  %181 = vmatpush1.msra.mxu0 0.0
  %182 = vmatprep.subr.mxu0 0.0
  %183 = vmatpush1.msra.mxu0 0.0
  %184 = vmatprep.subr.mxu0 0.0
  %185 = vmatpush1.msra.mxu0 0.0
  %186 = vmatprep.subr.mxu0 0.0
  %187 = vmatpush1.msra.mxu0 0.0
  %188 = vmatprep.subr.mxu0 0.0
  %189 = vmatpush1.msra.mxu0 0.0
  %190 = vmatprep.subr.mxu0 0.0
  %191 = vmatpush1.msra.mxu0 0.0
  %192 = vmatprep.subr.mxu0 0.0
  %193 = vmatpush1.msra.mxu0 0.0
  %194 = vmatprep.subr.mxu0 0.0
  %195 = vmatpush1.msra.mxu0 0.0
  %196 = vmatprep.subr.mxu0 0.0
  %197 = vmatpush1.msra.mxu0 0.0
  %198 = vmatprep.subr.mxu0 0.0
  %199 = vmatpush1.msra.mxu0 0.0
  %200 = vmatprep.subr.mxu0 0.0
  %201 = vmatpush1.msra.mxu0 0.0
  %202 = vmatprep.subr.mxu0 0.0
  %203 = vmatpush1.msra.mxu0 0.0
  %204 = vmatprep.subr.mxu0 0.0
  %205 = vmatpush1.msra.mxu0 0.0
  %206 = vmatprep.subr.mxu0 0.0
  %207 = vmatpush1.msra.mxu0 0.0
  %208 = vmatprep.subr.mxu0 0.0
  %209 = vmatpush1.msra.mxu0 0.0
  %210 = vmatprep.subr.mxu0 0.0
  %211 = vmatpush1.msra.mxu0 0.0
  %212 = vmatprep.subr.mxu0 0.0
  %213 = vmatpush1.msra.mxu0 0.0
  %214 = vmatprep.subr.mxu0 0.0
  %215 = vmatpush1.msra.mxu0 0.0
  %216 = vmatprep.subr.mxu0 0.0
  %217 = vmatpush1.msra.mxu0 0.0
  %218 = vmatprep.subr.mxu0 0.0
  %219 = vmatpush1.msra.mxu0 0.0
  %220 = vmatprep.subr.mxu0 0.0
  %221 = vmatpush1.msra.mxu0 0.0
  %222 = vmatprep.subr.mxu0 0.0
  %223 = vmatpush1.msra.mxu0 0.0
  %224 = vmatprep.subr.mxu0 0.0
  %225 = vmatpush1.msra.mxu0 0.0
  %226 = vmatprep.subr.mxu0 0.0
  %227 = vmatpush1.msra.mxu0 0.0
  %228 = vmatprep.subr.mxu0 0.0
  %229 = vmatpush1.msra.mxu0 0.0
  %230 = vmatprep.subr.mxu0 0.0
  %231 = vmatpush1.msra.mxu0 0.0
  %232 = vmatprep.subr.mxu0 0.0
  %233 = vmatpush1.msra.mxu0 0.0
  %234 = vmatprep.subr.mxu0 0.0
  %235 = vmatpush1.msra.mxu0 0.0
  %236 = vmatprep.subr.mxu0 0.0
  %237 = vmatpush1.msra.mxu0 0.0
  %238 = vmatprep.mubr.f32.mxu0 0.0
  %239 = vmatmul.mubr.f32.gmra.mrb[0].mxu0 %v166
  %v240 = vpop.f32.mrb[0].mxu0
  %v241 = vadd.f32 %v152, %v240
  %v242 = vpop.f32.mrb[0].mxu0
  %243 = vmatprep.mubr.f32.mxu0 0.0
  %244 = vmatmul.mubr.f32.gmra.mrb[0].mxu0 %v169
  %v245 = vpop.f32.mrb[0].mxu0
  %v246 = vadd.f32 %v157, %v245
  %v247 = vpop.f32.mrb[0].mxu0
  %248 = vmatprep.mubr.f32.mxu0 0.0
  %249 = vmatmul.mubr.f32.gmra.mrb[0].mxu0 %v172
  %v250 = vpop.f32.mrb[0].mxu0
  %v251 = vadd.f32 %v162, %v250
  %v252 = vpop.f32.mrb[0].mxu0
  %253 = vdwg.mxu0
  %v255 = vcombine.high %v241, %v241
  %v257 = vunpack.c.l.s4 1983009808
  %v258 = vunpack.c.0.s8 %v257
  %v259 = vlaneseq
  %v260 = vshrl.u32 %v259, 7
  %v261 = vsub.s32 %v258, %v260
  %v262 = vrot.slane %v241, %v261
  %v264 = vunpack.c.l.s4 1983009808
  %v265 = vunpack.c.0.s8 %v264
  %v266 = vlaneseq
  %v267 = vshrl.u32 %v266, 7
  %v268 = vsub.s32 %v265, %v267
  %v269 = vrot.slane %v255, %v268
  %v270 = vcombine.high %v262, %v262
  %v271 = vcombine.high %v269, %v269
  %v277 = vcombine.high %v246, %v246
  %v279 = vunpack.c.l.s4 1983009808
  %v280 = vunpack.c.0.s8 %v279
  %v281 = vlaneseq
  %v282 = vshrl.u32 %v281, 7
  %v283 = vsub.s32 %v280, %v282
  %v284 = vrot.slane %v246, %v283
  %v286 = vunpack.c.l.s4 1983009808
  %v287 = vunpack.c.0.s8 %v286
  %v288 = vlaneseq
  %v289 = vshrl.u32 %v288, 7
  %v290 = vsub.s32 %v287, %v289
  %v291 = vrot.slane %v277, %v290
  %v292 = vcombine.high %v284, %v284
  %v293 = vcombine.high %v291, %v291
  %v295 = vcombine.high %v251, %v251
  %v297 = vunpack.c.l.s4 1983009808
  %v298 = vunpack.c.0.s8 %v297
  %v299 = vlaneseq
  %v300 = vshrl.u32 %v299, 7
  %v301 = vsub.s32 %v298, %v300
  %v302 = vrot.slane %v251, %v301
  %v304 = vunpack.c.l.s4 1983009808
  %v305 = vunpack.c.0.s8 %v304
  %v306 = vlaneseq
  %v307 = vshrl.u32 %v306, 7
  %v308 = vsub.s32 %v305, %v307
  %v309 = vrot.slane %v295, %v308
  %v310 = vcombine.high %v302, %v302
  %v311 = vcombine.high %v309, %v309
  %312 = vxpose.xlu0.b32.start [1/16] %v262, 128
  %313 = vxpose.xlu0.b32.cont [2/16] 0.0, 128
  %314 = vxpose.xlu0.b32.cont [3/16] 0.0, 128
  %315 = vxpose.xlu0.b32.cont [4/16] 0.0, 128
  %316 = vxpose.xlu0.b32.cont [5/16] 0.0, 128
  %317 = vxpose.xlu0.b32.cont [6/16] 0.0, 128
  %318 = vxpose.xlu0.b32.cont [7/16] 0.0, 128
  %319 = vxpose.xlu0.b32.cont [8/16] 0.0, 128
  %320 = vxpose.xlu0.b32.cont [9/16] 0.0, 128
  %321 = vxpose.xlu0.b32.cont [10/16] 0.0, 128
  %322 = vxpose.xlu0.b32.cont [11/16] 0.0, 128
  %323 = vxpose.xlu0.b32.cont [12/16] 0.0, 128
  %324 = vxpose.xlu0.b32.cont [13/16] 0.0, 128
  %325 = vxpose.xlu0.b32.cont [14/16] 0.0, 128
  %326 = vxpose.xlu0.b32.cont [15/16] 0.0, 128
  %327 = vxpose.xlu0.b32.end [16/16] 0.0, 128
  %v328 = vpop.trf.xlu0
  %v329 = vpop.trf.xlu0
  %v330 = vpop.trf.xlu0
  %v331 = vpop.trf.xlu0
  %v332 = vpop.trf.xlu0
  %v333 = vpop.trf.xlu0
  %v334 = vpop.trf.xlu0
  %v335 = vpop.trf.xlu0
  %v336 = vpop.trf.xlu0
  %v337 = vpop.trf.xlu0
  %v338 = vpop.trf.xlu0
  %v339 = vpop.trf.xlu0
  %v340 = vpop.trf.xlu0
  %v341 = vpop.trf.xlu0
  %v342 = vpop.trf.xlu0
  %v343 = vpop.trf.xlu0
  %vm344 = vcmask 15360
  %v346 = vsel %vm344, %v328, 0
  %v349 = vsel %vm344, %v329, 0
  %v352 = vsel %vm344, %v330, 0
  %v355 = vsel %vm344, %v331, 0
  %v358 = vsel %vm344, %v332, 0
  %v361 = vsel %vm344, %v333, 0
  %v364 = vsel %vm344, %v334, 0
  %v367 = vsel %vm344, %v335, 0
  %vm369 = vcmask 1041408
  %v370 = vsel %vm369, %v284, 0
  %372 = vmatprep.subr.mxu0 0.0
  %373 = vmatpush1.msra.mxu0 %v370
  %374 = vmatprep.subr.mxu0 0.0
  %375 = vmatpush1.msra.mxu0 0.0
  %376 = vmatprep.subr.mxu0 0.0
  %377 = vmatpush1.msra.mxu0 0.0
  %378 = vmatprep.subr.mxu0 0.0
  %379 = vmatpush1.msra.mxu0 0.0
  %380 = vmatprep.subr.mxu0 0.0
  %381 = vmatpush1.msra.mxu0 0.0
  %382 = vmatprep.subr.mxu0 0.0
  %383 = vmatpush1.msra.mxu0 0.0
  %384 = vmatprep.subr.mxu0 0.0
  %385 = vmatpush1.msra.mxu0 0.0
  %386 = vmatprep.subr.mxu0 0.0
  %387 = vmatpush1.msra.mxu0 0.0
  %388 = vmatprep.subr.mxu0 0.0
  %389 = vmatpush1.msra.mxu0 0.0
  %390 = vmatprep.subr.mxu0 0.0
  %391 = vmatpush1.msra.mxu0 0.0
  %392 = vmatprep.subr.mxu0 0.0
  %393 = vmatpush1.msra.mxu0 0.0
  %394 = vmatprep.subr.mxu0 0.0
  %395 = vmatpush1.msra.mxu0 0.0
  %396 = vmatprep.subr.mxu0 0.0
  %397 = vmatpush1.msra.mxu0 0.0
  %398 = vmatprep.subr.mxu0 0.0
  %399 = vmatpush1.msra.mxu0 0.0
  %400 = vmatprep.subr.mxu0 0.0
  %401 = vmatpush1.msra.mxu0 0.0
  %402 = vmatprep.subr.mxu0 0.0
  %403 = vmatpush1.msra.mxu0 0.0
  %404 = vmatprep.subr.mxu0 0.0
  %405 = vmatpush1.msra.mxu0 0.0
  %406 = vmatprep.subr.mxu0 0.0
  %407 = vmatpush1.msra.mxu0 0.0
  %408 = vmatprep.subr.mxu0 0.0
  %409 = vmatpush1.msra.mxu0 0.0
  %410 = vmatprep.subr.mxu0 0.0
  %411 = vmatpush1.msra.mxu0 0.0
  %412 = vmatprep.subr.mxu0 0.0
  %413 = vmatpush1.msra.mxu0 0.0
  %414 = vmatprep.subr.mxu0 0.0
  %415 = vmatpush1.msra.mxu0 0.0
  %416 = vmatprep.subr.mxu0 0.0
  %417 = vmatpush1.msra.mxu0 0.0
  %418 = vmatprep.subr.mxu0 0.0
  %419 = vmatpush1.msra.mxu0 0.0
  %420 = vmatprep.subr.mxu0 0.0
  %421 = vmatpush1.msra.mxu0 0.0
  %422 = vmatprep.subr.mxu0 0.0
  %423 = vmatpush1.msra.mxu0 0.0
  %424 = vmatprep.subr.mxu0 0.0
  %425 = vmatpush1.msra.mxu0 0.0
  %426 = vmatprep.subr.mxu0 0.0
  %427 = vmatpush1.msra.mxu0 0.0
  %428 = vmatprep.subr.mxu0 0.0
  %429 = vmatpush1.msra.mxu0 0.0
  %430 = vmatprep.subr.mxu0 0.0
  %431 = vmatpush1.msra.mxu0 0.0
  %432 = vmatprep.subr.mxu0 0.0
  %433 = vmatpush1.msra.mxu0 0.0
  %434 = vmatprep.subr.mxu0 0.0
  %435 = vmatpush1.msra.mxu0 0.0
  %436 = vmatprep.mubr.f32.mxu0 0.0
  %437 = vmatmul.mubr.f32.gmra.mrb[0].mxu0 %v346
  %v438 = vpop.f32.mrb[0].mxu0
  %v439 = vadd.f32 0.0, %v438
  %v440 = vpop.f32.mrb[0].mxu0
  %441 = vmatprep.mubr.f32.mxu0 0.0
  %442 = vmatmul.mubr.f32.gmra.mrb[0].mxu0 %v349
  %v443 = vpop.f32.mrb[0].mxu0
  %v444 = vadd.f32 0.0, %v443
  %v445 = vpop.f32.mrb[0].mxu0
  %446 = vmatprep.mubr.f32.mxu0 0.0
  %447 = vmatmul.mubr.f32.gmra.mrb[0].mxu0 %v352
  %v448 = vpop.f32.mrb[0].mxu0
  %v449 = vadd.f32 0.0, %v448
  %v450 = vpop.f32.mrb[0].mxu0
  %451 = vmatprep.mubr.f32.mxu0 0.0
  %452 = vmatmul.mubr.f32.gmra.mrb[0].mxu0 %v355
  %v453 = vpop.f32.mrb[0].mxu0
  %v454 = vadd.f32 0.0, %v453
  %v455 = vpop.f32.mrb[0].mxu0
  %456 = vmatprep.mubr.f32.mxu0 0.0
  %457 = vmatmul.mubr.f32.gmra.mrb[0].mxu0 %v358
  %v458 = vpop.f32.mrb[0].mxu0
  %v459 = vadd.f32 0.0, %v458
  %v460 = vpop.f32.mrb[0].mxu0
  %461 = vmatprep.mubr.f32.mxu0 0.0
  %462 = vmatmul.mubr.f32.gmra.mrb[0].mxu0 %v361
  %v463 = vpop.f32.mrb[0].mxu0
  %v464 = vadd.f32 0.0, %v463
  %v465 = vpop.f32.mrb[0].mxu0
  %466 = vmatprep.mubr.f32.mxu0 0.0
  %467 = vmatmul.mubr.f32.gmra.mrb[0].mxu0 %v364
  %v468 = vpop.f32.mrb[0].mxu0
  %v469 = vadd.f32 0.0, %v468
  %v470 = vpop.f32.mrb[0].mxu0
  %471 = vmatprep.mubr.f32.mxu0 0.0
  %472 = vmatmul.mubr.f32.gmra.mrb[0].mxu0 %v367
  %v473 = vpop.f32.mrb[0].mxu0
  %v474 = vadd.f32 0.0, %v473
  %v475 = vpop.f32.mrb[0].mxu0
  %476 = vdwg.mxu0
  %477 = vxpose.xlu0.b32.start [1/16] %v270, 128
  %478 = vxpose.xlu0.b32.cont [2/16] 0.0, 128
  %479 = vxpose.xlu0.b32.cont [3/16] 0.0, 128
  %480 = vxpose.xlu0.b32.cont [4/16] 0.0, 128
  %481 = vxpose.xlu0.b32.cont [5/16] 0.0, 128
  %482 = vxpose.xlu0.b32.cont [6/16] 0.0, 128
  %483 = vxpose.xlu0.b32.cont [7/16] 0.0, 128
  %484 = vxpose.xlu0.b32.cont [8/16] 0.0, 128
  %485 = vxpose.xlu0.b32.cont [9/16] 0.0, 128
  %486 = vxpose.xlu0.b32.cont [10/16] 0.0, 128
  %487 = vxpose.xlu0.b32.cont [11/16] 0.0, 128
  %488 = vxpose.xlu0.b32.cont [12/16] 0.0, 128
  %489 = vxpose.xlu0.b32.cont [13/16] 0.0, 128
  %490 = vxpose.xlu0.b32.cont [14/16] 0.0, 128
  %491 = vxpose.xlu0.b32.cont [15/16] 0.0, 128
  %492 = vxpose.xlu0.b32.end [16/16] 0.0, 128
  %v493 = vpop.trf.xlu0
  %v494 = vpop.trf.xlu0
  %v495 = vpop.trf.xlu0
  %v496 = vpop.trf.xlu0
  %v497 = vpop.trf.xlu0
  %v498 = vpop.trf.xlu0
  %v499 = vpop.trf.xlu0
  %v500 = vpop.trf.xlu0
  %v501 = vpop.trf.xlu0
  %v502 = vpop.trf.xlu0
  %v503 = vpop.trf.xlu0
  %v504 = vpop.trf.xlu0
  %v505 = vpop.trf.xlu0
  %v506 = vpop.trf.xlu0
  %v507 = vpop.trf.xlu0
  %v508 = vpop.trf.xlu0
  %v510 = vsel %vm344, %v493, 0
  %v513 = vsel %vm344, %v494, 0
  %v516 = vsel %vm344, %v495, 0
  %v519 = vsel %vm344, %v496, 0
  %v522 = vsel %vm344, %v497, 0
  %v525 = vsel %vm344, %v498, 0
  %v528 = vsel %vm344, %v499, 0
  %v531 = vsel %vm344, %v500, 0
  %v533 = vsel %vm369, %v292, 0
  %535 = vmatprep.subr.mxu0 0.0
  %536 = vmatpush1.msra.mxu0 %v533
  %537 = vmatprep.subr.mxu0 0.0
  %538 = vmatpush1.msra.mxu0 0.0
  %539 = vmatprep.subr.mxu0 0.0
  %540 = vmatpush1.msra.mxu0 0.0
  %541 = vmatprep.subr.mxu0 0.0
  %542 = vmatpush1.msra.mxu0 0.0
  %543 = vmatprep.subr.mxu0 0.0
  %544 = vmatpush1.msra.mxu0 0.0
  %545 = vmatprep.subr.mxu0 0.0
  %546 = vmatpush1.msra.mxu0 0.0
  %547 = vmatprep.subr.mxu0 0.0
  %548 = vmatpush1.msra.mxu0 0.0
  %549 = vmatprep.subr.mxu0 0.0
  %550 = vmatpush1.msra.mxu0 0.0
  %551 = vmatprep.subr.mxu0 0.0
  %552 = vmatpush1.msra.mxu0 0.0
  %553 = vmatprep.subr.mxu0 0.0
  %554 = vmatpush1.msra.mxu0 0.0
  %555 = vmatprep.subr.mxu0 0.0
  %556 = vmatpush1.msra.mxu0 0.0
  %557 = vmatprep.subr.mxu0 0.0
  %558 = vmatpush1.msra.mxu0 0.0
  %559 = vmatprep.subr.mxu0 0.0
  %560 = vmatpush1.msra.mxu0 0.0
  %561 = vmatprep.subr.mxu0 0.0
  %562 = vmatpush1.msra.mxu0 0.0
  %563 = vmatprep.subr.mxu0 0.0
  %564 = vmatpush1.msra.mxu0 0.0
  %565 = vmatprep.subr.mxu0 0.0
  %566 = vmatpush1.msra.mxu0 0.0
  %567 = vmatprep.subr.mxu0 0.0
  %568 = vmatpush1.msra.mxu0 0.0
  %569 = vmatprep.subr.mxu0 0.0
  %570 = vmatpush1.msra.mxu0 0.0
  %571 = vmatprep.subr.mxu0 0.0
  %572 = vmatpush1.msra.mxu0 0.0
  %573 = vmatprep.subr.mxu0 0.0
  %574 = vmatpush1.msra.mxu0 0.0
  %575 = vmatprep.subr.mxu0 0.0
  %576 = vmatpush1.msra.mxu0 0.0
  %577 = vmatprep.subr.mxu0 0.0
  %578 = vmatpush1.msra.mxu0 0.0
  %579 = vmatprep.subr.mxu0 0.0
  %580 = vmatpush1.msra.mxu0 0.0
  %581 = vmatprep.subr.mxu0 0.0
  %582 = vmatpush1.msra.mxu0 0.0
  %583 = vmatprep.subr.mxu0 0.0
  %584 = vmatpush1.msra.mxu0 0.0
  %585 = vmatprep.subr.mxu0 0.0
  %586 = vmatpush1.msra.mxu0 0.0
  %587 = vmatprep.subr.mxu0 0.0
  %588 = vmatpush1.msra.mxu0 0.0
  %589 = vmatprep.subr.mxu0 0.0
  %590 = vmatpush1.msra.mxu0 0.0
  %591 = vmatprep.subr.mxu0 0.0
  %592 = vmatpush1.msra.mxu0 0.0
  %593 = vmatprep.subr.mxu0 0.0
  %594 = vmatpush1.msra.mxu0 0.0
  %595 = vmatprep.subr.mxu0 0.0
  %596 = vmatpush1.msra.mxu0 0.0
  %597 = vmatprep.subr.mxu0 0.0
  %598 = vmatpush1.msra.mxu0 0.0
  %599 = vmatprep.mubr.f32.mxu0 0.0
  %600 = vmatmul.mubr.f32.gmra.mrb[0].mxu0 %v510
  %v601 = vpop.f32.mrb[0].mxu0
  %v602 = vadd.f32 0.0, %v601
  %v603 = vpop.f32.mrb[0].mxu0
  %604 = vmatprep.mubr.f32.mxu0 0.0
  %605 = vmatmul.mubr.f32.gmra.mrb[0].mxu0 %v513
  %v606 = vpop.f32.mrb[0].mxu0
  %v607 = vadd.f32 0.0, %v606
  %v608 = vpop.f32.mrb[0].mxu0
  %609 = vmatprep.mubr.f32.mxu0 0.0
  %610 = vmatmul.mubr.f32.gmra.mrb[0].mxu0 %v516
  %v611 = vpop.f32.mrb[0].mxu0
  %v612 = vadd.f32 0.0, %v611
  %v613 = vpop.f32.mrb[0].mxu0
  %614 = vmatprep.mubr.f32.mxu0 0.0
  %615 = vmatmul.mubr.f32.gmra.mrb[0].mxu0 %v519
  %v616 = vpop.f32.mrb[0].mxu0
  %v617 = vadd.f32 0.0, %v616
  %v618 = vpop.f32.mrb[0].mxu0
  %619 = vmatprep.mubr.f32.mxu0 0.0
  %620 = vmatmul.mubr.f32.gmra.mrb[0].mxu0 %v522
  %v621 = vpop.f32.mrb[0].mxu0
  %v622 = vadd.f32 0.0, %v621
  %v623 = vpop.f32.mrb[0].mxu0
  %624 = vmatprep.mubr.f32.mxu0 0.0
  %625 = vmatmul.mubr.f32.gmra.mrb[0].mxu0 %v525
  %v626 = vpop.f32.mrb[0].mxu0
  %v627 = vadd.f32 0.0, %v626
  %v628 = vpop.f32.mrb[0].mxu0
  %629 = vmatprep.mubr.f32.mxu0 0.0
  %630 = vmatmul.mubr.f32.gmra.mrb[0].mxu0 %v528
  %v631 = vpop.f32.mrb[0].mxu0
  %v632 = vadd.f32 0.0, %v631
  %v633 = vpop.f32.mrb[0].mxu0
  %634 = vmatprep.mubr.f32.mxu0 0.0
  %635 = vmatmul.mubr.f32.gmra.mrb[0].mxu0 %v531
  %v636 = vpop.f32.mrb[0].mxu0
  %v637 = vadd.f32 0.0, %v636
  %v638 = vpop.f32.mrb[0].mxu0
  %639 = vdwg.mxu0
  %640 = vxpose.xlu0.b32.start [1/16] %v269, 128
  %641 = vxpose.xlu0.b32.cont [2/16] 0.0, 128
  %642 = vxpose.xlu0.b32.cont [3/16] 0.0, 128
  %643 = vxpose.xlu0.b32.cont [4/16] 0.0, 128
  %644 = vxpose.xlu0.b32.cont [5/16] 0.0, 128
  %645 = vxpose.xlu0.b32.cont [6/16] 0.0, 128
  %646 = vxpose.xlu0.b32.cont [7/16] 0.0, 128
  %647 = vxpose.xlu0.b32.cont [8/16] 0.0, 128
  %648 = vxpose.xlu0.b32.cont [9/16] 0.0, 128
  %649 = vxpose.xlu0.b32.cont [10/16] 0.0, 128
  %650 = vxpose.xlu0.b32.cont [11/16] 0.0, 128
  %651 = vxpose.xlu0.b32.cont [12/16] 0.0, 128
  %652 = vxpose.xlu0.b32.cont [13/16] 0.0, 128
  %653 = vxpose.xlu0.b32.cont [14/16] 0.0, 128
  %654 = vxpose.xlu0.b32.cont [15/16] 0.0, 128
  %655 = vxpose.xlu0.b32.end [16/16] 0.0, 128
  %v656 = vpop.trf.xlu0
  %v657 = vpop.trf.xlu0
  %v658 = vpop.trf.xlu0
  %v659 = vpop.trf.xlu0
  %v660 = vpop.trf.xlu0
  %v661 = vpop.trf.xlu0
  %v662 = vpop.trf.xlu0
  %v663 = vpop.trf.xlu0
  %v664 = vpop.trf.xlu0
  %v665 = vpop.trf.xlu0
  %v666 = vpop.trf.xlu0
  %v667 = vpop.trf.xlu0
  %v668 = vpop.trf.xlu0
  %v669 = vpop.trf.xlu0
  %v670 = vpop.trf.xlu0
  %v671 = vpop.trf.xlu0
  %v673 = vsel %vm344, %v656, 0
  %v676 = vsel %vm344, %v657, 0
  %v679 = vsel %vm344, %v658, 0
  %v682 = vsel %vm344, %v659, 0
  %v685 = vsel %vm344, %v660, 0
  %v688 = vsel %vm344, %v661, 0
  %v691 = vsel %vm344, %v662, 0
  %v694 = vsel %vm344, %v663, 0
  %v696 = vsel %vm369, %v291, 0
  %698 = vmatprep.subr.mxu0 0.0
  %699 = vmatpush1.msra.mxu0 %v696
  %700 = vmatprep.subr.mxu0 0.0
  %701 = vmatpush1.msra.mxu0 0.0
  %702 = vmatprep.subr.mxu0 0.0
  %703 = vmatpush1.msra.mxu0 0.0
  %704 = vmatprep.subr.mxu0 0.0
  %705 = vmatpush1.msra.mxu0 0.0
  %706 = vmatprep.subr.mxu0 0.0
  %707 = vmatpush1.msra.mxu0 0.0
  %708 = vmatprep.subr.mxu0 0.0
  %709 = vmatpush1.msra.mxu0 0.0
  %710 = vmatprep.subr.mxu0 0.0
  %711 = vmatpush1.msra.mxu0 0.0
  %712 = vmatprep.subr.mxu0 0.0
  %713 = vmatpush1.msra.mxu0 0.0
  %714 = vmatprep.subr.mxu0 0.0
  %715 = vmatpush1.msra.mxu0 0.0
  %716 = vmatprep.subr.mxu0 0.0
  %717 = vmatpush1.msra.mxu0 0.0
  %718 = vmatprep.subr.mxu0 0.0
  %719 = vmatpush1.msra.mxu0 0.0
  %720 = vmatprep.subr.mxu0 0.0
  %721 = vmatpush1.msra.mxu0 0.0
  %722 = vmatprep.subr.mxu0 0.0
  %723 = vmatpush1.msra.mxu0 0.0
  %724 = vmatprep.subr.mxu0 0.0
  %725 = vmatpush1.msra.mxu0 0.0
  %726 = vmatprep.subr.mxu0 0.0
  %727 = vmatpush1.msra.mxu0 0.0
  %728 = vmatprep.subr.mxu0 0.0
  %729 = vmatpush1.msra.mxu0 0.0
  %730 = vmatprep.subr.mxu0 0.0
  %731 = vmatpush1.msra.mxu0 0.0
  %732 = vmatprep.subr.mxu0 0.0
  %733 = vmatpush1.msra.mxu0 0.0
  %734 = vmatprep.subr.mxu0 0.0
  %735 = vmatpush1.msra.mxu0 0.0
  %736 = vmatprep.subr.mxu0 0.0
  %737 = vmatpush1.msra.mxu0 0.0
  %738 = vmatprep.subr.mxu0 0.0
  %739 = vmatpush1.msra.mxu0 0.0
  %740 = vmatprep.subr.mxu0 0.0
  %741 = vmatpush1.msra.mxu0 0.0
  %742 = vmatprep.subr.mxu0 0.0
  %743 = vmatpush1.msra.mxu0 0.0
  %744 = vmatprep.subr.mxu0 0.0
  %745 = vmatpush1.msra.mxu0 0.0
  %746 = vmatprep.subr.mxu0 0.0
  %747 = vmatpush1.msra.mxu0 0.0
  %748 = vmatprep.subr.mxu0 0.0
  %749 = vmatpush1.msra.mxu0 0.0
  %750 = vmatprep.subr.mxu0 0.0
  %751 = vmatpush1.msra.mxu0 0.0
  %752 = vmatprep.subr.mxu0 0.0
  %753 = vmatpush1.msra.mxu0 0.0
  %754 = vmatprep.subr.mxu0 0.0
  %755 = vmatpush1.msra.mxu0 0.0
  %756 = vmatprep.subr.mxu0 0.0
  %757 = vmatpush1.msra.mxu0 0.0
  %758 = vmatprep.subr.mxu0 0.0
  %759 = vmatpush1.msra.mxu0 0.0
  %760 = vmatprep.subr.mxu0 0.0
  %761 = vmatpush1.msra.mxu0 0.0
  %762 = vmatprep.mubr.f32.mxu0 0.0
  %763 = vmatmul.mubr.f32.gmra.mrb[0].mxu0 %v673
  %v764 = vpop.f32.mrb[0].mxu0
  %v765 = vadd.f32 0.0, %v764
  %v766 = vpop.f32.mrb[0].mxu0
  %767 = vmatprep.mubr.f32.mxu0 0.0
  %768 = vmatmul.mubr.f32.gmra.mrb[0].mxu0 %v676
  %v769 = vpop.f32.mrb[0].mxu0
  %v770 = vadd.f32 0.0, %v769
  %v771 = vpop.f32.mrb[0].mxu0
  %772 = vmatprep.mubr.f32.mxu0 0.0
  %773 = vmatmul.mubr.f32.gmra.mrb[0].mxu0 %v679
  %v774 = vpop.f32.mrb[0].mxu0
  %v775 = vadd.f32 0.0, %v774
  %v776 = vpop.f32.mrb[0].mxu0
  %777 = vmatprep.mubr.f32.mxu0 0.0
  %778 = vmatmul.mubr.f32.gmra.mrb[0].mxu0 %v682
  %v779 = vpop.f32.mrb[0].mxu0
  %v780 = vadd.f32 0.0, %v779
  %v781 = vpop.f32.mrb[0].mxu0
  %782 = vmatprep.mubr.f32.mxu0 0.0
  %783 = vmatmul.mubr.f32.gmra.mrb[0].mxu0 %v685
  %v784 = vpop.f32.mrb[0].mxu0
  %v785 = vadd.f32 0.0, %v784
  %v786 = vpop.f32.mrb[0].mxu0
  %787 = vmatprep.mubr.f32.mxu0 0.0
  %788 = vmatmul.mubr.f32.gmra.mrb[0].mxu0 %v688
  %v789 = vpop.f32.mrb[0].mxu0
  %v790 = vadd.f32 0.0, %v789
  %v791 = vpop.f32.mrb[0].mxu0
  %792 = vmatprep.mubr.f32.mxu0 0.0
  %793 = vmatmul.mubr.f32.gmra.mrb[0].mxu0 %v691
  %v794 = vpop.f32.mrb[0].mxu0
  %v795 = vadd.f32 0.0, %v794
  %v796 = vpop.f32.mrb[0].mxu0
  %797 = vmatprep.mubr.f32.mxu0 0.0
  %798 = vmatmul.mubr.f32.gmra.mrb[0].mxu0 %v694
  %v799 = vpop.f32.mrb[0].mxu0
  %v800 = vadd.f32 0.0, %v799
  %v801 = vpop.f32.mrb[0].mxu0
  %802 = vdwg.mxu0
  %803 = vxpose.xlu0.b32.start [1/16] %v271, 128
  %804 = vxpose.xlu0.b32.cont [2/16] 0.0, 128
  %805 = vxpose.xlu0.b32.cont [3/16] 0.0, 128
  %806 = vxpose.xlu0.b32.cont [4/16] 0.0, 128
  %807 = vxpose.xlu0.b32.cont [5/16] 0.0, 128
  %808 = vxpose.xlu0.b32.cont [6/16] 0.0, 128
  %809 = vxpose.xlu0.b32.cont [7/16] 0.0, 128
  %810 = vxpose.xlu0.b32.cont [8/16] 0.0, 128
  %811 = vxpose.xlu0.b32.cont [9/16] 0.0, 128
  %812 = vxpose.xlu0.b32.cont [10/16] 0.0, 128
  %813 = vxpose.xlu0.b32.cont [11/16] 0.0, 128
  %814 = vxpose.xlu0.b32.cont [12/16] 0.0, 128
  %815 = vxpose.xlu0.b32.cont [13/16] 0.0, 128
  %816 = vxpose.xlu0.b32.cont [14/16] 0.0, 128
  %817 = vxpose.xlu0.b32.cont [15/16] 0.0, 128
  %818 = vxpose.xlu0.b32.end [16/16] 0.0, 128
  %v819 = vpop.trf.xlu0
  %v820 = vpop.trf.xlu0
  %v821 = vpop.trf.xlu0
  %v822 = vpop.trf.xlu0
  %v823 = vpop.trf.xlu0
  %v824 = vpop.trf.xlu0
  %v825 = vpop.trf.xlu0
  %v826 = vpop.trf.xlu0
  %v827 = vpop.trf.xlu0
  %v828 = vpop.trf.xlu0
  %v829 = vpop.trf.xlu0
  %v830 = vpop.trf.xlu0
  %v831 = vpop.trf.xlu0
  %v832 = vpop.trf.xlu0
  %v833 = vpop.trf.xlu0
  %v834 = vpop.trf.xlu0
  %v836 = vsel %vm344, %v819, 0
  %v839 = vsel %vm344, %v820, 0
  %v842 = vsel %vm344, %v821, 0
  %v845 = vsel %vm344, %v822, 0
  %v848 = vsel %vm344, %v823, 0
  %v851 = vsel %vm344, %v824, 0
  %v854 = vsel %vm344, %v825, 0
  %v857 = vsel %vm344, %v826, 0
  %v859 = vsel %vm369, %v293, 0
  %861 = vmatprep.subr.mxu0 0.0
  %862 = vmatpush1.msra.mxu0 %v859
  %863 = vmatprep.subr.mxu0 0.0
  %864 = vmatpush1.msra.mxu0 0.0
  %865 = vmatprep.subr.mxu0 0.0
  %866 = vmatpush1.msra.mxu0 0.0
  %867 = vmatprep.subr.mxu0 0.0
  %868 = vmatpush1.msra.mxu0 0.0
  %869 = vmatprep.subr.mxu0 0.0
  %870 = vmatpush1.msra.mxu0 0.0
  %871 = vmatprep.subr.mxu0 0.0
  %872 = vmatpush1.msra.mxu0 0.0
  %873 = vmatprep.subr.mxu0 0.0
  %874 = vmatpush1.msra.mxu0 0.0
  %875 = vmatprep.subr.mxu0 0.0
  %876 = vmatpush1.msra.mxu0 0.0
  %877 = vmatprep.subr.mxu0 0.0
  %878 = vmatpush1.msra.mxu0 0.0
  %879 = vmatprep.subr.mxu0 0.0
  %880 = vmatpush1.msra.mxu0 0.0
  %881 = vmatprep.subr.mxu0 0.0
  %882 = vmatpush1.msra.mxu0 0.0
  %883 = vmatprep.subr.mxu0 0.0
  %884 = vmatpush1.msra.mxu0 0.0
  %885 = vmatprep.subr.mxu0 0.0
  %886 = vmatpush1.msra.mxu0 0.0
  %887 = vmatprep.subr.mxu0 0.0
  %888 = vmatpush1.msra.mxu0 0.0
  %889 = vmatprep.subr.mxu0 0.0
  %890 = vmatpush1.msra.mxu0 0.0
  %891 = vmatprep.subr.mxu0 0.0
  %892 = vmatpush1.msra.mxu0 0.0
  %893 = vmatprep.subr.mxu0 0.0
  %894 = vmatpush1.msra.mxu0 0.0
  %895 = vmatprep.subr.mxu0 0.0
  %896 = vmatpush1.msra.mxu0 0.0
  %897 = vmatprep.subr.mxu0 0.0
  %898 = vmatpush1.msra.mxu0 0.0
  %899 = vmatprep.subr.mxu0 0.0
  %900 = vmatpush1.msra.mxu0 0.0
  %901 = vmatprep.subr.mxu0 0.0
  %902 = vmatpush1.msra.mxu0 0.0
  %903 = vmatprep.subr.mxu0 0.0
  %904 = vmatpush1.msra.mxu0 0.0
  %905 = vmatprep.subr.mxu0 0.0
  %906 = vmatpush1.msra.mxu0 0.0
  %907 = vmatprep.subr.mxu0 0.0
  %908 = vmatpush1.msra.mxu0 0.0
  %909 = vmatprep.subr.mxu0 0.0
  %910 = vmatpush1.msra.mxu0 0.0
  %911 = vmatprep.subr.mxu0 0.0
  %912 = vmatpush1.msra.mxu0 0.0
  %913 = vmatprep.subr.mxu0 0.0
  %914 = vmatpush1.msra.mxu0 0.0
  %915 = vmatprep.subr.mxu0 0.0
  %916 = vmatpush1.msra.mxu0 0.0
  %917 = vmatprep.subr.mxu0 0.0
  %918 = vmatpush1.msra.mxu0 0.0
  %919 = vmatprep.subr.mxu0 0.0
  %920 = vmatpush1.msra.mxu0 0.0
  %921 = vmatprep.subr.mxu0 0.0
  %922 = vmatpush1.msra.mxu0 0.0
  %923 = vmatprep.subr.mxu0 0.0
  %924 = vmatpush1.msra.mxu0 0.0
  %925 = vmatprep.mubr.f32.mxu0 0.0
  %926 = vmatmul.mubr.f32.gmra.mrb[0].mxu0 %v836
  %v927 = vpop.f32.mrb[0].mxu0
  %v928 = vadd.f32 0.0, %v927
  %v929 = vpop.f32.mrb[0].mxu0
  %930 = vmatprep.mubr.f32.mxu0 0.0
  %931 = vmatmul.mubr.f32.gmra.mrb[0].mxu0 %v839
  %v932 = vpop.f32.mrb[0].mxu0
  %v933 = vadd.f32 0.0, %v932
  %v934 = vpop.f32.mrb[0].mxu0
  %935 = vmatprep.mubr.f32.mxu0 0.0
  %936 = vmatmul.mubr.f32.gmra.mrb[0].mxu0 %v842
  %v937 = vpop.f32.mrb[0].mxu0
  %v938 = vadd.f32 0.0, %v937
  %v939 = vpop.f32.mrb[0].mxu0
  %940 = vmatprep.mubr.f32.mxu0 0.0
  %941 = vmatmul.mubr.f32.gmra.mrb[0].mxu0 %v845
  %v942 = vpop.f32.mrb[0].mxu0
  %v943 = vadd.f32 0.0, %v942
  %v944 = vpop.f32.mrb[0].mxu0
  %945 = vmatprep.mubr.f32.mxu0 0.0
  %946 = vmatmul.mubr.f32.gmra.mrb[0].mxu0 %v848
  %v947 = vpop.f32.mrb[0].mxu0
  %v948 = vadd.f32 0.0, %v947
  %v949 = vpop.f32.mrb[0].mxu0
  %950 = vmatprep.mubr.f32.mxu0 0.0
  %951 = vmatmul.mubr.f32.gmra.mrb[0].mxu0 %v851
  %v952 = vpop.f32.mrb[0].mxu0
  %v953 = vadd.f32 0.0, %v952
  %v954 = vpop.f32.mrb[0].mxu0
  %955 = vmatprep.mubr.f32.mxu0 0.0
  %956 = vmatmul.mubr.f32.gmra.mrb[0].mxu0 %v854
  %v957 = vpop.f32.mrb[0].mxu0
  %v958 = vadd.f32 0.0, %v957
  %v959 = vpop.f32.mrb[0].mxu0
  %960 = vmatprep.mubr.f32.mxu0 0.0
  %961 = vmatmul.mubr.f32.gmra.mrb[0].mxu0 %v857
  %v962 = vpop.f32.mrb[0].mxu0
  %v963 = vadd.f32 0.0, %v962
  %v964 = vpop.f32.mrb[0].mxu0
  %965 = vdwg.mxu0
  %v966 = vmul.f32 %v439, 0.70710677
  %v967 = vmul.f32 %v444, 0.70710677
  %v968 = vmul.f32 %v449, 0.70710677
  %v969 = vmul.f32 %v454, 0.70710677
  %v970 = vmul.f32 %v459, 0.70710677
  %v971 = vmul.f32 %v464, 0.70710677
  %v972 = vmul.f32 %v469, 0.70710677
  %v973 = vmul.f32 %v474, 0.70710677
  %v974 = vmul.f32 %v602, 0.70710677
  %v975 = vmul.f32 %v607, 0.70710677
  %v976 = vmul.f32 %v612, 0.70710677
  %v977 = vmul.f32 %v617, 0.70710677
  %v978 = vmul.f32 %v622, 0.70710677
  %v979 = vmul.f32 %v627, 0.70710677
  %v980 = vmul.f32 %v632, 0.70710677
  %v981 = vmul.f32 %v637, 0.70710677
  %v982 = vmul.f32 %v765, 0.70710677
  %v983 = vmul.f32 %v770, 0.70710677
  %v984 = vmul.f32 %v775, 0.70710677
  %v985 = vmul.f32 %v780, 0.70710677
  %v986 = vmul.f32 %v785, 0.70710677
  %v987 = vmul.f32 %v790, 0.70710677
  %v988 = vmul.f32 %v795, 0.70710677
  %v989 = vmul.f32 %v800, 0.70710677
  %v990 = vmul.f32 %v928, 0.70710677
  %v991 = vmul.f32 %v933, 0.70710677
  %v992 = vmul.f32 %v938, 0.70710677
  %v993 = vmul.f32 %v943, 0.70710677
  %v994 = vmul.f32 %v948, 0.70710677
  %v995 = vmul.f32 %v953, 0.70710677
  %v996 = vmul.f32 %v958, 0.70710677
  %v997 = vmul.f32 %v963, 0.70710677
  %vm998 = vcmask 523264
  %v999 = vsel %vm998, %v966, -inf
  %1000 = vmax.xlane.f32.xlu0 %v999
  %v1001 = vpop.xlane.xlu0 %1000
  %v1002 = vsel %vm998, %v967, -inf
  %1003 = vmax.xlane.f32.xlu0 %v1002
  %v1004 = vpop.xlane.xlu0 %1003
  %v1005 = vsel %vm998, %v968, -inf
  %1006 = vmax.xlane.f32.xlu0 %v1005
  %v1007 = vpop.xlane.xlu0 %1006
  %v1008 = vsel %vm998, %v969, -inf
  %1009 = vmax.xlane.f32.xlu0 %v1008
  %v1010 = vpop.xlane.xlu0 %1009
  %v1011 = vsel %vm998, %v970, -inf
  %1012 = vmax.xlane.f32.xlu0 %v1011
  %v1013 = vpop.xlane.xlu0 %1012
  %v1014 = vsel %vm998, %v971, -inf
  %1015 = vmax.xlane.f32.xlu0 %v1014
  %v1016 = vpop.xlane.xlu0 %1015
  %v1017 = vsel %vm998, %v972, -inf
  %1018 = vmax.xlane.f32.xlu0 %v1017
  %v1019 = vpop.xlane.xlu0 %1018
  %v1020 = vsel %vm998, %v973, -inf
  %1021 = vmax.xlane.f32.xlu0 %v1020
  %v1022 = vpop.xlane.xlu0 %1021
  %v1023 = vsel %vm998, %v974, -inf
  %1024 = vmax.xlane.f32.xlu0 %v1023
  %v1025 = vpop.xlane.xlu0 %1024
  %v1026 = vsel %vm998, %v975, -inf
  %1027 = vmax.xlane.f32.xlu0 %v1026
  %v1028 = vpop.xlane.xlu0 %1027
  %v1029 = vsel %vm998, %v976, -inf
  %1030 = vmax.xlane.f32.xlu0 %v1029
  %v1031 = vpop.xlane.xlu0 %1030
  %v1032 = vsel %vm998, %v977, -inf
  %1033 = vmax.xlane.f32.xlu0 %v1032
  %v1034 = vpop.xlane.xlu0 %1033
  %v1035 = vsel %vm998, %v978, -inf
  %1036 = vmax.xlane.f32.xlu0 %v1035
  %v1037 = vpop.xlane.xlu0 %1036
  %v1038 = vsel %vm998, %v979, -inf
  %1039 = vmax.xlane.f32.xlu0 %v1038
  %v1040 = vpop.xlane.xlu0 %1039
  %v1041 = vsel %vm998, %v980, -inf
  %1042 = vmax.xlane.f32.xlu0 %v1041
  %v1043 = vpop.xlane.xlu0 %1042
  %v1044 = vsel %vm998, %v981, -inf
  %1045 = vmax.xlane.f32.xlu0 %v1044
  %v1046 = vpop.xlane.xlu0 %1045
  %v1047 = vsel %vm998, %v982, -inf
  %1048 = vmax.xlane.f32.xlu0 %v1047
  %v1049 = vpop.xlane.xlu0 %1048
  %v1050 = vsel %vm998, %v983, -inf
  %1051 = vmax.xlane.f32.xlu0 %v1050
  %v1052 = vpop.xlane.xlu0 %1051
  %v1053 = vsel %vm998, %v984, -inf
  %1054 = vmax.xlane.f32.xlu0 %v1053
  %v1055 = vpop.xlane.xlu0 %1054
  %v1056 = vsel %vm998, %v985, -inf
  %1057 = vmax.xlane.f32.xlu0 %v1056
  %v1058 = vpop.xlane.xlu0 %1057
  %v1059 = vsel %vm998, %v986, -inf
  %1060 = vmax.xlane.f32.xlu0 %v1059
  %v1061 = vpop.xlane.xlu0 %1060
  %v1062 = vsel %vm998, %v987, -inf
  %1063 = vmax.xlane.f32.xlu0 %v1062
  %v1064 = vpop.xlane.xlu0 %1063
  %v1065 = vsel %vm998, %v988, -inf
  %1066 = vmax.xlane.f32.xlu0 %v1065
  %v1067 = vpop.xlane.xlu0 %1066
  %v1068 = vsel %vm998, %v989, -inf
  %1069 = vmax.xlane.f32.xlu0 %v1068
  %v1070 = vpop.xlane.xlu0 %1069
  %v1071 = vsel %vm998, %v990, -inf
  %1072 = vmax.xlane.f32.xlu0 %v1071
  %v1073 = vpop.xlane.xlu0 %1072
  %v1074 = vsel %vm998, %v991, -inf
  %1075 = vmax.xlane.f32.xlu0 %v1074
  %v1076 = vpop.xlane.xlu0 %1075
  %v1077 = vsel %vm998, %v992, -inf
  %1078 = vmax.xlane.f32.xlu0 %v1077
  %v1079 = vpop.xlane.xlu0 %1078
  %v1080 = vsel %vm998, %v993, -inf
  %1081 = vmax.xlane.f32.xlu0 %v1080
  %v1082 = vpop.xlane.xlu0 %1081
  %v1083 = vsel %vm998, %v994, -inf
  %1084 = vmax.xlane.f32.xlu0 %v1083
  %v1085 = vpop.xlane.xlu0 %1084
  %v1086 = vsel %vm998, %v995, -inf
  %1087 = vmax.xlane.f32.xlu0 %v1086
  %v1088 = vpop.xlane.xlu0 %1087
  %v1089 = vsel %vm998, %v996, -inf
  %1090 = vmax.xlane.f32.xlu0 %v1089
  %v1091 = vpop.xlane.xlu0 %1090
  %v1092 = vsel %vm998, %v997, -inf
  %1093 = vmax.xlane.f32.xlu0 %v1092
  %v1094 = vpop.xlane.xlu0 %1093
  %v1095 = vsub.f32 %v966, %v1001
  %v1096 = vsub.f32 %v967, %v1004
  %v1097 = vsub.f32 %v968, %v1007
  %v1098 = vsub.f32 %v969, %v1010
  %v1099 = vsub.f32 %v970, %v1013
  %v1100 = vsub.f32 %v971, %v1016
  %v1101 = vsub.f32 %v972, %v1019
  %v1102 = vsub.f32 %v973, %v1022
  %v1103 = vsub.f32 %v974, %v1025
  %v1104 = vsub.f32 %v975, %v1028
  %v1105 = vsub.f32 %v976, %v1031
  %v1106 = vsub.f32 %v977, %v1034
  %v1107 = vsub.f32 %v978, %v1037
  %v1108 = vsub.f32 %v979, %v1040
  %v1109 = vsub.f32 %v980, %v1043
  %v1110 = vsub.f32 %v981, %v1046
  %v1111 = vsub.f32 %v982, %v1049
  %v1112 = vsub.f32 %v983, %v1052
  %v1113 = vsub.f32 %v984, %v1055
  %v1114 = vsub.f32 %v985, %v1058
  %v1115 = vsub.f32 %v986, %v1061
  %v1116 = vsub.f32 %v987, %v1064
  %v1117 = vsub.f32 %v988, %v1067
  %v1118 = vsub.f32 %v989, %v1070
  %v1119 = vsub.f32 %v990, %v1073
  %v1120 = vsub.f32 %v991, %v1076
  %v1121 = vsub.f32 %v992, %v1079
  %v1122 = vsub.f32 %v993, %v1082
  %v1123 = vsub.f32 %v994, %v1085
  %v1124 = vsub.f32 %v995, %v1088
  %v1125 = vsub.f32 %v996, %v1091
  %v1126 = vsub.f32 %v997, %v1094
  %v1127 = vmul.f32 %v1095, 1.442695
  %v1128 = vpow.pop %v1127
  %v1129 = vmul.f32 %v1096, 1.442695
  %v1130 = vpow.pop %v1129
  %v1131 = vmul.f32 %v1097, 1.442695
  %v1132 = vpow.pop %v1131
  %v1133 = vmul.f32 %v1098, 1.442695
  %v1134 = vpow.pop %v1133
  %v1135 = vmul.f32 %v1099, 1.442695
  %v1136 = vpow.pop %v1135
  %v1137 = vmul.f32 %v1100, 1.442695
  %v1138 = vpow.pop %v1137
  %v1139 = vmul.f32 %v1101, 1.442695
  %v1140 = vpow.pop %v1139
  %v1141 = vmul.f32 %v1102, 1.442695
  %v1142 = vpow.pop %v1141
  %v1143 = vmul.f32 %v1103, 1.442695
  %v1144 = vpow.pop %v1143
  %v1145 = vmul.f32 %v1104, 1.442695
  %v1146 = vpow.pop %v1145
  %v1147 = vmul.f32 %v1105, 1.442695
  %v1148 = vpow.pop %v1147
  %v1149 = vmul.f32 %v1106, 1.442695
  %v1150 = vpow.pop %v1149
  %v1151 = vmul.f32 %v1107, 1.442695
  %v1152 = vpow.pop %v1151
  %v1153 = vmul.f32 %v1108, 1.442695
  %v1154 = vpow.pop %v1153
  %v1155 = vmul.f32 %v1109, 1.442695
  %v1156 = vpow.pop %v1155
  %v1157 = vmul.f32 %v1110, 1.442695
  %v1158 = vpow.pop %v1157
  %v1159 = vmul.f32 %v1111, 1.442695
  %v1160 = vpow.pop %v1159
  %v1161 = vmul.f32 %v1112, 1.442695
  %v1162 = vpow.pop %v1161
  %v1163 = vmul.f32 %v1113, 1.442695
  %v1164 = vpow.pop %v1163
  %v1165 = vmul.f32 %v1114, 1.442695
  %v1166 = vpow.pop %v1165
  %v1167 = vmul.f32 %v1115, 1.442695
  %v1168 = vpow.pop %v1167
  %v1169 = vmul.f32 %v1116, 1.442695
  %v1170 = vpow.pop %v1169
  %v1171 = vmul.f32 %v1117, 1.442695
  %v1172 = vpow.pop %v1171
  %v1173 = vmul.f32 %v1118, 1.442695
  %v1174 = vpow.pop %v1173
  %v1175 = vmul.f32 %v1119, 1.442695
  %v1176 = vpow.pop %v1175
  %v1177 = vmul.f32 %v1120, 1.442695
  %v1178 = vpow.pop %v1177
  %v1179 = vmul.f32 %v1121, 1.442695
  %v1180 = vpow.pop %v1179
  %v1181 = vmul.f32 %v1122, 1.442695
  %v1182 = vpow.pop %v1181
  %v1183 = vmul.f32 %v1123, 1.442695
  %v1184 = vpow.pop %v1183
  %v1185 = vmul.f32 %v1124, 1.442695
  %v1186 = vpow.pop %v1185
  %v1187 = vmul.f32 %v1125, 1.442695
  %v1188 = vpow.pop %v1187
  %v1189 = vmul.f32 %v1126, 1.442695
  %v1190 = vpow.pop %v1189
  %v1191 = vsel %vm998, %v1128, 0.0
  %1192 = vadd.xlane.f32.xlu0 %v1191
  %v1193 = vpop.xlane.xlu0 %1192
  %v1194 = vsel %vm998, %v1130, 0.0
  %1195 = vadd.xlane.f32.xlu0 %v1194
  %v1196 = vpop.xlane.xlu0 %1195
  %v1197 = vsel %vm998, %v1132, 0.0
  %1198 = vadd.xlane.f32.xlu0 %v1197
  %v1199 = vpop.xlane.xlu0 %1198
  %v1200 = vsel %vm998, %v1134, 0.0
  %1201 = vadd.xlane.f32.xlu0 %v1200
  %v1202 = vpop.xlane.xlu0 %1201
  %v1203 = vsel %vm998, %v1136, 0.0
  %1204 = vadd.xlane.f32.xlu0 %v1203
  %v1205 = vpop.xlane.xlu0 %1204
  %v1206 = vsel %vm998, %v1138, 0.0
  %1207 = vadd.xlane.f32.xlu0 %v1206
  %v1208 = vpop.xlane.xlu0 %1207
  %v1209 = vsel %vm998, %v1140, 0.0
  %1210 = vadd.xlane.f32.xlu0 %v1209
  %v1211 = vpop.xlane.xlu0 %1210
  %v1212 = vsel %vm998, %v1142, 0.0
  %1213 = vadd.xlane.f32.xlu0 %v1212
  %v1214 = vpop.xlane.xlu0 %1213
  %v1215 = vsel %vm998, %v1144, 0.0
  %1216 = vadd.xlane.f32.xlu0 %v1215
  %v1217 = vpop.xlane.xlu0 %1216
  %v1218 = vsel %vm998, %v1146, 0.0
  %1219 = vadd.xlane.f32.xlu0 %v1218
  %v1220 = vpop.xlane.xlu0 %1219
  %v1221 = vsel %vm998, %v1148, 0.0
  %1222 = vadd.xlane.f32.xlu0 %v1221
  %v1223 = vpop.xlane.xlu0 %1222
  %v1224 = vsel %vm998, %v1150, 0.0
  %1225 = vadd.xlane.f32.xlu0 %v1224
  %v1226 = vpop.xlane.xlu0 %1225
  %v1227 = vsel %vm998, %v1152, 0.0
  %1228 = vadd.xlane.f32.xlu0 %v1227
  %v1229 = vpop.xlane.xlu0 %1228
  %v1230 = vsel %vm998, %v1154, 0.0
  %1231 = vadd.xlane.f32.xlu0 %v1230
  %v1232 = vpop.xlane.xlu0 %1231
  %v1233 = vsel %vm998, %v1156, 0.0
  %1234 = vadd.xlane.f32.xlu0 %v1233
  %v1235 = vpop.xlane.xlu0 %1234
  %v1236 = vsel %vm998, %v1158, 0.0
  %1237 = vadd.xlane.f32.xlu0 %v1236
  %v1238 = vpop.xlane.xlu0 %1237
  %v1239 = vsel %vm998, %v1160, 0.0
  %1240 = vadd.xlane.f32.xlu0 %v1239
  %v1241 = vpop.xlane.xlu0 %1240
  %v1242 = vsel %vm998, %v1162, 0.0
  %1243 = vadd.xlane.f32.xlu0 %v1242
  %v1244 = vpop.xlane.xlu0 %1243
  %v1245 = vsel %vm998, %v1164, 0.0
  %1246 = vadd.xlane.f32.xlu0 %v1245
  %v1247 = vpop.xlane.xlu0 %1246
  %v1248 = vsel %vm998, %v1166, 0.0
  %1249 = vadd.xlane.f32.xlu0 %v1248
  %v1250 = vpop.xlane.xlu0 %1249
  %v1251 = vsel %vm998, %v1168, 0.0
  %1252 = vadd.xlane.f32.xlu0 %v1251
  %v1253 = vpop.xlane.xlu0 %1252
  %v1254 = vsel %vm998, %v1170, 0.0
  %1255 = vadd.xlane.f32.xlu0 %v1254
  %v1256 = vpop.xlane.xlu0 %1255
  %v1257 = vsel %vm998, %v1172, 0.0
  %1258 = vadd.xlane.f32.xlu0 %v1257
  %v1259 = vpop.xlane.xlu0 %1258
  %v1260 = vsel %vm998, %v1174, 0.0
  %1261 = vadd.xlane.f32.xlu0 %v1260
  %v1262 = vpop.xlane.xlu0 %1261
  %v1263 = vsel %vm998, %v1176, 0.0
  %1264 = vadd.xlane.f32.xlu0 %v1263
  %v1265 = vpop.xlane.xlu0 %1264
  %v1266 = vsel %vm998, %v1178, 0.0
  %1267 = vadd.xlane.f32.xlu0 %v1266
  %v1268 = vpop.xlane.xlu0 %1267
  %v1269 = vsel %vm998, %v1180, 0.0
  %1270 = vadd.xlane.f32.xlu0 %v1269
  %v1271 = vpop.xlane.xlu0 %1270
  %v1272 = vsel %vm998, %v1182, 0.0
  %1273 = vadd.xlane.f32.xlu0 %v1272
  %v1274 = vpop.xlane.xlu0 %1273
  %v1275 = vsel %vm998, %v1184, 0.0
  %1276 = vadd.xlane.f32.xlu0 %v1275
  %v1277 = vpop.xlane.xlu0 %1276
  %v1278 = vsel %vm998, %v1186, 0.0
  %1279 = vadd.xlane.f32.xlu0 %v1278
  %v1280 = vpop.xlane.xlu0 %1279
  %v1281 = vsel %vm998, %v1188, 0.0
  %1282 = vadd.xlane.f32.xlu0 %v1281
  %v1283 = vpop.xlane.xlu0 %1282
  %v1284 = vsel %vm998, %v1190, 0.0
  %1285 = vadd.xlane.f32.xlu0 %v1284
  %v1286 = vpop.xlane.xlu0 %1285
  %v1287 = vrcp.pop %v1193
  %v1288 = vrcp.pop %v1196
  %v1289 = vrcp.pop %v1199
  %v1290 = vrcp.pop %v1202
  %v1291 = vrcp.pop %v1205
  %v1292 = vrcp.pop %v1208
  %v1293 = vrcp.pop %v1211
  %v1294 = vrcp.pop %v1214
  %v1295 = vrcp.pop %v1217
  %v1296 = vrcp.pop %v1220
  %v1297 = vrcp.pop %v1223
  %v1298 = vrcp.pop %v1226
  %v1299 = vrcp.pop %v1229
  %v1300 = vrcp.pop %v1232
  %v1301 = vrcp.pop %v1235
  %v1302 = vrcp.pop %v1238
  %v1303 = vrcp.pop %v1241
  %v1304 = vrcp.pop %v1244
  %v1305 = vrcp.pop %v1247
  %v1306 = vrcp.pop %v1250
  %v1307 = vrcp.pop %v1253
  %v1308 = vrcp.pop %v1256
  %v1309 = vrcp.pop %v1259
  %v1310 = vrcp.pop %v1262
  %v1311 = vrcp.pop %v1265
  %v1312 = vrcp.pop %v1268
  %v1313 = vrcp.pop %v1271
  %v1314 = vrcp.pop %v1274
  %v1315 = vrcp.pop %v1277
  %v1316 = vrcp.pop %v1280
  %v1317 = vrcp.pop %v1283
  %v1318 = vrcp.pop %v1286
  %v1319 = vmul.f32 %v1128, %v1287
  %v1320 = vmul.f32 %v1130, %v1288
  %v1321 = vmul.f32 %v1132, %v1289
  %v1322 = vmul.f32 %v1134, %v1290
  %v1323 = vmul.f32 %v1136, %v1291
  %v1324 = vmul.f32 %v1138, %v1292
  %v1325 = vmul.f32 %v1140, %v1293
  %v1326 = vmul.f32 %v1142, %v1294
  %v1327 = vmul.f32 %v1144, %v1295
  %v1328 = vmul.f32 %v1146, %v1296
  %v1329 = vmul.f32 %v1148, %v1297
  %v1330 = vmul.f32 %v1150, %v1298
  %v1331 = vmul.f32 %v1152, %v1299
  %v1332 = vmul.f32 %v1154, %v1300
  %v1333 = vmul.f32 %v1156, %v1301
  %v1334 = vmul.f32 %v1158, %v1302
  %v1335 = vmul.f32 %v1160, %v1303
  %v1336 = vmul.f32 %v1162, %v1304
  %v1337 = vmul.f32 %v1164, %v1305
  %v1338 = vmul.f32 %v1166, %v1306
  %v1339 = vmul.f32 %v1168, %v1307
  %v1340 = vmul.f32 %v1170, %v1308
  %v1341 = vmul.f32 %v1172, %v1309
  %v1342 = vmul.f32 %v1174, %v1310
  %v1343 = vmul.f32 %v1176, %v1311
  %v1344 = vmul.f32 %v1178, %v1312
  %v1345 = vmul.f32 %v1180, %v1313
  %v1346 = vmul.f32 %v1182, %v1314
  %v1347 = vmul.f32 %v1184, %v1315
  %v1348 = vmul.f32 %v1186, %v1316
  %v1349 = vmul.f32 %v1188, %v1317
  %v1350 = vmul.f32 %v1190, %v1318
  %v1351 = vsel %vm998, %v302, 0
  %v1354 = vsel %vm998, %v1319, 0
  %v1357 = vsel %vm998, %v1320, 0
  %v1360 = vsel %vm998, %v1321, 0
  %v1363 = vsel %vm998, %v1322, 0
  %v1366 = vsel %vm998, %v1323, 0
  %v1369 = vsel %vm998, %v1324, 0
  %v1372 = vsel %vm998, %v1325, 0
  %v1375 = vsel %vm998, %v1326, 0
  %1377 = vmatprep.subr.mxu0 0.0
  %1378 = vmatpush1.xpose.msra.mxu0 %v1354
  %1379 = vmatprep.subr.mxu0 0.0
  %1380 = vmatpush1.xpose.msra.mxu0 %v1357
  %1381 = vmatprep.subr.mxu0 0.0
  %1382 = vmatpush1.xpose.msra.mxu0 %v1360
  %1383 = vmatprep.subr.mxu0 0.0
  %1384 = vmatpush1.xpose.msra.mxu0 %v1363
  %1385 = vmatprep.subr.mxu0 0.0
  %1386 = vmatpush1.xpose.msra.mxu0 %v1366
  %1387 = vmatprep.subr.mxu0 0.0
  %1388 = vmatpush1.xpose.msra.mxu0 %v1369
  %1389 = vmatprep.subr.mxu0 0.0
  %1390 = vmatpush1.xpose.msra.mxu0 %v1372
  %1391 = vmatprep.subr.mxu0 0.0
  %1392 = vmatpush1.xpose.msra.mxu0 %v1375
  %1393 = vmatprep.subr.mxu0 0.0
  %1394 = vmatpush1.xpose.msra.mxu0 0.0
  %1395 = vmatprep.subr.mxu0 0.0
  %1396 = vmatpush1.xpose.msra.mxu0 0.0
  %1397 = vmatprep.subr.mxu0 0.0
  %1398 = vmatpush1.xpose.msra.mxu0 0.0
  %1399 = vmatprep.subr.mxu0 0.0
  %1400 = vmatpush1.xpose.msra.mxu0 0.0
  %1401 = vmatprep.subr.mxu0 0.0
  %1402 = vmatpush1.xpose.msra.mxu0 0.0
  %1403 = vmatprep.subr.mxu0 0.0
  %1404 = vmatpush1.xpose.msra.mxu0 0.0
  %1405 = vmatprep.subr.mxu0 0.0
  %1406 = vmatpush1.xpose.msra.mxu0 0.0
  %1407 = vmatprep.subr.mxu0 0.0
  %1408 = vmatpush1.xpose.msra.mxu0 0.0
  %1409 = vmatprep.subr.mxu0 0.0
  %1410 = vmatpush1.xpose.msra.mxu0 0.0
  %1411 = vmatprep.subr.mxu0 0.0
  %1412 = vmatpush1.xpose.msra.mxu0 0.0
  %1413 = vmatprep.subr.mxu0 0.0
  %1414 = vmatpush1.xpose.msra.mxu0 0.0
  %1415 = vmatprep.subr.mxu0 0.0
  %1416 = vmatpush1.xpose.msra.mxu0 0.0
  %1417 = vmatprep.subr.mxu0 0.0
  %1418 = vmatpush1.xpose.msra.mxu0 0.0
  %1419 = vmatprep.subr.mxu0 0.0
  %1420 = vmatpush1.xpose.msra.mxu0 0.0
  %1421 = vmatprep.subr.mxu0 0.0
  %1422 = vmatpush1.xpose.msra.mxu0 0.0
  %1423 = vmatprep.subr.mxu0 0.0
  %1424 = vmatpush1.xpose.msra.mxu0 0.0
  %1425 = vmatprep.subr.mxu0 0.0
  %1426 = vmatpush1.xpose.msra.mxu0 0.0
  %1427 = vmatprep.subr.mxu0 0.0
  %1428 = vmatpush1.xpose.msra.mxu0 0.0
  %1429 = vmatprep.subr.mxu0 0.0
  %1430 = vmatpush1.xpose.msra.mxu0 0.0
  %1431 = vmatprep.subr.mxu0 0.0
  %1432 = vmatpush1.xpose.msra.mxu0 0.0
  %1433 = vmatprep.subr.mxu0 0.0
  %1434 = vmatpush1.xpose.msra.mxu0 0.0
  %1435 = vmatprep.subr.mxu0 0.0
  %1436 = vmatpush1.xpose.msra.mxu0 0.0
  %1437 = vmatprep.subr.mxu0 0.0
  %1438 = vmatpush1.xpose.msra.mxu0 0.0
  %1439 = vmatprep.subr.mxu0 0.0
  %1440 = vmatpush1.xpose.msra.mxu0 0.0
  %1441 = vmatprep.mubr.f32.mxu0 0.0
  %1442 = vmatmul.mubr.f32.gmra.mrb[0].mxu0 %v1351
  %v1443 = vpop.f32.mrb[0].mxu0
  %v1444 = vadd.f32 0.0, %v1443
  %v1445 = vpop.f32.mrb[0].mxu0
  %1446 = vdwg.mxu0
  %v1447 = vsel %vm998, %v310, 0
  %v1450 = vsel %vm998, %v1327, 0
  %v1453 = vsel %vm998, %v1328, 0
  %v1456 = vsel %vm998, %v1329, 0
  %v1459 = vsel %vm998, %v1330, 0
  %v1462 = vsel %vm998, %v1331, 0
  %v1465 = vsel %vm998, %v1332, 0
  %v1468 = vsel %vm998, %v1333, 0
  %v1471 = vsel %vm998, %v1334, 0
  %1473 = vmatprep.subr.mxu0 0.0
  %1474 = vmatpush1.xpose.msra.mxu0 %v1450
  %1475 = vmatprep.subr.mxu0 0.0
  %1476 = vmatpush1.xpose.msra.mxu0 %v1453
  %1477 = vmatprep.subr.mxu0 0.0
  %1478 = vmatpush1.xpose.msra.mxu0 %v1456
  %1479 = vmatprep.subr.mxu0 0.0
  %1480 = vmatpush1.xpose.msra.mxu0 %v1459
  %1481 = vmatprep.subr.mxu0 0.0
  %1482 = vmatpush1.xpose.msra.mxu0 %v1462
  %1483 = vmatprep.subr.mxu0 0.0
  %1484 = vmatpush1.xpose.msra.mxu0 %v1465
  %1485 = vmatprep.subr.mxu0 0.0
  %1486 = vmatpush1.xpose.msra.mxu0 %v1468
  %1487 = vmatprep.subr.mxu0 0.0
  %1488 = vmatpush1.xpose.msra.mxu0 %v1471
  %1489 = vmatprep.subr.mxu0 0.0
  %1490 = vmatpush1.xpose.msra.mxu0 0.0
  %1491 = vmatprep.subr.mxu0 0.0
  %1492 = vmatpush1.xpose.msra.mxu0 0.0
  %1493 = vmatprep.subr.mxu0 0.0
  %1494 = vmatpush1.xpose.msra.mxu0 0.0
  %1495 = vmatprep.subr.mxu0 0.0
  %1496 = vmatpush1.xpose.msra.mxu0 0.0
  %1497 = vmatprep.subr.mxu0 0.0
  %1498 = vmatpush1.xpose.msra.mxu0 0.0
  %1499 = vmatprep.subr.mxu0 0.0
  %1500 = vmatpush1.xpose.msra.mxu0 0.0
  %1501 = vmatprep.subr.mxu0 0.0
  %1502 = vmatpush1.xpose.msra.mxu0 0.0
  %1503 = vmatprep.subr.mxu0 0.0
  %1504 = vmatpush1.xpose.msra.mxu0 0.0
  %1505 = vmatprep.subr.mxu0 0.0
  %1506 = vmatpush1.xpose.msra.mxu0 0.0
  %1507 = vmatprep.subr.mxu0 0.0
  %1508 = vmatpush1.xpose.msra.mxu0 0.0
  %1509 = vmatprep.subr.mxu0 0.0
  %1510 = vmatpush1.xpose.msra.mxu0 0.0
  %1511 = vmatprep.subr.mxu0 0.0
  %1512 = vmatpush1.xpose.msra.mxu0 0.0
  %1513 = vmatprep.subr.mxu0 0.0
  %1514 = vmatpush1.xpose.msra.mxu0 0.0
  %1515 = vmatprep.subr.mxu0 0.0
  %1516 = vmatpush1.xpose.msra.mxu0 0.0
  %1517 = vmatprep.subr.mxu0 0.0
  %1518 = vmatpush1.xpose.msra.mxu0 0.0
  %1519 = vmatprep.subr.mxu0 0.0
  %1520 = vmatpush1.xpose.msra.mxu0 0.0
  %1521 = vmatprep.subr.mxu0 0.0
  %1522 = vmatpush1.xpose.msra.mxu0 0.0
  %1523 = vmatprep.subr.mxu0 0.0
  %1524 = vmatpush1.xpose.msra.mxu0 0.0
  %1525 = vmatprep.subr.mxu0 0.0
  %1526 = vmatpush1.xpose.msra.mxu0 0.0
  %1527 = vmatprep.subr.mxu0 0.0
  %1528 = vmatpush1.xpose.msra.mxu0 0.0
  %1529 = vmatprep.subr.mxu0 0.0
  %1530 = vmatpush1.xpose.msra.mxu0 0.0
  %1531 = vmatprep.subr.mxu0 0.0
  %1532 = vmatpush1.xpose.msra.mxu0 0.0
  %1533 = vmatprep.subr.mxu0 0.0
  %1534 = vmatpush1.xpose.msra.mxu0 0.0
  %1535 = vmatprep.subr.mxu0 0.0
  %1536 = vmatpush1.xpose.msra.mxu0 0.0
  %1537 = vmatprep.mubr.f32.mxu0 0.0
  %1538 = vmatmul.mubr.f32.gmra.mrb[0].mxu0 %v1447
  %v1539 = vpop.f32.mrb[0].mxu0
  %v1540 = vadd.f32 0.0, %v1539
  %v1541 = vpop.f32.mrb[0].mxu0
  %1542 = vdwg.mxu0
  %v1543 = vsel %vm998, %v309, 0
  %v1546 = vsel %vm998, %v1335, 0
  %v1549 = vsel %vm998, %v1336, 0
  %v1552 = vsel %vm998, %v1337, 0
  %v1555 = vsel %vm998, %v1338, 0
  %v1558 = vsel %vm998, %v1339, 0
  %v1561 = vsel %vm998, %v1340, 0
  %v1564 = vsel %vm998, %v1341, 0
  %v1567 = vsel %vm998, %v1342, 0
  %1569 = vmatprep.subr.mxu0 0.0
  %1570 = vmatpush1.xpose.msra.mxu0 %v1546
  %1571 = vmatprep.subr.mxu0 0.0
  %1572 = vmatpush1.xpose.msra.mxu0 %v1549
  %1573 = vmatprep.subr.mxu0 0.0
  %1574 = vmatpush1.xpose.msra.mxu0 %v1552
  %1575 = vmatprep.subr.mxu0 0.0
  %1576 = vmatpush1.xpose.msra.mxu0 %v1555
  %1577 = vmatprep.subr.mxu0 0.0
  %1578 = vmatpush1.xpose.msra.mxu0 %v1558
  %1579 = vmatprep.subr.mxu0 0.0
  %1580 = vmatpush1.xpose.msra.mxu0 %v1561
  %1581 = vmatprep.subr.mxu0 0.0
  %1582 = vmatpush1.xpose.msra.mxu0 %v1564
  %1583 = vmatprep.subr.mxu0 0.0
  %1584 = vmatpush1.xpose.msra.mxu0 %v1567
  %1585 = vmatprep.subr.mxu0 0.0
  %1586 = vmatpush1.xpose.msra.mxu0 0.0
  %1587 = vmatprep.subr.mxu0 0.0
  %1588 = vmatpush1.xpose.msra.mxu0 0.0
  %1589 = vmatprep.subr.mxu0 0.0
  %1590 = vmatpush1.xpose.msra.mxu0 0.0
  %1591 = vmatprep.subr.mxu0 0.0
  %1592 = vmatpush1.xpose.msra.mxu0 0.0
  %1593 = vmatprep.subr.mxu0 0.0
  %1594 = vmatpush1.xpose.msra.mxu0 0.0
  %1595 = vmatprep.subr.mxu0 0.0
  %1596 = vmatpush1.xpose.msra.mxu0 0.0
  %1597 = vmatprep.subr.mxu0 0.0
  %1598 = vmatpush1.xpose.msra.mxu0 0.0
  %1599 = vmatprep.subr.mxu0 0.0
  %1600 = vmatpush1.xpose.msra.mxu0 0.0
  %1601 = vmatprep.subr.mxu0 0.0
  %1602 = vmatpush1.xpose.msra.mxu0 0.0
  %1603 = vmatprep.subr.mxu0 0.0
  %1604 = vmatpush1.xpose.msra.mxu0 0.0
  %1605 = vmatprep.subr.mxu0 0.0
  %1606 = vmatpush1.xpose.msra.mxu0 0.0
  %1607 = vmatprep.subr.mxu0 0.0
  %1608 = vmatpush1.xpose.msra.mxu0 0.0
  %1609 = vmatprep.subr.mxu0 0.0
  %1610 = vmatpush1.xpose.msra.mxu0 0.0
  %1611 = vmatprep.subr.mxu0 0.0
  %1612 = vmatpush1.xpose.msra.mxu0 0.0
  %1613 = vmatprep.subr.mxu0 0.0
  %1614 = vmatpush1.xpose.msra.mxu0 0.0
  %1615 = vmatprep.subr.mxu0 0.0
  %1616 = vmatpush1.xpose.msra.mxu0 0.0
  %1617 = vmatprep.subr.mxu0 0.0
  %1618 = vmatpush1.xpose.msra.mxu0 0.0
  %1619 = vmatprep.subr.mxu0 0.0
  %1620 = vmatpush1.xpose.msra.mxu0 0.0
  %1621 = vmatprep.subr.mxu0 0.0
  %1622 = vmatpush1.xpose.msra.mxu0 0.0
  %1623 = vmatprep.subr.mxu0 0.0
  %1624 = vmatpush1.xpose.msra.mxu0 0.0
  %1625 = vmatprep.subr.mxu0 0.0
  %1626 = vmatpush1.xpose.msra.mxu0 0.0
  %1627 = vmatprep.subr.mxu0 0.0
  %1628 = vmatpush1.xpose.msra.mxu0 0.0
  %1629 = vmatprep.subr.mxu0 0.0
  %1630 = vmatpush1.xpose.msra.mxu0 0.0
  %1631 = vmatprep.subr.mxu0 0.0
  %1632 = vmatpush1.xpose.msra.mxu0 0.0
  %1633 = vmatprep.mubr.f32.mxu0 0.0
  %1634 = vmatmul.mubr.f32.gmra.mrb[0].mxu0 %v1543
  %v1635 = vpop.f32.mrb[0].mxu0
  %v1636 = vadd.f32 0.0, %v1635
  %v1637 = vpop.f32.mrb[0].mxu0
  %1638 = vdwg.mxu0
  %v1639 = vsel %vm998, %v311, 0
  %v1642 = vsel %vm998, %v1343, 0
  %v1645 = vsel %vm998, %v1344, 0
  %v1648 = vsel %vm998, %v1345, 0
  %v1651 = vsel %vm998, %v1346, 0
  %v1654 = vsel %vm998, %v1347, 0
  %v1657 = vsel %vm998, %v1348, 0
  %v1660 = vsel %vm998, %v1349, 0
  %v1663 = vsel %vm998, %v1350, 0
  %1665 = vmatprep.subr.mxu0 0.0
  %1666 = vmatpush1.xpose.msra.mxu0 %v1642
  %1667 = vmatprep.subr.mxu0 0.0
  %1668 = vmatpush1.xpose.msra.mxu0 %v1645
  %1669 = vmatprep.subr.mxu0 0.0
  %1670 = vmatpush1.xpose.msra.mxu0 %v1648
  %1671 = vmatprep.subr.mxu0 0.0
  %1672 = vmatpush1.xpose.msra.mxu0 %v1651
  %1673 = vmatprep.subr.mxu0 0.0
  %1674 = vmatpush1.xpose.msra.mxu0 %v1654
  %1675 = vmatprep.subr.mxu0 0.0
  %1676 = vmatpush1.xpose.msra.mxu0 %v1657
  %1677 = vmatprep.subr.mxu0 0.0
  %1678 = vmatpush1.xpose.msra.mxu0 %v1660
  %1679 = vmatprep.subr.mxu0 0.0
  %1680 = vmatpush1.xpose.msra.mxu0 %v1663
  %1681 = vmatprep.subr.mxu0 0.0
  %1682 = vmatpush1.xpose.msra.mxu0 0.0
  %1683 = vmatprep.subr.mxu0 0.0
  %1684 = vmatpush1.xpose.msra.mxu0 0.0
  %1685 = vmatprep.subr.mxu0 0.0
  %1686 = vmatpush1.xpose.msra.mxu0 0.0
  %1687 = vmatprep.subr.mxu0 0.0
  %1688 = vmatpush1.xpose.msra.mxu0 0.0
  %1689 = vmatprep.subr.mxu0 0.0
  %1690 = vmatpush1.xpose.msra.mxu0 0.0
  %1691 = vmatprep.subr.mxu0 0.0
  %1692 = vmatpush1.xpose.msra.mxu0 0.0
  %1693 = vmatprep.subr.mxu0 0.0
  %1694 = vmatpush1.xpose.msra.mxu0 0.0
  %1695 = vmatprep.subr.mxu0 0.0
  %1696 = vmatpush1.xpose.msra.mxu0 0.0
  %1697 = vmatprep.subr.mxu0 0.0
  %1698 = vmatpush1.xpose.msra.mxu0 0.0
  %1699 = vmatprep.subr.mxu0 0.0
  %1700 = vmatpush1.xpose.msra.mxu0 0.0
  %1701 = vmatprep.subr.mxu0 0.0
  %1702 = vmatpush1.xpose.msra.mxu0 0.0
  %1703 = vmatprep.subr.mxu0 0.0
  %1704 = vmatpush1.xpose.msra.mxu0 0.0
  %1705 = vmatprep.subr.mxu0 0.0
  %1706 = vmatpush1.xpose.msra.mxu0 0.0
  %1707 = vmatprep.subr.mxu0 0.0
  %1708 = vmatpush1.xpose.msra.mxu0 0.0
  %1709 = vmatprep.subr.mxu0 0.0
  %1710 = vmatpush1.xpose.msra.mxu0 0.0
  %1711 = vmatprep.subr.mxu0 0.0
  %1712 = vmatpush1.xpose.msra.mxu0 0.0
  %1713 = vmatprep.subr.mxu0 0.0
  %1714 = vmatpush1.xpose.msra.mxu0 0.0
  %1715 = vmatprep.subr.mxu0 0.0
  %1716 = vmatpush1.xpose.msra.mxu0 0.0
  %1717 = vmatprep.subr.mxu0 0.0
  %1718 = vmatpush1.xpose.msra.mxu0 0.0
  %1719 = vmatprep.subr.mxu0 0.0
  %1720 = vmatpush1.xpose.msra.mxu0 0.0
  %1721 = vmatprep.subr.mxu0 0.0
  %1722 = vmatpush1.xpose.msra.mxu0 0.0
  %1723 = vmatprep.subr.mxu0 0.0
  %1724 = vmatpush1.xpose.msra.mxu0 0.0
  %1725 = vmatprep.subr.mxu0 0.0
  %1726 = vmatpush1.xpose.msra.mxu0 0.0
  %1727 = vmatprep.subr.mxu0 0.0
  %1728 = vmatpush1.xpose.msra.mxu0 0.0
  %1729 = vmatprep.mubr.f32.mxu0 0.0
  %1730 = vmatmul.mubr.f32.gmra.mrb[0].mxu0 %v1639
  %v1731 = vpop.f32.mrb[0].mxu0
  %v1732 = vadd.f32 0.0, %v1731
  %v1733 = vpop.f32.mrb[0].mxu0
  %1734 = vdwg.mxu0
  %v1736 = vunpack.c.l.s4 1983009808
  %v1737 = vunpack.c.0.s8 %v1736
  %v1738 = vlaneseq
  %v1739 = vshrl.u32 %v1738, 7
  %v1740 = vsub.s32 %v1737, %v1739
  %v1741 = vrot.slane %v262, %v1740
  %1742 = vrot.lane.b32.xlu0 %v1741, 64
  %v1743 = vpop.permute.xlu0 %1742
  %1745 = vxpose.xlu0.b32.start [1/16] %v1743, 128
  %1746 = vxpose.xlu0.b32.cont [2/16] 0.0, 128
  %1747 = vxpose.xlu0.b32.cont [3/16] 0.0, 128
  %1748 = vxpose.xlu0.b32.cont [4/16] 0.0, 128
  %1749 = vxpose.xlu0.b32.cont [5/16] 0.0, 128
  %1750 = vxpose.xlu0.b32.cont [6/16] 0.0, 128
  %1751 = vxpose.xlu0.b32.cont [7/16] 0.0, 128
  %1752 = vxpose.xlu0.b32.cont [8/16] 0.0, 128
  %1753 = vxpose.xlu0.b32.cont [9/16] 0.0, 128
  %1754 = vxpose.xlu0.b32.cont [10/16] 0.0, 128
  %1755 = vxpose.xlu0.b32.cont [11/16] 0.0, 128
  %1756 = vxpose.xlu0.b32.cont [12/16] 0.0, 128
  %1757 = vxpose.xlu0.b32.cont [13/16] 0.0, 128
  %1758 = vxpose.xlu0.b32.cont [14/16] 0.0, 128
  %1759 = vxpose.xlu0.b32.cont [15/16] 0.0, 128
  %1760 = vxpose.xlu0.b32.end [16/16] 0.0, 128
  %v1761 = vpop.trf.xlu0
  %v1762 = vpop.trf.xlu0
  %v1763 = vpop.trf.xlu0
  %v1764 = vpop.trf.xlu0
  %v1765 = vpop.trf.xlu0
  %v1766 = vpop.trf.xlu0
  %v1767 = vpop.trf.xlu0
  %v1768 = vpop.trf.xlu0
  %v1769 = vpop.trf.xlu0
  %v1770 = vpop.trf.xlu0
  %v1771 = vpop.trf.xlu0
  %v1772 = vpop.trf.xlu0
  %v1773 = vpop.trf.xlu0
  %v1774 = vpop.trf.xlu0
  %v1775 = vpop.trf.xlu0
  %v1776 = vpop.trf.xlu0
  %v1778 = vunpack.c.l.s4 1983009808
  %v1779 = vunpack.c.0.s8 %v1778
  %v1780 = vlaneseq
  %v1781 = vshrl.u32 %v1780, 7
  %v1782 = vsub.s32 %v1779, %v1781
  %v1783 = vrot.slane %v284, %v1782
  %1784 = vrot.lane.b32.xlu0 %v1783, 64
  %v1785 = vpop.permute.xlu0 %1784
  %v1787 = vsel %vm344, %v1761, 0
  %v1790 = vsel %vm344, %v1762, 0
  %v1793 = vsel %vm344, %v1763, 0
  %v1796 = vsel %vm344, %v1764, 0
  %v1799 = vsel %vm344, %v1765, 0
  %v1802 = vsel %vm344, %v1766, 0
  %v1805 = vsel %vm344, %v1767, 0
  %v1808 = vsel %vm344, %v1768, 0
  %v1810 = vsel %vm369, %v1785, 0
  %1812 = vmatprep.subr.mxu0 0.0
  %1813 = vmatpush1.msra.mxu0 %v1810
  %1814 = vmatprep.subr.mxu0 0.0
  %1815 = vmatpush1.msra.mxu0 0.0
  %1816 = vmatprep.subr.mxu0 0.0
  %1817 = vmatpush1.msra.mxu0 0.0
  %1818 = vmatprep.subr.mxu0 0.0
  %1819 = vmatpush1.msra.mxu0 0.0
  %1820 = vmatprep.subr.mxu0 0.0
  %1821 = vmatpush1.msra.mxu0 0.0
  %1822 = vmatprep.subr.mxu0 0.0
  %1823 = vmatpush1.msra.mxu0 0.0
  %1824 = vmatprep.subr.mxu0 0.0
  %1825 = vmatpush1.msra.mxu0 0.0
  %1826 = vmatprep.subr.mxu0 0.0
  %1827 = vmatpush1.msra.mxu0 0.0
  %1828 = vmatprep.subr.mxu0 0.0
  %1829 = vmatpush1.msra.mxu0 0.0
  %1830 = vmatprep.subr.mxu0 0.0
  %1831 = vmatpush1.msra.mxu0 0.0
  %1832 = vmatprep.subr.mxu0 0.0
  %1833 = vmatpush1.msra.mxu0 0.0
  %1834 = vmatprep.subr.mxu0 0.0
  %1835 = vmatpush1.msra.mxu0 0.0
  %1836 = vmatprep.subr.mxu0 0.0
  %1837 = vmatpush1.msra.mxu0 0.0
  %1838 = vmatprep.subr.mxu0 0.0
  %1839 = vmatpush1.msra.mxu0 0.0
  %1840 = vmatprep.subr.mxu0 0.0
  %1841 = vmatpush1.msra.mxu0 0.0
  %1842 = vmatprep.subr.mxu0 0.0
  %1843 = vmatpush1.msra.mxu0 0.0
  %1844 = vmatprep.subr.mxu0 0.0
  %1845 = vmatpush1.msra.mxu0 0.0
  %1846 = vmatprep.subr.mxu0 0.0
  %1847 = vmatpush1.msra.mxu0 0.0
  %1848 = vmatprep.subr.mxu0 0.0
  %1849 = vmatpush1.msra.mxu0 0.0
  %1850 = vmatprep.subr.mxu0 0.0
  %1851 = vmatpush1.msra.mxu0 0.0
  %1852 = vmatprep.subr.mxu0 0.0
  %1853 = vmatpush1.msra.mxu0 0.0
  %1854 = vmatprep.subr.mxu0 0.0
  %1855 = vmatpush1.msra.mxu0 0.0
  %1856 = vmatprep.subr.mxu0 0.0
  %1857 = vmatpush1.msra.mxu0 0.0
  %1858 = vmatprep.subr.mxu0 0.0
  %1859 = vmatpush1.msra.mxu0 0.0
  %1860 = vmatprep.subr.mxu0 0.0
  %1861 = vmatpush1.msra.mxu0 0.0
  %1862 = vmatprep.subr.mxu0 0.0
  %1863 = vmatpush1.msra.mxu0 0.0
  %1864 = vmatprep.subr.mxu0 0.0
  %1865 = vmatpush1.msra.mxu0 0.0
  %1866 = vmatprep.subr.mxu0 0.0
  %1867 = vmatpush1.msra.mxu0 0.0
  %1868 = vmatprep.subr.mxu0 0.0
  %1869 = vmatpush1.msra.mxu0 0.0
  %1870 = vmatprep.subr.mxu0 0.0
  %1871 = vmatpush1.msra.mxu0 0.0
  %1872 = vmatprep.subr.mxu0 0.0
  %1873 = vmatpush1.msra.mxu0 0.0
  %1874 = vmatprep.subr.mxu0 0.0
  %1875 = vmatpush1.msra.mxu0 0.0
  %1876 = vmatprep.mubr.f32.mxu0 0.0
  %1877 = vmatmul.mubr.f32.gmra.mrb[0].mxu0 %v1787
  %v1878 = vpop.f32.mrb[0].mxu0
  %v1879 = vadd.f32 0.0, %v1878
  %v1880 = vpop.f32.mrb[0].mxu0
  %1881 = vmatprep.mubr.f32.mxu0 0.0
  %1882 = vmatmul.mubr.f32.gmra.mrb[0].mxu0 %v1790
  %v1883 = vpop.f32.mrb[0].mxu0
  %v1884 = vadd.f32 0.0, %v1883
  %v1885 = vpop.f32.mrb[0].mxu0
  %1886 = vmatprep.mubr.f32.mxu0 0.0
  %1887 = vmatmul.mubr.f32.gmra.mrb[0].mxu0 %v1793
  %v1888 = vpop.f32.mrb[0].mxu0
  %v1889 = vadd.f32 0.0, %v1888
  %v1890 = vpop.f32.mrb[0].mxu0
  %1891 = vmatprep.mubr.f32.mxu0 0.0
  %1892 = vmatmul.mubr.f32.gmra.mrb[0].mxu0 %v1796
  %v1893 = vpop.f32.mrb[0].mxu0
  %v1894 = vadd.f32 0.0, %v1893
  %v1895 = vpop.f32.mrb[0].mxu0
  %1896 = vmatprep.mubr.f32.mxu0 0.0
  %1897 = vmatmul.mubr.f32.gmra.mrb[0].mxu0 %v1799
  %v1898 = vpop.f32.mrb[0].mxu0
  %v1899 = vadd.f32 0.0, %v1898
  %v1900 = vpop.f32.mrb[0].mxu0
  %1901 = vmatprep.mubr.f32.mxu0 0.0
  %1902 = vmatmul.mubr.f32.gmra.mrb[0].mxu0 %v1802
  %v1903 = vpop.f32.mrb[0].mxu0
  %v1904 = vadd.f32 0.0, %v1903
  %v1905 = vpop.f32.mrb[0].mxu0
  %1906 = vmatprep.mubr.f32.mxu0 0.0
  %1907 = vmatmul.mubr.f32.gmra.mrb[0].mxu0 %v1805
  %v1908 = vpop.f32.mrb[0].mxu0
  %v1909 = vadd.f32 0.0, %v1908
  %v1910 = vpop.f32.mrb[0].mxu0
  %1911 = vmatprep.mubr.f32.mxu0 0.0
  %1912 = vmatmul.mubr.f32.gmra.mrb[0].mxu0 %v1808
  %v1913 = vpop.f32.mrb[0].mxu0
  %v1914 = vadd.f32 0.0, %v1913
  %v1915 = vpop.f32.mrb[0].mxu0
  %1916 = vdwg.mxu0
  %v1918 = vunpack.c.l.s4 1983009808
  %v1919 = vunpack.c.0.s8 %v1918
  %v1920 = vlaneseq
  %v1921 = vshrl.u32 %v1920, 7
  %v1922 = vsub.s32 %v1919, %v1921
  %v1923 = vrot.slane %v270, %v1922
  %1924 = vrot.lane.b32.xlu0 %v1923, 64
  %v1925 = vpop.permute.xlu0 %1924
  %1927 = vxpose.xlu0.b32.start [1/16] %v1925, 128
  %1928 = vxpose.xlu0.b32.cont [2/16] 0.0, 128
  %1929 = vxpose.xlu0.b32.cont [3/16] 0.0, 128
  %1930 = vxpose.xlu0.b32.cont [4/16] 0.0, 128
  %1931 = vxpose.xlu0.b32.cont [5/16] 0.0, 128
  %1932 = vxpose.xlu0.b32.cont [6/16] 0.0, 128
  %1933 = vxpose.xlu0.b32.cont [7/16] 0.0, 128
  %1934 = vxpose.xlu0.b32.cont [8/16] 0.0, 128
  %1935 = vxpose.xlu0.b32.cont [9/16] 0.0, 128
  %1936 = vxpose.xlu0.b32.cont [10/16] 0.0, 128
  %1937 = vxpose.xlu0.b32.cont [11/16] 0.0, 128
  %1938 = vxpose.xlu0.b32.cont [12/16] 0.0, 128
  %1939 = vxpose.xlu0.b32.cont [13/16] 0.0, 128
  %1940 = vxpose.xlu0.b32.cont [14/16] 0.0, 128
  %1941 = vxpose.xlu0.b32.cont [15/16] 0.0, 128
  %1942 = vxpose.xlu0.b32.end [16/16] 0.0, 128
  %v1943 = vpop.trf.xlu0
  %v1944 = vpop.trf.xlu0
  %v1945 = vpop.trf.xlu0
  %v1946 = vpop.trf.xlu0
  %v1947 = vpop.trf.xlu0
  %v1948 = vpop.trf.xlu0
  %v1949 = vpop.trf.xlu0
  %v1950 = vpop.trf.xlu0
  %v1951 = vpop.trf.xlu0
  %v1952 = vpop.trf.xlu0
  %v1953 = vpop.trf.xlu0
  %v1954 = vpop.trf.xlu0
  %v1955 = vpop.trf.xlu0
  %v1956 = vpop.trf.xlu0
  %v1957 = vpop.trf.xlu0
  %v1958 = vpop.trf.xlu0
  %v1960 = vunpack.c.l.s4 1983009808
  %v1961 = vunpack.c.0.s8 %v1960
  %v1962 = vlaneseq
  %v1963 = vshrl.u32 %v1962, 7
  %v1964 = vsub.s32 %v1961, %v1963
  %v1965 = vrot.slane %v292, %v1964
  %1966 = vrot.lane.b32.xlu0 %v1965, 64
  %v1967 = vpop.permute.xlu0 %1966
  %v1969 = vsel %vm344, %v1943, 0
  %v1972 = vsel %vm344, %v1944, 0
  %v1975 = vsel %vm344, %v1945, 0
  %v1978 = vsel %vm344, %v1946, 0
  %v1981 = vsel %vm344, %v1947, 0
  %v1984 = vsel %vm344, %v1948, 0
  %v1987 = vsel %vm344, %v1949, 0
  %v1990 = vsel %vm344, %v1950, 0
  %v1992 = vsel %vm369, %v1967, 0
  %1994 = vmatprep.subr.mxu0 0.0
  %1995 = vmatpush1.msra.mxu0 %v1992
  %1996 = vmatprep.subr.mxu0 0.0
  %1997 = vmatpush1.msra.mxu0 0.0
  %1998 = vmatprep.subr.mxu0 0.0
  %1999 = vmatpush1.msra.mxu0 0.0
  %2000 = vmatprep.subr.mxu0 0.0
  %2001 = vmatpush1.msra.mxu0 0.0
  %2002 = vmatprep.subr.mxu0 0.0
  %2003 = vmatpush1.msra.mxu0 0.0
  %2004 = vmatprep.subr.mxu0 0.0
  %2005 = vmatpush1.msra.mxu0 0.0
  %2006 = vmatprep.subr.mxu0 0.0
  %2007 = vmatpush1.msra.mxu0 0.0
  %2008 = vmatprep.subr.mxu0 0.0
  %2009 = vmatpush1.msra.mxu0 0.0
  %2010 = vmatprep.subr.mxu0 0.0
  %2011 = vmatpush1.msra.mxu0 0.0
  %2012 = vmatprep.subr.mxu0 0.0
  %2013 = vmatpush1.msra.mxu0 0.0
  %2014 = vmatprep.subr.mxu0 0.0
  %2015 = vmatpush1.msra.mxu0 0.0
  %2016 = vmatprep.subr.mxu0 0.0
  %2017 = vmatpush1.msra.mxu0 0.0
  %2018 = vmatprep.subr.mxu0 0.0
  %2019 = vmatpush1.msra.mxu0 0.0
  %2020 = vmatprep.subr.mxu0 0.0
  %2021 = vmatpush1.msra.mxu0 0.0
  %2022 = vmatprep.subr.mxu0 0.0
  %2023 = vmatpush1.msra.mxu0 0.0
  %2024 = vmatprep.subr.mxu0 0.0
  %2025 = vmatpush1.msra.mxu0 0.0
  %2026 = vmatprep.subr.mxu0 0.0
  %2027 = vmatpush1.msra.mxu0 0.0
  %2028 = vmatprep.subr.mxu0 0.0
  %2029 = vmatpush1.msra.mxu0 0.0
  %2030 = vmatprep.subr.mxu0 0.0
  %2031 = vmatpush1.msra.mxu0 0.0
  %2032 = vmatprep.subr.mxu0 0.0
  %2033 = vmatpush1.msra.mxu0 0.0
  %2034 = vmatprep.subr.mxu0 0.0
  %2035 = vmatpush1.msra.mxu0 0.0
  %2036 = vmatprep.subr.mxu0 0.0
  %2037 = vmatpush1.msra.mxu0 0.0
  %2038 = vmatprep.subr.mxu0 0.0
  %2039 = vmatpush1.msra.mxu0 0.0
  %2040 = vmatprep.subr.mxu0 0.0
  %2041 = vmatpush1.msra.mxu0 0.0
  %2042 = vmatprep.subr.mxu0 0.0
  %2043 = vmatpush1.msra.mxu0 0.0
  %2044 = vmatprep.subr.mxu0 0.0
  %2045 = vmatpush1.msra.mxu0 0.0
  %2046 = vmatprep.subr.mxu0 0.0
  %2047 = vmatpush1.msra.mxu0 0.0
  %2048 = vmatprep.subr.mxu0 0.0
  %2049 = vmatpush1.msra.mxu0 0.0
  %2050 = vmatprep.subr.mxu0 0.0
  %2051 = vmatpush1.msra.mxu0 0.0
  %2052 = vmatprep.subr.mxu0 0.0
  %2053 = vmatpush1.msra.mxu0 0.0
  %2054 = vmatprep.subr.mxu0 0.0
  %2055 = vmatpush1.msra.mxu0 0.0
  %2056 = vmatprep.subr.mxu0 0.0
  %2057 = vmatpush1.msra.mxu0 0.0
  %2058 = vmatprep.mubr.f32.mxu0 0.0
  %2059 = vmatmul.mubr.f32.gmra.mrb[0].mxu0 %v1969
  %v2060 = vpop.f32.mrb[0].mxu0
  %v2061 = vadd.f32 0.0, %v2060
  %v2062 = vpop.f32.mrb[0].mxu0
  %2063 = vmatprep.mubr.f32.mxu0 0.0
  %2064 = vmatmul.mubr.f32.gmra.mrb[0].mxu0 %v1972
  %v2065 = vpop.f32.mrb[0].mxu0
  %v2066 = vadd.f32 0.0, %v2065
  %v2067 = vpop.f32.mrb[0].mxu0
  %2068 = vmatprep.mubr.f32.mxu0 0.0
  %2069 = vmatmul.mubr.f32.gmra.mrb[0].mxu0 %v1975
  %v2070 = vpop.f32.mrb[0].mxu0
  %v2071 = vadd.f32 0.0, %v2070
  %v2072 = vpop.f32.mrb[0].mxu0
  %2073 = vmatprep.mubr.f32.mxu0 0.0
  %2074 = vmatmul.mubr.f32.gmra.mrb[0].mxu0 %v1978
  %v2075 = vpop.f32.mrb[0].mxu0
  %v2076 = vadd.f32 0.0, %v2075
  %v2077 = vpop.f32.mrb[0].mxu0
  %2078 = vmatprep.mubr.f32.mxu0 0.0
  %2079 = vmatmul.mubr.f32.gmra.mrb[0].mxu0 %v1981
  %v2080 = vpop.f32.mrb[0].mxu0
  %v2081 = vadd.f32 0.0, %v2080
  %v2082 = vpop.f32.mrb[0].mxu0
  %2083 = vmatprep.mubr.f32.mxu0 0.0
  %2084 = vmatmul.mubr.f32.gmra.mrb[0].mxu0 %v1984
  %v2085 = vpop.f32.mrb[0].mxu0
  %v2086 = vadd.f32 0.0, %v2085
  %v2087 = vpop.f32.mrb[0].mxu0
  %2088 = vmatprep.mubr.f32.mxu0 0.0
  %2089 = vmatmul.mubr.f32.gmra.mrb[0].mxu0 %v1987
  %v2090 = vpop.f32.mrb[0].mxu0
  %v2091 = vadd.f32 0.0, %v2090
  %v2092 = vpop.f32.mrb[0].mxu0
  %2093 = vmatprep.mubr.f32.mxu0 0.0
  %2094 = vmatmul.mubr.f32.gmra.mrb[0].mxu0 %v1990
  %v2095 = vpop.f32.mrb[0].mxu0
  %v2096 = vadd.f32 0.0, %v2095
  %v2097 = vpop.f32.mrb[0].mxu0
  %2098 = vdwg.mxu0
  %v2100 = vunpack.c.l.s4 1983009808
  %v2101 = vunpack.c.0.s8 %v2100
  %v2102 = vlaneseq
  %v2103 = vshrl.u32 %v2102, 7
  %v2104 = vsub.s32 %v2101, %v2103
  %v2105 = vrot.slane %v269, %v2104
  %2106 = vrot.lane.b32.xlu0 %v2105, 64
  %v2107 = vpop.permute.xlu0 %2106
  %2109 = vxpose.xlu0.b32.start [1/16] %v2107, 128
  %2110 = vxpose.xlu0.b32.cont [2/16] 0.0, 128
  %2111 = vxpose.xlu0.b32.cont [3/16] 0.0, 128
  %2112 = vxpose.xlu0.b32.cont [4/16] 0.0, 128
  %2113 = vxpose.xlu0.b32.cont [5/16] 0.0, 128
  %2114 = vxpose.xlu0.b32.cont [6/16] 0.0, 128
  %2115 = vxpose.xlu0.b32.cont [7/16] 0.0, 128
  %2116 = vxpose.xlu0.b32.cont [8/16] 0.0, 128
  %2117 = vxpose.xlu0.b32.cont [9/16] 0.0, 128
  %2118 = vxpose.xlu0.b32.cont [10/16] 0.0, 128
  %2119 = vxpose.xlu0.b32.cont [11/16] 0.0, 128
  %2120 = vxpose.xlu0.b32.cont [12/16] 0.0, 128
  %2121 = vxpose.xlu0.b32.cont [13/16] 0.0, 128
  %2122 = vxpose.xlu0.b32.cont [14/16] 0.0, 128
  %2123 = vxpose.xlu0.b32.cont [15/16] 0.0, 128
  %2124 = vxpose.xlu0.b32.end [16/16] 0.0, 128
  %v2125 = vpop.trf.xlu0
  %v2126 = vpop.trf.xlu0
  %v2127 = vpop.trf.xlu0
  %v2128 = vpop.trf.xlu0
  %v2129 = vpop.trf.xlu0
  %v2130 = vpop.trf.xlu0
  %v2131 = vpop.trf.xlu0
  %v2132 = vpop.trf.xlu0
  %v2133 = vpop.trf.xlu0
  %v2134 = vpop.trf.xlu0
  %v2135 = vpop.trf.xlu0
  %v2136 = vpop.trf.xlu0
  %v2137 = vpop.trf.xlu0
  %v2138 = vpop.trf.xlu0
  %v2139 = vpop.trf.xlu0
  %v2140 = vpop.trf.xlu0
  %v2142 = vunpack.c.l.s4 1983009808
  %v2143 = vunpack.c.0.s8 %v2142
  %v2144 = vlaneseq
  %v2145 = vshrl.u32 %v2144, 7
  %v2146 = vsub.s32 %v2143, %v2145
  %v2147 = vrot.slane %v291, %v2146
  %2148 = vrot.lane.b32.xlu0 %v2147, 64
  %v2149 = vpop.permute.xlu0 %2148
  %v2151 = vsel %vm344, %v2125, 0
  %v2154 = vsel %vm344, %v2126, 0
  %v2157 = vsel %vm344, %v2127, 0
  %v2160 = vsel %vm344, %v2128, 0
  %v2163 = vsel %vm344, %v2129, 0
  %v2166 = vsel %vm344, %v2130, 0
  %v2169 = vsel %vm344, %v2131, 0
  %v2172 = vsel %vm344, %v2132, 0
  %v2174 = vsel %vm369, %v2149, 0
  %2176 = vmatprep.subr.mxu0 0.0
  %2177 = vmatpush1.msra.mxu0 %v2174
  %2178 = vmatprep.subr.mxu0 0.0
  %2179 = vmatpush1.msra.mxu0 0.0
  %2180 = vmatprep.subr.mxu0 0.0
  %2181 = vmatpush1.msra.mxu0 0.0
  %2182 = vmatprep.subr.mxu0 0.0
  %2183 = vmatpush1.msra.mxu0 0.0
  %2184 = vmatprep.subr.mxu0 0.0
  %2185 = vmatpush1.msra.mxu0 0.0
  %2186 = vmatprep.subr.mxu0 0.0
  %2187 = vmatpush1.msra.mxu0 0.0
  %2188 = vmatprep.subr.mxu0 0.0
  %2189 = vmatpush1.msra.mxu0 0.0
  %2190 = vmatprep.subr.mxu0 0.0
  %2191 = vmatpush1.msra.mxu0 0.0
  %2192 = vmatprep.subr.mxu0 0.0
  %2193 = vmatpush1.msra.mxu0 0.0
  %2194 = vmatprep.subr.mxu0 0.0
  %2195 = vmatpush1.msra.mxu0 0.0
  %2196 = vmatprep.subr.mxu0 0.0
  %2197 = vmatpush1.msra.mxu0 0.0
  %2198 = vmatprep.subr.mxu0 0.0
  %2199 = vmatpush1.msra.mxu0 0.0
  %2200 = vmatprep.subr.mxu0 0.0
  %2201 = vmatpush1.msra.mxu0 0.0
  %2202 = vmatprep.subr.mxu0 0.0
  %2203 = vmatpush1.msra.mxu0 0.0
  %2204 = vmatprep.subr.mxu0 0.0
  %2205 = vmatpush1.msra.mxu0 0.0
  %2206 = vmatprep.subr.mxu0 0.0
  %2207 = vmatpush1.msra.mxu0 0.0
  %2208 = vmatprep.subr.mxu0 0.0
  %2209 = vmatpush1.msra.mxu0 0.0
  %2210 = vmatprep.subr.mxu0 0.0
  %2211 = vmatpush1.msra.mxu0 0.0
  %2212 = vmatprep.subr.mxu0 0.0
  %2213 = vmatpush1.msra.mxu0 0.0
  %2214 = vmatprep.subr.mxu0 0.0
  %2215 = vmatpush1.msra.mxu0 0.0
  %2216 = vmatprep.subr.mxu0 0.0
  %2217 = vmatpush1.msra.mxu0 0.0
  %2218 = vmatprep.subr.mxu0 0.0
  %2219 = vmatpush1.msra.mxu0 0.0
  %2220 = vmatprep.subr.mxu0 0.0
  %2221 = vmatpush1.msra.mxu0 0.0
  %2222 = vmatprep.subr.mxu0 0.0
  %2223 = vmatpush1.msra.mxu0 0.0
  %2224 = vmatprep.subr.mxu0 0.0
  %2225 = vmatpush1.msra.mxu0 0.0
  %2226 = vmatprep.subr.mxu0 0.0
  %2227 = vmatpush1.msra.mxu0 0.0
  %2228 = vmatprep.subr.mxu0 0.0
  %2229 = vmatpush1.msra.mxu0 0.0
  %2230 = vmatprep.subr.mxu0 0.0
  %2231 = vmatpush1.msra.mxu0 0.0
  %2232 = vmatprep.subr.mxu0 0.0
  %2233 = vmatpush1.msra.mxu0 0.0
  %2234 = vmatprep.subr.mxu0 0.0
  %2235 = vmatpush1.msra.mxu0 0.0
  %2236 = vmatprep.subr.mxu0 0.0
  %2237 = vmatpush1.msra.mxu0 0.0
  %2238 = vmatprep.subr.mxu0 0.0
  %2239 = vmatpush1.msra.mxu0 0.0
  %2240 = vmatprep.mubr.f32.mxu0 0.0
  %2241 = vmatmul.mubr.f32.gmra.mrb[0].mxu0 %v2151
  %v2242 = vpop.f32.mrb[0].mxu0
  %v2243 = vadd.f32 0.0, %v2242
  %v2244 = vpop.f32.mrb[0].mxu0
  %2245 = vmatprep.mubr.f32.mxu0 0.0
  %2246 = vmatmul.mubr.f32.gmra.mrb[0].mxu0 %v2154
  %v2247 = vpop.f32.mrb[0].mxu0
  %v2248 = vadd.f32 0.0, %v2247
  %v2249 = vpop.f32.mrb[0].mxu0
  %2250 = vmatprep.mubr.f32.mxu0 0.0
  %2251 = vmatmul.mubr.f32.gmra.mrb[0].mxu0 %v2157
  %v2252 = vpop.f32.mrb[0].mxu0
  %v2253 = vadd.f32 0.0, %v2252
  %v2254 = vpop.f32.mrb[0].mxu0
  %2255 = vmatprep.mubr.f32.mxu0 0.0
  %2256 = vmatmul.mubr.f32.gmra.mrb[0].mxu0 %v2160
  %v2257 = vpop.f32.mrb[0].mxu0
  %v2258 = vadd.f32 0.0, %v2257
  %v2259 = vpop.f32.mrb[0].mxu0
  %2260 = vmatprep.mubr.f32.mxu0 0.0
  %2261 = vmatmul.mubr.f32.gmra.mrb[0].mxu0 %v2163
  %v2262 = vpop.f32.mrb[0].mxu0
  %v2263 = vadd.f32 0.0, %v2262
  %v2264 = vpop.f32.mrb[0].mxu0
  %2265 = vmatprep.mubr.f32.mxu0 0.0
  %2266 = vmatmul.mubr.f32.gmra.mrb[0].mxu0 %v2166
  %v2267 = vpop.f32.mrb[0].mxu0
  %v2268 = vadd.f32 0.0, %v2267
  %v2269 = vpop.f32.mrb[0].mxu0
  %2270 = vmatprep.mubr.f32.mxu0 0.0
  %2271 = vmatmul.mubr.f32.gmra.mrb[0].mxu0 %v2169
  %v2272 = vpop.f32.mrb[0].mxu0
  %v2273 = vadd.f32 0.0, %v2272
  %v2274 = vpop.f32.mrb[0].mxu0
  %2275 = vmatprep.mubr.f32.mxu0 0.0
  %2276 = vmatmul.mubr.f32.gmra.mrb[0].mxu0 %v2172
  %v2277 = vpop.f32.mrb[0].mxu0
  %v2278 = vadd.f32 0.0, %v2277
  %v2279 = vpop.f32.mrb[0].mxu0
  %2280 = vdwg.mxu0
  %v2282 = vunpack.c.l.s4 1983009808
  %v2283 = vunpack.c.0.s8 %v2282
  %v2284 = vlaneseq
  %v2285 = vshrl.u32 %v2284, 7
  %v2286 = vsub.s32 %v2283, %v2285
  %v2287 = vrot.slane %v271, %v2286
  %2288 = vrot.lane.b32.xlu0 %v2287, 64
  %v2289 = vpop.permute.xlu0 %2288
  %2291 = vxpose.xlu0.b32.start [1/16] %v2289, 128
  %2292 = vxpose.xlu0.b32.cont [2/16] 0.0, 128
  %2293 = vxpose.xlu0.b32.cont [3/16] 0.0, 128
  %2294 = vxpose.xlu0.b32.cont [4/16] 0.0, 128
  %2295 = vxpose.xlu0.b32.cont [5/16] 0.0, 128
  %2296 = vxpose.xlu0.b32.cont [6/16] 0.0, 128
  %2297 = vxpose.xlu0.b32.cont [7/16] 0.0, 128
  %2298 = vxpose.xlu0.b32.cont [8/16] 0.0, 128
  %2299 = vxpose.xlu0.b32.cont [9/16] 0.0, 128
  %2300 = vxpose.xlu0.b32.cont [10/16] 0.0, 128
  %2301 = vxpose.xlu0.b32.cont [11/16] 0.0, 128
  %2302 = vxpose.xlu0.b32.cont [12/16] 0.0, 128
  %2303 = vxpose.xlu0.b32.cont [13/16] 0.0, 128
  %2304 = vxpose.xlu0.b32.cont [14/16] 0.0, 128
  %2305 = vxpose.xlu0.b32.cont [15/16] 0.0, 128
  %2306 = vxpose.xlu0.b32.end [16/16] 0.0, 128
  %v2307 = vpop.trf.xlu0
  %v2308 = vpop.trf.xlu0
  %v2309 = vpop.trf.xlu0
  %v2310 = vpop.trf.xlu0
  %v2311 = vpop.trf.xlu0
  %v2312 = vpop.trf.xlu0
  %v2313 = vpop.trf.xlu0
  %v2314 = vpop.trf.xlu0
  %v2315 = vpop.trf.xlu0
  %v2316 = vpop.trf.xlu0
  %v2317 = vpop.trf.xlu0
  %v2318 = vpop.trf.xlu0
  %v2319 = vpop.trf.xlu0
  %v2320 = vpop.trf.xlu0
  %v2321 = vpop.trf.xlu0
  %v2322 = vpop.trf.xlu0
  %v2324 = vunpack.c.l.s4 1983009808
  %v2325 = vunpack.c.0.s8 %v2324
  %v2326 = vlaneseq
  %v2327 = vshrl.u32 %v2326, 7
  %v2328 = vsub.s32 %v2325, %v2327
  %v2329 = vrot.slane %v293, %v2328
  %2330 = vrot.lane.b32.xlu0 %v2329, 64
  %v2331 = vpop.permute.xlu0 %2330
  %v2333 = vsel %vm344, %v2307, 0
  %v2336 = vsel %vm344, %v2308, 0
  %v2339 = vsel %vm344, %v2309, 0
  %v2342 = vsel %vm344, %v2310, 0
  %v2345 = vsel %vm344, %v2311, 0
  %v2348 = vsel %vm344, %v2312, 0
  %v2351 = vsel %vm344, %v2313, 0
  %v2354 = vsel %vm344, %v2314, 0
  %v2356 = vsel %vm369, %v2331, 0
  %2358 = vmatprep.subr.mxu0 0.0
  %2359 = vmatpush1.msra.mxu0 %v2356
  %2360 = vmatprep.subr.mxu0 0.0
  %2361 = vmatpush1.msra.mxu0 0.0
  %2362 = vmatprep.subr.mxu0 0.0
  %2363 = vmatpush1.msra.mxu0 0.0
  %2364 = vmatprep.subr.mxu0 0.0
  %2365 = vmatpush1.msra.mxu0 0.0
  %2366 = vmatprep.subr.mxu0 0.0
  %2367 = vmatpush1.msra.mxu0 0.0
  %2368 = vmatprep.subr.mxu0 0.0
  %2369 = vmatpush1.msra.mxu0 0.0
  %2370 = vmatprep.subr.mxu0 0.0
  %2371 = vmatpush1.msra.mxu0 0.0
  %2372 = vmatprep.subr.mxu0 0.0
  %2373 = vmatpush1.msra.mxu0 0.0
  %2374 = vmatprep.subr.mxu0 0.0
  %2375 = vmatpush1.msra.mxu0 0.0
  %2376 = vmatprep.subr.mxu0 0.0
  %2377 = vmatpush1.msra.mxu0 0.0
  %2378 = vmatprep.subr.mxu0 0.0
  %2379 = vmatpush1.msra.mxu0 0.0
  %2380 = vmatprep.subr.mxu0 0.0
  %2381 = vmatpush1.msra.mxu0 0.0
  %2382 = vmatprep.subr.mxu0 0.0
  %2383 = vmatpush1.msra.mxu0 0.0
  %2384 = vmatprep.subr.mxu0 0.0
  %2385 = vmatpush1.msra.mxu0 0.0
  %2386 = vmatprep.subr.mxu0 0.0
  %2387 = vmatpush1.msra.mxu0 0.0
  %2388 = vmatprep.subr.mxu0 0.0
  %2389 = vmatpush1.msra.mxu0 0.0
  %2390 = vmatprep.subr.mxu0 0.0
  %2391 = vmatpush1.msra.mxu0 0.0
  %2392 = vmatprep.subr.mxu0 0.0
  %2393 = vmatpush1.msra.mxu0 0.0
  %2394 = vmatprep.subr.mxu0 0.0
  %2395 = vmatpush1.msra.mxu0 0.0
  %2396 = vmatprep.subr.mxu0 0.0
  %2397 = vmatpush1.msra.mxu0 0.0
  %2398 = vmatprep.subr.mxu0 0.0
  %2399 = vmatpush1.msra.mxu0 0.0
  %2400 = vmatprep.subr.mxu0 0.0
  %2401 = vmatpush1.msra.mxu0 0.0
  %2402 = vmatprep.subr.mxu0 0.0
  %2403 = vmatpush1.msra.mxu0 0.0
  %2404 = vmatprep.subr.mxu0 0.0
  %2405 = vmatpush1.msra.mxu0 0.0
  %2406 = vmatprep.subr.mxu0 0.0
  %2407 = vmatpush1.msra.mxu0 0.0
  %2408 = vmatprep.subr.mxu0 0.0
  %2409 = vmatpush1.msra.mxu0 0.0
  %2410 = vmatprep.subr.mxu0 0.0
  %2411 = vmatpush1.msra.mxu0 0.0
  %2412 = vmatprep.subr.mxu0 0.0
  %2413 = vmatpush1.msra.mxu0 0.0
  %2414 = vmatprep.subr.mxu0 0.0
  %2415 = vmatpush1.msra.mxu0 0.0
  %2416 = vmatprep.subr.mxu0 0.0
  %2417 = vmatpush1.msra.mxu0 0.0
  %2418 = vmatprep.subr.mxu0 0.0
  %2419 = vmatpush1.msra.mxu0 0.0
  %2420 = vmatprep.subr.mxu0 0.0
  %2421 = vmatpush1.msra.mxu0 0.0
  %2422 = vmatprep.mubr.f32.mxu0 0.0
  %2423 = vmatmul.mubr.f32.gmra.mrb[0].mxu0 %v2333
  %v2424 = vpop.f32.mrb[0].mxu0
  %v2425 = vadd.f32 0.0, %v2424
  %v2426 = vpop.f32.mrb[0].mxu0
  %2427 = vmatprep.mubr.f32.mxu0 0.0
  %2428 = vmatmul.mubr.f32.gmra.mrb[0].mxu0 %v2336
  %v2429 = vpop.f32.mrb[0].mxu0
  %v2430 = vadd.f32 0.0, %v2429
  %v2431 = vpop.f32.mrb[0].mxu0
  %2432 = vmatprep.mubr.f32.mxu0 0.0
  %2433 = vmatmul.mubr.f32.gmra.mrb[0].mxu0 %v2339
  %v2434 = vpop.f32.mrb[0].mxu0
  %v2435 = vadd.f32 0.0, %v2434
  %v2436 = vpop.f32.mrb[0].mxu0
  %2437 = vmatprep.mubr.f32.mxu0 0.0
  %2438 = vmatmul.mubr.f32.gmra.mrb[0].mxu0 %v2342
  %v2439 = vpop.f32.mrb[0].mxu0
  %v2440 = vadd.f32 0.0, %v2439
  %v2441 = vpop.f32.mrb[0].mxu0
  %2442 = vmatprep.mubr.f32.mxu0 0.0
  %2443 = vmatmul.mubr.f32.gmra.mrb[0].mxu0 %v2345
  %v2444 = vpop.f32.mrb[0].mxu0
  %v2445 = vadd.f32 0.0, %v2444
  %v2446 = vpop.f32.mrb[0].mxu0
  %2447 = vmatprep.mubr.f32.mxu0 0.0
  %2448 = vmatmul.mubr.f32.gmra.mrb[0].mxu0 %v2348
  %v2449 = vpop.f32.mrb[0].mxu0
  %v2450 = vadd.f32 0.0, %v2449
  %v2451 = vpop.f32.mrb[0].mxu0
  %2452 = vmatprep.mubr.f32.mxu0 0.0
  %2453 = vmatmul.mubr.f32.gmra.mrb[0].mxu0 %v2351
  %v2454 = vpop.f32.mrb[0].mxu0
  %v2455 = vadd.f32 0.0, %v2454
  %v2456 = vpop.f32.mrb[0].mxu0
  %2457 = vmatprep.mubr.f32.mxu0 0.0
  %2458 = vmatmul.mubr.f32.gmra.mrb[0].mxu0 %v2354
  %v2459 = vpop.f32.mrb[0].mxu0
  %v2460 = vadd.f32 0.0, %v2459
  %v2461 = vpop.f32.mrb[0].mxu0
  %2462 = vdwg.mxu0
  %v2463 = vmul.f32 %v1879, 0.70710677
  %v2464 = vmul.f32 %v1884, 0.70710677
  %v2465 = vmul.f32 %v1889, 0.70710677
  %v2466 = vmul.f32 %v1894, 0.70710677
  %v2467 = vmul.f32 %v1899, 0.70710677
  %v2468 = vmul.f32 %v1904, 0.70710677
  %v2469 = vmul.f32 %v1909, 0.70710677
  %v2470 = vmul.f32 %v1914, 0.70710677
  %v2471 = vmul.f32 %v2061, 0.70710677
  %v2472 = vmul.f32 %v2066, 0.70710677
  %v2473 = vmul.f32 %v2071, 0.70710677
  %v2474 = vmul.f32 %v2076, 0.70710677
  %v2475 = vmul.f32 %v2081, 0.70710677
  %v2476 = vmul.f32 %v2086, 0.70710677
  %v2477 = vmul.f32 %v2091, 0.70710677
  %v2478 = vmul.f32 %v2096, 0.70710677
  %v2479 = vmul.f32 %v2243, 0.70710677
  %v2480 = vmul.f32 %v2248, 0.70710677
  %v2481 = vmul.f32 %v2253, 0.70710677
  %v2482 = vmul.f32 %v2258, 0.70710677
  %v2483 = vmul.f32 %v2263, 0.70710677
  %v2484 = vmul.f32 %v2268, 0.70710677
  %v2485 = vmul.f32 %v2273, 0.70710677
  %v2486 = vmul.f32 %v2278, 0.70710677
  %v2487 = vmul.f32 %v2425, 0.70710677
  %v2488 = vmul.f32 %v2430, 0.70710677
  %v2489 = vmul.f32 %v2435, 0.70710677
  %v2490 = vmul.f32 %v2440, 0.70710677
  %v2491 = vmul.f32 %v2445, 0.70710677
  %v2492 = vmul.f32 %v2450, 0.70710677
  %v2493 = vmul.f32 %v2455, 0.70710677
  %v2494 = vmul.f32 %v2460, 0.70710677
  %v2495 = vsel %vm998, %v2463, -inf
  %2496 = vmax.xlane.f32.xlu0 %v2495
  %v2497 = vpop.xlane.xlu0 %2496
  %v2498 = vsel %vm998, %v2464, -inf
  %2499 = vmax.xlane.f32.xlu0 %v2498
  %v2500 = vpop.xlane.xlu0 %2499
  %v2501 = vsel %vm998, %v2465, -inf
  %2502 = vmax.xlane.f32.xlu0 %v2501
  %v2503 = vpop.xlane.xlu0 %2502
  %v2504 = vsel %vm998, %v2466, -inf
  %2505 = vmax.xlane.f32.xlu0 %v2504
  %v2506 = vpop.xlane.xlu0 %2505
  %v2507 = vsel %vm998, %v2467, -inf
  %2508 = vmax.xlane.f32.xlu0 %v2507
  %v2509 = vpop.xlane.xlu0 %2508
  %v2510 = vsel %vm998, %v2468, -inf
  %2511 = vmax.xlane.f32.xlu0 %v2510
  %v2512 = vpop.xlane.xlu0 %2511
  %v2513 = vsel %vm998, %v2469, -inf
  %2514 = vmax.xlane.f32.xlu0 %v2513
  %v2515 = vpop.xlane.xlu0 %2514
  %v2516 = vsel %vm998, %v2470, -inf
  %2517 = vmax.xlane.f32.xlu0 %v2516
  %v2518 = vpop.xlane.xlu0 %2517
  %v2519 = vsel %vm998, %v2471, -inf
  %2520 = vmax.xlane.f32.xlu0 %v2519
  %v2521 = vpop.xlane.xlu0 %2520
  %v2522 = vsel %vm998, %v2472, -inf
  %2523 = vmax.xlane.f32.xlu0 %v2522
  %v2524 = vpop.xlane.xlu0 %2523
  %v2525 = vsel %vm998, %v2473, -inf
  %2526 = vmax.xlane.f32.xlu0 %v2525
  %v2527 = vpop.xlane.xlu0 %2526
  %v2528 = vsel %vm998, %v2474, -inf
  %2529 = vmax.xlane.f32.xlu0 %v2528
  %v2530 = vpop.xlane.xlu0 %2529
  %v2531 = vsel %vm998, %v2475, -inf
  %2532 = vmax.xlane.f32.xlu0 %v2531
  %v2533 = vpop.xlane.xlu0 %2532
  %v2534 = vsel %vm998, %v2476, -inf
  %2535 = vmax.xlane.f32.xlu0 %v2534
  %v2536 = vpop.xlane.xlu0 %2535
  %v2537 = vsel %vm998, %v2477, -inf
  %2538 = vmax.xlane.f32.xlu0 %v2537
  %v2539 = vpop.xlane.xlu0 %2538
  %v2540 = vsel %vm998, %v2478, -inf
  %2541 = vmax.xlane.f32.xlu0 %v2540
  %v2542 = vpop.xlane.xlu0 %2541
  %v2543 = vsel %vm998, %v2479, -inf
  %2544 = vmax.xlane.f32.xlu0 %v2543
  %v2545 = vpop.xlane.xlu0 %2544
  %v2546 = vsel %vm998, %v2480, -inf
  %2547 = vmax.xlane.f32.xlu0 %v2546
  %v2548 = vpop.xlane.xlu0 %2547
  %v2549 = vsel %vm998, %v2481, -inf
  %2550 = vmax.xlane.f32.xlu0 %v2549
  %v2551 = vpop.xlane.xlu0 %2550
  %v2552 = vsel %vm998, %v2482, -inf
  %2553 = vmax.xlane.f32.xlu0 %v2552
  %v2554 = vpop.xlane.xlu0 %2553
  %v2555 = vsel %vm998, %v2483, -inf
  %2556 = vmax.xlane.f32.xlu0 %v2555
  %v2557 = vpop.xlane.xlu0 %2556
  %v2558 = vsel %vm998, %v2484, -inf
  %2559 = vmax.xlane.f32.xlu0 %v2558
  %v2560 = vpop.xlane.xlu0 %2559
  %v2561 = vsel %vm998, %v2485, -inf
  %2562 = vmax.xlane.f32.xlu0 %v2561
  %v2563 = vpop.xlane.xlu0 %2562
  %v2564 = vsel %vm998, %v2486, -inf
  %2565 = vmax.xlane.f32.xlu0 %v2564
  %v2566 = vpop.xlane.xlu0 %2565
  %v2567 = vsel %vm998, %v2487, -inf
  %2568 = vmax.xlane.f32.xlu0 %v2567
  %v2569 = vpop.xlane.xlu0 %2568
  %v2570 = vsel %vm998, %v2488, -inf
  %2571 = vmax.xlane.f32.xlu0 %v2570
  %v2572 = vpop.xlane.xlu0 %2571
  %v2573 = vsel %vm998, %v2489, -inf
  %2574 = vmax.xlane.f32.xlu0 %v2573
  %v2575 = vpop.xlane.xlu0 %2574
  %v2576 = vsel %vm998, %v2490, -inf
  %2577 = vmax.xlane.f32.xlu0 %v2576
  %v2578 = vpop.xlane.xlu0 %2577
  %v2579 = vsel %vm998, %v2491, -inf
  %2580 = vmax.xlane.f32.xlu0 %v2579
  %v2581 = vpop.xlane.xlu0 %2580
  %v2582 = vsel %vm998, %v2492, -inf
  %2583 = vmax.xlane.f32.xlu0 %v2582
  %v2584 = vpop.xlane.xlu0 %2583
  %v2585 = vsel %vm998, %v2493, -inf
  %2586 = vmax.xlane.f32.xlu0 %v2585
  %v2587 = vpop.xlane.xlu0 %2586
  %v2588 = vsel %vm998, %v2494, -inf
  %2589 = vmax.xlane.f32.xlu0 %v2588
  %v2590 = vpop.xlane.xlu0 %2589
  %v2591 = vsub.f32 %v2463, %v2497
  %v2592 = vsub.f32 %v2464, %v2500
  %v2593 = vsub.f32 %v2465, %v2503
  %v2594 = vsub.f32 %v2466, %v2506
  %v2595 = vsub.f32 %v2467, %v2509
  %v2596 = vsub.f32 %v2468, %v2512
  %v2597 = vsub.f32 %v2469, %v2515
  %v2598 = vsub.f32 %v2470, %v2518
  %v2599 = vsub.f32 %v2471, %v2521
  %v2600 = vsub.f32 %v2472, %v2524
  %v2601 = vsub.f32 %v2473, %v2527
  %v2602 = vsub.f32 %v2474, %v2530
  %v2603 = vsub.f32 %v2475, %v2533
  %v2604 = vsub.f32 %v2476, %v2536
  %v2605 = vsub.f32 %v2477, %v2539
  %v2606 = vsub.f32 %v2478, %v2542
  %v2607 = vsub.f32 %v2479, %v2545
  %v2608 = vsub.f32 %v2480, %v2548
  %v2609 = vsub.f32 %v2481, %v2551
  %v2610 = vsub.f32 %v2482, %v2554
  %v2611 = vsub.f32 %v2483, %v2557
  %v2612 = vsub.f32 %v2484, %v2560
  %v2613 = vsub.f32 %v2485, %v2563
  %v2614 = vsub.f32 %v2486, %v2566
  %v2615 = vsub.f32 %v2487, %v2569
  %v2616 = vsub.f32 %v2488, %v2572
  %v2617 = vsub.f32 %v2489, %v2575
  %v2618 = vsub.f32 %v2490, %v2578
  %v2619 = vsub.f32 %v2491, %v2581
  %v2620 = vsub.f32 %v2492, %v2584
  %v2621 = vsub.f32 %v2493, %v2587
  %v2622 = vsub.f32 %v2494, %v2590
  %v2623 = vmul.f32 %v2591, 1.442695
  %v2624 = vpow.pop %v2623
  %v2625 = vmul.f32 %v2592, 1.442695
  %v2626 = vpow.pop %v2625
  %v2627 = vmul.f32 %v2593, 1.442695
  %v2628 = vpow.pop %v2627
  %v2629 = vmul.f32 %v2594, 1.442695
  %v2630 = vpow.pop %v2629
  %v2631 = vmul.f32 %v2595, 1.442695
  %v2632 = vpow.pop %v2631
  %v2633 = vmul.f32 %v2596, 1.442695
  %v2634 = vpow.pop %v2633
  %v2635 = vmul.f32 %v2597, 1.442695
  %v2636 = vpow.pop %v2635
  %v2637 = vmul.f32 %v2598, 1.442695
  %v2638 = vpow.pop %v2637
  %v2639 = vmul.f32 %v2599, 1.442695
  %v2640 = vpow.pop %v2639
  %v2641 = vmul.f32 %v2600, 1.442695
  %v2642 = vpow.pop %v2641
  %v2643 = vmul.f32 %v2601, 1.442695
  %v2644 = vpow.pop %v2643
  %v2645 = vmul.f32 %v2602, 1.442695
  %v2646 = vpow.pop %v2645
  %v2647 = vmul.f32 %v2603, 1.442695
  %v2648 = vpow.pop %v2647
  %v2649 = vmul.f32 %v2604, 1.442695
  %v2650 = vpow.pop %v2649
  %v2651 = vmul.f32 %v2605, 1.442695
  %v2652 = vpow.pop %v2651
  %v2653 = vmul.f32 %v2606, 1.442695
  %v2654 = vpow.pop %v2653
  %v2655 = vmul.f32 %v2607, 1.442695
  %v2656 = vpow.pop %v2655
  %v2657 = vmul.f32 %v2608, 1.442695
  %v2658 = vpow.pop %v2657
  %v2659 = vmul.f32 %v2609, 1.442695
  %v2660 = vpow.pop %v2659
  %v2661 = vmul.f32 %v2610, 1.442695
  %v2662 = vpow.pop %v2661
  %v2663 = vmul.f32 %v2611, 1.442695
  %v2664 = vpow.pop %v2663
  %v2665 = vmul.f32 %v2612, 1.442695
  %v2666 = vpow.pop %v2665
  %v2667 = vmul.f32 %v2613, 1.442695
  %v2668 = vpow.pop %v2667
  %v2669 = vmul.f32 %v2614, 1.442695
  %v2670 = vpow.pop %v2669
  %v2671 = vmul.f32 %v2615, 1.442695
  %v2672 = vpow.pop %v2671
  %v2673 = vmul.f32 %v2616, 1.442695
  %v2674 = vpow.pop %v2673
  %v2675 = vmul.f32 %v2617, 1.442695
  %v2676 = vpow.pop %v2675
  %v2677 = vmul.f32 %v2618, 1.442695
  %v2678 = vpow.pop %v2677
  %v2679 = vmul.f32 %v2619, 1.442695
  %v2680 = vpow.pop %v2679
  %v2681 = vmul.f32 %v2620, 1.442695
  %v2682 = vpow.pop %v2681
  %v2683 = vmul.f32 %v2621, 1.442695
  %v2684 = vpow.pop %v2683
  %v2685 = vmul.f32 %v2622, 1.442695
  %v2686 = vpow.pop %v2685
  %v2687 = vsel %vm998, %v2624, 0.0
  %2688 = vadd.xlane.f32.xlu0 %v2687
  %v2689 = vpop.xlane.xlu0 %2688
  %v2690 = vsel %vm998, %v2626, 0.0
  %2691 = vadd.xlane.f32.xlu0 %v2690
  %v2692 = vpop.xlane.xlu0 %2691
  %v2693 = vsel %vm998, %v2628, 0.0
  %2694 = vadd.xlane.f32.xlu0 %v2693
  %v2695 = vpop.xlane.xlu0 %2694
  %v2696 = vsel %vm998, %v2630, 0.0
  %2697 = vadd.xlane.f32.xlu0 %v2696
  %v2698 = vpop.xlane.xlu0 %2697
  %v2699 = vsel %vm998, %v2632, 0.0
  %2700 = vadd.xlane.f32.xlu0 %v2699
  %v2701 = vpop.xlane.xlu0 %2700
  %v2702 = vsel %vm998, %v2634, 0.0
  %2703 = vadd.xlane.f32.xlu0 %v2702
  %v2704 = vpop.xlane.xlu0 %2703
  %v2705 = vsel %vm998, %v2636, 0.0
  %2706 = vadd.xlane.f32.xlu0 %v2705
  %v2707 = vpop.xlane.xlu0 %2706
  %v2708 = vsel %vm998, %v2638, 0.0
  %2709 = vadd.xlane.f32.xlu0 %v2708
  %v2710 = vpop.xlane.xlu0 %2709
  %v2711 = vsel %vm998, %v2640, 0.0
  %2712 = vadd.xlane.f32.xlu0 %v2711
  %v2713 = vpop.xlane.xlu0 %2712
  %v2714 = vsel %vm998, %v2642, 0.0
  %2715 = vadd.xlane.f32.xlu0 %v2714
  %v2716 = vpop.xlane.xlu0 %2715
  %v2717 = vsel %vm998, %v2644, 0.0
  %2718 = vadd.xlane.f32.xlu0 %v2717
  %v2719 = vpop.xlane.xlu0 %2718
  %v2720 = vsel %vm998, %v2646, 0.0
  %2721 = vadd.xlane.f32.xlu0 %v2720
  %v2722 = vpop.xlane.xlu0 %2721
  %v2723 = vsel %vm998, %v2648, 0.0
  %2724 = vadd.xlane.f32.xlu0 %v2723
  %v2725 = vpop.xlane.xlu0 %2724
  %v2726 = vsel %vm998, %v2650, 0.0
  %2727 = vadd.xlane.f32.xlu0 %v2726
  %v2728 = vpop.xlane.xlu0 %2727
  %v2729 = vsel %vm998, %v2652, 0.0
  %2730 = vadd.xlane.f32.xlu0 %v2729
  %v2731 = vpop.xlane.xlu0 %2730
  %v2732 = vsel %vm998, %v2654, 0.0
  %2733 = vadd.xlane.f32.xlu0 %v2732
  %v2734 = vpop.xlane.xlu0 %2733
  %v2735 = vsel %vm998, %v2656, 0.0
  %2736 = vadd.xlane.f32.xlu0 %v2735
  %v2737 = vpop.xlane.xlu0 %2736
  %v2738 = vsel %vm998, %v2658, 0.0
  %2739 = vadd.xlane.f32.xlu0 %v2738
  %v2740 = vpop.xlane.xlu0 %2739
  %v2741 = vsel %vm998, %v2660, 0.0
  %2742 = vadd.xlane.f32.xlu0 %v2741
  %v2743 = vpop.xlane.xlu0 %2742
  %v2744 = vsel %vm998, %v2662, 0.0
  %2745 = vadd.xlane.f32.xlu0 %v2744
  %v2746 = vpop.xlane.xlu0 %2745
  %v2747 = vsel %vm998, %v2664, 0.0
  %2748 = vadd.xlane.f32.xlu0 %v2747
  %v2749 = vpop.xlane.xlu0 %2748
  %v2750 = vsel %vm998, %v2666, 0.0
  %2751 = vadd.xlane.f32.xlu0 %v2750
  %v2752 = vpop.xlane.xlu0 %2751
  %v2753 = vsel %vm998, %v2668, 0.0
  %2754 = vadd.xlane.f32.xlu0 %v2753
  %v2755 = vpop.xlane.xlu0 %2754
  %v2756 = vsel %vm998, %v2670, 0.0
  %2757 = vadd.xlane.f32.xlu0 %v2756
  %v2758 = vpop.xlane.xlu0 %2757
  %v2759 = vsel %vm998, %v2672, 0.0
  %2760 = vadd.xlane.f32.xlu0 %v2759
  %v2761 = vpop.xlane.xlu0 %2760
  %v2762 = vsel %vm998, %v2674, 0.0
  %2763 = vadd.xlane.f32.xlu0 %v2762
  %v2764 = vpop.xlane.xlu0 %2763
  %v2765 = vsel %vm998, %v2676, 0.0
  %2766 = vadd.xlane.f32.xlu0 %v2765
  %v2767 = vpop.xlane.xlu0 %2766
  %v2768 = vsel %vm998, %v2678, 0.0
  %2769 = vadd.xlane.f32.xlu0 %v2768
  %v2770 = vpop.xlane.xlu0 %2769
  %v2771 = vsel %vm998, %v2680, 0.0
  %2772 = vadd.xlane.f32.xlu0 %v2771
  %v2773 = vpop.xlane.xlu0 %2772
  %v2774 = vsel %vm998, %v2682, 0.0
  %2775 = vadd.xlane.f32.xlu0 %v2774
  %v2776 = vpop.xlane.xlu0 %2775
  %v2777 = vsel %vm998, %v2684, 0.0
  %2778 = vadd.xlane.f32.xlu0 %v2777
  %v2779 = vpop.xlane.xlu0 %2778
  %v2780 = vsel %vm998, %v2686, 0.0
  %2781 = vadd.xlane.f32.xlu0 %v2780
  %v2782 = vpop.xlane.xlu0 %2781
  %v2783 = vrcp.pop %v2689
  %v2784 = vrcp.pop %v2692
  %v2785 = vrcp.pop %v2695
  %v2786 = vrcp.pop %v2698
  %v2787 = vrcp.pop %v2701
  %v2788 = vrcp.pop %v2704
  %v2789 = vrcp.pop %v2707
  %v2790 = vrcp.pop %v2710
  %v2791 = vrcp.pop %v2713
  %v2792 = vrcp.pop %v2716
  %v2793 = vrcp.pop %v2719
  %v2794 = vrcp.pop %v2722
  %v2795 = vrcp.pop %v2725
  %v2796 = vrcp.pop %v2728
  %v2797 = vrcp.pop %v2731
  %v2798 = vrcp.pop %v2734
  %v2799 = vrcp.pop %v2737
  %v2800 = vrcp.pop %v2740
  %v2801 = vrcp.pop %v2743
  %v2802 = vrcp.pop %v2746
  %v2803 = vrcp.pop %v2749
  %v2804 = vrcp.pop %v2752
  %v2805 = vrcp.pop %v2755
  %v2806 = vrcp.pop %v2758
  %v2807 = vrcp.pop %v2761
  %v2808 = vrcp.pop %v2764
  %v2809 = vrcp.pop %v2767
  %v2810 = vrcp.pop %v2770
  %v2811 = vrcp.pop %v2773
  %v2812 = vrcp.pop %v2776
  %v2813 = vrcp.pop %v2779
  %v2814 = vrcp.pop %v2782
  %v2815 = vmul.f32 %v2624, %v2783
  %v2816 = vmul.f32 %v2626, %v2784
  %v2817 = vmul.f32 %v2628, %v2785
  %v2818 = vmul.f32 %v2630, %v2786
  %v2819 = vmul.f32 %v2632, %v2787
  %v2820 = vmul.f32 %v2634, %v2788
  %v2821 = vmul.f32 %v2636, %v2789
  %v2822 = vmul.f32 %v2638, %v2790
  %v2823 = vmul.f32 %v2640, %v2791
  %v2824 = vmul.f32 %v2642, %v2792
  %v2825 = vmul.f32 %v2644, %v2793
  %v2826 = vmul.f32 %v2646, %v2794
  %v2827 = vmul.f32 %v2648, %v2795
  %v2828 = vmul.f32 %v2650, %v2796
  %v2829 = vmul.f32 %v2652, %v2797
  %v2830 = vmul.f32 %v2654, %v2798
  %v2831 = vmul.f32 %v2656, %v2799
  %v2832 = vmul.f32 %v2658, %v2800
  %v2833 = vmul.f32 %v2660, %v2801
  %v2834 = vmul.f32 %v2662, %v2802
  %v2835 = vmul.f32 %v2664, %v2803
  %v2836 = vmul.f32 %v2666, %v2804
  %v2837 = vmul.f32 %v2668, %v2805
  %v2838 = vmul.f32 %v2670, %v2806
  %v2839 = vmul.f32 %v2672, %v2807
  %v2840 = vmul.f32 %v2674, %v2808
  %v2841 = vmul.f32 %v2676, %v2809
  %v2842 = vmul.f32 %v2678, %v2810
  %v2843 = vmul.f32 %v2680, %v2811
  %v2844 = vmul.f32 %v2682, %v2812
  %v2845 = vmul.f32 %v2684, %v2813
  %v2846 = vmul.f32 %v2686, %v2814
  %v2848 = vunpack.c.l.s4 1983009808
  %v2849 = vunpack.c.0.s8 %v2848
  %v2850 = vlaneseq
  %v2851 = vshrl.u32 %v2850, 7
  %v2852 = vsub.s32 %v2849, %v2851
  %v2853 = vrot.slane %v302, %v2852
  %2854 = vrot.lane.b32.xlu0 %v2853, 64
  %v2855 = vpop.permute.xlu0 %2854
  %v2856 = vsel %vm998, %v2855, 0
  %v2859 = vsel %vm998, %v2815, 0
  %v2862 = vsel %vm998, %v2816, 0
  %v2865 = vsel %vm998, %v2817, 0
  %v2868 = vsel %vm998, %v2818, 0
  %v2871 = vsel %vm998, %v2819, 0
  %v2874 = vsel %vm998, %v2820, 0
  %v2877 = vsel %vm998, %v2821, 0
  %v2880 = vsel %vm998, %v2822, 0
  %2882 = vmatprep.subr.mxu0 0.0
  %2883 = vmatpush1.xpose.msra.mxu0 %v2859
  %2884 = vmatprep.subr.mxu0 0.0
  %2885 = vmatpush1.xpose.msra.mxu0 %v2862
  %2886 = vmatprep.subr.mxu0 0.0
  %2887 = vmatpush1.xpose.msra.mxu0 %v2865
  %2888 = vmatprep.subr.mxu0 0.0
  %2889 = vmatpush1.xpose.msra.mxu0 %v2868
  %2890 = vmatprep.subr.mxu0 0.0
  %2891 = vmatpush1.xpose.msra.mxu0 %v2871
  %2892 = vmatprep.subr.mxu0 0.0
  %2893 = vmatpush1.xpose.msra.mxu0 %v2874
  %2894 = vmatprep.subr.mxu0 0.0
  %2895 = vmatpush1.xpose.msra.mxu0 %v2877
  %2896 = vmatprep.subr.mxu0 0.0
  %2897 = vmatpush1.xpose.msra.mxu0 %v2880
  %2898 = vmatprep.subr.mxu0 0.0
  %2899 = vmatpush1.xpose.msra.mxu0 0.0
  %2900 = vmatprep.subr.mxu0 0.0
  %2901 = vmatpush1.xpose.msra.mxu0 0.0
  %2902 = vmatprep.subr.mxu0 0.0
  %2903 = vmatpush1.xpose.msra.mxu0 0.0
  %2904 = vmatprep.subr.mxu0 0.0
  %2905 = vmatpush1.xpose.msra.mxu0 0.0
  %2906 = vmatprep.subr.mxu0 0.0
  %2907 = vmatpush1.xpose.msra.mxu0 0.0
  %2908 = vmatprep.subr.mxu0 0.0
  %2909 = vmatpush1.xpose.msra.mxu0 0.0
  %2910 = vmatprep.subr.mxu0 0.0
  %2911 = vmatpush1.xpose.msra.mxu0 0.0
  %2912 = vmatprep.subr.mxu0 0.0
  %2913 = vmatpush1.xpose.msra.mxu0 0.0
  %2914 = vmatprep.subr.mxu0 0.0
  %2915 = vmatpush1.xpose.msra.mxu0 0.0
  %2916 = vmatprep.subr.mxu0 0.0
  %2917 = vmatpush1.xpose.msra.mxu0 0.0
  %2918 = vmatprep.subr.mxu0 0.0
  %2919 = vmatpush1.xpose.msra.mxu0 0.0
  %2920 = vmatprep.subr.mxu0 0.0
  %2921 = vmatpush1.xpose.msra.mxu0 0.0
  %2922 = vmatprep.subr.mxu0 0.0
  %2923 = vmatpush1.xpose.msra.mxu0 0.0
  %2924 = vmatprep.subr.mxu0 0.0
  %2925 = vmatpush1.xpose.msra.mxu0 0.0
  %2926 = vmatprep.subr.mxu0 0.0
  %2927 = vmatpush1.xpose.msra.mxu0 0.0
  %2928 = vmatprep.subr.mxu0 0.0
  %2929 = vmatpush1.xpose.msra.mxu0 0.0
  %2930 = vmatprep.subr.mxu0 0.0
  %2931 = vmatpush1.xpose.msra.mxu0 0.0
  %2932 = vmatprep.subr.mxu0 0.0
  %2933 = vmatpush1.xpose.msra.mxu0 0.0
  %2934 = vmatprep.subr.mxu0 0.0
  %2935 = vmatpush1.xpose.msra.mxu0 0.0
  %2936 = vmatprep.subr.mxu0 0.0
  %2937 = vmatpush1.xpose.msra.mxu0 0.0
  %2938 = vmatprep.subr.mxu0 0.0
  %2939 = vmatpush1.xpose.msra.mxu0 0.0
  %2940 = vmatprep.subr.mxu0 0.0
  %2941 = vmatpush1.xpose.msra.mxu0 0.0
  %2942 = vmatprep.subr.mxu0 0.0
  %2943 = vmatpush1.xpose.msra.mxu0 0.0
  %2944 = vmatprep.subr.mxu0 0.0
  %2945 = vmatpush1.xpose.msra.mxu0 0.0
  %2946 = vmatprep.mubr.f32.mxu0 0.0
  %2947 = vmatmul.mubr.f32.gmra.mrb[0].mxu0 %v2856
  %v2948 = vpop.f32.mrb[0].mxu0
  %v2949 = vadd.f32 0.0, %v2948
  %v2950 = vpop.f32.mrb[0].mxu0
  %2951 = vdwg.mxu0
  %v2953 = vunpack.c.l.s4 1983009808
  %v2954 = vunpack.c.0.s8 %v2953
  %v2955 = vlaneseq
  %v2956 = vshrl.u32 %v2955, 7
  %v2957 = vsub.s32 %v2954, %v2956
  %v2958 = vrot.slane %v310, %v2957
  %2959 = vrot.lane.b32.xlu0 %v2958, 64
  %v2960 = vpop.permute.xlu0 %2959
  %v2961 = vsel %vm998, %v2960, 0
  %v2964 = vsel %vm998, %v2823, 0
  %v2967 = vsel %vm998, %v2824, 0
  %v2970 = vsel %vm998, %v2825, 0
  %v2973 = vsel %vm998, %v2826, 0
  %v2976 = vsel %vm998, %v2827, 0
  %v2979 = vsel %vm998, %v2828, 0
  %v2982 = vsel %vm998, %v2829, 0
  %v2985 = vsel %vm998, %v2830, 0
  %2987 = vmatprep.subr.mxu0 0.0
  %2988 = vmatpush1.xpose.msra.mxu0 %v2964
  %2989 = vmatprep.subr.mxu0 0.0
  %2990 = vmatpush1.xpose.msra.mxu0 %v2967
  %2991 = vmatprep.subr.mxu0 0.0
  %2992 = vmatpush1.xpose.msra.mxu0 %v2970
  %2993 = vmatprep.subr.mxu0 0.0
  %2994 = vmatpush1.xpose.msra.mxu0 %v2973
  %2995 = vmatprep.subr.mxu0 0.0
  %2996 = vmatpush1.xpose.msra.mxu0 %v2976
  %2997 = vmatprep.subr.mxu0 0.0
  %2998 = vmatpush1.xpose.msra.mxu0 %v2979
  %2999 = vmatprep.subr.mxu0 0.0
  %3000 = vmatpush1.xpose.msra.mxu0 %v2982
  %3001 = vmatprep.subr.mxu0 0.0
  %3002 = vmatpush1.xpose.msra.mxu0 %v2985
  %3003 = vmatprep.subr.mxu0 0.0
  %3004 = vmatpush1.xpose.msra.mxu0 0.0
  %3005 = vmatprep.subr.mxu0 0.0
  %3006 = vmatpush1.xpose.msra.mxu0 0.0
  %3007 = vmatprep.subr.mxu0 0.0
  %3008 = vmatpush1.xpose.msra.mxu0 0.0
  %3009 = vmatprep.subr.mxu0 0.0
  %3010 = vmatpush1.xpose.msra.mxu0 0.0
  %3011 = vmatprep.subr.mxu0 0.0
  %3012 = vmatpush1.xpose.msra.mxu0 0.0
  %3013 = vmatprep.subr.mxu0 0.0
  %3014 = vmatpush1.xpose.msra.mxu0 0.0
  %3015 = vmatprep.subr.mxu0 0.0
  %3016 = vmatpush1.xpose.msra.mxu0 0.0
  %3017 = vmatprep.subr.mxu0 0.0
  %3018 = vmatpush1.xpose.msra.mxu0 0.0
  %3019 = vmatprep.subr.mxu0 0.0
  %3020 = vmatpush1.xpose.msra.mxu0 0.0
  %3021 = vmatprep.subr.mxu0 0.0
  %3022 = vmatpush1.xpose.msra.mxu0 0.0
  %3023 = vmatprep.subr.mxu0 0.0
  %3024 = vmatpush1.xpose.msra.mxu0 0.0
  %3025 = vmatprep.subr.mxu0 0.0
  %3026 = vmatpush1.xpose.msra.mxu0 0.0
  %3027 = vmatprep.subr.mxu0 0.0
  %3028 = vmatpush1.xpose.msra.mxu0 0.0
  %3029 = vmatprep.subr.mxu0 0.0
  %3030 = vmatpush1.xpose.msra.mxu0 0.0
  %3031 = vmatprep.subr.mxu0 0.0
  %3032 = vmatpush1.xpose.msra.mxu0 0.0
  %3033 = vmatprep.subr.mxu0 0.0
  %3034 = vmatpush1.xpose.msra.mxu0 0.0
  %3035 = vmatprep.subr.mxu0 0.0
  %3036 = vmatpush1.xpose.msra.mxu0 0.0
  %3037 = vmatprep.subr.mxu0 0.0
  %3038 = vmatpush1.xpose.msra.mxu0 0.0
  %3039 = vmatprep.subr.mxu0 0.0
  %3040 = vmatpush1.xpose.msra.mxu0 0.0
  %3041 = vmatprep.subr.mxu0 0.0
  %3042 = vmatpush1.xpose.msra.mxu0 0.0
  %3043 = vmatprep.subr.mxu0 0.0
  %3044 = vmatpush1.xpose.msra.mxu0 0.0
  %3045 = vmatprep.subr.mxu0 0.0
  %3046 = vmatpush1.xpose.msra.mxu0 0.0
  %3047 = vmatprep.subr.mxu0 0.0
  %3048 = vmatpush1.xpose.msra.mxu0 0.0
  %3049 = vmatprep.subr.mxu0 0.0
  %3050 = vmatpush1.xpose.msra.mxu0 0.0
  %3051 = vmatprep.mubr.f32.mxu0 0.0
  %3052 = vmatmul.mubr.f32.gmra.mrb[0].mxu0 %v2961
  %v3053 = vpop.f32.mrb[0].mxu0
  %v3054 = vadd.f32 0.0, %v3053
  %v3055 = vpop.f32.mrb[0].mxu0
  %3056 = vdwg.mxu0
  %v3058 = vunpack.c.l.s4 1983009808
  %v3059 = vunpack.c.0.s8 %v3058
  %v3060 = vlaneseq
  %v3061 = vshrl.u32 %v3060, 7
  %v3062 = vsub.s32 %v3059, %v3061
  %v3063 = vrot.slane %v309, %v3062
  %3064 = vrot.lane.b32.xlu0 %v3063, 64
  %v3065 = vpop.permute.xlu0 %3064
  %v3066 = vsel %vm998, %v3065, 0
  %v3069 = vsel %vm998, %v2831, 0
  %v3072 = vsel %vm998, %v2832, 0
  %v3075 = vsel %vm998, %v2833, 0
  %v3078 = vsel %vm998, %v2834, 0
  %v3081 = vsel %vm998, %v2835, 0
  %v3084 = vsel %vm998, %v2836, 0
  %v3087 = vsel %vm998, %v2837, 0
  %v3090 = vsel %vm998, %v2838, 0
  %3092 = vmatprep.subr.mxu0 0.0
  %3093 = vmatpush1.xpose.msra.mxu0 %v3069
  %3094 = vmatprep.subr.mxu0 0.0
  %3095 = vmatpush1.xpose.msra.mxu0 %v3072
  %3096 = vmatprep.subr.mxu0 0.0
  %3097 = vmatpush1.xpose.msra.mxu0 %v3075
  %3098 = vmatprep.subr.mxu0 0.0
  %3099 = vmatpush1.xpose.msra.mxu0 %v3078
  %3100 = vmatprep.subr.mxu0 0.0
  %3101 = vmatpush1.xpose.msra.mxu0 %v3081
  %3102 = vmatprep.subr.mxu0 0.0
  %3103 = vmatpush1.xpose.msra.mxu0 %v3084
  %3104 = vmatprep.subr.mxu0 0.0
  %3105 = vmatpush1.xpose.msra.mxu0 %v3087
  %3106 = vmatprep.subr.mxu0 0.0
  %3107 = vmatpush1.xpose.msra.mxu0 %v3090
  %3108 = vmatprep.subr.mxu0 0.0
  %3109 = vmatpush1.xpose.msra.mxu0 0.0
  %3110 = vmatprep.subr.mxu0 0.0
  %3111 = vmatpush1.xpose.msra.mxu0 0.0
  %3112 = vmatprep.subr.mxu0 0.0
  %3113 = vmatpush1.xpose.msra.mxu0 0.0
  %3114 = vmatprep.subr.mxu0 0.0
  %3115 = vmatpush1.xpose.msra.mxu0 0.0
  %3116 = vmatprep.subr.mxu0 0.0
  %3117 = vmatpush1.xpose.msra.mxu0 0.0
  %3118 = vmatprep.subr.mxu0 0.0
  %3119 = vmatpush1.xpose.msra.mxu0 0.0
  %3120 = vmatprep.subr.mxu0 0.0
  %3121 = vmatpush1.xpose.msra.mxu0 0.0
  %3122 = vmatprep.subr.mxu0 0.0
  %3123 = vmatpush1.xpose.msra.mxu0 0.0
  %3124 = vmatprep.subr.mxu0 0.0
  %3125 = vmatpush1.xpose.msra.mxu0 0.0
  %3126 = vmatprep.subr.mxu0 0.0
  %3127 = vmatpush1.xpose.msra.mxu0 0.0
  %3128 = vmatprep.subr.mxu0 0.0
  %3129 = vmatpush1.xpose.msra.mxu0 0.0
  %3130 = vmatprep.subr.mxu0 0.0
  %3131 = vmatpush1.xpose.msra.mxu0 0.0
  %3132 = vmatprep.subr.mxu0 0.0
  %3133 = vmatpush1.xpose.msra.mxu0 0.0
  %3134 = vmatprep.subr.mxu0 0.0
  %3135 = vmatpush1.xpose.msra.mxu0 0.0
  %3136 = vmatprep.subr.mxu0 0.0
  %3137 = vmatpush1.xpose.msra.mxu0 0.0
  %3138 = vmatprep.subr.mxu0 0.0
  %3139 = vmatpush1.xpose.msra.mxu0 0.0
  %3140 = vmatprep.subr.mxu0 0.0
  %3141 = vmatpush1.xpose.msra.mxu0 0.0
  %3142 = vmatprep.subr.mxu0 0.0
  %3143 = vmatpush1.xpose.msra.mxu0 0.0
  %3144 = vmatprep.subr.mxu0 0.0
  %3145 = vmatpush1.xpose.msra.mxu0 0.0
  %3146 = vmatprep.subr.mxu0 0.0
  %3147 = vmatpush1.xpose.msra.mxu0 0.0
  %3148 = vmatprep.subr.mxu0 0.0
  %3149 = vmatpush1.xpose.msra.mxu0 0.0
  %3150 = vmatprep.subr.mxu0 0.0
  %3151 = vmatpush1.xpose.msra.mxu0 0.0
  %3152 = vmatprep.subr.mxu0 0.0
  %3153 = vmatpush1.xpose.msra.mxu0 0.0
  %3154 = vmatprep.subr.mxu0 0.0
  %3155 = vmatpush1.xpose.msra.mxu0 0.0
  %3156 = vmatprep.mubr.f32.mxu0 0.0
  %3157 = vmatmul.mubr.f32.gmra.mrb[0].mxu0 %v3066
  %v3158 = vpop.f32.mrb[0].mxu0
  %v3159 = vadd.f32 0.0, %v3158
  %v3160 = vpop.f32.mrb[0].mxu0
  %3161 = vdwg.mxu0
  %v3163 = vunpack.c.l.s4 1983009808
  %v3164 = vunpack.c.0.s8 %v3163
  %v3165 = vlaneseq
  %v3166 = vshrl.u32 %v3165, 7
  %v3167 = vsub.s32 %v3164, %v3166
  %v3168 = vrot.slane %v311, %v3167
  %3169 = vrot.lane.b32.xlu0 %v3168, 64
  %v3170 = vpop.permute.xlu0 %3169
  %v3171 = vsel %vm998, %v3170, 0
  %v3174 = vsel %vm998, %v2839, 0
  %v3177 = vsel %vm998, %v2840, 0
  %v3180 = vsel %vm998, %v2841, 0
  %v3183 = vsel %vm998, %v2842, 0
  %v3186 = vsel %vm998, %v2843, 0
  %v3189 = vsel %vm998, %v2844, 0
  %v3192 = vsel %vm998, %v2845, 0
  %v3195 = vsel %vm998, %v2846, 0
  %3197 = vmatprep.subr.mxu0 0.0
  %3198 = vmatpush1.xpose.msra.mxu0 %v3174
  %3199 = vmatprep.subr.mxu0 0.0
  %3200 = vmatpush1.xpose.msra.mxu0 %v3177
  %3201 = vmatprep.subr.mxu0 0.0
  %3202 = vmatpush1.xpose.msra.mxu0 %v3180
  %3203 = vmatprep.subr.mxu0 0.0
  %3204 = vmatpush1.xpose.msra.mxu0 %v3183
  %3205 = vmatprep.subr.mxu0 0.0
  %3206 = vmatpush1.xpose.msra.mxu0 %v3186
  %3207 = vmatprep.subr.mxu0 0.0
  %3208 = vmatpush1.xpose.msra.mxu0 %v3189
  %3209 = vmatprep.subr.mxu0 0.0
  %3210 = vmatpush1.xpose.msra.mxu0 %v3192
  %3211 = vmatprep.subr.mxu0 0.0
  %3212 = vmatpush1.xpose.msra.mxu0 %v3195
  %3213 = vmatprep.subr.mxu0 0.0
  %3214 = vmatpush1.xpose.msra.mxu0 0.0
  %3215 = vmatprep.subr.mxu0 0.0
  %3216 = vmatpush1.xpose.msra.mxu0 0.0
  %3217 = vmatprep.subr.mxu0 0.0
  %3218 = vmatpush1.xpose.msra.mxu0 0.0
  %3219 = vmatprep.subr.mxu0 0.0
  %3220 = vmatpush1.xpose.msra.mxu0 0.0
  %3221 = vmatprep.subr.mxu0 0.0
  %3222 = vmatpush1.xpose.msra.mxu0 0.0
  %3223 = vmatprep.subr.mxu0 0.0
  %3224 = vmatpush1.xpose.msra.mxu0 0.0
  %3225 = vmatprep.subr.mxu0 0.0
  %3226 = vmatpush1.xpose.msra.mxu0 0.0
  %3227 = vmatprep.subr.mxu0 0.0
  %3228 = vmatpush1.xpose.msra.mxu0 0.0
  %3229 = vmatprep.subr.mxu0 0.0
  %3230 = vmatpush1.xpose.msra.mxu0 0.0
  %3231 = vmatprep.subr.mxu0 0.0
  %3232 = vmatpush1.xpose.msra.mxu0 0.0
  %3233 = vmatprep.subr.mxu0 0.0
  %3234 = vmatpush1.xpose.msra.mxu0 0.0
  %3235 = vmatprep.subr.mxu0 0.0
  %3236 = vmatpush1.xpose.msra.mxu0 0.0
  %3237 = vmatprep.subr.mxu0 0.0
  %3238 = vmatpush1.xpose.msra.mxu0 0.0
  %3239 = vmatprep.subr.mxu0 0.0
  %3240 = vmatpush1.xpose.msra.mxu0 0.0
  %3241 = vmatprep.subr.mxu0 0.0
  %3242 = vmatpush1.xpose.msra.mxu0 0.0
  %3243 = vmatprep.subr.mxu0 0.0
  %3244 = vmatpush1.xpose.msra.mxu0 0.0
  %3245 = vmatprep.subr.mxu0 0.0
  %3246 = vmatpush1.xpose.msra.mxu0 0.0
  %3247 = vmatprep.subr.mxu0 0.0
  %3248 = vmatpush1.xpose.msra.mxu0 0.0
  %3249 = vmatprep.subr.mxu0 0.0
  %3250 = vmatpush1.xpose.msra.mxu0 0.0
  %3251 = vmatprep.subr.mxu0 0.0
  %3252 = vmatpush1.xpose.msra.mxu0 0.0
  %3253 = vmatprep.subr.mxu0 0.0
  %3254 = vmatpush1.xpose.msra.mxu0 0.0
  %3255 = vmatprep.subr.mxu0 0.0
  %3256 = vmatpush1.xpose.msra.mxu0 0.0
  %3257 = vmatprep.subr.mxu0 0.0
  %3258 = vmatpush1.xpose.msra.mxu0 0.0
  %3259 = vmatprep.subr.mxu0 0.0
  %3260 = vmatpush1.xpose.msra.mxu0 0.0
  %3261 = vmatprep.mubr.f32.mxu0 0.0
  %3262 = vmatmul.mubr.f32.gmra.mrb[0].mxu0 %v3171
  %v3263 = vpop.f32.mrb[0].mxu0
  %v3264 = vadd.f32 0.0, %v3263
  %v3265 = vpop.f32.mrb[0].mxu0
  %3266 = vdwg.mxu0
  %v3271 = vcombine.low %v1444, %v1540
  %v3272 = vcombine.low %v1636, %v1732
  %v3274 = vunpack.c.l.s4 1983009808
  %v3275 = vunpack.c.0.s8 %v3274
  %v3276 = vlaneseq
  %v3277 = vshrl.u32 %v3276, 7
  %v3278 = vsub.s32 %v3275, %v3277
  %v3279 = vrot.slane %v3271, %v3278
  %v3281 = vunpack.c.l.s4 1983009808
  %v3282 = vunpack.c.0.s8 %v3281
  %v3283 = vlaneseq
  %v3284 = vshrl.u32 %v3283, 7
  %v3285 = vsub.s32 %v3282, %v3284
  %v3286 = vrot.slane %v3272, %v3285
  %v3287 = vcombine.low %v3279, %v3286
  %v3293 = vcombine.low %v2949, %v3054
  %v3294 = vcombine.low %v3159, %v3264
  %v3296 = vunpack.c.l.s4 1983009808
  %v3297 = vunpack.c.0.s8 %v3296
  %v3298 = vlaneseq
  %v3299 = vshrl.u32 %v3298, 7
  %v3300 = vsub.s32 %v3297, %v3299
  %v3301 = vrot.slane %v3293, %v3300
  %v3303 = vunpack.c.l.s4 1983009808
  %v3304 = vunpack.c.0.s8 %v3303
  %v3305 = vlaneseq
  %v3306 = vshrl.u32 %v3305, 7
  %v3307 = vsub.s32 %v3304, %v3306
  %v3308 = vrot.slane %v3294, %v3307
  %v3309 = vcombine.low %v3301, %v3308
  %3310 = vrot.lane.b32.xlu0 %v3309, 64
  %v3311 = vpop.permute.xlu0 %3310
  %v3313 = vsel %vm998, %v3287, %v3311
  %v3314 = vld [vmem:[%s5] sm:$0xff]
  %v3315 = vld [vmem:[%s6] sm:$0xff]
  %3317 = vset.pattern.permute.xlu0 0
  %3318 = vperm.xlu0 %3317, %v3315
  %v3319 = vpop.permute.xlu0 %3318
  %v3322 = vsel %vm164, %v3314, 0
  %3324 = vmatprep.subr.mxu0 0.0
  %3325 = vmatpush1.msra.mxu0 %v3313
  %3326 = vmatprep.subr.mxu0 0.0
  %3327 = vmatpush1.msra.mxu0 0.0
  %3328 = vmatprep.subr.mxu0 0.0
  %3329 = vmatpush1.msra.mxu0 0.0
  %3330 = vmatprep.subr.mxu0 0.0
  %3331 = vmatpush1.msra.mxu0 0.0
  %3332 = vmatprep.subr.mxu0 0.0
  %3333 = vmatpush1.msra.mxu0 0.0
  %3334 = vmatprep.subr.mxu0 0.0
  %3335 = vmatpush1.msra.mxu0 0.0
  %3336 = vmatprep.subr.mxu0 0.0
  %3337 = vmatpush1.msra.mxu0 0.0
  %3338 = vmatprep.subr.mxu0 0.0
  %3339 = vmatpush1.msra.mxu0 0.0
  %3340 = vmatprep.subr.mxu0 0.0
  %3341 = vmatpush1.msra.mxu0 0.0
  %3342 = vmatprep.subr.mxu0 0.0
  %3343 = vmatpush1.msra.mxu0 0.0
  %3344 = vmatprep.subr.mxu0 0.0
  %3345 = vmatpush1.msra.mxu0 0.0
  %3346 = vmatprep.subr.mxu0 0.0
  %3347 = vmatpush1.msra.mxu0 0.0
  %3348 = vmatprep.subr.mxu0 0.0
  %3349 = vmatpush1.msra.mxu0 0.0
  %3350 = vmatprep.subr.mxu0 0.0
  %3351 = vmatpush1.msra.mxu0 0.0
  %3352 = vmatprep.subr.mxu0 0.0
  %3353 = vmatpush1.msra.mxu0 0.0
  %3354 = vmatprep.subr.mxu0 0.0
  %3355 = vmatpush1.msra.mxu0 0.0
  %3356 = vmatprep.subr.mxu0 0.0
  %3357 = vmatpush1.msra.mxu0 0.0
  %3358 = vmatprep.subr.mxu0 0.0
  %3359 = vmatpush1.msra.mxu0 0.0
  %3360 = vmatprep.subr.mxu0 0.0
  %3361 = vmatpush1.msra.mxu0 0.0
  %3362 = vmatprep.subr.mxu0 0.0
  %3363 = vmatpush1.msra.mxu0 0.0
  %3364 = vmatprep.subr.mxu0 0.0
  %3365 = vmatpush1.msra.mxu0 0.0
  %3366 = vmatprep.subr.mxu0 0.0
  %3367 = vmatpush1.msra.mxu0 0.0
  %3368 = vmatprep.subr.mxu0 0.0
  %3369 = vmatpush1.msra.mxu0 0.0
  %3370 = vmatprep.subr.mxu0 0.0
  %3371 = vmatpush1.msra.mxu0 0.0
  %3372 = vmatprep.subr.mxu0 0.0
  %3373 = vmatpush1.msra.mxu0 0.0
  %3374 = vmatprep.subr.mxu0 0.0
  %3375 = vmatpush1.msra.mxu0 0.0
  %3376 = vmatprep.subr.mxu0 0.0
  %3377 = vmatpush1.msra.mxu0 0.0
  %3378 = vmatprep.subr.mxu0 0.0
  %3379 = vmatpush1.msra.mxu0 0.0
  %3380 = vmatprep.subr.mxu0 0.0
  %3381 = vmatpush1.msra.mxu0 0.0
  %3382 = vmatprep.subr.mxu0 0.0
  %3383 = vmatpush1.msra.mxu0 0.0
  %3384 = vmatprep.subr.mxu0 0.0
  %3385 = vmatpush1.msra.mxu0 0.0
  %3386 = vmatprep.subr.mxu0 0.0
  %3387 = vmatpush1.msra.mxu0 0.0
  %3388 = vmatprep.mubr.f32.mxu0 0.0
  %3389 = vmatmul.mubr.f32.gmra.mrb[0].mxu0 %v3322
  %v3390 = vpop.f32.mrb[0].mxu0
  %v3391 = vadd.f32 %v3319, %v3390
  %v3392 = vpop.f32.mrb[0].mxu0
  %3393 = vdwg.mxu0
  %v3394 = vadd.f32 %v140, %v3391
  %v3395 = vld [vmem:[%s7] sm:$0xff]
  %v3396 = vld [vmem:[%s8] sm:$0xff]
  %v3397 = vrot.slane %v3394, 4
  %v3398 = vadd.f32 %v3394, %v3397
  %v3399 = vrot.slane %v3398, 2
  %v3400 = vadd.f32 %v3398, %v3399
  %v3401 = vrot.slane %v3400, 1
  %v3402 = vadd.f32 %v3400, %v3401
  %v3403 = vrcp.pop 8.0
  %v3404 = vmul.f32 %v3402, %v3403
  %v3405 = vsub.f32 %v3394, %v3404
  %v3406 = vmul.f32 %v3405, %v3405
  %v3407 = vrot.slane %v3406, 4
  %v3408 = vadd.f32 %v3406, %v3407
  %v3409 = vrot.slane %v3408, 2
  %v3410 = vadd.f32 %v3408, %v3409
  %v3411 = vrot.slane %v3410, 1
  %v3412 = vadd.f32 %v3410, %v3411
  %v3413 = vmul.f32 %v3412, %v3403
  %v3414 = vadd.f32 %v3413, 1e-05
  %v3415 = vrsqrt.pop %v3414
  %v3416 = vmul.f32 %v3405, %v3415
  %3418 = vset.pattern.permute.xlu0 0
  %3419 = vperm.xlu0 %3418, %v3395
  %v3420 = vpop.permute.xlu0 %3419
  %v3422 = vmul.f32 %v3416, %v3420
  %3424 = vset.pattern.permute.xlu0 0
  %3425 = vperm.xlu0 %3424, %v3396
  %v3426 = vpop.permute.xlu0 %3425
  %v3428 = vadd.f32 %v3422, %v3426
  %v3429 = vld [vmem:[%s9] sm:$0xff]
  %v3430 = vld [vmem:[%s9 + $0x8] sm:$0xff]
  %v3431 = vld [vmem:[%s9 + $0x10] sm:$0xff]
  %v3432 = vld [vmem:[%s9 + $0x18] sm:$0xff]
  %v3433 = vld [vmem:[%s9 + $0x20] sm:$0xff]
  %v3434 = vld [vmem:[%s9 + $0x28] sm:$0xff]
  %v3435 = vld [vmem:[%s9 + $0x30] sm:$0xff]
  %v3436 = vld [vmem:[%s9 + $0x38] sm:$0xff]
  %v3437 = vld [vmem:[%s10] sm:$0xff]
  %v3438 = vld [vmem:[%s10 + $0x8] sm:$0xff]
  %v3439 = vld [vmem:[%s10 + $0x10] sm:$0xff]
  %v3440 = vld [vmem:[%s10 + $0x18] sm:$0xff]
  %v3441 = vld [vmem:[%s10 + $0x20] sm:$0xff]
  %v3442 = vld [vmem:[%s10 + $0x28] sm:$0xff]
  %v3443 = vld [vmem:[%s10 + $0x30] sm:$0xff]
  %v3444 = vld [vmem:[%s10 + $0x38] sm:$0xff]
  %3446 = vset.pattern.permute.xlu0 0
  %3447 = vperm.xlu0 %3446, %v3437
  %v3448 = vpop.permute.xlu0 %3447
  %3451 = vset.pattern.permute.xlu0 0
  %3452 = vperm.xlu0 %3451, %v3438
  %v3453 = vpop.permute.xlu0 %3452
  %3456 = vset.pattern.permute.xlu0 0
  %3457 = vperm.xlu0 %3456, %v3439
  %v3458 = vpop.permute.xlu0 %3457
  %3461 = vset.pattern.permute.xlu0 0
  %3462 = vperm.xlu0 %3461, %v3440
  %v3463 = vpop.permute.xlu0 %3462
  %3466 = vset.pattern.permute.xlu0 0
  %3467 = vperm.xlu0 %3466, %v3441
  %v3468 = vpop.permute.xlu0 %3467
  %3471 = vset.pattern.permute.xlu0 0
  %3472 = vperm.xlu0 %3471, %v3442
  %v3473 = vpop.permute.xlu0 %3472
  %3476 = vset.pattern.permute.xlu0 0
  %3477 = vperm.xlu0 %3476, %v3443
  %v3478 = vpop.permute.xlu0 %3477
  %3481 = vset.pattern.permute.xlu0 0
  %3482 = vperm.xlu0 %3481, %v3444
  %v3483 = vpop.permute.xlu0 %3482
  %v3486 = vsel %vm164, %v3429, 0
  %v3489 = vsel %vm164, %v3430, 0
  %v3492 = vsel %vm164, %v3431, 0
  %v3495 = vsel %vm164, %v3432, 0
  %v3498 = vsel %vm164, %v3433, 0
  %v3501 = vsel %vm164, %v3434, 0
  %v3504 = vsel %vm164, %v3435, 0
  %v3507 = vsel %vm164, %v3436, 0
  %3509 = vmatprep.subr.mxu0 0.0
  %3510 = vmatpush1.msra.mxu0 %v3428
  %3511 = vmatprep.subr.mxu0 0.0
  %3512 = vmatpush1.msra.mxu0 0.0
  %3513 = vmatprep.subr.mxu0 0.0
  %3514 = vmatpush1.msra.mxu0 0.0
  %3515 = vmatprep.subr.mxu0 0.0
  %3516 = vmatpush1.msra.mxu0 0.0
  %3517 = vmatprep.subr.mxu0 0.0
  %3518 = vmatpush1.msra.mxu0 0.0
  %3519 = vmatprep.subr.mxu0 0.0
  %3520 = vmatpush1.msra.mxu0 0.0
  %3521 = vmatprep.subr.mxu0 0.0
  %3522 = vmatpush1.msra.mxu0 0.0
  %3523 = vmatprep.subr.mxu0 0.0
  %3524 = vmatpush1.msra.mxu0 0.0
  %3525 = vmatprep.subr.mxu0 0.0
  %3526 = vmatpush1.msra.mxu0 0.0
  %3527 = vmatprep.subr.mxu0 0.0
  %3528 = vmatpush1.msra.mxu0 0.0
  %3529 = vmatprep.subr.mxu0 0.0
  %3530 = vmatpush1.msra.mxu0 0.0
  %3531 = vmatprep.subr.mxu0 0.0
  %3532 = vmatpush1.msra.mxu0 0.0
  %3533 = vmatprep.subr.mxu0 0.0
  %3534 = vmatpush1.msra.mxu0 0.0
  %3535 = vmatprep.subr.mxu0 0.0
  %3536 = vmatpush1.msra.mxu0 0.0
  %3537 = vmatprep.subr.mxu0 0.0
  %3538 = vmatpush1.msra.mxu0 0.0
  %3539 = vmatprep.subr.mxu0 0.0
  %3540 = vmatpush1.msra.mxu0 0.0
  %3541 = vmatprep.subr.mxu0 0.0
  %3542 = vmatpush1.msra.mxu0 0.0
  %3543 = vmatprep.subr.mxu0 0.0
  %3544 = vmatpush1.msra.mxu0 0.0
  %3545 = vmatprep.subr.mxu0 0.0
  %3546 = vmatpush1.msra.mxu0 0.0
  %3547 = vmatprep.subr.mxu0 0.0
  %3548 = vmatpush1.msra.mxu0 0.0
  %3549 = vmatprep.subr.mxu0 0.0
  %3550 = vmatpush1.msra.mxu0 0.0
  %3551 = vmatprep.subr.mxu0 0.0
  %3552 = vmatpush1.msra.mxu0 0.0
  %3553 = vmatprep.subr.mxu0 0.0
  %3554 = vmatpush1.msra.mxu0 0.0
  %3555 = vmatprep.subr.mxu0 0.0
  %3556 = vmatpush1.msra.mxu0 0.0
  %3557 = vmatprep.subr.mxu0 0.0
  %3558 = vmatpush1.msra.mxu0 0.0
  %3559 = vmatprep.subr.mxu0 0.0
  %3560 = vmatpush1.msra.mxu0 0.0
  %3561 = vmatprep.subr.mxu0 0.0
  %3562 = vmatpush1.msra.mxu0 0.0
  %3563 = vmatprep.subr.mxu0 0.0
  %3564 = vmatpush1.msra.mxu0 0.0
  %3565 = vmatprep.subr.mxu0 0.0
  %3566 = vmatpush1.msra.mxu0 0.0
  %3567 = vmatprep.subr.mxu0 0.0
  %3568 = vmatpush1.msra.mxu0 0.0
  %3569 = vmatprep.subr.mxu0 0.0
  %3570 = vmatpush1.msra.mxu0 0.0
  %3571 = vmatprep.subr.mxu0 0.0
  %3572 = vmatpush1.msra.mxu0 0.0
  %3573 = vmatprep.mubr.f32.mxu0 0.0
  %3574 = vmatmul.mubr.f32.gmra.mrb[0].mxu0 %v3486
  %v3575 = vpop.f32.mrb[0].mxu0
  %v3576 = vadd.f32 %v3448, %v3575
  %v3577 = vpop.f32.mrb[0].mxu0
  %3578 = vmatprep.mubr.f32.mxu0 0.0
  %3579 = vmatmul.mubr.f32.gmra.mrb[0].mxu0 %v3489
  %v3580 = vpop.f32.mrb[0].mxu0
  %v3581 = vadd.f32 %v3453, %v3580
  %v3582 = vpop.f32.mrb[0].mxu0
  %3583 = vmatprep.mubr.f32.mxu0 0.0
  %3584 = vmatmul.mubr.f32.gmra.mrb[0].mxu0 %v3492
  %v3585 = vpop.f32.mrb[0].mxu0
  %v3586 = vadd.f32 %v3458, %v3585
  %v3587 = vpop.f32.mrb[0].mxu0
  %3588 = vmatprep.mubr.f32.mxu0 0.0
  %3589 = vmatmul.mubr.f32.gmra.mrb[0].mxu0 %v3495
  %v3590 = vpop.f32.mrb[0].mxu0
  %v3591 = vadd.f32 %v3463, %v3590
  %v3592 = vpop.f32.mrb[0].mxu0
  %3593 = vmatprep.mubr.f32.mxu0 0.0
  %3594 = vmatmul.mubr.f32.gmra.mrb[0].mxu0 %v3498
  %v3595 = vpop.f32.mrb[0].mxu0
  %v3596 = vadd.f32 %v3468, %v3595
  %v3597 = vpop.f32.mrb[0].mxu0
  %3598 = vmatprep.mubr.f32.mxu0 0.0
  %3599 = vmatmul.mubr.f32.gmra.mrb[0].mxu0 %v3501
  %v3600 = vpop.f32.mrb[0].mxu0
  %v3601 = vadd.f32 %v3473, %v3600
  %v3602 = vpop.f32.mrb[0].mxu0
  %3603 = vmatprep.mubr.f32.mxu0 0.0
  %3604 = vmatmul.mubr.f32.gmra.mrb[0].mxu0 %v3504
  %v3605 = vpop.f32.mrb[0].mxu0
  %v3606 = vadd.f32 %v3478, %v3605
  %v3607 = vpop.f32.mrb[0].mxu0
  %3608 = vmatprep.mubr.f32.mxu0 0.0
  %3609 = vmatmul.mubr.f32.gmra.mrb[0].mxu0 %v3507
  %v3610 = vpop.f32.mrb[0].mxu0
  %v3611 = vadd.f32 %v3483, %v3610
  %v3612 = vpop.f32.mrb[0].mxu0
  %3613 = vdwg.mxu0
  %v3614 = vmax.f32 %v3576, 0.0
  %v3615 = vmax.f32 %v3581, 0.0
  %v3616 = vmax.f32 %v3586, 0.0
  %v3617 = vmax.f32 %v3591, 0.0
  %v3618 = vmax.f32 %v3596, 0.0
  %v3619 = vmax.f32 %v3601, 0.0
  %v3620 = vmax.f32 %v3606, 0.0
  %v3621 = vmax.f32 %v3611, 0.0
  %v3622 = vld [vmem:[%s11] sm:$0xff]
  %v3623 = vld [vmem:[%s12] sm:$0xff]
  %3625 = vset.pattern.permute.xlu0 0
  %3626 = vperm.xlu0 %3625, %v3623
  %v3627 = vpop.permute.xlu0 %3626
  %v3630 = vsel %vm998, %v3622, 0
  %3632 = vmatprep.subr.mxu0 0.0
  %3633 = vmatpush1.msra.mxu0 %v3614
  %3634 = vmatprep.subr.mxu0 0.0
  %3635 = vmatpush1.msra.mxu0 %v3615
  %3636 = vmatprep.subr.mxu0 0.0
  %3637 = vmatpush1.msra.mxu0 %v3616
  %3638 = vmatprep.subr.mxu0 0.0
  %3639 = vmatpush1.msra.mxu0 %v3617
  %3640 = vmatprep.subr.mxu0 0.0
  %3641 = vmatpush1.msra.mxu0 %v3618
  %3642 = vmatprep.subr.mxu0 0.0
  %3643 = vmatpush1.msra.mxu0 %v3619
  %3644 = vmatprep.subr.mxu0 0.0
  %3645 = vmatpush1.msra.mxu0 %v3620
  %3646 = vmatprep.subr.mxu0 0.0
  %3647 = vmatpush1.msra.mxu0 %v3621
  %3648 = vmatprep.subr.mxu0 0.0
  %3649 = vmatpush1.msra.mxu0 0.0
  %3650 = vmatprep.subr.mxu0 0.0
  %3651 = vmatpush1.msra.mxu0 0.0
  %3652 = vmatprep.subr.mxu0 0.0
  %3653 = vmatpush1.msra.mxu0 0.0
  %3654 = vmatprep.subr.mxu0 0.0
  %3655 = vmatpush1.msra.mxu0 0.0
  %3656 = vmatprep.subr.mxu0 0.0
  %3657 = vmatpush1.msra.mxu0 0.0
  %3658 = vmatprep.subr.mxu0 0.0
  %3659 = vmatpush1.msra.mxu0 0.0
  %3660 = vmatprep.subr.mxu0 0.0
  %3661 = vmatpush1.msra.mxu0 0.0
  %3662 = vmatprep.subr.mxu0 0.0
  %3663 = vmatpush1.msra.mxu0 0.0
  %3664 = vmatprep.subr.mxu0 0.0
  %3665 = vmatpush1.msra.mxu0 0.0
  %3666 = vmatprep.subr.mxu0 0.0
  %3667 = vmatpush1.msra.mxu0 0.0
  %3668 = vmatprep.subr.mxu0 0.0
  %3669 = vmatpush1.msra.mxu0 0.0
  %3670 = vmatprep.subr.mxu0 0.0
  %3671 = vmatpush1.msra.mxu0 0.0
  %3672 = vmatprep.subr.mxu0 0.0
  %3673 = vmatpush1.msra.mxu0 0.0
  %3674 = vmatprep.subr.mxu0 0.0
  %3675 = vmatpush1.msra.mxu0 0.0
  %3676 = vmatprep.subr.mxu0 0.0
  %3677 = vmatpush1.msra.mxu0 0.0
  %3678 = vmatprep.subr.mxu0 0.0
  %3679 = vmatpush1.msra.mxu0 0.0
  %3680 = vmatprep.subr.mxu0 0.0
  %3681 = vmatpush1.msra.mxu0 0.0
  %3682 = vmatprep.subr.mxu0 0.0
  %3683 = vmatpush1.msra.mxu0 0.0
  %3684 = vmatprep.subr.mxu0 0.0
  %3685 = vmatpush1.msra.mxu0 0.0
  %3686 = vmatprep.subr.mxu0 0.0
  %3687 = vmatpush1.msra.mxu0 0.0
  %3688 = vmatprep.subr.mxu0 0.0
  %3689 = vmatpush1.msra.mxu0 0.0
  %3690 = vmatprep.subr.mxu0 0.0
  %3691 = vmatpush1.msra.mxu0 0.0
  %3692 = vmatprep.subr.mxu0 0.0
  %3693 = vmatpush1.msra.mxu0 0.0
  %3694 = vmatprep.subr.mxu0 0.0
  %3695 = vmatpush1.msra.mxu0 0.0
  %3696 = vmatprep.mubr.f32.mxu0 0.0
  %3697 = vmatmul.mubr.f32.gmra.mrb[0].mxu0 %v3630
  %v3698 = vpop.f32.mrb[0].mxu0
  %v3699 = vadd.f32 %v3627, %v3698
  %v3700 = vpop.f32.mrb[0].mxu0
  %3701 = vdwg.mxu0
  %v3702 = vadd.f32 %v3428, %v3699
  %v3703 = vld [vmem:[%s13] sm:$0xff]
  %v3704 = vld [vmem:[%s14] sm:$0xff]
  %v3705 = vrot.slane %v3702, 4
  %v3706 = vadd.f32 %v3702, %v3705
  %v3707 = vrot.slane %v3706, 2
  %v3708 = vadd.f32 %v3706, %v3707
  %v3709 = vrot.slane %v3708, 1
  %v3710 = vadd.f32 %v3708, %v3709
  %v3711 = vmul.f32 %v3710, %v3403
  %v3712 = vsub.f32 %v3702, %v3711
  %v3713 = vmul.f32 %v3712, %v3712
  %v3714 = vrot.slane %v3713, 4
  %v3715 = vadd.f32 %v3713, %v3714
  %v3716 = vrot.slane %v3715, 2
  %v3717 = vadd.f32 %v3715, %v3716
  %v3718 = vrot.slane %v3717, 1
  %v3719 = vadd.f32 %v3717, %v3718
  %v3720 = vmul.f32 %v3719, %v3403
  %v3721 = vadd.f32 %v3720, 1e-05
  %v3722 = vrsqrt.pop %v3721
  %v3723 = vmul.f32 %v3712, %v3722
  %3725 = vset.pattern.permute.xlu0 0
  %3726 = vperm.xlu0 %3725, %v3703
  %v3727 = vpop.permute.xlu0 %3726
  %v3729 = vmul.f32 %v3723, %v3727
  %3731 = vset.pattern.permute.xlu0 0
  %3732 = vperm.xlu0 %3731, %v3704
  %v3733 = vpop.permute.xlu0 %3732
  %v3735 = vadd.f32 %v3729, %v3733
  %s3736 = scalar_lea.vmem %s3, 24
  %v3737 = vld [vmem:[%s3736] sm:$0xff]
  %v3738 = vld [vmem:[%s3736 + $0x8] sm:$0xff]
  %v3739 = vld [vmem:[%s3736 + $0x10] sm:$0xff]
  %s3740 = scalar_lea.vmem %s4, 24
  %v3741 = vld [vmem:[%s3740] sm:$0xff]
  %v3742 = vld [vmem:[%s3740 + $0x8] sm:$0xff]
  %v3743 = vld [vmem:[%s3740 + $0x10] sm:$0xff]
  %3745 = vset.pattern.permute.xlu0 0
  %3746 = vperm.xlu0 %3745, %v3741
  %v3747 = vpop.permute.xlu0 %3746
  %3750 = vset.pattern.permute.xlu0 0
  %3751 = vperm.xlu0 %3750, %v3742
  %v3752 = vpop.permute.xlu0 %3751
  %3755 = vset.pattern.permute.xlu0 0
  %3756 = vperm.xlu0 %3755, %v3743
  %v3757 = vpop.permute.xlu0 %3756
  %v3760 = vsel %vm164, %v3737, 0
  %v3763 = vsel %vm164, %v3738, 0
  %v3766 = vsel %vm164, %v3739, 0
  %3768 = vmatprep.subr.mxu0 0.0
  %3769 = vmatpush1.msra.mxu0 %v3735
  %3770 = vmatprep.subr.mxu0 0.0
  %3771 = vmatpush1.msra.mxu0 0.0
  %3772 = vmatprep.subr.mxu0 0.0
  %3773 = vmatpush1.msra.mxu0 0.0
  %3774 = vmatprep.subr.mxu0 0.0
  %3775 = vmatpush1.msra.mxu0 0.0
  %3776 = vmatprep.subr.mxu0 0.0
  %3777 = vmatpush1.msra.mxu0 0.0
  %3778 = vmatprep.subr.mxu0 0.0
  %3779 = vmatpush1.msra.mxu0 0.0
  %3780 = vmatprep.subr.mxu0 0.0
  %3781 = vmatpush1.msra.mxu0 0.0
  %3782 = vmatprep.subr.mxu0 0.0
  %3783 = vmatpush1.msra.mxu0 0.0
  %3784 = vmatprep.subr.mxu0 0.0
  %3785 = vmatpush1.msra.mxu0 0.0
  %3786 = vmatprep.subr.mxu0 0.0
  %3787 = vmatpush1.msra.mxu0 0.0
  %3788 = vmatprep.subr.mxu0 0.0
  %3789 = vmatpush1.msra.mxu0 0.0
  %3790 = vmatprep.subr.mxu0 0.0
  %3791 = vmatpush1.msra.mxu0 0.0
  %3792 = vmatprep.subr.mxu0 0.0
  %3793 = vmatpush1.msra.mxu0 0.0
  %3794 = vmatprep.subr.mxu0 0.0
  %3795 = vmatpush1.msra.mxu0 0.0
  %3796 = vmatprep.subr.mxu0 0.0
  %3797 = vmatpush1.msra.mxu0 0.0
  %3798 = vmatprep.subr.mxu0 0.0
  %3799 = vmatpush1.msra.mxu0 0.0
  %3800 = vmatprep.subr.mxu0 0.0
  %3801 = vmatpush1.msra.mxu0 0.0
  %3802 = vmatprep.subr.mxu0 0.0
  %3803 = vmatpush1.msra.mxu0 0.0
  %3804 = vmatprep.subr.mxu0 0.0
  %3805 = vmatpush1.msra.mxu0 0.0
  %3806 = vmatprep.subr.mxu0 0.0
  %3807 = vmatpush1.msra.mxu0 0.0
  %3808 = vmatprep.subr.mxu0 0.0
  %3809 = vmatpush1.msra.mxu0 0.0
  %3810 = vmatprep.subr.mxu0 0.0
  %3811 = vmatpush1.msra.mxu0 0.0
  %3812 = vmatprep.subr.mxu0 0.0
  %3813 = vmatpush1.msra.mxu0 0.0
  %3814 = vmatprep.subr.mxu0 0.0
  %3815 = vmatpush1.msra.mxu0 0.0
  %3816 = vmatprep.subr.mxu0 0.0
  %3817 = vmatpush1.msra.mxu0 0.0
  %3818 = vmatprep.subr.mxu0 0.0
  %3819 = vmatpush1.msra.mxu0 0.0
  %3820 = vmatprep.subr.mxu0 0.0
  %3821 = vmatpush1.msra.mxu0 0.0
  %3822 = vmatprep.subr.mxu0 0.0
  %3823 = vmatpush1.msra.mxu0 0.0
  %3824 = vmatprep.subr.mxu0 0.0
  %3825 = vmatpush1.msra.mxu0 0.0
  %3826 = vmatprep.subr.mxu0 0.0
  %3827 = vmatpush1.msra.mxu0 0.0
  %3828 = vmatprep.subr.mxu0 0.0
  %3829 = vmatpush1.msra.mxu0 0.0
  %3830 = vmatprep.subr.mxu0 0.0
  %3831 = vmatpush1.msra.mxu0 0.0
  %3832 = vmatprep.mubr.f32.mxu0 0.0
  %3833 = vmatmul.mubr.f32.gmra.mrb[0].mxu0 %v3760
  %v3834 = vpop.f32.mrb[0].mxu0
  %v3835 = vadd.f32 %v3747, %v3834
  %v3836 = vpop.f32.mrb[0].mxu0
  %3837 = vmatprep.mubr.f32.mxu0 0.0
  %3838 = vmatmul.mubr.f32.gmra.mrb[0].mxu0 %v3763
  %v3839 = vpop.f32.mrb[0].mxu0
  %v3840 = vadd.f32 %v3752, %v3839
  %v3841 = vpop.f32.mrb[0].mxu0
  %3842 = vmatprep.mubr.f32.mxu0 0.0
  %3843 = vmatmul.mubr.f32.gmra.mrb[0].mxu0 %v3766
  %v3844 = vpop.f32.mrb[0].mxu0
  %v3845 = vadd.f32 %v3757, %v3844
  %v3846 = vpop.f32.mrb[0].mxu0
  %3847 = vdwg.mxu0
  %v3849 = vcombine.high %v3835, %v3835
  %v3851 = vunpack.c.l.s4 1983009808
  %v3852 = vunpack.c.0.s8 %v3851
  %v3853 = vlaneseq
  %v3854 = vshrl.u32 %v3853, 7
  %v3855 = vsub.s32 %v3852, %v3854
  %v3856 = vrot.slane %v3835, %v3855
  %v3858 = vunpack.c.l.s4 1983009808
  %v3859 = vunpack.c.0.s8 %v3858
  %v3860 = vlaneseq
  %v3861 = vshrl.u32 %v3860, 7
  %v3862 = vsub.s32 %v3859, %v3861
  %v3863 = vrot.slane %v3849, %v3862
  %v3864 = vcombine.high %v3856, %v3856
  %v3865 = vcombine.high %v3863, %v3863
  %v3871 = vcombine.high %v3840, %v3840
  %v3873 = vunpack.c.l.s4 1983009808
  %v3874 = vunpack.c.0.s8 %v3873
  %v3875 = vlaneseq
  %v3876 = vshrl.u32 %v3875, 7
  %v3877 = vsub.s32 %v3874, %v3876
  %v3878 = vrot.slane %v3840, %v3877
  %v3880 = vunpack.c.l.s4 1983009808
  %v3881 = vunpack.c.0.s8 %v3880
  %v3882 = vlaneseq
  %v3883 = vshrl.u32 %v3882, 7
  %v3884 = vsub.s32 %v3881, %v3883
  %v3885 = vrot.slane %v3871, %v3884
  %v3886 = vcombine.high %v3878, %v3878
  %v3887 = vcombine.high %v3885, %v3885
  %v3889 = vcombine.high %v3845, %v3845
  %v3891 = vunpack.c.l.s4 1983009808
  %v3892 = vunpack.c.0.s8 %v3891
  %v3893 = vlaneseq
  %v3894 = vshrl.u32 %v3893, 7
  %v3895 = vsub.s32 %v3892, %v3894
  %v3896 = vrot.slane %v3845, %v3895
  %v3898 = vunpack.c.l.s4 1983009808
  %v3899 = vunpack.c.0.s8 %v3898
  %v3900 = vlaneseq
  %v3901 = vshrl.u32 %v3900, 7
  %v3902 = vsub.s32 %v3899, %v3901
  %v3903 = vrot.slane %v3889, %v3902
  %v3904 = vcombine.high %v3896, %v3896
  %v3905 = vcombine.high %v3903, %v3903
  %3906 = vxpose.xlu0.b32.start [1/16] %v3856, 128
  %3907 = vxpose.xlu0.b32.cont [2/16] 0.0, 128
  %3908 = vxpose.xlu0.b32.cont [3/16] 0.0, 128
  %3909 = vxpose.xlu0.b32.cont [4/16] 0.0, 128
  %3910 = vxpose.xlu0.b32.cont [5/16] 0.0, 128
  %3911 = vxpose.xlu0.b32.cont [6/16] 0.0, 128
  %3912 = vxpose.xlu0.b32.cont [7/16] 0.0, 128
  %3913 = vxpose.xlu0.b32.cont [8/16] 0.0, 128
  %3914 = vxpose.xlu0.b32.cont [9/16] 0.0, 128
  %3915 = vxpose.xlu0.b32.cont [10/16] 0.0, 128
  %3916 = vxpose.xlu0.b32.cont [11/16] 0.0, 128
  %3917 = vxpose.xlu0.b32.cont [12/16] 0.0, 128
  %3918 = vxpose.xlu0.b32.cont [13/16] 0.0, 128
  %3919 = vxpose.xlu0.b32.cont [14/16] 0.0, 128
  %3920 = vxpose.xlu0.b32.cont [15/16] 0.0, 128
  %3921 = vxpose.xlu0.b32.end [16/16] 0.0, 128
  %v3922 = vpop.trf.xlu0
  %v3923 = vpop.trf.xlu0
  %v3924 = vpop.trf.xlu0
  %v3925 = vpop.trf.xlu0
  %v3926 = vpop.trf.xlu0
  %v3927 = vpop.trf.xlu0
  %v3928 = vpop.trf.xlu0
  %v3929 = vpop.trf.xlu0
  %v3930 = vpop.trf.xlu0
  %v3931 = vpop.trf.xlu0
  %v3932 = vpop.trf.xlu0
  %v3933 = vpop.trf.xlu0
  %v3934 = vpop.trf.xlu0
  %v3935 = vpop.trf.xlu0
  %v3936 = vpop.trf.xlu0
  %v3937 = vpop.trf.xlu0
  %v3939 = vsel %vm344, %v3922, 0
  %v3942 = vsel %vm344, %v3923, 0
  %v3945 = vsel %vm344, %v3924, 0
  %v3948 = vsel %vm344, %v3925, 0
  %v3951 = vsel %vm344, %v3926, 0
  %v3954 = vsel %vm344, %v3927, 0
  %v3957 = vsel %vm344, %v3928, 0
  %v3960 = vsel %vm344, %v3929, 0
  %v3962 = vsel %vm369, %v3878, 0
  %3964 = vmatprep.subr.mxu0 0.0
  %3965 = vmatpush1.msra.mxu0 %v3962
  %3966 = vmatprep.subr.mxu0 0.0
  %3967 = vmatpush1.msra.mxu0 0.0
  %3968 = vmatprep.subr.mxu0 0.0
  %3969 = vmatpush1.msra.mxu0 0.0
  %3970 = vmatprep.subr.mxu0 0.0
  %3971 = vmatpush1.msra.mxu0 0.0
  %3972 = vmatprep.subr.mxu0 0.0
  %3973 = vmatpush1.msra.mxu0 0.0
  %3974 = vmatprep.subr.mxu0 0.0
  %3975 = vmatpush1.msra.mxu0 0.0
  %3976 = vmatprep.subr.mxu0 0.0
  %3977 = vmatpush1.msra.mxu0 0.0
  %3978 = vmatprep.subr.mxu0 0.0
  %3979 = vmatpush1.msra.mxu0 0.0
  %3980 = vmatprep.subr.mxu0 0.0
  %3981 = vmatpush1.msra.mxu0 0.0
  %3982 = vmatprep.subr.mxu0 0.0
  %3983 = vmatpush1.msra.mxu0 0.0
  %3984 = vmatprep.subr.mxu0 0.0
  %3985 = vmatpush1.msra.mxu0 0.0
  %3986 = vmatprep.subr.mxu0 0.0
  %3987 = vmatpush1.msra.mxu0 0.0
  %3988 = vmatprep.subr.mxu0 0.0
  %3989 = vmatpush1.msra.mxu0 0.0
  %3990 = vmatprep.subr.mxu0 0.0
  %3991 = vmatpush1.msra.mxu0 0.0
  %3992 = vmatprep.subr.mxu0 0.0
  %3993 = vmatpush1.msra.mxu0 0.0
  %3994 = vmatprep.subr.mxu0 0.0
  %3995 = vmatpush1.msra.mxu0 0.0
  %3996 = vmatprep.subr.mxu0 0.0
  %3997 = vmatpush1.msra.mxu0 0.0
  %3998 = vmatprep.subr.mxu0 0.0
  %3999 = vmatpush1.msra.mxu0 0.0
  %4000 = vmatprep.subr.mxu0 0.0
  %4001 = vmatpush1.msra.mxu0 0.0
  %4002 = vmatprep.subr.mxu0 0.0
  %4003 = vmatpush1.msra.mxu0 0.0
  %4004 = vmatprep.subr.mxu0 0.0
  %4005 = vmatpush1.msra.mxu0 0.0
  %4006 = vmatprep.subr.mxu0 0.0
  %4007 = vmatpush1.msra.mxu0 0.0
  %4008 = vmatprep.subr.mxu0 0.0
  %4009 = vmatpush1.msra.mxu0 0.0
  %4010 = vmatprep.subr.mxu0 0.0
  %4011 = vmatpush1.msra.mxu0 0.0
  %4012 = vmatprep.subr.mxu0 0.0
  %4013 = vmatpush1.msra.mxu0 0.0
  %4014 = vmatprep.subr.mxu0 0.0
  %4015 = vmatpush1.msra.mxu0 0.0
  %4016 = vmatprep.subr.mxu0 0.0
  %4017 = vmatpush1.msra.mxu0 0.0
  %4018 = vmatprep.subr.mxu0 0.0
  %4019 = vmatpush1.msra.mxu0 0.0
  %4020 = vmatprep.subr.mxu0 0.0
  %4021 = vmatpush1.msra.mxu0 0.0
  %4022 = vmatprep.subr.mxu0 0.0
  %4023 = vmatpush1.msra.mxu0 0.0
  %4024 = vmatprep.subr.mxu0 0.0
  %4025 = vmatpush1.msra.mxu0 0.0
  %4026 = vmatprep.subr.mxu0 0.0
  %4027 = vmatpush1.msra.mxu0 0.0
  %4028 = vmatprep.mubr.f32.mxu0 0.0
  %4029 = vmatmul.mubr.f32.gmra.mrb[0].mxu0 %v3939
  %v4030 = vpop.f32.mrb[0].mxu0
  %v4031 = vadd.f32 0.0, %v4030
  %v4032 = vpop.f32.mrb[0].mxu0
  %4033 = vmatprep.mubr.f32.mxu0 0.0
  %4034 = vmatmul.mubr.f32.gmra.mrb[0].mxu0 %v3942
  %v4035 = vpop.f32.mrb[0].mxu0
  %v4036 = vadd.f32 0.0, %v4035
  %v4037 = vpop.f32.mrb[0].mxu0
  %4038 = vmatprep.mubr.f32.mxu0 0.0
  %4039 = vmatmul.mubr.f32.gmra.mrb[0].mxu0 %v3945
  %v4040 = vpop.f32.mrb[0].mxu0
  %v4041 = vadd.f32 0.0, %v4040
  %v4042 = vpop.f32.mrb[0].mxu0
  %4043 = vmatprep.mubr.f32.mxu0 0.0
  %4044 = vmatmul.mubr.f32.gmra.mrb[0].mxu0 %v3948
  %v4045 = vpop.f32.mrb[0].mxu0
  %v4046 = vadd.f32 0.0, %v4045
  %v4047 = vpop.f32.mrb[0].mxu0
  %4048 = vmatprep.mubr.f32.mxu0 0.0
  %4049 = vmatmul.mubr.f32.gmra.mrb[0].mxu0 %v3951
  %v4050 = vpop.f32.mrb[0].mxu0
  %v4051 = vadd.f32 0.0, %v4050
  %v4052 = vpop.f32.mrb[0].mxu0
  %4053 = vmatprep.mubr.f32.mxu0 0.0
  %4054 = vmatmul.mubr.f32.gmra.mrb[0].mxu0 %v3954
  %v4055 = vpop.f32.mrb[0].mxu0
  %v4056 = vadd.f32 0.0, %v4055
  %v4057 = vpop.f32.mrb[0].mxu0
  %4058 = vmatprep.mubr.f32.mxu0 0.0
  %4059 = vmatmul.mubr.f32.gmra.mrb[0].mxu0 %v3957
  %v4060 = vpop.f32.mrb[0].mxu0
  %v4061 = vadd.f32 0.0, %v4060
  %v4062 = vpop.f32.mrb[0].mxu0
  %4063 = vmatprep.mubr.f32.mxu0 0.0
  %4064 = vmatmul.mubr.f32.gmra.mrb[0].mxu0 %v3960
  %v4065 = vpop.f32.mrb[0].mxu0
  %v4066 = vadd.f32 0.0, %v4065
  %v4067 = vpop.f32.mrb[0].mxu0
  %4068 = vdwg.mxu0
  %4069 = vxpose.xlu0.b32.start [1/16] %v3864, 128
  %4070 = vxpose.xlu0.b32.cont [2/16] 0.0, 128
  %4071 = vxpose.xlu0.b32.cont [3/16] 0.0, 128
  %4072 = vxpose.xlu0.b32.cont [4/16] 0.0, 128
  %4073 = vxpose.xlu0.b32.cont [5/16] 0.0, 128
  %4074 = vxpose.xlu0.b32.cont [6/16] 0.0, 128
  %4075 = vxpose.xlu0.b32.cont [7/16] 0.0, 128
  %4076 = vxpose.xlu0.b32.cont [8/16] 0.0, 128
  %4077 = vxpose.xlu0.b32.cont [9/16] 0.0, 128
  %4078 = vxpose.xlu0.b32.cont [10/16] 0.0, 128
  %4079 = vxpose.xlu0.b32.cont [11/16] 0.0, 128
  %4080 = vxpose.xlu0.b32.cont [12/16] 0.0, 128
  %4081 = vxpose.xlu0.b32.cont [13/16] 0.0, 128
  %4082 = vxpose.xlu0.b32.cont [14/16] 0.0, 128
  %4083 = vxpose.xlu0.b32.cont [15/16] 0.0, 128
  %4084 = vxpose.xlu0.b32.end [16/16] 0.0, 128
  %v4085 = vpop.trf.xlu0
  %v4086 = vpop.trf.xlu0
  %v4087 = vpop.trf.xlu0
  %v4088 = vpop.trf.xlu0
  %v4089 = vpop.trf.xlu0
  %v4090 = vpop.trf.xlu0
  %v4091 = vpop.trf.xlu0
  %v4092 = vpop.trf.xlu0
  %v4093 = vpop.trf.xlu0
  %v4094 = vpop.trf.xlu0
  %v4095 = vpop.trf.xlu0
  %v4096 = vpop.trf.xlu0
  %v4097 = vpop.trf.xlu0
  %v4098 = vpop.trf.xlu0
  %v4099 = vpop.trf.xlu0
  %v4100 = vpop.trf.xlu0
  %v4102 = vsel %vm344, %v4085, 0
  %v4105 = vsel %vm344, %v4086, 0
  %v4108 = vsel %vm344, %v4087, 0
  %v4111 = vsel %vm344, %v4088, 0
  %v4114 = vsel %vm344, %v4089, 0
  %v4117 = vsel %vm344, %v4090, 0
  %v4120 = vsel %vm344, %v4091, 0
  %v4123 = vsel %vm344, %v4092, 0
  %v4125 = vsel %vm369, %v3886, 0
  %4127 = vmatprep.subr.mxu0 0.0
  %4128 = vmatpush1.msra.mxu0 %v4125
  %4129 = vmatprep.subr.mxu0 0.0
  %4130 = vmatpush1.msra.mxu0 0.0
  %4131 = vmatprep.subr.mxu0 0.0
  %4132 = vmatpush1.msra.mxu0 0.0
  %4133 = vmatprep.subr.mxu0 0.0
  %4134 = vmatpush1.msra.mxu0 0.0
  %4135 = vmatprep.subr.mxu0 0.0
  %4136 = vmatpush1.msra.mxu0 0.0
  %4137 = vmatprep.subr.mxu0 0.0
  %4138 = vmatpush1.msra.mxu0 0.0
  %4139 = vmatprep.subr.mxu0 0.0
  %4140 = vmatpush1.msra.mxu0 0.0
  %4141 = vmatprep.subr.mxu0 0.0
  %4142 = vmatpush1.msra.mxu0 0.0
  %4143 = vmatprep.subr.mxu0 0.0
  %4144 = vmatpush1.msra.mxu0 0.0
  %4145 = vmatprep.subr.mxu0 0.0
  %4146 = vmatpush1.msra.mxu0 0.0
  %4147 = vmatprep.subr.mxu0 0.0
  %4148 = vmatpush1.msra.mxu0 0.0
  %4149 = vmatprep.subr.mxu0 0.0
  %4150 = vmatpush1.msra.mxu0 0.0
  %4151 = vmatprep.subr.mxu0 0.0
  %4152 = vmatpush1.msra.mxu0 0.0
  %4153 = vmatprep.subr.mxu0 0.0
  %4154 = vmatpush1.msra.mxu0 0.0
  %4155 = vmatprep.subr.mxu0 0.0
  %4156 = vmatpush1.msra.mxu0 0.0
  %4157 = vmatprep.subr.mxu0 0.0
  %4158 = vmatpush1.msra.mxu0 0.0
  %4159 = vmatprep.subr.mxu0 0.0
  %4160 = vmatpush1.msra.mxu0 0.0
  %4161 = vmatprep.subr.mxu0 0.0
  %4162 = vmatpush1.msra.mxu0 0.0
  %4163 = vmatprep.subr.mxu0 0.0
  %4164 = vmatpush1.msra.mxu0 0.0
  %4165 = vmatprep.subr.mxu0 0.0
  %4166 = vmatpush1.msra.mxu0 0.0
  %4167 = vmatprep.subr.mxu0 0.0
  %4168 = vmatpush1.msra.mxu0 0.0
  %4169 = vmatprep.subr.mxu0 0.0
  %4170 = vmatpush1.msra.mxu0 0.0
  %4171 = vmatprep.subr.mxu0 0.0
  %4172 = vmatpush1.msra.mxu0 0.0
  %4173 = vmatprep.subr.mxu0 0.0
  %4174 = vmatpush1.msra.mxu0 0.0
  %4175 = vmatprep.subr.mxu0 0.0
  %4176 = vmatpush1.msra.mxu0 0.0
  %4177 = vmatprep.subr.mxu0 0.0
  %4178 = vmatpush1.msra.mxu0 0.0
  %4179 = vmatprep.subr.mxu0 0.0
  %4180 = vmatpush1.msra.mxu0 0.0
  %4181 = vmatprep.subr.mxu0 0.0
  %4182 = vmatpush1.msra.mxu0 0.0
  %4183 = vmatprep.subr.mxu0 0.0
  %4184 = vmatpush1.msra.mxu0 0.0
  %4185 = vmatprep.subr.mxu0 0.0
  %4186 = vmatpush1.msra.mxu0 0.0
  %4187 = vmatprep.subr.mxu0 0.0
  %4188 = vmatpush1.msra.mxu0 0.0
  %4189 = vmatprep.subr.mxu0 0.0
  %4190 = vmatpush1.msra.mxu0 0.0
  %4191 = vmatprep.mubr.f32.mxu0 0.0
  %4192 = vmatmul.mubr.f32.gmra.mrb[0].mxu0 %v4102
  %v4193 = vpop.f32.mrb[0].mxu0
  %v4194 = vadd.f32 0.0, %v4193
  %v4195 = vpop.f32.mrb[0].mxu0
  %4196 = vmatprep.mubr.f32.mxu0 0.0
  %4197 = vmatmul.mubr.f32.gmra.mrb[0].mxu0 %v4105
  %v4198 = vpop.f32.mrb[0].mxu0
  %v4199 = vadd.f32 0.0, %v4198
  %v4200 = vpop.f32.mrb[0].mxu0
  %4201 = vmatprep.mubr.f32.mxu0 0.0
  %4202 = vmatmul.mubr.f32.gmra.mrb[0].mxu0 %v4108
  %v4203 = vpop.f32.mrb[0].mxu0
  %v4204 = vadd.f32 0.0, %v4203
  %v4205 = vpop.f32.mrb[0].mxu0
  %4206 = vmatprep.mubr.f32.mxu0 0.0
  %4207 = vmatmul.mubr.f32.gmra.mrb[0].mxu0 %v4111
  %v4208 = vpop.f32.mrb[0].mxu0
  %v4209 = vadd.f32 0.0, %v4208
  %v4210 = vpop.f32.mrb[0].mxu0
  %4211 = vmatprep.mubr.f32.mxu0 0.0
  %4212 = vmatmul.mubr.f32.gmra.mrb[0].mxu0 %v4114
  %v4213 = vpop.f32.mrb[0].mxu0
  %v4214 = vadd.f32 0.0, %v4213
  %v4215 = vpop.f32.mrb[0].mxu0
  %4216 = vmatprep.mubr.f32.mxu0 0.0
  %4217 = vmatmul.mubr.f32.gmra.mrb[0].mxu0 %v4117
  %v4218 = vpop.f32.mrb[0].mxu0
  %v4219 = vadd.f32 0.0, %v4218
  %v4220 = vpop.f32.mrb[0].mxu0
  %4221 = vmatprep.mubr.f32.mxu0 0.0
  %4222 = vmatmul.mubr.f32.gmra.mrb[0].mxu0 %v4120
  %v4223 = vpop.f32.mrb[0].mxu0
  %v4224 = vadd.f32 0.0, %v4223
  %v4225 = vpop.f32.mrb[0].mxu0
  %4226 = vmatprep.mubr.f32.mxu0 0.0
  %4227 = vmatmul.mubr.f32.gmra.mrb[0].mxu0 %v4123
  %v4228 = vpop.f32.mrb[0].mxu0
  %v4229 = vadd.f32 0.0, %v4228
  %v4230 = vpop.f32.mrb[0].mxu0
  %4231 = vdwg.mxu0
  %4232 = vxpose.xlu0.b32.start [1/16] %v3863, 128
  %4233 = vxpose.xlu0.b32.cont [2/16] 0.0, 128
  %4234 = vxpose.xlu0.b32.cont [3/16] 0.0, 128
  %4235 = vxpose.xlu0.b32.cont [4/16] 0.0, 128
  %4236 = vxpose.xlu0.b32.cont [5/16] 0.0, 128
  %4237 = vxpose.xlu0.b32.cont [6/16] 0.0, 128
  %4238 = vxpose.xlu0.b32.cont [7/16] 0.0, 128
  %4239 = vxpose.xlu0.b32.cont [8/16] 0.0, 128
  %4240 = vxpose.xlu0.b32.cont [9/16] 0.0, 128
  %4241 = vxpose.xlu0.b32.cont [10/16] 0.0, 128
  %4242 = vxpose.xlu0.b32.cont [11/16] 0.0, 128
  %4243 = vxpose.xlu0.b32.cont [12/16] 0.0, 128
  %4244 = vxpose.xlu0.b32.cont [13/16] 0.0, 128
  %4245 = vxpose.xlu0.b32.cont [14/16] 0.0, 128
  %4246 = vxpose.xlu0.b32.cont [15/16] 0.0, 128
  %4247 = vxpose.xlu0.b32.end [16/16] 0.0, 128
  %v4248 = vpop.trf.xlu0
  %v4249 = vpop.trf.xlu0
  %v4250 = vpop.trf.xlu0
  %v4251 = vpop.trf.xlu0
  %v4252 = vpop.trf.xlu0
  %v4253 = vpop.trf.xlu0
  %v4254 = vpop.trf.xlu0
  %v4255 = vpop.trf.xlu0
  %v4256 = vpop.trf.xlu0
  %v4257 = vpop.trf.xlu0
  %v4258 = vpop.trf.xlu0
  %v4259 = vpop.trf.xlu0
  %v4260 = vpop.trf.xlu0
  %v4261 = vpop.trf.xlu0
  %v4262 = vpop.trf.xlu0
  %v4263 = vpop.trf.xlu0
  %v4265 = vsel %vm344, %v4248, 0
  %v4268 = vsel %vm344, %v4249, 0
  %v4271 = vsel %vm344, %v4250, 0
  %v4274 = vsel %vm344, %v4251, 0
  %v4277 = vsel %vm344, %v4252, 0
  %v4280 = vsel %vm344, %v4253, 0
  %v4283 = vsel %vm344, %v4254, 0
  %v4286 = vsel %vm344, %v4255, 0
  %v4288 = vsel %vm369, %v3885, 0
  %4290 = vmatprep.subr.mxu0 0.0
  %4291 = vmatpush1.msra.mxu0 %v4288
  %4292 = vmatprep.subr.mxu0 0.0
  %4293 = vmatpush1.msra.mxu0 0.0
  %4294 = vmatprep.subr.mxu0 0.0
  %4295 = vmatpush1.msra.mxu0 0.0
  %4296 = vmatprep.subr.mxu0 0.0
  %4297 = vmatpush1.msra.mxu0 0.0
  %4298 = vmatprep.subr.mxu0 0.0
  %4299 = vmatpush1.msra.mxu0 0.0
  %4300 = vmatprep.subr.mxu0 0.0
  %4301 = vmatpush1.msra.mxu0 0.0
  %4302 = vmatprep.subr.mxu0 0.0
  %4303 = vmatpush1.msra.mxu0 0.0
  %4304 = vmatprep.subr.mxu0 0.0
  %4305 = vmatpush1.msra.mxu0 0.0
  %4306 = vmatprep.subr.mxu0 0.0
  %4307 = vmatpush1.msra.mxu0 0.0
  %4308 = vmatprep.subr.mxu0 0.0
  %4309 = vmatpush1.msra.mxu0 0.0
  %4310 = vmatprep.subr.mxu0 0.0
  %4311 = vmatpush1.msra.mxu0 0.0
  %4312 = vmatprep.subr.mxu0 0.0
  %4313 = vmatpush1.msra.mxu0 0.0
  %4314 = vmatprep.subr.mxu0 0.0
  %4315 = vmatpush1.msra.mxu0 0.0
  %4316 = vmatprep.subr.mxu0 0.0
  %4317 = vmatpush1.msra.mxu0 0.0
  %4318 = vmatprep.subr.mxu0 0.0
  %4319 = vmatpush1.msra.mxu0 0.0
  %4320 = vmatprep.subr.mxu0 0.0
  %4321 = vmatpush1.msra.mxu0 0.0
  %4322 = vmatprep.subr.mxu0 0.0
  %4323 = vmatpush1.msra.mxu0 0.0
  %4324 = vmatprep.subr.mxu0 0.0
  %4325 = vmatpush1.msra.mxu0 0.0
  %4326 = vmatprep.subr.mxu0 0.0
  %4327 = vmatpush1.msra.mxu0 0.0
  %4328 = vmatprep.subr.mxu0 0.0
  %4329 = vmatpush1.msra.mxu0 0.0
  %4330 = vmatprep.subr.mxu0 0.0
  %4331 = vmatpush1.msra.mxu0 0.0
  %4332 = vmatprep.subr.mxu0 0.0
  %4333 = vmatpush1.msra.mxu0 0.0
  %4334 = vmatprep.subr.mxu0 0.0
  %4335 = vmatpush1.msra.mxu0 0.0
  %4336 = vmatprep.subr.mxu0 0.0
  %4337 = vmatpush1.msra.mxu0 0.0
  %4338 = vmatprep.subr.mxu0 0.0
  %4339 = vmatpush1.msra.mxu0 0.0
  %4340 = vmatprep.subr.mxu0 0.0
  %4341 = vmatpush1.msra.mxu0 0.0
  %4342 = vmatprep.subr.mxu0 0.0
  %4343 = vmatpush1.msra.mxu0 0.0
  %4344 = vmatprep.subr.mxu0 0.0
  %4345 = vmatpush1.msra.mxu0 0.0
  %4346 = vmatprep.subr.mxu0 0.0
  %4347 = vmatpush1.msra.mxu0 0.0
  %4348 = vmatprep.subr.mxu0 0.0
  %4349 = vmatpush1.msra.mxu0 0.0
  %4350 = vmatprep.subr.mxu0 0.0
  %4351 = vmatpush1.msra.mxu0 0.0
  %4352 = vmatprep.subr.mxu0 0.0
  %4353 = vmatpush1.msra.mxu0 0.0
  %4354 = vmatprep.mubr.f32.mxu0 0.0
  %4355 = vmatmul.mubr.f32.gmra.mrb[0].mxu0 %v4265
  %v4356 = vpop.f32.mrb[0].mxu0
  %v4357 = vadd.f32 0.0, %v4356
  %v4358 = vpop.f32.mrb[0].mxu0
  %4359 = vmatprep.mubr.f32.mxu0 0.0
  %4360 = vmatmul.mubr.f32.gmra.mrb[0].mxu0 %v4268
  %v4361 = vpop.f32.mrb[0].mxu0
  %v4362 = vadd.f32 0.0, %v4361
  %v4363 = vpop.f32.mrb[0].mxu0
  %4364 = vmatprep.mubr.f32.mxu0 0.0
  %4365 = vmatmul.mubr.f32.gmra.mrb[0].mxu0 %v4271
  %v4366 = vpop.f32.mrb[0].mxu0
  %v4367 = vadd.f32 0.0, %v4366
  %v4368 = vpop.f32.mrb[0].mxu0
  %4369 = vmatprep.mubr.f32.mxu0 0.0
  %4370 = vmatmul.mubr.f32.gmra.mrb[0].mxu0 %v4274
  %v4371 = vpop.f32.mrb[0].mxu0
  %v4372 = vadd.f32 0.0, %v4371
  %v4373 = vpop.f32.mrb[0].mxu0
  %4374 = vmatprep.mubr.f32.mxu0 0.0
  %4375 = vmatmul.mubr.f32.gmra.mrb[0].mxu0 %v4277
  %v4376 = vpop.f32.mrb[0].mxu0
  %v4377 = vadd.f32 0.0, %v4376
  %v4378 = vpop.f32.mrb[0].mxu0
  %4379 = vmatprep.mubr.f32.mxu0 0.0
  %4380 = vmatmul.mubr.f32.gmra.mrb[0].mxu0 %v4280
  %v4381 = vpop.f32.mrb[0].mxu0
  %v4382 = vadd.f32 0.0, %v4381
  %v4383 = vpop.f32.mrb[0].mxu0
  %4384 = vmatprep.mubr.f32.mxu0 0.0
  %4385 = vmatmul.mubr.f32.gmra.mrb[0].mxu0 %v4283
  %v4386 = vpop.f32.mrb[0].mxu0
  %v4387 = vadd.f32 0.0, %v4386
  %v4388 = vpop.f32.mrb[0].mxu0
  %4389 = vmatprep.mubr.f32.mxu0 0.0
  %4390 = vmatmul.mubr.f32.gmra.mrb[0].mxu0 %v4286
  %v4391 = vpop.f32.mrb[0].mxu0
  %v4392 = vadd.f32 0.0, %v4391
  %v4393 = vpop.f32.mrb[0].mxu0
  %4394 = vdwg.mxu0
  %4395 = vxpose.xlu0.b32.start [1/16] %v3865, 128
  %4396 = vxpose.xlu0.b32.cont [2/16] 0.0, 128
  %4397 = vxpose.xlu0.b32.cont [3/16] 0.0, 128
  %4398 = vxpose.xlu0.b32.cont [4/16] 0.0, 128
  %4399 = vxpose.xlu0.b32.cont [5/16] 0.0, 128
  %4400 = vxpose.xlu0.b32.cont [6/16] 0.0, 128
  %4401 = vxpose.xlu0.b32.cont [7/16] 0.0, 128
  %4402 = vxpose.xlu0.b32.cont [8/16] 0.0, 128
  %4403 = vxpose.xlu0.b32.cont [9/16] 0.0, 128
  %4404 = vxpose.xlu0.b32.cont [10/16] 0.0, 128
  %4405 = vxpose.xlu0.b32.cont [11/16] 0.0, 128
  %4406 = vxpose.xlu0.b32.cont [12/16] 0.0, 128
  %4407 = vxpose.xlu0.b32.cont [13/16] 0.0, 128
  %4408 = vxpose.xlu0.b32.cont [14/16] 0.0, 128
  %4409 = vxpose.xlu0.b32.cont [15/16] 0.0, 128
  %4410 = vxpose.xlu0.b32.end [16/16] 0.0, 128
  %v4411 = vpop.trf.xlu0
  %v4412 = vpop.trf.xlu0
  %v4413 = vpop.trf.xlu0
  %v4414 = vpop.trf.xlu0
  %v4415 = vpop.trf.xlu0
  %v4416 = vpop.trf.xlu0
  %v4417 = vpop.trf.xlu0
  %v4418 = vpop.trf.xlu0
  %v4419 = vpop.trf.xlu0
  %v4420 = vpop.trf.xlu0
  %v4421 = vpop.trf.xlu0
  %v4422 = vpop.trf.xlu0
  %v4423 = vpop.trf.xlu0
  %v4424 = vpop.trf.xlu0
  %v4425 = vpop.trf.xlu0
  %v4426 = vpop.trf.xlu0
  %v4428 = vsel %vm344, %v4411, 0
  %v4431 = vsel %vm344, %v4412, 0
  %v4434 = vsel %vm344, %v4413, 0
  %v4437 = vsel %vm344, %v4414, 0
  %v4440 = vsel %vm344, %v4415, 0
  %v4443 = vsel %vm344, %v4416, 0
  %v4446 = vsel %vm344, %v4417, 0
  %v4449 = vsel %vm344, %v4418, 0
  %v4451 = vsel %vm369, %v3887, 0
  %4453 = vmatprep.subr.mxu0 0.0
  %4454 = vmatpush1.msra.mxu0 %v4451
  %4455 = vmatprep.subr.mxu0 0.0
  %4456 = vmatpush1.msra.mxu0 0.0
  %4457 = vmatprep.subr.mxu0 0.0
  %4458 = vmatpush1.msra.mxu0 0.0
  %4459 = vmatprep.subr.mxu0 0.0
  %4460 = vmatpush1.msra.mxu0 0.0
  %4461 = vmatprep.subr.mxu0 0.0
  %4462 = vmatpush1.msra.mxu0 0.0
  %4463 = vmatprep.subr.mxu0 0.0
  %4464 = vmatpush1.msra.mxu0 0.0
  %4465 = vmatprep.subr.mxu0 0.0
  %4466 = vmatpush1.msra.mxu0 0.0
  %4467 = vmatprep.subr.mxu0 0.0
  %4468 = vmatpush1.msra.mxu0 0.0
  %4469 = vmatprep.subr.mxu0 0.0
  %4470 = vmatpush1.msra.mxu0 0.0
  %4471 = vmatprep.subr.mxu0 0.0
  %4472 = vmatpush1.msra.mxu0 0.0
  %4473 = vmatprep.subr.mxu0 0.0
  %4474 = vmatpush1.msra.mxu0 0.0
  %4475 = vmatprep.subr.mxu0 0.0
  %4476 = vmatpush1.msra.mxu0 0.0
  %4477 = vmatprep.subr.mxu0 0.0
  %4478 = vmatpush1.msra.mxu0 0.0
  %4479 = vmatprep.subr.mxu0 0.0
  %4480 = vmatpush1.msra.mxu0 0.0
  %4481 = vmatprep.subr.mxu0 0.0
  %4482 = vmatpush1.msra.mxu0 0.0
  %4483 = vmatprep.subr.mxu0 0.0
  %4484 = vmatpush1.msra.mxu0 0.0
  %4485 = vmatprep.subr.mxu0 0.0
  %4486 = vmatpush1.msra.mxu0 0.0
  %4487 = vmatprep.subr.mxu0 0.0
  %4488 = vmatpush1.msra.mxu0 0.0
  %4489 = vmatprep.subr.mxu0 0.0
  %4490 = vmatpush1.msra.mxu0 0.0
  %4491 = vmatprep.subr.mxu0 0.0
  %4492 = vmatpush1.msra.mxu0 0.0
  %4493 = vmatprep.subr.mxu0 0.0
  %4494 = vmatpush1.msra.mxu0 0.0
  %4495 = vmatprep.subr.mxu0 0.0
  %4496 = vmatpush1.msra.mxu0 0.0
  %4497 = vmatprep.subr.mxu0 0.0
  %4498 = vmatpush1.msra.mxu0 0.0
  %4499 = vmatprep.subr.mxu0 0.0
  %4500 = vmatpush1.msra.mxu0 0.0
  %4501 = vmatprep.subr.mxu0 0.0
  %4502 = vmatpush1.msra.mxu0 0.0
  %4503 = vmatprep.subr.mxu0 0.0
  %4504 = vmatpush1.msra.mxu0 0.0
  %4505 = vmatprep.subr.mxu0 0.0
  %4506 = vmatpush1.msra.mxu0 0.0
  %4507 = vmatprep.subr.mxu0 0.0
  %4508 = vmatpush1.msra.mxu0 0.0
  %4509 = vmatprep.subr.mxu0 0.0
  %4510 = vmatpush1.msra.mxu0 0.0
  %4511 = vmatprep.subr.mxu0 0.0
  %4512 = vmatpush1.msra.mxu0 0.0
  %4513 = vmatprep.subr.mxu0 0.0
  %4514 = vmatpush1.msra.mxu0 0.0
  %4515 = vmatprep.subr.mxu0 0.0
  %4516 = vmatpush1.msra.mxu0 0.0
  %4517 = vmatprep.mubr.f32.mxu0 0.0
  %4518 = vmatmul.mubr.f32.gmra.mrb[0].mxu0 %v4428
  %v4519 = vpop.f32.mrb[0].mxu0
  %v4520 = vadd.f32 0.0, %v4519
  %v4521 = vpop.f32.mrb[0].mxu0
  %4522 = vmatprep.mubr.f32.mxu0 0.0
  %4523 = vmatmul.mubr.f32.gmra.mrb[0].mxu0 %v4431
  %v4524 = vpop.f32.mrb[0].mxu0
  %v4525 = vadd.f32 0.0, %v4524
  %v4526 = vpop.f32.mrb[0].mxu0
  %4527 = vmatprep.mubr.f32.mxu0 0.0
  %4528 = vmatmul.mubr.f32.gmra.mrb[0].mxu0 %v4434
  %v4529 = vpop.f32.mrb[0].mxu0
  %v4530 = vadd.f32 0.0, %v4529
  %v4531 = vpop.f32.mrb[0].mxu0
  %4532 = vmatprep.mubr.f32.mxu0 0.0
  %4533 = vmatmul.mubr.f32.gmra.mrb[0].mxu0 %v4437
  %v4534 = vpop.f32.mrb[0].mxu0
  %v4535 = vadd.f32 0.0, %v4534
  %v4536 = vpop.f32.mrb[0].mxu0
  %4537 = vmatprep.mubr.f32.mxu0 0.0
  %4538 = vmatmul.mubr.f32.gmra.mrb[0].mxu0 %v4440
  %v4539 = vpop.f32.mrb[0].mxu0
  %v4540 = vadd.f32 0.0, %v4539
  %v4541 = vpop.f32.mrb[0].mxu0
  %4542 = vmatprep.mubr.f32.mxu0 0.0
  %4543 = vmatmul.mubr.f32.gmra.mrb[0].mxu0 %v4443
  %v4544 = vpop.f32.mrb[0].mxu0
  %v4545 = vadd.f32 0.0, %v4544
  %v4546 = vpop.f32.mrb[0].mxu0
  %4547 = vmatprep.mubr.f32.mxu0 0.0
  %4548 = vmatmul.mubr.f32.gmra.mrb[0].mxu0 %v4446
  %v4549 = vpop.f32.mrb[0].mxu0
  %v4550 = vadd.f32 0.0, %v4549
  %v4551 = vpop.f32.mrb[0].mxu0
  %4552 = vmatprep.mubr.f32.mxu0 0.0
  %4553 = vmatmul.mubr.f32.gmra.mrb[0].mxu0 %v4449
  %v4554 = vpop.f32.mrb[0].mxu0
  %v4555 = vadd.f32 0.0, %v4554
  %v4556 = vpop.f32.mrb[0].mxu0
  %4557 = vdwg.mxu0
  %v4558 = vmul.f32 %v4031, 0.70710677
  %v4559 = vmul.f32 %v4036, 0.70710677
  %v4560 = vmul.f32 %v4041, 0.70710677
  %v4561 = vmul.f32 %v4046, 0.70710677
  %v4562 = vmul.f32 %v4051, 0.70710677
  %v4563 = vmul.f32 %v4056, 0.70710677
  %v4564 = vmul.f32 %v4061, 0.70710677
  %v4565 = vmul.f32 %v4066, 0.70710677
  %v4566 = vmul.f32 %v4194, 0.70710677
  %v4567 = vmul.f32 %v4199, 0.70710677
  %v4568 = vmul.f32 %v4204, 0.70710677
  %v4569 = vmul.f32 %v4209, 0.70710677
  %v4570 = vmul.f32 %v4214, 0.70710677
  %v4571 = vmul.f32 %v4219, 0.70710677
  %v4572 = vmul.f32 %v4224, 0.70710677
  %v4573 = vmul.f32 %v4229, 0.70710677
  %v4574 = vmul.f32 %v4357, 0.70710677
  %v4575 = vmul.f32 %v4362, 0.70710677
  %v4576 = vmul.f32 %v4367, 0.70710677
  %v4577 = vmul.f32 %v4372, 0.70710677
  %v4578 = vmul.f32 %v4377, 0.70710677
  %v4579 = vmul.f32 %v4382, 0.70710677
  %v4580 = vmul.f32 %v4387, 0.70710677
  %v4581 = vmul.f32 %v4392, 0.70710677
  %v4582 = vmul.f32 %v4520, 0.70710677
  %v4583 = vmul.f32 %v4525, 0.70710677
  %v4584 = vmul.f32 %v4530, 0.70710677
  %v4585 = vmul.f32 %v4535, 0.70710677
  %v4586 = vmul.f32 %v4540, 0.70710677
  %v4587 = vmul.f32 %v4545, 0.70710677
  %v4588 = vmul.f32 %v4550, 0.70710677
  %v4589 = vmul.f32 %v4555, 0.70710677
  %v4590 = vsel %vm998, %v4558, -inf
  %4591 = vmax.xlane.f32.xlu0 %v4590
  %v4592 = vpop.xlane.xlu0 %4591
  %v4593 = vsel %vm998, %v4559, -inf
  %4594 = vmax.xlane.f32.xlu0 %v4593
  %v4595 = vpop.xlane.xlu0 %4594
  %v4596 = vsel %vm998, %v4560, -inf
  %4597 = vmax.xlane.f32.xlu0 %v4596
  %v4598 = vpop.xlane.xlu0 %4597
  %v4599 = vsel %vm998, %v4561, -inf
  %4600 = vmax.xlane.f32.xlu0 %v4599
  %v4601 = vpop.xlane.xlu0 %4600
  %v4602 = vsel %vm998, %v4562, -inf
  %4603 = vmax.xlane.f32.xlu0 %v4602
  %v4604 = vpop.xlane.xlu0 %4603
  %v4605 = vsel %vm998, %v4563, -inf
  %4606 = vmax.xlane.f32.xlu0 %v4605
  %v4607 = vpop.xlane.xlu0 %4606
  %v4608 = vsel %vm998, %v4564, -inf
  %4609 = vmax.xlane.f32.xlu0 %v4608
  %v4610 = vpop.xlane.xlu0 %4609
  %v4611 = vsel %vm998, %v4565, -inf
  %4612 = vmax.xlane.f32.xlu0 %v4611
  %v4613 = vpop.xlane.xlu0 %4612
  %v4614 = vsel %vm998, %v4566, -inf
  %4615 = vmax.xlane.f32.xlu0 %v4614
  %v4616 = vpop.xlane.xlu0 %4615
  %v4617 = vsel %vm998, %v4567, -inf
  %4618 = vmax.xlane.f32.xlu0 %v4617
  %v4619 = vpop.xlane.xlu0 %4618
  %v4620 = vsel %vm998, %v4568, -inf
  %4621 = vmax.xlane.f32.xlu0 %v4620
  %v4622 = vpop.xlane.xlu0 %4621
  %v4623 = vsel %vm998, %v4569, -inf
  %4624 = vmax.xlane.f32.xlu0 %v4623
  %v4625 = vpop.xlane.xlu0 %4624
  %v4626 = vsel %vm998, %v4570, -inf
  %4627 = vmax.xlane.f32.xlu0 %v4626
  %v4628 = vpop.xlane.xlu0 %4627
  %v4629 = vsel %vm998, %v4571, -inf
  %4630 = vmax.xlane.f32.xlu0 %v4629
  %v4631 = vpop.xlane.xlu0 %4630
  %v4632 = vsel %vm998, %v4572, -inf
  %4633 = vmax.xlane.f32.xlu0 %v4632
  %v4634 = vpop.xlane.xlu0 %4633
  %v4635 = vsel %vm998, %v4573, -inf
  %4636 = vmax.xlane.f32.xlu0 %v4635
  %v4637 = vpop.xlane.xlu0 %4636
  %v4638 = vsel %vm998, %v4574, -inf
  %4639 = vmax.xlane.f32.xlu0 %v4638
  %v4640 = vpop.xlane.xlu0 %4639
  %v4641 = vsel %vm998, %v4575, -inf
  %4642 = vmax.xlane.f32.xlu0 %v4641
  %v4643 = vpop.xlane.xlu0 %4642
  %v4644 = vsel %vm998, %v4576, -inf
  %4645 = vmax.xlane.f32.xlu0 %v4644
  %v4646 = vpop.xlane.xlu0 %4645
  %v4647 = vsel %vm998, %v4577, -inf
  %4648 = vmax.xlane.f32.xlu0 %v4647
  %v4649 = vpop.xlane.xlu0 %4648
  %v4650 = vsel %vm998, %v4578, -inf
  %4651 = vmax.xlane.f32.xlu0 %v4650
  %v4652 = vpop.xlane.xlu0 %4651
  %v4653 = vsel %vm998, %v4579, -inf
  %4654 = vmax.xlane.f32.xlu0 %v4653
  %v4655 = vpop.xlane.xlu0 %4654
  %v4656 = vsel %vm998, %v4580, -inf
  %4657 = vmax.xlane.f32.xlu0 %v4656
  %v4658 = vpop.xlane.xlu0 %4657
  %v4659 = vsel %vm998, %v4581, -inf
  %4660 = vmax.xlane.f32.xlu0 %v4659
  %v4661 = vpop.xlane.xlu0 %4660
  %v4662 = vsel %vm998, %v4582, -inf
  %4663 = vmax.xlane.f32.xlu0 %v4662
  %v4664 = vpop.xlane.xlu0 %4663
  %v4665 = vsel %vm998, %v4583, -inf
  %4666 = vmax.xlane.f32.xlu0 %v4665
  %v4667 = vpop.xlane.xlu0 %4666
  %v4668 = vsel %vm998, %v4584, -inf
  %4669 = vmax.xlane.f32.xlu0 %v4668
  %v4670 = vpop.xlane.xlu0 %4669
  %v4671 = vsel %vm998, %v4585, -inf
  %4672 = vmax.xlane.f32.xlu0 %v4671
  %v4673 = vpop.xlane.xlu0 %4672
  %v4674 = vsel %vm998, %v4586, -inf
  %4675 = vmax.xlane.f32.xlu0 %v4674
  %v4676 = vpop.xlane.xlu0 %4675
  %v4677 = vsel %vm998, %v4587, -inf
  %4678 = vmax.xlane.f32.xlu0 %v4677
  %v4679 = vpop.xlane.xlu0 %4678
  %v4680 = vsel %vm998, %v4588, -inf
  %4681 = vmax.xlane.f32.xlu0 %v4680
  %v4682 = vpop.xlane.xlu0 %4681
  %v4683 = vsel %vm998, %v4589, -inf
  %4684 = vmax.xlane.f32.xlu0 %v4683
  %v4685 = vpop.xlane.xlu0 %4684
  %v4686 = vsub.f32 %v4558, %v4592
  %v4687 = vsub.f32 %v4559, %v4595
  %v4688 = vsub.f32 %v4560, %v4598
  %v4689 = vsub.f32 %v4561, %v4601
  %v4690 = vsub.f32 %v4562, %v4604
  %v4691 = vsub.f32 %v4563, %v4607
  %v4692 = vsub.f32 %v4564, %v4610
  %v4693 = vsub.f32 %v4565, %v4613
  %v4694 = vsub.f32 %v4566, %v4616
  %v4695 = vsub.f32 %v4567, %v4619
  %v4696 = vsub.f32 %v4568, %v4622
  %v4697 = vsub.f32 %v4569, %v4625
  %v4698 = vsub.f32 %v4570, %v4628
  %v4699 = vsub.f32 %v4571, %v4631
  %v4700 = vsub.f32 %v4572, %v4634
  %v4701 = vsub.f32 %v4573, %v4637
  %v4702 = vsub.f32 %v4574, %v4640
  %v4703 = vsub.f32 %v4575, %v4643
  %v4704 = vsub.f32 %v4576, %v4646
  %v4705 = vsub.f32 %v4577, %v4649
  %v4706 = vsub.f32 %v4578, %v4652
  %v4707 = vsub.f32 %v4579, %v4655
  %v4708 = vsub.f32 %v4580, %v4658
  %v4709 = vsub.f32 %v4581, %v4661
  %v4710 = vsub.f32 %v4582, %v4664
  %v4711 = vsub.f32 %v4583, %v4667
  %v4712 = vsub.f32 %v4584, %v4670
  %v4713 = vsub.f32 %v4585, %v4673
  %v4714 = vsub.f32 %v4586, %v4676
  %v4715 = vsub.f32 %v4587, %v4679
  %v4716 = vsub.f32 %v4588, %v4682
  %v4717 = vsub.f32 %v4589, %v4685
  %v4718 = vmul.f32 %v4686, 1.442695
  %v4719 = vpow.pop %v4718
  %v4720 = vmul.f32 %v4687, 1.442695
  %v4721 = vpow.pop %v4720
  %v4722 = vmul.f32 %v4688, 1.442695
  %v4723 = vpow.pop %v4722
  %v4724 = vmul.f32 %v4689, 1.442695
  %v4725 = vpow.pop %v4724
  %v4726 = vmul.f32 %v4690, 1.442695
  %v4727 = vpow.pop %v4726
  %v4728 = vmul.f32 %v4691, 1.442695
  %v4729 = vpow.pop %v4728
  %v4730 = vmul.f32 %v4692, 1.442695
  %v4731 = vpow.pop %v4730
  %v4732 = vmul.f32 %v4693, 1.442695
  %v4733 = vpow.pop %v4732
  %v4734 = vmul.f32 %v4694, 1.442695
  %v4735 = vpow.pop %v4734
  %v4736 = vmul.f32 %v4695, 1.442695
  %v4737 = vpow.pop %v4736
  %v4738 = vmul.f32 %v4696, 1.442695
  %v4739 = vpow.pop %v4738
  %v4740 = vmul.f32 %v4697, 1.442695
  %v4741 = vpow.pop %v4740
  %v4742 = vmul.f32 %v4698, 1.442695
  %v4743 = vpow.pop %v4742
  %v4744 = vmul.f32 %v4699, 1.442695
  %v4745 = vpow.pop %v4744
  %v4746 = vmul.f32 %v4700, 1.442695
  %v4747 = vpow.pop %v4746
  %v4748 = vmul.f32 %v4701, 1.442695
  %v4749 = vpow.pop %v4748
  %v4750 = vmul.f32 %v4702, 1.442695
  %v4751 = vpow.pop %v4750
  %v4752 = vmul.f32 %v4703, 1.442695
  %v4753 = vpow.pop %v4752
  %v4754 = vmul.f32 %v4704, 1.442695
  %v4755 = vpow.pop %v4754
  %v4756 = vmul.f32 %v4705, 1.442695
  %v4757 = vpow.pop %v4756
  %v4758 = vmul.f32 %v4706, 1.442695
  %v4759 = vpow.pop %v4758
  %v4760 = vmul.f32 %v4707, 1.442695
  %v4761 = vpow.pop %v4760
  %v4762 = vmul.f32 %v4708, 1.442695
  %v4763 = vpow.pop %v4762
  %v4764 = vmul.f32 %v4709, 1.442695
  %v4765 = vpow.pop %v4764
  %v4766 = vmul.f32 %v4710, 1.442695
  %v4767 = vpow.pop %v4766
  %v4768 = vmul.f32 %v4711, 1.442695
  %v4769 = vpow.pop %v4768
  %v4770 = vmul.f32 %v4712, 1.442695
  %v4771 = vpow.pop %v4770
  %v4772 = vmul.f32 %v4713, 1.442695
  %v4773 = vpow.pop %v4772
  %v4774 = vmul.f32 %v4714, 1.442695
  %v4775 = vpow.pop %v4774
  %v4776 = vmul.f32 %v4715, 1.442695
  %v4777 = vpow.pop %v4776
  %v4778 = vmul.f32 %v4716, 1.442695
  %v4779 = vpow.pop %v4778
  %v4780 = vmul.f32 %v4717, 1.442695
  %v4781 = vpow.pop %v4780
  %v4782 = vsel %vm998, %v4719, 0.0
  %4783 = vadd.xlane.f32.xlu0 %v4782
  %v4784 = vpop.xlane.xlu0 %4783
  %v4785 = vsel %vm998, %v4721, 0.0
  %4786 = vadd.xlane.f32.xlu0 %v4785
  %v4787 = vpop.xlane.xlu0 %4786
  %v4788 = vsel %vm998, %v4723, 0.0
  %4789 = vadd.xlane.f32.xlu0 %v4788
  %v4790 = vpop.xlane.xlu0 %4789
  %v4791 = vsel %vm998, %v4725, 0.0
  %4792 = vadd.xlane.f32.xlu0 %v4791
  %v4793 = vpop.xlane.xlu0 %4792
  %v4794 = vsel %vm998, %v4727, 0.0
  %4795 = vadd.xlane.f32.xlu0 %v4794
  %v4796 = vpop.xlane.xlu0 %4795
  %v4797 = vsel %vm998, %v4729, 0.0
  %4798 = vadd.xlane.f32.xlu0 %v4797
  %v4799 = vpop.xlane.xlu0 %4798
  %v4800 = vsel %vm998, %v4731, 0.0
  %4801 = vadd.xlane.f32.xlu0 %v4800
  %v4802 = vpop.xlane.xlu0 %4801
  %v4803 = vsel %vm998, %v4733, 0.0
  %4804 = vadd.xlane.f32.xlu0 %v4803
  %v4805 = vpop.xlane.xlu0 %4804
  %v4806 = vsel %vm998, %v4735, 0.0
  %4807 = vadd.xlane.f32.xlu0 %v4806
  %v4808 = vpop.xlane.xlu0 %4807
  %v4809 = vsel %vm998, %v4737, 0.0
  %4810 = vadd.xlane.f32.xlu0 %v4809
  %v4811 = vpop.xlane.xlu0 %4810
  %v4812 = vsel %vm998, %v4739, 0.0
  %4813 = vadd.xlane.f32.xlu0 %v4812
  %v4814 = vpop.xlane.xlu0 %4813
  %v4815 = vsel %vm998, %v4741, 0.0
  %4816 = vadd.xlane.f32.xlu0 %v4815
  %v4817 = vpop.xlane.xlu0 %4816
  %v4818 = vsel %vm998, %v4743, 0.0
  %4819 = vadd.xlane.f32.xlu0 %v4818
  %v4820 = vpop.xlane.xlu0 %4819
  %v4821 = vsel %vm998, %v4745, 0.0
  %4822 = vadd.xlane.f32.xlu0 %v4821
  %v4823 = vpop.xlane.xlu0 %4822
  %v4824 = vsel %vm998, %v4747, 0.0
  %4825 = vadd.xlane.f32.xlu0 %v4824
  %v4826 = vpop.xlane.xlu0 %4825
  %v4827 = vsel %vm998, %v4749, 0.0
  %4828 = vadd.xlane.f32.xlu0 %v4827
  %v4829 = vpop.xlane.xlu0 %4828
  %v4830 = vsel %vm998, %v4751, 0.0
  %4831 = vadd.xlane.f32.xlu0 %v4830
  %v4832 = vpop.xlane.xlu0 %4831
  %v4833 = vsel %vm998, %v4753, 0.0
  %4834 = vadd.xlane.f32.xlu0 %v4833
  %v4835 = vpop.xlane.xlu0 %4834
  %v4836 = vsel %vm998, %v4755, 0.0
  %4837 = vadd.xlane.f32.xlu0 %v4836
  %v4838 = vpop.xlane.xlu0 %4837
  %v4839 = vsel %vm998, %v4757, 0.0
  %4840 = vadd.xlane.f32.xlu0 %v4839
  %v4841 = vpop.xlane.xlu0 %4840
  %v4842 = vsel %vm998, %v4759, 0.0
  %4843 = vadd.xlane.f32.xlu0 %v4842
  %v4844 = vpop.xlane.xlu0 %4843
  %v4845 = vsel %vm998, %v4761, 0.0
  %4846 = vadd.xlane.f32.xlu0 %v4845
  %v4847 = vpop.xlane.xlu0 %4846
  %v4848 = vsel %vm998, %v4763, 0.0
  %4849 = vadd.xlane.f32.xlu0 %v4848
  %v4850 = vpop.xlane.xlu0 %4849
  %v4851 = vsel %vm998, %v4765, 0.0
  %4852 = vadd.xlane.f32.xlu0 %v4851
  %v4853 = vpop.xlane.xlu0 %4852
  %v4854 = vsel %vm998, %v4767, 0.0
  %4855 = vadd.xlane.f32.xlu0 %v4854
  %v4856 = vpop.xlane.xlu0 %4855
  %v4857 = vsel %vm998, %v4769, 0.0
  %4858 = vadd.xlane.f32.xlu0 %v4857
  %v4859 = vpop.xlane.xlu0 %4858
  %v4860 = vsel %vm998, %v4771, 0.0
  %4861 = vadd.xlane.f32.xlu0 %v4860
  %v4862 = vpop.xlane.xlu0 %4861
  %v4863 = vsel %vm998, %v4773, 0.0
  %4864 = vadd.xlane.f32.xlu0 %v4863
  %v4865 = vpop.xlane.xlu0 %4864
  %v4866 = vsel %vm998, %v4775, 0.0
  %4867 = vadd.xlane.f32.xlu0 %v4866
  %v4868 = vpop.xlane.xlu0 %4867
  %v4869 = vsel %vm998, %v4777, 0.0
  %4870 = vadd.xlane.f32.xlu0 %v4869
  %v4871 = vpop.xlane.xlu0 %4870
  %v4872 = vsel %vm998, %v4779, 0.0
  %4873 = vadd.xlane.f32.xlu0 %v4872
  %v4874 = vpop.xlane.xlu0 %4873
  %v4875 = vsel %vm998, %v4781, 0.0
  %4876 = vadd.xlane.f32.xlu0 %v4875
  %v4877 = vpop.xlane.xlu0 %4876
  %v4878 = vrcp.pop %v4784
  %v4879 = vrcp.pop %v4787
  %v4880 = vrcp.pop %v4790
  %v4881 = vrcp.pop %v4793
  %v4882 = vrcp.pop %v4796
  %v4883 = vrcp.pop %v4799
  %v4884 = vrcp.pop %v4802
  %v4885 = vrcp.pop %v4805
  %v4886 = vrcp.pop %v4808
  %v4887 = vrcp.pop %v4811
  %v4888 = vrcp.pop %v4814
  %v4889 = vrcp.pop %v4817
  %v4890 = vrcp.pop %v4820
  %v4891 = vrcp.pop %v4823
  %v4892 = vrcp.pop %v4826
  %v4893 = vrcp.pop %v4829
  %v4894 = vrcp.pop %v4832
  %v4895 = vrcp.pop %v4835
  %v4896 = vrcp.pop %v4838
  %v4897 = vrcp.pop %v4841
  %v4898 = vrcp.pop %v4844
  %v4899 = vrcp.pop %v4847
  %v4900 = vrcp.pop %v4850
  %v4901 = vrcp.pop %v4853
  %v4902 = vrcp.pop %v4856
  %v4903 = vrcp.pop %v4859
  %v4904 = vrcp.pop %v4862
  %v4905 = vrcp.pop %v4865
  %v4906 = vrcp.pop %v4868
  %v4907 = vrcp.pop %v4871
  %v4908 = vrcp.pop %v4874
  %v4909 = vrcp.pop %v4877
  %v4910 = vmul.f32 %v4719, %v4878
  %v4911 = vmul.f32 %v4721, %v4879
  %v4912 = vmul.f32 %v4723, %v4880
  %v4913 = vmul.f32 %v4725, %v4881
  %v4914 = vmul.f32 %v4727, %v4882
  %v4915 = vmul.f32 %v4729, %v4883
  %v4916 = vmul.f32 %v4731, %v4884
  %v4917 = vmul.f32 %v4733, %v4885
  %v4918 = vmul.f32 %v4735, %v4886
  %v4919 = vmul.f32 %v4737, %v4887
  %v4920 = vmul.f32 %v4739, %v4888
  %v4921 = vmul.f32 %v4741, %v4889
  %v4922 = vmul.f32 %v4743, %v4890
  %v4923 = vmul.f32 %v4745, %v4891
  %v4924 = vmul.f32 %v4747, %v4892
  %v4925 = vmul.f32 %v4749, %v4893
  %v4926 = vmul.f32 %v4751, %v4894
  %v4927 = vmul.f32 %v4753, %v4895
  %v4928 = vmul.f32 %v4755, %v4896
  %v4929 = vmul.f32 %v4757, %v4897
  %v4930 = vmul.f32 %v4759, %v4898
  %v4931 = vmul.f32 %v4761, %v4899
  %v4932 = vmul.f32 %v4763, %v4900
  %v4933 = vmul.f32 %v4765, %v4901
  %v4934 = vmul.f32 %v4767, %v4902
  %v4935 = vmul.f32 %v4769, %v4903
  %v4936 = vmul.f32 %v4771, %v4904
  %v4937 = vmul.f32 %v4773, %v4905
  %v4938 = vmul.f32 %v4775, %v4906
  %v4939 = vmul.f32 %v4777, %v4907
  %v4940 = vmul.f32 %v4779, %v4908
  %v4941 = vmul.f32 %v4781, %v4909
  %v4942 = vsel %vm998, %v3896, 0
  %v4945 = vsel %vm998, %v4910, 0
  %v4948 = vsel %vm998, %v4911, 0
  %v4951 = vsel %vm998, %v4912, 0
  %v4954 = vsel %vm998, %v4913, 0
  %v4957 = vsel %vm998, %v4914, 0
  %v4960 = vsel %vm998, %v4915, 0
  %v4963 = vsel %vm998, %v4916, 0
  %v4966 = vsel %vm998, %v4917, 0
  %4968 = vmatprep.subr.mxu0 0.0
  %4969 = vmatpush1.xpose.msra.mxu0 %v4945
  %4970 = vmatprep.subr.mxu0 0.0
  %4971 = vmatpush1.xpose.msra.mxu0 %v4948
  %4972 = vmatprep.subr.mxu0 0.0
  %4973 = vmatpush1.xpose.msra.mxu0 %v4951
  %4974 = vmatprep.subr.mxu0 0.0
  %4975 = vmatpush1.xpose.msra.mxu0 %v4954
  %4976 = vmatprep.subr.mxu0 0.0
  %4977 = vmatpush1.xpose.msra.mxu0 %v4957
  %4978 = vmatprep.subr.mxu0 0.0
  %4979 = vmatpush1.xpose.msra.mxu0 %v4960
  %4980 = vmatprep.subr.mxu0 0.0
  %4981 = vmatpush1.xpose.msra.mxu0 %v4963
  %4982 = vmatprep.subr.mxu0 0.0
  %4983 = vmatpush1.xpose.msra.mxu0 %v4966
  %4984 = vmatprep.subr.mxu0 0.0
  %4985 = vmatpush1.xpose.msra.mxu0 0.0
  %4986 = vmatprep.subr.mxu0 0.0
  %4987 = vmatpush1.xpose.msra.mxu0 0.0
  %4988 = vmatprep.subr.mxu0 0.0
  %4989 = vmatpush1.xpose.msra.mxu0 0.0
  %4990 = vmatprep.subr.mxu0 0.0
  %4991 = vmatpush1.xpose.msra.mxu0 0.0
  %4992 = vmatprep.subr.mxu0 0.0
  %4993 = vmatpush1.xpose.msra.mxu0 0.0
  %4994 = vmatprep.subr.mxu0 0.0
  %4995 = vmatpush1.xpose.msra.mxu0 0.0
  %4996 = vmatprep.subr.mxu0 0.0
  %4997 = vmatpush1.xpose.msra.mxu0 0.0
  %4998 = vmatprep.subr.mxu0 0.0
  %4999 = vmatpush1.xpose.msra.mxu0 0.0
  %5000 = vmatprep.subr.mxu0 0.0
  %5001 = vmatpush1.xpose.msra.mxu0 0.0
  %5002 = vmatprep.subr.mxu0 0.0
  %5003 = vmatpush1.xpose.msra.mxu0 0.0
  %5004 = vmatprep.subr.mxu0 0.0
  %5005 = vmatpush1.xpose.msra.mxu0 0.0
  %5006 = vmatprep.subr.mxu0 0.0
  %5007 = vmatpush1.xpose.msra.mxu0 0.0
  %5008 = vmatprep.subr.mxu0 0.0
  %5009 = vmatpush1.xpose.msra.mxu0 0.0
  %5010 = vmatprep.subr.mxu0 0.0
  %5011 = vmatpush1.xpose.msra.mxu0 0.0
  %5012 = vmatprep.subr.mxu0 0.0
  %5013 = vmatpush1.xpose.msra.mxu0 0.0
  %5014 = vmatprep.subr.mxu0 0.0
  %5015 = vmatpush1.xpose.msra.mxu0 0.0
  %5016 = vmatprep.subr.mxu0 0.0
  %5017 = vmatpush1.xpose.msra.mxu0 0.0
  %5018 = vmatprep.subr.mxu0 0.0
  %5019 = vmatpush1.xpose.msra.mxu0 0.0
  %5020 = vmatprep.subr.mxu0 0.0
  %5021 = vmatpush1.xpose.msra.mxu0 0.0
  %5022 = vmatprep.subr.mxu0 0.0
  %5023 = vmatpush1.xpose.msra.mxu0 0.0
  %5024 = vmatprep.subr.mxu0 0.0
  %5025 = vmatpush1.xpose.msra.mxu0 0.0
  %5026 = vmatprep.subr.mxu0 0.0
  %5027 = vmatpush1.xpose.msra.mxu0 0.0
  %5028 = vmatprep.subr.mxu0 0.0
  %5029 = vmatpush1.xpose.msra.mxu0 0.0
  %5030 = vmatprep.subr.mxu0 0.0
  %5031 = vmatpush1.xpose.msra.mxu0 0.0
  %5032 = vmatprep.mubr.f32.mxu0 0.0
  %5033 = vmatmul.mubr.f32.gmra.mrb[0].mxu0 %v4942
  %v5034 = vpop.f32.mrb[0].mxu0
  %v5035 = vadd.f32 0.0, %v5034
  %v5036 = vpop.f32.mrb[0].mxu0
  %5037 = vdwg.mxu0
  %v5038 = vsel %vm998, %v3904, 0
  %v5041 = vsel %vm998, %v4918, 0
  %v5044 = vsel %vm998, %v4919, 0
  %v5047 = vsel %vm998, %v4920, 0
  %v5050 = vsel %vm998, %v4921, 0
  %v5053 = vsel %vm998, %v4922, 0
  %v5056 = vsel %vm998, %v4923, 0
  %v5059 = vsel %vm998, %v4924, 0
  %v5062 = vsel %vm998, %v4925, 0
  %5064 = vmatprep.subr.mxu0 0.0
  %5065 = vmatpush1.xpose.msra.mxu0 %v5041
  %5066 = vmatprep.subr.mxu0 0.0
  %5067 = vmatpush1.xpose.msra.mxu0 %v5044
  %5068 = vmatprep.subr.mxu0 0.0
  %5069 = vmatpush1.xpose.msra.mxu0 %v5047
  %5070 = vmatprep.subr.mxu0 0.0
  %5071 = vmatpush1.xpose.msra.mxu0 %v5050
  %5072 = vmatprep.subr.mxu0 0.0
  %5073 = vmatpush1.xpose.msra.mxu0 %v5053
  %5074 = vmatprep.subr.mxu0 0.0
  %5075 = vmatpush1.xpose.msra.mxu0 %v5056
  %5076 = vmatprep.subr.mxu0 0.0
  %5077 = vmatpush1.xpose.msra.mxu0 %v5059
  %5078 = vmatprep.subr.mxu0 0.0
  %5079 = vmatpush1.xpose.msra.mxu0 %v5062
  %5080 = vmatprep.subr.mxu0 0.0
  %5081 = vmatpush1.xpose.msra.mxu0 0.0
  %5082 = vmatprep.subr.mxu0 0.0
  %5083 = vmatpush1.xpose.msra.mxu0 0.0
  %5084 = vmatprep.subr.mxu0 0.0
  %5085 = vmatpush1.xpose.msra.mxu0 0.0
  %5086 = vmatprep.subr.mxu0 0.0
  %5087 = vmatpush1.xpose.msra.mxu0 0.0
  %5088 = vmatprep.subr.mxu0 0.0
  %5089 = vmatpush1.xpose.msra.mxu0 0.0
  %5090 = vmatprep.subr.mxu0 0.0
  %5091 = vmatpush1.xpose.msra.mxu0 0.0
  %5092 = vmatprep.subr.mxu0 0.0
  %5093 = vmatpush1.xpose.msra.mxu0 0.0
  %5094 = vmatprep.subr.mxu0 0.0
  %5095 = vmatpush1.xpose.msra.mxu0 0.0
  %5096 = vmatprep.subr.mxu0 0.0
  %5097 = vmatpush1.xpose.msra.mxu0 0.0
  %5098 = vmatprep.subr.mxu0 0.0
  %5099 = vmatpush1.xpose.msra.mxu0 0.0
  %5100 = vmatprep.subr.mxu0 0.0
  %5101 = vmatpush1.xpose.msra.mxu0 0.0
  %5102 = vmatprep.subr.mxu0 0.0
  %5103 = vmatpush1.xpose.msra.mxu0 0.0
  %5104 = vmatprep.subr.mxu0 0.0
  %5105 = vmatpush1.xpose.msra.mxu0 0.0
  %5106 = vmatprep.subr.mxu0 0.0
  %5107 = vmatpush1.xpose.msra.mxu0 0.0
  %5108 = vmatprep.subr.mxu0 0.0
  %5109 = vmatpush1.xpose.msra.mxu0 0.0
  %5110 = vmatprep.subr.mxu0 0.0
  %5111 = vmatpush1.xpose.msra.mxu0 0.0
  %5112 = vmatprep.subr.mxu0 0.0
  %5113 = vmatpush1.xpose.msra.mxu0 0.0
  %5114 = vmatprep.subr.mxu0 0.0
  %5115 = vmatpush1.xpose.msra.mxu0 0.0
  %5116 = vmatprep.subr.mxu0 0.0
  %5117 = vmatpush1.xpose.msra.mxu0 0.0
  %5118 = vmatprep.subr.mxu0 0.0
  %5119 = vmatpush1.xpose.msra.mxu0 0.0
  %5120 = vmatprep.subr.mxu0 0.0
  %5121 = vmatpush1.xpose.msra.mxu0 0.0
  %5122 = vmatprep.subr.mxu0 0.0
  %5123 = vmatpush1.xpose.msra.mxu0 0.0
  %5124 = vmatprep.subr.mxu0 0.0
  %5125 = vmatpush1.xpose.msra.mxu0 0.0
  %5126 = vmatprep.subr.mxu0 0.0
  %5127 = vmatpush1.xpose.msra.mxu0 0.0
  %5128 = vmatprep.mubr.f32.mxu0 0.0
  %5129 = vmatmul.mubr.f32.gmra.mrb[0].mxu0 %v5038
  %v5130 = vpop.f32.mrb[0].mxu0
  %v5131 = vadd.f32 0.0, %v5130
  %v5132 = vpop.f32.mrb[0].mxu0
  %5133 = vdwg.mxu0
  %v5134 = vsel %vm998, %v3903, 0
  %v5137 = vsel %vm998, %v4926, 0
  %v5140 = vsel %vm998, %v4927, 0
  %v5143 = vsel %vm998, %v4928, 0
  %v5146 = vsel %vm998, %v4929, 0
  %v5149 = vsel %vm998, %v4930, 0
  %v5152 = vsel %vm998, %v4931, 0
  %v5155 = vsel %vm998, %v4932, 0
  %v5158 = vsel %vm998, %v4933, 0
  %5160 = vmatprep.subr.mxu0 0.0
  %5161 = vmatpush1.xpose.msra.mxu0 %v5137
  %5162 = vmatprep.subr.mxu0 0.0
  %5163 = vmatpush1.xpose.msra.mxu0 %v5140
  %5164 = vmatprep.subr.mxu0 0.0
  %5165 = vmatpush1.xpose.msra.mxu0 %v5143
  %5166 = vmatprep.subr.mxu0 0.0
  %5167 = vmatpush1.xpose.msra.mxu0 %v5146
  %5168 = vmatprep.subr.mxu0 0.0
  %5169 = vmatpush1.xpose.msra.mxu0 %v5149
  %5170 = vmatprep.subr.mxu0 0.0
  %5171 = vmatpush1.xpose.msra.mxu0 %v5152
  %5172 = vmatprep.subr.mxu0 0.0
  %5173 = vmatpush1.xpose.msra.mxu0 %v5155
  %5174 = vmatprep.subr.mxu0 0.0
  %5175 = vmatpush1.xpose.msra.mxu0 %v5158
  %5176 = vmatprep.subr.mxu0 0.0
  %5177 = vmatpush1.xpose.msra.mxu0 0.0
  %5178 = vmatprep.subr.mxu0 0.0
  %5179 = vmatpush1.xpose.msra.mxu0 0.0
  %5180 = vmatprep.subr.mxu0 0.0
  %5181 = vmatpush1.xpose.msra.mxu0 0.0
  %5182 = vmatprep.subr.mxu0 0.0
  %5183 = vmatpush1.xpose.msra.mxu0 0.0
  %5184 = vmatprep.subr.mxu0 0.0
  %5185 = vmatpush1.xpose.msra.mxu0 0.0
  %5186 = vmatprep.subr.mxu0 0.0
  %5187 = vmatpush1.xpose.msra.mxu0 0.0
  %5188 = vmatprep.subr.mxu0 0.0
  %5189 = vmatpush1.xpose.msra.mxu0 0.0
  %5190 = vmatprep.subr.mxu0 0.0
  %5191 = vmatpush1.xpose.msra.mxu0 0.0
  %5192 = vmatprep.subr.mxu0 0.0
  %5193 = vmatpush1.xpose.msra.mxu0 0.0
  %5194 = vmatprep.subr.mxu0 0.0
  %5195 = vmatpush1.xpose.msra.mxu0 0.0
  %5196 = vmatprep.subr.mxu0 0.0
  %5197 = vmatpush1.xpose.msra.mxu0 0.0
  %5198 = vmatprep.subr.mxu0 0.0
  %5199 = vmatpush1.xpose.msra.mxu0 0.0
  %5200 = vmatprep.subr.mxu0 0.0
  %5201 = vmatpush1.xpose.msra.mxu0 0.0
  %5202 = vmatprep.subr.mxu0 0.0
  %5203 = vmatpush1.xpose.msra.mxu0 0.0
  %5204 = vmatprep.subr.mxu0 0.0
  %5205 = vmatpush1.xpose.msra.mxu0 0.0
  %5206 = vmatprep.subr.mxu0 0.0
  %5207 = vmatpush1.xpose.msra.mxu0 0.0
  %5208 = vmatprep.subr.mxu0 0.0
  %5209 = vmatpush1.xpose.msra.mxu0 0.0
  %5210 = vmatprep.subr.mxu0 0.0
  %5211 = vmatpush1.xpose.msra.mxu0 0.0
  %5212 = vmatprep.subr.mxu0 0.0
  %5213 = vmatpush1.xpose.msra.mxu0 0.0
  %5214 = vmatprep.subr.mxu0 0.0
  %5215 = vmatpush1.xpose.msra.mxu0 0.0
  %5216 = vmatprep.subr.mxu0 0.0
  %5217 = vmatpush1.xpose.msra.mxu0 0.0
  %5218 = vmatprep.subr.mxu0 0.0
  %5219 = vmatpush1.xpose.msra.mxu0 0.0
  %5220 = vmatprep.subr.mxu0 0.0
  %5221 = vmatpush1.xpose.msra.mxu0 0.0
  %5222 = vmatprep.subr.mxu0 0.0
  %5223 = vmatpush1.xpose.msra.mxu0 0.0
  %5224 = vmatprep.mubr.f32.mxu0 0.0
  %5225 = vmatmul.mubr.f32.gmra.mrb[0].mxu0 %v5134
  %v5226 = vpop.f32.mrb[0].mxu0
  %v5227 = vadd.f32 0.0, %v5226
  %v5228 = vpop.f32.mrb[0].mxu0
  %5229 = vdwg.mxu0
  %v5230 = vsel %vm998, %v3905, 0
  %v5233 = vsel %vm998, %v4934, 0
  %v5236 = vsel %vm998, %v4935, 0
  %v5239 = vsel %vm998, %v4936, 0
  %v5242 = vsel %vm998, %v4937, 0
  %v5245 = vsel %vm998, %v4938, 0
  %v5248 = vsel %vm998, %v4939, 0
  %v5251 = vsel %vm998, %v4940, 0
  %v5254 = vsel %vm998, %v4941, 0
  %5256 = vmatprep.subr.mxu0 0.0
  %5257 = vmatpush1.xpose.msra.mxu0 %v5233
  %5258 = vmatprep.subr.mxu0 0.0
  %5259 = vmatpush1.xpose.msra.mxu0 %v5236
  %5260 = vmatprep.subr.mxu0 0.0
  %5261 = vmatpush1.xpose.msra.mxu0 %v5239
  %5262 = vmatprep.subr.mxu0 0.0
  %5263 = vmatpush1.xpose.msra.mxu0 %v5242
  %5264 = vmatprep.subr.mxu0 0.0
  %5265 = vmatpush1.xpose.msra.mxu0 %v5245
  %5266 = vmatprep.subr.mxu0 0.0
  %5267 = vmatpush1.xpose.msra.mxu0 %v5248
  %5268 = vmatprep.subr.mxu0 0.0
  %5269 = vmatpush1.xpose.msra.mxu0 %v5251
  %5270 = vmatprep.subr.mxu0 0.0
  %5271 = vmatpush1.xpose.msra.mxu0 %v5254
  %5272 = vmatprep.subr.mxu0 0.0
  %5273 = vmatpush1.xpose.msra.mxu0 0.0
  %5274 = vmatprep.subr.mxu0 0.0
  %5275 = vmatpush1.xpose.msra.mxu0 0.0
  %5276 = vmatprep.subr.mxu0 0.0
  %5277 = vmatpush1.xpose.msra.mxu0 0.0
  %5278 = vmatprep.subr.mxu0 0.0
  %5279 = vmatpush1.xpose.msra.mxu0 0.0
  %5280 = vmatprep.subr.mxu0 0.0
  %5281 = vmatpush1.xpose.msra.mxu0 0.0
  %5282 = vmatprep.subr.mxu0 0.0
  %5283 = vmatpush1.xpose.msra.mxu0 0.0
  %5284 = vmatprep.subr.mxu0 0.0
  %5285 = vmatpush1.xpose.msra.mxu0 0.0
  %5286 = vmatprep.subr.mxu0 0.0
  %5287 = vmatpush1.xpose.msra.mxu0 0.0
  %5288 = vmatprep.subr.mxu0 0.0
  %5289 = vmatpush1.xpose.msra.mxu0 0.0
  %5290 = vmatprep.subr.mxu0 0.0
  %5291 = vmatpush1.xpose.msra.mxu0 0.0
  %5292 = vmatprep.subr.mxu0 0.0
  %5293 = vmatpush1.xpose.msra.mxu0 0.0
  %5294 = vmatprep.subr.mxu0 0.0
  %5295 = vmatpush1.xpose.msra.mxu0 0.0
  %5296 = vmatprep.subr.mxu0 0.0
  %5297 = vmatpush1.xpose.msra.mxu0 0.0
  %5298 = vmatprep.subr.mxu0 0.0
  %5299 = vmatpush1.xpose.msra.mxu0 0.0
  %5300 = vmatprep.subr.mxu0 0.0
  %5301 = vmatpush1.xpose.msra.mxu0 0.0
  %5302 = vmatprep.subr.mxu0 0.0
  %5303 = vmatpush1.xpose.msra.mxu0 0.0
  %5304 = vmatprep.subr.mxu0 0.0
  %5305 = vmatpush1.xpose.msra.mxu0 0.0
  %5306 = vmatprep.subr.mxu0 0.0
  %5307 = vmatpush1.xpose.msra.mxu0 0.0
  %5308 = vmatprep.subr.mxu0 0.0
  %5309 = vmatpush1.xpose.msra.mxu0 0.0
  %5310 = vmatprep.subr.mxu0 0.0
  %5311 = vmatpush1.xpose.msra.mxu0 0.0
  %5312 = vmatprep.subr.mxu0 0.0
  %5313 = vmatpush1.xpose.msra.mxu0 0.0
  %5314 = vmatprep.subr.mxu0 0.0
  %5315 = vmatpush1.xpose.msra.mxu0 0.0
  %5316 = vmatprep.subr.mxu0 0.0
  %5317 = vmatpush1.xpose.msra.mxu0 0.0
  %5318 = vmatprep.subr.mxu0 0.0
  %5319 = vmatpush1.xpose.msra.mxu0 0.0
  %5320 = vmatprep.mubr.f32.mxu0 0.0
  %5321 = vmatmul.mubr.f32.gmra.mrb[0].mxu0 %v5230
  %v5322 = vpop.f32.mrb[0].mxu0
  %v5323 = vadd.f32 0.0, %v5322
  %v5324 = vpop.f32.mrb[0].mxu0
  %5325 = vdwg.mxu0
  %v5327 = vunpack.c.l.s4 1983009808
  %v5328 = vunpack.c.0.s8 %v5327
  %v5329 = vlaneseq
  %v5330 = vshrl.u32 %v5329, 7
  %v5331 = vsub.s32 %v5328, %v5330
  %v5332 = vrot.slane %v3856, %v5331
  %5333 = vrot.lane.b32.xlu0 %v5332, 64
  %v5334 = vpop.permute.xlu0 %5333
  %5336 = vxpose.xlu0.b32.start [1/16] %v5334, 128
  %5337 = vxpose.xlu0.b32.cont [2/16] 0.0, 128
  %5338 = vxpose.xlu0.b32.cont [3/16] 0.0, 128
  %5339 = vxpose.xlu0.b32.cont [4/16] 0.0, 128
  %5340 = vxpose.xlu0.b32.cont [5/16] 0.0, 128
  %5341 = vxpose.xlu0.b32.cont [6/16] 0.0, 128
  %5342 = vxpose.xlu0.b32.cont [7/16] 0.0, 128
  %5343 = vxpose.xlu0.b32.cont [8/16] 0.0, 128
  %5344 = vxpose.xlu0.b32.cont [9/16] 0.0, 128
  %5345 = vxpose.xlu0.b32.cont [10/16] 0.0, 128
  %5346 = vxpose.xlu0.b32.cont [11/16] 0.0, 128
  %5347 = vxpose.xlu0.b32.cont [12/16] 0.0, 128
  %5348 = vxpose.xlu0.b32.cont [13/16] 0.0, 128
  %5349 = vxpose.xlu0.b32.cont [14/16] 0.0, 128
  %5350 = vxpose.xlu0.b32.cont [15/16] 0.0, 128
  %5351 = vxpose.xlu0.b32.end [16/16] 0.0, 128
  %v5352 = vpop.trf.xlu0
  %v5353 = vpop.trf.xlu0
  %v5354 = vpop.trf.xlu0
  %v5355 = vpop.trf.xlu0
  %v5356 = vpop.trf.xlu0
  %v5357 = vpop.trf.xlu0
  %v5358 = vpop.trf.xlu0
  %v5359 = vpop.trf.xlu0
  %v5360 = vpop.trf.xlu0
  %v5361 = vpop.trf.xlu0
  %v5362 = vpop.trf.xlu0
  %v5363 = vpop.trf.xlu0
  %v5364 = vpop.trf.xlu0
  %v5365 = vpop.trf.xlu0
  %v5366 = vpop.trf.xlu0
  %v5367 = vpop.trf.xlu0
  %v5369 = vunpack.c.l.s4 1983009808
  %v5370 = vunpack.c.0.s8 %v5369
  %v5371 = vlaneseq
  %v5372 = vshrl.u32 %v5371, 7
  %v5373 = vsub.s32 %v5370, %v5372
  %v5374 = vrot.slane %v3878, %v5373
  %5375 = vrot.lane.b32.xlu0 %v5374, 64
  %v5376 = vpop.permute.xlu0 %5375
  %v5378 = vsel %vm344, %v5352, 0
  %v5381 = vsel %vm344, %v5353, 0
  %v5384 = vsel %vm344, %v5354, 0
  %v5387 = vsel %vm344, %v5355, 0
  %v5390 = vsel %vm344, %v5356, 0
  %v5393 = vsel %vm344, %v5357, 0
  %v5396 = vsel %vm344, %v5358, 0
  %v5399 = vsel %vm344, %v5359, 0
  %v5401 = vsel %vm369, %v5376, 0
  %5403 = vmatprep.subr.mxu0 0.0
  %5404 = vmatpush1.msra.mxu0 %v5401
  %5405 = vmatprep.subr.mxu0 0.0
  %5406 = vmatpush1.msra.mxu0 0.0
  %5407 = vmatprep.subr.mxu0 0.0
  %5408 = vmatpush1.msra.mxu0 0.0
  %5409 = vmatprep.subr.mxu0 0.0
  %5410 = vmatpush1.msra.mxu0 0.0
  %5411 = vmatprep.subr.mxu0 0.0
  %5412 = vmatpush1.msra.mxu0 0.0
  %5413 = vmatprep.subr.mxu0 0.0
  %5414 = vmatpush1.msra.mxu0 0.0
  %5415 = vmatprep.subr.mxu0 0.0
  %5416 = vmatpush1.msra.mxu0 0.0
  %5417 = vmatprep.subr.mxu0 0.0
  %5418 = vmatpush1.msra.mxu0 0.0
  %5419 = vmatprep.subr.mxu0 0.0
  %5420 = vmatpush1.msra.mxu0 0.0
  %5421 = vmatprep.subr.mxu0 0.0
  %5422 = vmatpush1.msra.mxu0 0.0
  %5423 = vmatprep.subr.mxu0 0.0
  %5424 = vmatpush1.msra.mxu0 0.0
  %5425 = vmatprep.subr.mxu0 0.0
  %5426 = vmatpush1.msra.mxu0 0.0
  %5427 = vmatprep.subr.mxu0 0.0
  %5428 = vmatpush1.msra.mxu0 0.0
  %5429 = vmatprep.subr.mxu0 0.0
  %5430 = vmatpush1.msra.mxu0 0.0
  %5431 = vmatprep.subr.mxu0 0.0
  %5432 = vmatpush1.msra.mxu0 0.0
  %5433 = vmatprep.subr.mxu0 0.0
  %5434 = vmatpush1.msra.mxu0 0.0
  %5435 = vmatprep.subr.mxu0 0.0
  %5436 = vmatpush1.msra.mxu0 0.0
  %5437 = vmatprep.subr.mxu0 0.0
  %5438 = vmatpush1.msra.mxu0 0.0
  %5439 = vmatprep.subr.mxu0 0.0
  %5440 = vmatpush1.msra.mxu0 0.0
  %5441 = vmatprep.subr.mxu0 0.0
  %5442 = vmatpush1.msra.mxu0 0.0
  %5443 = vmatprep.subr.mxu0 0.0
  %5444 = vmatpush1.msra.mxu0 0.0
  %5445 = vmatprep.subr.mxu0 0.0
  %5446 = vmatpush1.msra.mxu0 0.0
  %5447 = vmatprep.subr.mxu0 0.0
  %5448 = vmatpush1.msra.mxu0 0.0
  %5449 = vmatprep.subr.mxu0 0.0
  %5450 = vmatpush1.msra.mxu0 0.0
  %5451 = vmatprep.subr.mxu0 0.0
  %5452 = vmatpush1.msra.mxu0 0.0
  %5453 = vmatprep.subr.mxu0 0.0
  %5454 = vmatpush1.msra.mxu0 0.0
  %5455 = vmatprep.subr.mxu0 0.0
  %5456 = vmatpush1.msra.mxu0 0.0
  %5457 = vmatprep.subr.mxu0 0.0
  %5458 = vmatpush1.msra.mxu0 0.0
  %5459 = vmatprep.subr.mxu0 0.0
  %5460 = vmatpush1.msra.mxu0 0.0
  %5461 = vmatprep.subr.mxu0 0.0
  %5462 = vmatpush1.msra.mxu0 0.0
  %5463 = vmatprep.subr.mxu0 0.0
  %5464 = vmatpush1.msra.mxu0 0.0
  %5465 = vmatprep.subr.mxu0 0.0
  %5466 = vmatpush1.msra.mxu0 0.0
  %5467 = vmatprep.mubr.f32.mxu0 0.0
  %5468 = vmatmul.mubr.f32.gmra.mrb[0].mxu0 %v5378
  %v5469 = vpop.f32.mrb[0].mxu0
  %v5470 = vadd.f32 0.0, %v5469
  %v5471 = vpop.f32.mrb[0].mxu0
  %5472 = vmatprep.mubr.f32.mxu0 0.0
  %5473 = vmatmul.mubr.f32.gmra.mrb[0].mxu0 %v5381
  %v5474 = vpop.f32.mrb[0].mxu0
  %v5475 = vadd.f32 0.0, %v5474
  %v5476 = vpop.f32.mrb[0].mxu0
  %5477 = vmatprep.mubr.f32.mxu0 0.0
  %5478 = vmatmul.mubr.f32.gmra.mrb[0].mxu0 %v5384
  %v5479 = vpop.f32.mrb[0].mxu0
  %v5480 = vadd.f32 0.0, %v5479
  %v5481 = vpop.f32.mrb[0].mxu0
  %5482 = vmatprep.mubr.f32.mxu0 0.0
  %5483 = vmatmul.mubr.f32.gmra.mrb[0].mxu0 %v5387
  %v5484 = vpop.f32.mrb[0].mxu0
  %v5485 = vadd.f32 0.0, %v5484
  %v5486 = vpop.f32.mrb[0].mxu0
  %5487 = vmatprep.mubr.f32.mxu0 0.0
  %5488 = vmatmul.mubr.f32.gmra.mrb[0].mxu0 %v5390
  %v5489 = vpop.f32.mrb[0].mxu0
  %v5490 = vadd.f32 0.0, %v5489
  %v5491 = vpop.f32.mrb[0].mxu0
  %5492 = vmatprep.mubr.f32.mxu0 0.0
  %5493 = vmatmul.mubr.f32.gmra.mrb[0].mxu0 %v5393
  %v5494 = vpop.f32.mrb[0].mxu0
  %v5495 = vadd.f32 0.0, %v5494
  %v5496 = vpop.f32.mrb[0].mxu0
  %5497 = vmatprep.mubr.f32.mxu0 0.0
  %5498 = vmatmul.mubr.f32.gmra.mrb[0].mxu0 %v5396
  %v5499 = vpop.f32.mrb[0].mxu0
  %v5500 = vadd.f32 0.0, %v5499
  %v5501 = vpop.f32.mrb[0].mxu0
  %5502 = vmatprep.mubr.f32.mxu0 0.0
  %5503 = vmatmul.mubr.f32.gmra.mrb[0].mxu0 %v5399
  %v5504 = vpop.f32.mrb[0].mxu0
  %v5505 = vadd.f32 0.0, %v5504
  %v5506 = vpop.f32.mrb[0].mxu0
  %5507 = vdwg.mxu0
  %v5509 = vunpack.c.l.s4 1983009808
  %v5510 = vunpack.c.0.s8 %v5509
  %v5511 = vlaneseq
  %v5512 = vshrl.u32 %v5511, 7
  %v5513 = vsub.s32 %v5510, %v5512
  %v5514 = vrot.slane %v3864, %v5513
  %5515 = vrot.lane.b32.xlu0 %v5514, 64
  %v5516 = vpop.permute.xlu0 %5515
  %5518 = vxpose.xlu0.b32.start [1/16] %v5516, 128
  %5519 = vxpose.xlu0.b32.cont [2/16] 0.0, 128
  %5520 = vxpose.xlu0.b32.cont [3/16] 0.0, 128
  %5521 = vxpose.xlu0.b32.cont [4/16] 0.0, 128
  %5522 = vxpose.xlu0.b32.cont [5/16] 0.0, 128
  %5523 = vxpose.xlu0.b32.cont [6/16] 0.0, 128
  %5524 = vxpose.xlu0.b32.cont [7/16] 0.0, 128
  %5525 = vxpose.xlu0.b32.cont [8/16] 0.0, 128
  %5526 = vxpose.xlu0.b32.cont [9/16] 0.0, 128
  %5527 = vxpose.xlu0.b32.cont [10/16] 0.0, 128
  %5528 = vxpose.xlu0.b32.cont [11/16] 0.0, 128
  %5529 = vxpose.xlu0.b32.cont [12/16] 0.0, 128
  %5530 = vxpose.xlu0.b32.cont [13/16] 0.0, 128
  %5531 = vxpose.xlu0.b32.cont [14/16] 0.0, 128
  %5532 = vxpose.xlu0.b32.cont [15/16] 0.0, 128
  %5533 = vxpose.xlu0.b32.end [16/16] 0.0, 128
  %v5534 = vpop.trf.xlu0
  %v5535 = vpop.trf.xlu0
  %v5536 = vpop.trf.xlu0
  %v5537 = vpop.trf.xlu0
  %v5538 = vpop.trf.xlu0
  %v5539 = vpop.trf.xlu0
  %v5540 = vpop.trf.xlu0
  %v5541 = vpop.trf.xlu0
  %v5542 = vpop.trf.xlu0
  %v5543 = vpop.trf.xlu0
  %v5544 = vpop.trf.xlu0
  %v5545 = vpop.trf.xlu0
  %v5546 = vpop.trf.xlu0
  %v5547 = vpop.trf.xlu0
  %v5548 = vpop.trf.xlu0
  %v5549 = vpop.trf.xlu0
  %v5551 = vunpack.c.l.s4 1983009808
  %v5552 = vunpack.c.0.s8 %v5551
  %v5553 = vlaneseq
  %v5554 = vshrl.u32 %v5553, 7
  %v5555 = vsub.s32 %v5552, %v5554
  %v5556 = vrot.slane %v3886, %v5555
  %5557 = vrot.lane.b32.xlu0 %v5556, 64
  %v5558 = vpop.permute.xlu0 %5557
  %v5560 = vsel %vm344, %v5534, 0
  %v5563 = vsel %vm344, %v5535, 0
  %v5566 = vsel %vm344, %v5536, 0
  %v5569 = vsel %vm344, %v5537, 0
  %v5572 = vsel %vm344, %v5538, 0
  %v5575 = vsel %vm344, %v5539, 0
  %v5578 = vsel %vm344, %v5540, 0
  %v5581 = vsel %vm344, %v5541, 0
  %v5583 = vsel %vm369, %v5558, 0
  %5585 = vmatprep.subr.mxu0 0.0
  %5586 = vmatpush1.msra.mxu0 %v5583
  %5587 = vmatprep.subr.mxu0 0.0
  %5588 = vmatpush1.msra.mxu0 0.0
  %5589 = vmatprep.subr.mxu0 0.0
  %5590 = vmatpush1.msra.mxu0 0.0
  %5591 = vmatprep.subr.mxu0 0.0
  %5592 = vmatpush1.msra.mxu0 0.0
  %5593 = vmatprep.subr.mxu0 0.0
  %5594 = vmatpush1.msra.mxu0 0.0
  %5595 = vmatprep.subr.mxu0 0.0
  %5596 = vmatpush1.msra.mxu0 0.0
  %5597 = vmatprep.subr.mxu0 0.0
  %5598 = vmatpush1.msra.mxu0 0.0
  %5599 = vmatprep.subr.mxu0 0.0
  %5600 = vmatpush1.msra.mxu0 0.0
  %5601 = vmatprep.subr.mxu0 0.0
  %5602 = vmatpush1.msra.mxu0 0.0
  %5603 = vmatprep.subr.mxu0 0.0
  %5604 = vmatpush1.msra.mxu0 0.0
  %5605 = vmatprep.subr.mxu0 0.0
  %5606 = vmatpush1.msra.mxu0 0.0
  %5607 = vmatprep.subr.mxu0 0.0
  %5608 = vmatpush1.msra.mxu0 0.0
  %5609 = vmatprep.subr.mxu0 0.0
  %5610 = vmatpush1.msra.mxu0 0.0
  %5611 = vmatprep.subr.mxu0 0.0
  %5612 = vmatpush1.msra.mxu0 0.0
  %5613 = vmatprep.subr.mxu0 0.0
  %5614 = vmatpush1.msra.mxu0 0.0
  %5615 = vmatprep.subr.mxu0 0.0
  %5616 = vmatpush1.msra.mxu0 0.0
  %5617 = vmatprep.subr.mxu0 0.0
  %5618 = vmatpush1.msra.mxu0 0.0
  %5619 = vmatprep.subr.mxu0 0.0
  %5620 = vmatpush1.msra.mxu0 0.0
  %5621 = vmatprep.subr.mxu0 0.0
  %5622 = vmatpush1.msra.mxu0 0.0
  %5623 = vmatprep.subr.mxu0 0.0
  %5624 = vmatpush1.msra.mxu0 0.0
  %5625 = vmatprep.subr.mxu0 0.0
  %5626 = vmatpush1.msra.mxu0 0.0
  %5627 = vmatprep.subr.mxu0 0.0
  %5628 = vmatpush1.msra.mxu0 0.0
  %5629 = vmatprep.subr.mxu0 0.0
  %5630 = vmatpush1.msra.mxu0 0.0
  %5631 = vmatprep.subr.mxu0 0.0
  %5632 = vmatpush1.msra.mxu0 0.0
  %5633 = vmatprep.subr.mxu0 0.0
  %5634 = vmatpush1.msra.mxu0 0.0
  %5635 = vmatprep.subr.mxu0 0.0
  %5636 = vmatpush1.msra.mxu0 0.0
  %5637 = vmatprep.subr.mxu0 0.0
  %5638 = vmatpush1.msra.mxu0 0.0
  %5639 = vmatprep.subr.mxu0 0.0
  %5640 = vmatpush1.msra.mxu0 0.0
  %5641 = vmatprep.subr.mxu0 0.0
  %5642 = vmatpush1.msra.mxu0 0.0
  %5643 = vmatprep.subr.mxu0 0.0
  %5644 = vmatpush1.msra.mxu0 0.0
  %5645 = vmatprep.subr.mxu0 0.0
  %5646 = vmatpush1.msra.mxu0 0.0
  %5647 = vmatprep.subr.mxu0 0.0
  %5648 = vmatpush1.msra.mxu0 0.0
  %5649 = vmatprep.mubr.f32.mxu0 0.0
  %5650 = vmatmul.mubr.f32.gmra.mrb[0].mxu0 %v5560
  %v5651 = vpop.f32.mrb[0].mxu0
  %v5652 = vadd.f32 0.0, %v5651
  %v5653 = vpop.f32.mrb[0].mxu0
  %5654 = vmatprep.mubr.f32.mxu0 0.0
  %5655 = vmatmul.mubr.f32.gmra.mrb[0].mxu0 %v5563
  %v5656 = vpop.f32.mrb[0].mxu0
  %v5657 = vadd.f32 0.0, %v5656
  %v5658 = vpop.f32.mrb[0].mxu0
  %5659 = vmatprep.mubr.f32.mxu0 0.0
  %5660 = vmatmul.mubr.f32.gmra.mrb[0].mxu0 %v5566
  %v5661 = vpop.f32.mrb[0].mxu0
  %v5662 = vadd.f32 0.0, %v5661
  %v5663 = vpop.f32.mrb[0].mxu0
  %5664 = vmatprep.mubr.f32.mxu0 0.0
  %5665 = vmatmul.mubr.f32.gmra.mrb[0].mxu0 %v5569
  %v5666 = vpop.f32.mrb[0].mxu0
  %v5667 = vadd.f32 0.0, %v5666
  %v5668 = vpop.f32.mrb[0].mxu0
  %5669 = vmatprep.mubr.f32.mxu0 0.0
  %5670 = vmatmul.mubr.f32.gmra.mrb[0].mxu0 %v5572
  %v5671 = vpop.f32.mrb[0].mxu0
  %v5672 = vadd.f32 0.0, %v5671
  %v5673 = vpop.f32.mrb[0].mxu0
  %5674 = vmatprep.mubr.f32.mxu0 0.0
  %5675 = vmatmul.mubr.f32.gmra.mrb[0].mxu0 %v5575
  %v5676 = vpop.f32.mrb[0].mxu0
  %v5677 = vadd.f32 0.0, %v5676
  %v5678 = vpop.f32.mrb[0].mxu0
  %5679 = vmatprep.mubr.f32.mxu0 0.0
  %5680 = vmatmul.mubr.f32.gmra.mrb[0].mxu0 %v5578
  %v5681 = vpop.f32.mrb[0].mxu0
  %v5682 = vadd.f32 0.0, %v5681
  %v5683 = vpop.f32.mrb[0].mxu0
  %5684 = vmatprep.mubr.f32.mxu0 0.0
  %5685 = vmatmul.mubr.f32.gmra.mrb[0].mxu0 %v5581
  %v5686 = vpop.f32.mrb[0].mxu0
  %v5687 = vadd.f32 0.0, %v5686
  %v5688 = vpop.f32.mrb[0].mxu0
  %5689 = vdwg.mxu0
  %v5691 = vunpack.c.l.s4 1983009808
  %v5692 = vunpack.c.0.s8 %v5691
  %v5693 = vlaneseq
  %v5694 = vshrl.u32 %v5693, 7
  %v5695 = vsub.s32 %v5692, %v5694
  %v5696 = vrot.slane %v3863, %v5695
  %5697 = vrot.lane.b32.xlu0 %v5696, 64
  %v5698 = vpop.permute.xlu0 %5697
  %5700 = vxpose.xlu0.b32.start [1/16] %v5698, 128
  %5701 = vxpose.xlu0.b32.cont [2/16] 0.0, 128
  %5702 = vxpose.xlu0.b32.cont [3/16] 0.0, 128
  %5703 = vxpose.xlu0.b32.cont [4/16] 0.0, 128
  %5704 = vxpose.xlu0.b32.cont [5/16] 0.0, 128
  %5705 = vxpose.xlu0.b32.cont [6/16] 0.0, 128
  %5706 = vxpose.xlu0.b32.cont [7/16] 0.0, 128
  %5707 = vxpose.xlu0.b32.cont [8/16] 0.0, 128
  %5708 = vxpose.xlu0.b32.cont [9/16] 0.0, 128
  %5709 = vxpose.xlu0.b32.cont [10/16] 0.0, 128
  %5710 = vxpose.xlu0.b32.cont [11/16] 0.0, 128
  %5711 = vxpose.xlu0.b32.cont [12/16] 0.0, 128
  %5712 = vxpose.xlu0.b32.cont [13/16] 0.0, 128
  %5713 = vxpose.xlu0.b32.cont [14/16] 0.0, 128
  %5714 = vxpose.xlu0.b32.cont [15/16] 0.0, 128
  %5715 = vxpose.xlu0.b32.end [16/16] 0.0, 128
  %v5716 = vpop.trf.xlu0
  %v5717 = vpop.trf.xlu0
  %v5718 = vpop.trf.xlu0
  %v5719 = vpop.trf.xlu0
  %v5720 = vpop.trf.xlu0
  %v5721 = vpop.trf.xlu0
  %v5722 = vpop.trf.xlu0
  %v5723 = vpop.trf.xlu0
  %v5724 = vpop.trf.xlu0
  %v5725 = vpop.trf.xlu0
  %v5726 = vpop.trf.xlu0
  %v5727 = vpop.trf.xlu0
  %v5728 = vpop.trf.xlu0
  %v5729 = vpop.trf.xlu0
  %v5730 = vpop.trf.xlu0
  %v5731 = vpop.trf.xlu0
  %v5733 = vunpack.c.l.s4 1983009808
  %v5734 = vunpack.c.0.s8 %v5733
  %v5735 = vlaneseq
  %v5736 = vshrl.u32 %v5735, 7
  %v5737 = vsub.s32 %v5734, %v5736
  %v5738 = vrot.slane %v3885, %v5737
  %5739 = vrot.lane.b32.xlu0 %v5738, 64
  %v5740 = vpop.permute.xlu0 %5739
  %v5742 = vsel %vm344, %v5716, 0
  %v5745 = vsel %vm344, %v5717, 0
  %v5748 = vsel %vm344, %v5718, 0
  %v5751 = vsel %vm344, %v5719, 0
  %v5754 = vsel %vm344, %v5720, 0
  %v5757 = vsel %vm344, %v5721, 0
  %v5760 = vsel %vm344, %v5722, 0
  %v5763 = vsel %vm344, %v5723, 0
  %v5765 = vsel %vm369, %v5740, 0
  %5767 = vmatprep.subr.mxu0 0.0
  %5768 = vmatpush1.msra.mxu0 %v5765
  %5769 = vmatprep.subr.mxu0 0.0
  %5770 = vmatpush1.msra.mxu0 0.0
  %5771 = vmatprep.subr.mxu0 0.0
  %5772 = vmatpush1.msra.mxu0 0.0
  %5773 = vmatprep.subr.mxu0 0.0
  %5774 = vmatpush1.msra.mxu0 0.0
  %5775 = vmatprep.subr.mxu0 0.0
  %5776 = vmatpush1.msra.mxu0 0.0
  %5777 = vmatprep.subr.mxu0 0.0
  %5778 = vmatpush1.msra.mxu0 0.0
  %5779 = vmatprep.subr.mxu0 0.0
  %5780 = vmatpush1.msra.mxu0 0.0
  %5781 = vmatprep.subr.mxu0 0.0
  %5782 = vmatpush1.msra.mxu0 0.0
  %5783 = vmatprep.subr.mxu0 0.0
  %5784 = vmatpush1.msra.mxu0 0.0
  %5785 = vmatprep.subr.mxu0 0.0
  %5786 = vmatpush1.msra.mxu0 0.0
  %5787 = vmatprep.subr.mxu0 0.0
  %5788 = vmatpush1.msra.mxu0 0.0
  %5789 = vmatprep.subr.mxu0 0.0
  %5790 = vmatpush1.msra.mxu0 0.0
  %5791 = vmatprep.subr.mxu0 0.0
  %5792 = vmatpush1.msra.mxu0 0.0
  %5793 = vmatprep.subr.mxu0 0.0
  %5794 = vmatpush1.msra.mxu0 0.0
  %5795 = vmatprep.subr.mxu0 0.0
  %5796 = vmatpush1.msra.mxu0 0.0
  %5797 = vmatprep.subr.mxu0 0.0
  %5798 = vmatpush1.msra.mxu0 0.0
  %5799 = vmatprep.subr.mxu0 0.0
  %5800 = vmatpush1.msra.mxu0 0.0
  %5801 = vmatprep.subr.mxu0 0.0
  %5802 = vmatpush1.msra.mxu0 0.0
  %5803 = vmatprep.subr.mxu0 0.0
  %5804 = vmatpush1.msra.mxu0 0.0
  %5805 = vmatprep.subr.mxu0 0.0
  %5806 = vmatpush1.msra.mxu0 0.0
  %5807 = vmatprep.subr.mxu0 0.0
  %5808 = vmatpush1.msra.mxu0 0.0
  %5809 = vmatprep.subr.mxu0 0.0
  %5810 = vmatpush1.msra.mxu0 0.0
  %5811 = vmatprep.subr.mxu0 0.0
  %5812 = vmatpush1.msra.mxu0 0.0
  %5813 = vmatprep.subr.mxu0 0.0
  %5814 = vmatpush1.msra.mxu0 0.0
  %5815 = vmatprep.subr.mxu0 0.0
  %5816 = vmatpush1.msra.mxu0 0.0
  %5817 = vmatprep.subr.mxu0 0.0
  %5818 = vmatpush1.msra.mxu0 0.0
  %5819 = vmatprep.subr.mxu0 0.0
  %5820 = vmatpush1.msra.mxu0 0.0
  %5821 = vmatprep.subr.mxu0 0.0
  %5822 = vmatpush1.msra.mxu0 0.0
  %5823 = vmatprep.subr.mxu0 0.0
  %5824 = vmatpush1.msra.mxu0 0.0
  %5825 = vmatprep.subr.mxu0 0.0
  %5826 = vmatpush1.msra.mxu0 0.0
  %5827 = vmatprep.subr.mxu0 0.0
  %5828 = vmatpush1.msra.mxu0 0.0
  %5829 = vmatprep.subr.mxu0 0.0
  %5830 = vmatpush1.msra.mxu0 0.0
  %5831 = vmatprep.mubr.f32.mxu0 0.0
  %5832 = vmatmul.mubr.f32.gmra.mrb[0].mxu0 %v5742
  %v5833 = vpop.f32.mrb[0].mxu0
  %v5834 = vadd.f32 0.0, %v5833
  %v5835 = vpop.f32.mrb[0].mxu0
  %5836 = vmatprep.mubr.f32.mxu0 0.0
  %5837 = vmatmul.mubr.f32.gmra.mrb[0].mxu0 %v5745
  %v5838 = vpop.f32.mrb[0].mxu0
  %v5839 = vadd.f32 0.0, %v5838
  %v5840 = vpop.f32.mrb[0].mxu0
  %5841 = vmatprep.mubr.f32.mxu0 0.0
  %5842 = vmatmul.mubr.f32.gmra.mrb[0].mxu0 %v5748
  %v5843 = vpop.f32.mrb[0].mxu0
  %v5844 = vadd.f32 0.0, %v5843
  %v5845 = vpop.f32.mrb[0].mxu0
  %5846 = vmatprep.mubr.f32.mxu0 0.0
  %5847 = vmatmul.mubr.f32.gmra.mrb[0].mxu0 %v5751
  %v5848 = vpop.f32.mrb[0].mxu0
  %v5849 = vadd.f32 0.0, %v5848
  %v5850 = vpop.f32.mrb[0].mxu0
  %5851 = vmatprep.mubr.f32.mxu0 0.0
  %5852 = vmatmul.mubr.f32.gmra.mrb[0].mxu0 %v5754
  %v5853 = vpop.f32.mrb[0].mxu0
  %v5854 = vadd.f32 0.0, %v5853
  %v5855 = vpop.f32.mrb[0].mxu0
  %5856 = vmatprep.mubr.f32.mxu0 0.0
  %5857 = vmatmul.mubr.f32.gmra.mrb[0].mxu0 %v5757
  %v5858 = vpop.f32.mrb[0].mxu0
  %v5859 = vadd.f32 0.0, %v5858
  %v5860 = vpop.f32.mrb[0].mxu0
  %5861 = vmatprep.mubr.f32.mxu0 0.0
  %5862 = vmatmul.mubr.f32.gmra.mrb[0].mxu0 %v5760
  %v5863 = vpop.f32.mrb[0].mxu0
  %v5864 = vadd.f32 0.0, %v5863
  %v5865 = vpop.f32.mrb[0].mxu0
  %5866 = vmatprep.mubr.f32.mxu0 0.0
  %5867 = vmatmul.mubr.f32.gmra.mrb[0].mxu0 %v5763
  %v5868 = vpop.f32.mrb[0].mxu0
  %v5869 = vadd.f32 0.0, %v5868
  %v5870 = vpop.f32.mrb[0].mxu0
  %5871 = vdwg.mxu0
  %v5873 = vunpack.c.l.s4 1983009808
  %v5874 = vunpack.c.0.s8 %v5873
  %v5875 = vlaneseq
  %v5876 = vshrl.u32 %v5875, 7
  %v5877 = vsub.s32 %v5874, %v5876
  %v5878 = vrot.slane %v3865, %v5877
  %5879 = vrot.lane.b32.xlu0 %v5878, 64
  %v5880 = vpop.permute.xlu0 %5879
  %5882 = vxpose.xlu0.b32.start [1/16] %v5880, 128
  %5883 = vxpose.xlu0.b32.cont [2/16] 0.0, 128
  %5884 = vxpose.xlu0.b32.cont [3/16] 0.0, 128
  %5885 = vxpose.xlu0.b32.cont [4/16] 0.0, 128
  %5886 = vxpose.xlu0.b32.cont [5/16] 0.0, 128
  %5887 = vxpose.xlu0.b32.cont [6/16] 0.0, 128
  %5888 = vxpose.xlu0.b32.cont [7/16] 0.0, 128
  %5889 = vxpose.xlu0.b32.cont [8/16] 0.0, 128
  %5890 = vxpose.xlu0.b32.cont [9/16] 0.0, 128
  %5891 = vxpose.xlu0.b32.cont [10/16] 0.0, 128
  %5892 = vxpose.xlu0.b32.cont [11/16] 0.0, 128
  %5893 = vxpose.xlu0.b32.cont [12/16] 0.0, 128
  %5894 = vxpose.xlu0.b32.cont [13/16] 0.0, 128
  %5895 = vxpose.xlu0.b32.cont [14/16] 0.0, 128
  %5896 = vxpose.xlu0.b32.cont [15/16] 0.0, 128
  %5897 = vxpose.xlu0.b32.end [16/16] 0.0, 128
  %v5898 = vpop.trf.xlu0
  %v5899 = vpop.trf.xlu0
  %v5900 = vpop.trf.xlu0
  %v5901 = vpop.trf.xlu0
  %v5902 = vpop.trf.xlu0
  %v5903 = vpop.trf.xlu0
  %v5904 = vpop.trf.xlu0
  %v5905 = vpop.trf.xlu0
  %v5906 = vpop.trf.xlu0
  %v5907 = vpop.trf.xlu0
  %v5908 = vpop.trf.xlu0
  %v5909 = vpop.trf.xlu0
  %v5910 = vpop.trf.xlu0
  %v5911 = vpop.trf.xlu0
  %v5912 = vpop.trf.xlu0
  %v5913 = vpop.trf.xlu0
  %v5915 = vunpack.c.l.s4 1983009808
  %v5916 = vunpack.c.0.s8 %v5915
  %v5917 = vlaneseq
  %v5918 = vshrl.u32 %v5917, 7
  %v5919 = vsub.s32 %v5916, %v5918
  %v5920 = vrot.slane %v3887, %v5919
  %5921 = vrot.lane.b32.xlu0 %v5920, 64
  %v5922 = vpop.permute.xlu0 %5921
  %v5924 = vsel %vm344, %v5898, 0
  %v5927 = vsel %vm344, %v5899, 0
  %v5930 = vsel %vm344, %v5900, 0
  %v5933 = vsel %vm344, %v5901, 0
  %v5936 = vsel %vm344, %v5902, 0
  %v5939 = vsel %vm344, %v5903, 0
  %v5942 = vsel %vm344, %v5904, 0
  %v5945 = vsel %vm344, %v5905, 0
  %v5947 = vsel %vm369, %v5922, 0
  %5949 = vmatprep.subr.mxu0 0.0
  %5950 = vmatpush1.msra.mxu0 %v5947
  %5951 = vmatprep.subr.mxu0 0.0
  %5952 = vmatpush1.msra.mxu0 0.0
  %5953 = vmatprep.subr.mxu0 0.0
  %5954 = vmatpush1.msra.mxu0 0.0
  %5955 = vmatprep.subr.mxu0 0.0
  %5956 = vmatpush1.msra.mxu0 0.0
  %5957 = vmatprep.subr.mxu0 0.0
  %5958 = vmatpush1.msra.mxu0 0.0
  %5959 = vmatprep.subr.mxu0 0.0
  %5960 = vmatpush1.msra.mxu0 0.0
  %5961 = vmatprep.subr.mxu0 0.0
  %5962 = vmatpush1.msra.mxu0 0.0
  %5963 = vmatprep.subr.mxu0 0.0
  %5964 = vmatpush1.msra.mxu0 0.0
  %5965 = vmatprep.subr.mxu0 0.0
  %5966 = vmatpush1.msra.mxu0 0.0
  %5967 = vmatprep.subr.mxu0 0.0
  %5968 = vmatpush1.msra.mxu0 0.0
  %5969 = vmatprep.subr.mxu0 0.0
  %5970 = vmatpush1.msra.mxu0 0.0
  %5971 = vmatprep.subr.mxu0 0.0
  %5972 = vmatpush1.msra.mxu0 0.0
  %5973 = vmatprep.subr.mxu0 0.0
  %5974 = vmatpush1.msra.mxu0 0.0
  %5975 = vmatprep.subr.mxu0 0.0
  %5976 = vmatpush1.msra.mxu0 0.0
  %5977 = vmatprep.subr.mxu0 0.0
  %5978 = vmatpush1.msra.mxu0 0.0
  %5979 = vmatprep.subr.mxu0 0.0
  %5980 = vmatpush1.msra.mxu0 0.0
  %5981 = vmatprep.subr.mxu0 0.0
  %5982 = vmatpush1.msra.mxu0 0.0
  %5983 = vmatprep.subr.mxu0 0.0
  %5984 = vmatpush1.msra.mxu0 0.0
  %5985 = vmatprep.subr.mxu0 0.0
  %5986 = vmatpush1.msra.mxu0 0.0
  %5987 = vmatprep.subr.mxu0 0.0
  %5988 = vmatpush1.msra.mxu0 0.0
  %5989 = vmatprep.subr.mxu0 0.0
  %5990 = vmatpush1.msra.mxu0 0.0
  %5991 = vmatprep.subr.mxu0 0.0
  %5992 = vmatpush1.msra.mxu0 0.0
  %5993 = vmatprep.subr.mxu0 0.0
  %5994 = vmatpush1.msra.mxu0 0.0
  %5995 = vmatprep.subr.mxu0 0.0
  %5996 = vmatpush1.msra.mxu0 0.0
  %5997 = vmatprep.subr.mxu0 0.0
  %5998 = vmatpush1.msra.mxu0 0.0
  %5999 = vmatprep.subr.mxu0 0.0
  %6000 = vmatpush1.msra.mxu0 0.0
  %6001 = vmatprep.subr.mxu0 0.0
  %6002 = vmatpush1.msra.mxu0 0.0
  %6003 = vmatprep.subr.mxu0 0.0
  %6004 = vmatpush1.msra.mxu0 0.0
  %6005 = vmatprep.subr.mxu0 0.0
  %6006 = vmatpush1.msra.mxu0 0.0
  %6007 = vmatprep.subr.mxu0 0.0
  %6008 = vmatpush1.msra.mxu0 0.0
  %6009 = vmatprep.subr.mxu0 0.0
  %6010 = vmatpush1.msra.mxu0 0.0
  %6011 = vmatprep.subr.mxu0 0.0
  %6012 = vmatpush1.msra.mxu0 0.0
  %6013 = vmatprep.mubr.f32.mxu0 0.0
  %6014 = vmatmul.mubr.f32.gmra.mrb[0].mxu0 %v5924
  %v6015 = vpop.f32.mrb[0].mxu0
  %v6016 = vadd.f32 0.0, %v6015
  %v6017 = vpop.f32.mrb[0].mxu0
  %6018 = vmatprep.mubr.f32.mxu0 0.0
  %6019 = vmatmul.mubr.f32.gmra.mrb[0].mxu0 %v5927
  %v6020 = vpop.f32.mrb[0].mxu0
  %v6021 = vadd.f32 0.0, %v6020
  %v6022 = vpop.f32.mrb[0].mxu0
  %6023 = vmatprep.mubr.f32.mxu0 0.0
  %6024 = vmatmul.mubr.f32.gmra.mrb[0].mxu0 %v5930
  %v6025 = vpop.f32.mrb[0].mxu0
  %v6026 = vadd.f32 0.0, %v6025
  %v6027 = vpop.f32.mrb[0].mxu0
  %6028 = vmatprep.mubr.f32.mxu0 0.0
  %6029 = vmatmul.mubr.f32.gmra.mrb[0].mxu0 %v5933
  %v6030 = vpop.f32.mrb[0].mxu0
  %v6031 = vadd.f32 0.0, %v6030
  %v6032 = vpop.f32.mrb[0].mxu0
  %6033 = vmatprep.mubr.f32.mxu0 0.0
  %6034 = vmatmul.mubr.f32.gmra.mrb[0].mxu0 %v5936
  %v6035 = vpop.f32.mrb[0].mxu0
  %v6036 = vadd.f32 0.0, %v6035
  %v6037 = vpop.f32.mrb[0].mxu0
  %6038 = vmatprep.mubr.f32.mxu0 0.0
  %6039 = vmatmul.mubr.f32.gmra.mrb[0].mxu0 %v5939
  %v6040 = vpop.f32.mrb[0].mxu0
  %v6041 = vadd.f32 0.0, %v6040
  %v6042 = vpop.f32.mrb[0].mxu0
  %6043 = vmatprep.mubr.f32.mxu0 0.0
  %6044 = vmatmul.mubr.f32.gmra.mrb[0].mxu0 %v5942
  %v6045 = vpop.f32.mrb[0].mxu0
  %v6046 = vadd.f32 0.0, %v6045
  %v6047 = vpop.f32.mrb[0].mxu0
  %6048 = vmatprep.mubr.f32.mxu0 0.0
  %6049 = vmatmul.mubr.f32.gmra.mrb[0].mxu0 %v5945
  %v6050 = vpop.f32.mrb[0].mxu0
  %v6051 = vadd.f32 0.0, %v6050
  %v6052 = vpop.f32.mrb[0].mxu0
  %6053 = vdwg.mxu0
  %v6054 = vmul.f32 %v5470, 0.70710677
  %v6055 = vmul.f32 %v5475, 0.70710677
  %v6056 = vmul.f32 %v5480, 0.70710677
  %v6057 = vmul.f32 %v5485, 0.70710677
  %v6058 = vmul.f32 %v5490, 0.70710677
  %v6059 = vmul.f32 %v5495, 0.70710677
  %v6060 = vmul.f32 %v5500, 0.70710677
  %v6061 = vmul.f32 %v5505, 0.70710677
  %v6062 = vmul.f32 %v5652, 0.70710677
  %v6063 = vmul.f32 %v5657, 0.70710677
  %v6064 = vmul.f32 %v5662, 0.70710677
  %v6065 = vmul.f32 %v5667, 0.70710677
  %v6066 = vmul.f32 %v5672, 0.70710677
  %v6067 = vmul.f32 %v5677, 0.70710677
  %v6068 = vmul.f32 %v5682, 0.70710677
  %v6069 = vmul.f32 %v5687, 0.70710677
  %v6070 = vmul.f32 %v5834, 0.70710677
  %v6071 = vmul.f32 %v5839, 0.70710677
  %v6072 = vmul.f32 %v5844, 0.70710677
  %v6073 = vmul.f32 %v5849, 0.70710677
  %v6074 = vmul.f32 %v5854, 0.70710677
  %v6075 = vmul.f32 %v5859, 0.70710677
  %v6076 = vmul.f32 %v5864, 0.70710677
  %v6077 = vmul.f32 %v5869, 0.70710677
  %v6078 = vmul.f32 %v6016, 0.70710677
  %v6079 = vmul.f32 %v6021, 0.70710677
  %v6080 = vmul.f32 %v6026, 0.70710677
  %v6081 = vmul.f32 %v6031, 0.70710677
  %v6082 = vmul.f32 %v6036, 0.70710677
  %v6083 = vmul.f32 %v6041, 0.70710677
  %v6084 = vmul.f32 %v6046, 0.70710677
  %v6085 = vmul.f32 %v6051, 0.70710677
  %v6086 = vsel %vm998, %v6054, -inf
  %6087 = vmax.xlane.f32.xlu0 %v6086
  %v6088 = vpop.xlane.xlu0 %6087
  %v6089 = vsel %vm998, %v6055, -inf
  %6090 = vmax.xlane.f32.xlu0 %v6089
  %v6091 = vpop.xlane.xlu0 %6090
  %v6092 = vsel %vm998, %v6056, -inf
  %6093 = vmax.xlane.f32.xlu0 %v6092
  %v6094 = vpop.xlane.xlu0 %6093
  %v6095 = vsel %vm998, %v6057, -inf
  %6096 = vmax.xlane.f32.xlu0 %v6095
  %v6097 = vpop.xlane.xlu0 %6096
  %v6098 = vsel %vm998, %v6058, -inf
  %6099 = vmax.xlane.f32.xlu0 %v6098
  %v6100 = vpop.xlane.xlu0 %6099
  %v6101 = vsel %vm998, %v6059, -inf
  %6102 = vmax.xlane.f32.xlu0 %v6101
  %v6103 = vpop.xlane.xlu0 %6102
  %v6104 = vsel %vm998, %v6060, -inf
  %6105 = vmax.xlane.f32.xlu0 %v6104
  %v6106 = vpop.xlane.xlu0 %6105
  %v6107 = vsel %vm998, %v6061, -inf
  %6108 = vmax.xlane.f32.xlu0 %v6107
  %v6109 = vpop.xlane.xlu0 %6108
  %v6110 = vsel %vm998, %v6062, -inf
  %6111 = vmax.xlane.f32.xlu0 %v6110
  %v6112 = vpop.xlane.xlu0 %6111
  %v6113 = vsel %vm998, %v6063, -inf
  %6114 = vmax.xlane.f32.xlu0 %v6113
  %v6115 = vpop.xlane.xlu0 %6114
  %v6116 = vsel %vm998, %v6064, -inf
  %6117 = vmax.xlane.f32.xlu0 %v6116
  %v6118 = vpop.xlane.xlu0 %6117
  %v6119 = vsel %vm998, %v6065, -inf
  %6120 = vmax.xlane.f32.xlu0 %v6119
  %v6121 = vpop.xlane.xlu0 %6120
  %v6122 = vsel %vm998, %v6066, -inf
  %6123 = vmax.xlane.f32.xlu0 %v6122
  %v6124 = vpop.xlane.xlu0 %6123
  %v6125 = vsel %vm998, %v6067, -inf
  %6126 = vmax.xlane.f32.xlu0 %v6125
  %v6127 = vpop.xlane.xlu0 %6126
  %v6128 = vsel %vm998, %v6068, -inf
  %6129 = vmax.xlane.f32.xlu0 %v6128
  %v6130 = vpop.xlane.xlu0 %6129
  %v6131 = vsel %vm998, %v6069, -inf
  %6132 = vmax.xlane.f32.xlu0 %v6131
  %v6133 = vpop.xlane.xlu0 %6132
  %v6134 = vsel %vm998, %v6070, -inf
  %6135 = vmax.xlane.f32.xlu0 %v6134
  %v6136 = vpop.xlane.xlu0 %6135
  %v6137 = vsel %vm998, %v6071, -inf
  %6138 = vmax.xlane.f32.xlu0 %v6137
  %v6139 = vpop.xlane.xlu0 %6138
  %v6140 = vsel %vm998, %v6072, -inf
  %6141 = vmax.xlane.f32.xlu0 %v6140
  %v6142 = vpop.xlane.xlu0 %6141
  %v6143 = vsel %vm998, %v6073, -inf
  %6144 = vmax.xlane.f32.xlu0 %v6143
  %v6145 = vpop.xlane.xlu0 %6144
  %v6146 = vsel %vm998, %v6074, -inf
  %6147 = vmax.xlane.f32.xlu0 %v6146
  %v6148 = vpop.xlane.xlu0 %6147
  %v6149 = vsel %vm998, %v6075, -inf
  %6150 = vmax.xlane.f32.xlu0 %v6149
  %v6151 = vpop.xlane.xlu0 %6150
  %v6152 = vsel %vm998, %v6076, -inf
  %6153 = vmax.xlane.f32.xlu0 %v6152
  %v6154 = vpop.xlane.xlu0 %6153
  %v6155 = vsel %vm998, %v6077, -inf
  %6156 = vmax.xlane.f32.xlu0 %v6155
  %v6157 = vpop.xlane.xlu0 %6156
  %v6158 = vsel %vm998, %v6078, -inf
  %6159 = vmax.xlane.f32.xlu0 %v6158
  %v6160 = vpop.xlane.xlu0 %6159
  %v6161 = vsel %vm998, %v6079, -inf
  %6162 = vmax.xlane.f32.xlu0 %v6161
  %v6163 = vpop.xlane.xlu0 %6162
  %v6164 = vsel %vm998, %v6080, -inf
  %6165 = vmax.xlane.f32.xlu0 %v6164
  %v6166 = vpop.xlane.xlu0 %6165
  %v6167 = vsel %vm998, %v6081, -inf
  %6168 = vmax.xlane.f32.xlu0 %v6167
  %v6169 = vpop.xlane.xlu0 %6168
  %v6170 = vsel %vm998, %v6082, -inf
  %6171 = vmax.xlane.f32.xlu0 %v6170
  %v6172 = vpop.xlane.xlu0 %6171
  %v6173 = vsel %vm998, %v6083, -inf
  %6174 = vmax.xlane.f32.xlu0 %v6173
  %v6175 = vpop.xlane.xlu0 %6174
  %v6176 = vsel %vm998, %v6084, -inf
  %6177 = vmax.xlane.f32.xlu0 %v6176
  %v6178 = vpop.xlane.xlu0 %6177
  %v6179 = vsel %vm998, %v6085, -inf
  %6180 = vmax.xlane.f32.xlu0 %v6179
  %v6181 = vpop.xlane.xlu0 %6180
  %v6182 = vsub.f32 %v6054, %v6088
  %v6183 = vsub.f32 %v6055, %v6091
  %v6184 = vsub.f32 %v6056, %v6094
  %v6185 = vsub.f32 %v6057, %v6097
  %v6186 = vsub.f32 %v6058, %v6100
  %v6187 = vsub.f32 %v6059, %v6103
  %v6188 = vsub.f32 %v6060, %v6106
  %v6189 = vsub.f32 %v6061, %v6109
  %v6190 = vsub.f32 %v6062, %v6112
  %v6191 = vsub.f32 %v6063, %v6115
  %v6192 = vsub.f32 %v6064, %v6118
  %v6193 = vsub.f32 %v6065, %v6121
  %v6194 = vsub.f32 %v6066, %v6124
  %v6195 = vsub.f32 %v6067, %v6127
  %v6196 = vsub.f32 %v6068, %v6130
  %v6197 = vsub.f32 %v6069, %v6133
  %v6198 = vsub.f32 %v6070, %v6136
  %v6199 = vsub.f32 %v6071, %v6139
  %v6200 = vsub.f32 %v6072, %v6142
  %v6201 = vsub.f32 %v6073, %v6145
  %v6202 = vsub.f32 %v6074, %v6148
  %v6203 = vsub.f32 %v6075, %v6151
  %v6204 = vsub.f32 %v6076, %v6154
  %v6205 = vsub.f32 %v6077, %v6157
  %v6206 = vsub.f32 %v6078, %v6160
  %v6207 = vsub.f32 %v6079, %v6163
  %v6208 = vsub.f32 %v6080, %v6166
  %v6209 = vsub.f32 %v6081, %v6169
  %v6210 = vsub.f32 %v6082, %v6172
  %v6211 = vsub.f32 %v6083, %v6175
  %v6212 = vsub.f32 %v6084, %v6178
  %v6213 = vsub.f32 %v6085, %v6181
  %v6214 = vmul.f32 %v6182, 1.442695
  %v6215 = vpow.pop %v6214
  %v6216 = vmul.f32 %v6183, 1.442695
  %v6217 = vpow.pop %v6216
  %v6218 = vmul.f32 %v6184, 1.442695
  %v6219 = vpow.pop %v6218
  %v6220 = vmul.f32 %v6185, 1.442695
  %v6221 = vpow.pop %v6220
  %v6222 = vmul.f32 %v6186, 1.442695
  %v6223 = vpow.pop %v6222
  %v6224 = vmul.f32 %v6187, 1.442695
  %v6225 = vpow.pop %v6224
  %v6226 = vmul.f32 %v6188, 1.442695
  %v6227 = vpow.pop %v6226
  %v6228 = vmul.f32 %v6189, 1.442695
  %v6229 = vpow.pop %v6228
  %v6230 = vmul.f32 %v6190, 1.442695
  %v6231 = vpow.pop %v6230
  %v6232 = vmul.f32 %v6191, 1.442695
  %v6233 = vpow.pop %v6232
  %v6234 = vmul.f32 %v6192, 1.442695
  %v6235 = vpow.pop %v6234
  %v6236 = vmul.f32 %v6193, 1.442695
  %v6237 = vpow.pop %v6236
  %v6238 = vmul.f32 %v6194, 1.442695
  %v6239 = vpow.pop %v6238
  %v6240 = vmul.f32 %v6195, 1.442695
  %v6241 = vpow.pop %v6240
  %v6242 = vmul.f32 %v6196, 1.442695
  %v6243 = vpow.pop %v6242
  %v6244 = vmul.f32 %v6197, 1.442695
  %v6245 = vpow.pop %v6244
  %v6246 = vmul.f32 %v6198, 1.442695
  %v6247 = vpow.pop %v6246
  %v6248 = vmul.f32 %v6199, 1.442695
  %v6249 = vpow.pop %v6248
  %v6250 = vmul.f32 %v6200, 1.442695
  %v6251 = vpow.pop %v6250
  %v6252 = vmul.f32 %v6201, 1.442695
  %v6253 = vpow.pop %v6252
  %v6254 = vmul.f32 %v6202, 1.442695
  %v6255 = vpow.pop %v6254
  %v6256 = vmul.f32 %v6203, 1.442695
  %v6257 = vpow.pop %v6256
  %v6258 = vmul.f32 %v6204, 1.442695
  %v6259 = vpow.pop %v6258
  %v6260 = vmul.f32 %v6205, 1.442695
  %v6261 = vpow.pop %v6260
  %v6262 = vmul.f32 %v6206, 1.442695
  %v6263 = vpow.pop %v6262
  %v6264 = vmul.f32 %v6207, 1.442695
  %v6265 = vpow.pop %v6264
  %v6266 = vmul.f32 %v6208, 1.442695
  %v6267 = vpow.pop %v6266
  %v6268 = vmul.f32 %v6209, 1.442695
  %v6269 = vpow.pop %v6268
  %v6270 = vmul.f32 %v6210, 1.442695
  %v6271 = vpow.pop %v6270
  %v6272 = vmul.f32 %v6211, 1.442695
  %v6273 = vpow.pop %v6272
  %v6274 = vmul.f32 %v6212, 1.442695
  %v6275 = vpow.pop %v6274
  %v6276 = vmul.f32 %v6213, 1.442695
  %v6277 = vpow.pop %v6276
  %v6278 = vsel %vm998, %v6215, 0.0
  %6279 = vadd.xlane.f32.xlu0 %v6278
  %v6280 = vpop.xlane.xlu0 %6279
  %v6281 = vsel %vm998, %v6217, 0.0
  %6282 = vadd.xlane.f32.xlu0 %v6281
  %v6283 = vpop.xlane.xlu0 %6282
  %v6284 = vsel %vm998, %v6219, 0.0
  %6285 = vadd.xlane.f32.xlu0 %v6284
  %v6286 = vpop.xlane.xlu0 %6285
  %v6287 = vsel %vm998, %v6221, 0.0
  %6288 = vadd.xlane.f32.xlu0 %v6287
  %v6289 = vpop.xlane.xlu0 %6288
  %v6290 = vsel %vm998, %v6223, 0.0
  %6291 = vadd.xlane.f32.xlu0 %v6290
  %v6292 = vpop.xlane.xlu0 %6291
  %v6293 = vsel %vm998, %v6225, 0.0
  %6294 = vadd.xlane.f32.xlu0 %v6293
  %v6295 = vpop.xlane.xlu0 %6294
  %v6296 = vsel %vm998, %v6227, 0.0
  %6297 = vadd.xlane.f32.xlu0 %v6296
  %v6298 = vpop.xlane.xlu0 %6297
  %v6299 = vsel %vm998, %v6229, 0.0
  %6300 = vadd.xlane.f32.xlu0 %v6299
  %v6301 = vpop.xlane.xlu0 %6300
  %v6302 = vsel %vm998, %v6231, 0.0
  %6303 = vadd.xlane.f32.xlu0 %v6302
  %v6304 = vpop.xlane.xlu0 %6303
  %v6305 = vsel %vm998, %v6233, 0.0
  %6306 = vadd.xlane.f32.xlu0 %v6305
  %v6307 = vpop.xlane.xlu0 %6306
  %v6308 = vsel %vm998, %v6235, 0.0
  %6309 = vadd.xlane.f32.xlu0 %v6308
  %v6310 = vpop.xlane.xlu0 %6309
  %v6311 = vsel %vm998, %v6237, 0.0
  %6312 = vadd.xlane.f32.xlu0 %v6311
  %v6313 = vpop.xlane.xlu0 %6312
  %v6314 = vsel %vm998, %v6239, 0.0
  %6315 = vadd.xlane.f32.xlu0 %v6314
  %v6316 = vpop.xlane.xlu0 %6315
  %v6317 = vsel %vm998, %v6241, 0.0
  %6318 = vadd.xlane.f32.xlu0 %v6317
  %v6319 = vpop.xlane.xlu0 %6318
  %v6320 = vsel %vm998, %v6243, 0.0
  %6321 = vadd.xlane.f32.xlu0 %v6320
  %v6322 = vpop.xlane.xlu0 %6321
  %v6323 = vsel %vm998, %v6245, 0.0
  %6324 = vadd.xlane.f32.xlu0 %v6323
  %v6325 = vpop.xlane.xlu0 %6324
  %v6326 = vsel %vm998, %v6247, 0.0
  %6327 = vadd.xlane.f32.xlu0 %v6326
  %v6328 = vpop.xlane.xlu0 %6327
  %v6329 = vsel %vm998, %v6249, 0.0
  %6330 = vadd.xlane.f32.xlu0 %v6329
  %v6331 = vpop.xlane.xlu0 %6330
  %v6332 = vsel %vm998, %v6251, 0.0
  %6333 = vadd.xlane.f32.xlu0 %v6332
  %v6334 = vpop.xlane.xlu0 %6333
  %v6335 = vsel %vm998, %v6253, 0.0
  %6336 = vadd.xlane.f32.xlu0 %v6335
  %v6337 = vpop.xlane.xlu0 %6336
  %v6338 = vsel %vm998, %v6255, 0.0
  %6339 = vadd.xlane.f32.xlu0 %v6338
  %v6340 = vpop.xlane.xlu0 %6339
  %v6341 = vsel %vm998, %v6257, 0.0
  %6342 = vadd.xlane.f32.xlu0 %v6341
  %v6343 = vpop.xlane.xlu0 %6342
  %v6344 = vsel %vm998, %v6259, 0.0
  %6345 = vadd.xlane.f32.xlu0 %v6344
  %v6346 = vpop.xlane.xlu0 %6345
  %v6347 = vsel %vm998, %v6261, 0.0
  %6348 = vadd.xlane.f32.xlu0 %v6347
  %v6349 = vpop.xlane.xlu0 %6348
  %v6350 = vsel %vm998, %v6263, 0.0
  %6351 = vadd.xlane.f32.xlu0 %v6350
  %v6352 = vpop.xlane.xlu0 %6351
  %v6353 = vsel %vm998, %v6265, 0.0
  %6354 = vadd.xlane.f32.xlu0 %v6353
  %v6355 = vpop.xlane.xlu0 %6354
  %v6356 = vsel %vm998, %v6267, 0.0
  %6357 = vadd.xlane.f32.xlu0 %v6356
  %v6358 = vpop.xlane.xlu0 %6357
  %v6359 = vsel %vm998, %v6269, 0.0
  %6360 = vadd.xlane.f32.xlu0 %v6359
  %v6361 = vpop.xlane.xlu0 %6360
  %v6362 = vsel %vm998, %v6271, 0.0
  %6363 = vadd.xlane.f32.xlu0 %v6362
  %v6364 = vpop.xlane.xlu0 %6363
  %v6365 = vsel %vm998, %v6273, 0.0
  %6366 = vadd.xlane.f32.xlu0 %v6365
  %v6367 = vpop.xlane.xlu0 %6366
  %v6368 = vsel %vm998, %v6275, 0.0
  %6369 = vadd.xlane.f32.xlu0 %v6368
  %v6370 = vpop.xlane.xlu0 %6369
  %v6371 = vsel %vm998, %v6277, 0.0
  %6372 = vadd.xlane.f32.xlu0 %v6371
  %v6373 = vpop.xlane.xlu0 %6372
  %v6374 = vrcp.pop %v6280
  %v6375 = vrcp.pop %v6283
  %v6376 = vrcp.pop %v6286
  %v6377 = vrcp.pop %v6289
  %v6378 = vrcp.pop %v6292
  %v6379 = vrcp.pop %v6295
  %v6380 = vrcp.pop %v6298
  %v6381 = vrcp.pop %v6301
  %v6382 = vrcp.pop %v6304
  %v6383 = vrcp.pop %v6307
  %v6384 = vrcp.pop %v6310
  %v6385 = vrcp.pop %v6313
  %v6386 = vrcp.pop %v6316
  %v6387 = vrcp.pop %v6319
  %v6388 = vrcp.pop %v6322
  %v6389 = vrcp.pop %v6325
  %v6390 = vrcp.pop %v6328
  %v6391 = vrcp.pop %v6331
  %v6392 = vrcp.pop %v6334
  %v6393 = vrcp.pop %v6337
  %v6394 = vrcp.pop %v6340
  %v6395 = vrcp.pop %v6343
  %v6396 = vrcp.pop %v6346
  %v6397 = vrcp.pop %v6349
  %v6398 = vrcp.pop %v6352
  %v6399 = vrcp.pop %v6355
  %v6400 = vrcp.pop %v6358
  %v6401 = vrcp.pop %v6361
  %v6402 = vrcp.pop %v6364
  %v6403 = vrcp.pop %v6367
  %v6404 = vrcp.pop %v6370
  %v6405 = vrcp.pop %v6373
  %v6406 = vmul.f32 %v6215, %v6374
  %v6407 = vmul.f32 %v6217, %v6375
  %v6408 = vmul.f32 %v6219, %v6376
  %v6409 = vmul.f32 %v6221, %v6377
  %v6410 = vmul.f32 %v6223, %v6378
  %v6411 = vmul.f32 %v6225, %v6379
  %v6412 = vmul.f32 %v6227, %v6380
  %v6413 = vmul.f32 %v6229, %v6381
  %v6414 = vmul.f32 %v6231, %v6382
  %v6415 = vmul.f32 %v6233, %v6383
  %v6416 = vmul.f32 %v6235, %v6384
  %v6417 = vmul.f32 %v6237, %v6385
  %v6418 = vmul.f32 %v6239, %v6386
  %v6419 = vmul.f32 %v6241, %v6387
  %v6420 = vmul.f32 %v6243, %v6388
  %v6421 = vmul.f32 %v6245, %v6389
  %v6422 = vmul.f32 %v6247, %v6390
  %v6423 = vmul.f32 %v6249, %v6391
  %v6424 = vmul.f32 %v6251, %v6392
  %v6425 = vmul.f32 %v6253, %v6393
  %v6426 = vmul.f32 %v6255, %v6394
  %v6427 = vmul.f32 %v6257, %v6395
  %v6428 = vmul.f32 %v6259, %v6396
  %v6429 = vmul.f32 %v6261, %v6397
  %v6430 = vmul.f32 %v6263, %v6398
  %v6431 = vmul.f32 %v6265, %v6399
  %v6432 = vmul.f32 %v6267, %v6400
  %v6433 = vmul.f32 %v6269, %v6401
  %v6434 = vmul.f32 %v6271, %v6402
  %v6435 = vmul.f32 %v6273, %v6403
  %v6436 = vmul.f32 %v6275, %v6404
  %v6437 = vmul.f32 %v6277, %v6405
  %v6439 = vunpack.c.l.s4 1983009808
  %v6440 = vunpack.c.0.s8 %v6439
  %v6441 = vlaneseq
  %v6442 = vshrl.u32 %v6441, 7
  %v6443 = vsub.s32 %v6440, %v6442
  %v6444 = vrot.slane %v3896, %v6443
  %6445 = vrot.lane.b32.xlu0 %v6444, 64
  %v6446 = vpop.permute.xlu0 %6445
  %v6447 = vsel %vm998, %v6446, 0
  %v6450 = vsel %vm998, %v6406, 0
  %v6453 = vsel %vm998, %v6407, 0
  %v6456 = vsel %vm998, %v6408, 0
  %v6459 = vsel %vm998, %v6409, 0
  %v6462 = vsel %vm998, %v6410, 0
  %v6465 = vsel %vm998, %v6411, 0
  %v6468 = vsel %vm998, %v6412, 0
  %v6471 = vsel %vm998, %v6413, 0
  %6473 = vmatprep.subr.mxu0 0.0
  %6474 = vmatpush1.xpose.msra.mxu0 %v6450
  %6475 = vmatprep.subr.mxu0 0.0
  %6476 = vmatpush1.xpose.msra.mxu0 %v6453
  %6477 = vmatprep.subr.mxu0 0.0
  %6478 = vmatpush1.xpose.msra.mxu0 %v6456
  %6479 = vmatprep.subr.mxu0 0.0
  %6480 = vmatpush1.xpose.msra.mxu0 %v6459
  %6481 = vmatprep.subr.mxu0 0.0
  %6482 = vmatpush1.xpose.msra.mxu0 %v6462
  %6483 = vmatprep.subr.mxu0 0.0
  %6484 = vmatpush1.xpose.msra.mxu0 %v6465
  %6485 = vmatprep.subr.mxu0 0.0
  %6486 = vmatpush1.xpose.msra.mxu0 %v6468
  %6487 = vmatprep.subr.mxu0 0.0
  %6488 = vmatpush1.xpose.msra.mxu0 %v6471
  %6489 = vmatprep.subr.mxu0 0.0
  %6490 = vmatpush1.xpose.msra.mxu0 0.0
  %6491 = vmatprep.subr.mxu0 0.0
  %6492 = vmatpush1.xpose.msra.mxu0 0.0
  %6493 = vmatprep.subr.mxu0 0.0
  %6494 = vmatpush1.xpose.msra.mxu0 0.0
  %6495 = vmatprep.subr.mxu0 0.0
  %6496 = vmatpush1.xpose.msra.mxu0 0.0
  %6497 = vmatprep.subr.mxu0 0.0
  %6498 = vmatpush1.xpose.msra.mxu0 0.0
  %6499 = vmatprep.subr.mxu0 0.0
  %6500 = vmatpush1.xpose.msra.mxu0 0.0
  %6501 = vmatprep.subr.mxu0 0.0
  %6502 = vmatpush1.xpose.msra.mxu0 0.0
  %6503 = vmatprep.subr.mxu0 0.0
  %6504 = vmatpush1.xpose.msra.mxu0 0.0
  %6505 = vmatprep.subr.mxu0 0.0
  %6506 = vmatpush1.xpose.msra.mxu0 0.0
  %6507 = vmatprep.subr.mxu0 0.0
  %6508 = vmatpush1.xpose.msra.mxu0 0.0
  %6509 = vmatprep.subr.mxu0 0.0
  %6510 = vmatpush1.xpose.msra.mxu0 0.0
  %6511 = vmatprep.subr.mxu0 0.0
  %6512 = vmatpush1.xpose.msra.mxu0 0.0
  %6513 = vmatprep.subr.mxu0 0.0
  %6514 = vmatpush1.xpose.msra.mxu0 0.0
  %6515 = vmatprep.subr.mxu0 0.0
  %6516 = vmatpush1.xpose.msra.mxu0 0.0
  %6517 = vmatprep.subr.mxu0 0.0
  %6518 = vmatpush1.xpose.msra.mxu0 0.0
  %6519 = vmatprep.subr.mxu0 0.0
  %6520 = vmatpush1.xpose.msra.mxu0 0.0
  %6521 = vmatprep.subr.mxu0 0.0
  %6522 = vmatpush1.xpose.msra.mxu0 0.0
  %6523 = vmatprep.subr.mxu0 0.0
  %6524 = vmatpush1.xpose.msra.mxu0 0.0
  %6525 = vmatprep.subr.mxu0 0.0
  %6526 = vmatpush1.xpose.msra.mxu0 0.0
  %6527 = vmatprep.subr.mxu0 0.0
  %6528 = vmatpush1.xpose.msra.mxu0 0.0
  %6529 = vmatprep.subr.mxu0 0.0
  %6530 = vmatpush1.xpose.msra.mxu0 0.0
  %6531 = vmatprep.subr.mxu0 0.0
  %6532 = vmatpush1.xpose.msra.mxu0 0.0
  %6533 = vmatprep.subr.mxu0 0.0
  %6534 = vmatpush1.xpose.msra.mxu0 0.0
  %6535 = vmatprep.subr.mxu0 0.0
  %6536 = vmatpush1.xpose.msra.mxu0 0.0
  %6537 = vmatprep.mubr.f32.mxu0 0.0
  %6538 = vmatmul.mubr.f32.gmra.mrb[0].mxu0 %v6447
  %v6539 = vpop.f32.mrb[0].mxu0
  %v6540 = vadd.f32 0.0, %v6539
  %v6541 = vpop.f32.mrb[0].mxu0
  %6542 = vdwg.mxu0
  %v6544 = vunpack.c.l.s4 1983009808
  %v6545 = vunpack.c.0.s8 %v6544
  %v6546 = vlaneseq
  %v6547 = vshrl.u32 %v6546, 7
  %v6548 = vsub.s32 %v6545, %v6547
  %v6549 = vrot.slane %v3904, %v6548
  %6550 = vrot.lane.b32.xlu0 %v6549, 64
  %v6551 = vpop.permute.xlu0 %6550
  %v6552 = vsel %vm998, %v6551, 0
  %v6555 = vsel %vm998, %v6414, 0
  %v6558 = vsel %vm998, %v6415, 0
  %v6561 = vsel %vm998, %v6416, 0
  %v6564 = vsel %vm998, %v6417, 0
  %v6567 = vsel %vm998, %v6418, 0
  %v6570 = vsel %vm998, %v6419, 0
  %v6573 = vsel %vm998, %v6420, 0
  %v6576 = vsel %vm998, %v6421, 0
  %6578 = vmatprep.subr.mxu0 0.0
  %6579 = vmatpush1.xpose.msra.mxu0 %v6555
  %6580 = vmatprep.subr.mxu0 0.0
  %6581 = vmatpush1.xpose.msra.mxu0 %v6558
  %6582 = vmatprep.subr.mxu0 0.0
  %6583 = vmatpush1.xpose.msra.mxu0 %v6561
  %6584 = vmatprep.subr.mxu0 0.0
  %6585 = vmatpush1.xpose.msra.mxu0 %v6564
  %6586 = vmatprep.subr.mxu0 0.0
  %6587 = vmatpush1.xpose.msra.mxu0 %v6567
  %6588 = vmatprep.subr.mxu0 0.0
  %6589 = vmatpush1.xpose.msra.mxu0 %v6570
  %6590 = vmatprep.subr.mxu0 0.0
  %6591 = vmatpush1.xpose.msra.mxu0 %v6573
  %6592 = vmatprep.subr.mxu0 0.0
  %6593 = vmatpush1.xpose.msra.mxu0 %v6576
  %6594 = vmatprep.subr.mxu0 0.0
  %6595 = vmatpush1.xpose.msra.mxu0 0.0
  %6596 = vmatprep.subr.mxu0 0.0
  %6597 = vmatpush1.xpose.msra.mxu0 0.0
  %6598 = vmatprep.subr.mxu0 0.0
  %6599 = vmatpush1.xpose.msra.mxu0 0.0
  %6600 = vmatprep.subr.mxu0 0.0
  %6601 = vmatpush1.xpose.msra.mxu0 0.0
  %6602 = vmatprep.subr.mxu0 0.0
  %6603 = vmatpush1.xpose.msra.mxu0 0.0
  %6604 = vmatprep.subr.mxu0 0.0
  %6605 = vmatpush1.xpose.msra.mxu0 0.0
  %6606 = vmatprep.subr.mxu0 0.0
  %6607 = vmatpush1.xpose.msra.mxu0 0.0
  %6608 = vmatprep.subr.mxu0 0.0
  %6609 = vmatpush1.xpose.msra.mxu0 0.0
  %6610 = vmatprep.subr.mxu0 0.0
  %6611 = vmatpush1.xpose.msra.mxu0 0.0
  %6612 = vmatprep.subr.mxu0 0.0
  %6613 = vmatpush1.xpose.msra.mxu0 0.0
  %6614 = vmatprep.subr.mxu0 0.0
  %6615 = vmatpush1.xpose.msra.mxu0 0.0
  %6616 = vmatprep.subr.mxu0 0.0
  %6617 = vmatpush1.xpose.msra.mxu0 0.0
  %6618 = vmatprep.subr.mxu0 0.0
  %6619 = vmatpush1.xpose.msra.mxu0 0.0
  %6620 = vmatprep.subr.mxu0 0.0
  %6621 = vmatpush1.xpose.msra.mxu0 0.0
  %6622 = vmatprep.subr.mxu0 0.0
  %6623 = vmatpush1.xpose.msra.mxu0 0.0
  %6624 = vmatprep.subr.mxu0 0.0
  %6625 = vmatpush1.xpose.msra.mxu0 0.0
  %6626 = vmatprep.subr.mxu0 0.0
  %6627 = vmatpush1.xpose.msra.mxu0 0.0
  %6628 = vmatprep.subr.mxu0 0.0
  %6629 = vmatpush1.xpose.msra.mxu0 0.0
  %6630 = vmatprep.subr.mxu0 0.0
  %6631 = vmatpush1.xpose.msra.mxu0 0.0
  %6632 = vmatprep.subr.mxu0 0.0
  %6633 = vmatpush1.xpose.msra.mxu0 0.0
  %6634 = vmatprep.subr.mxu0 0.0
  %6635 = vmatpush1.xpose.msra.mxu0 0.0
  %6636 = vmatprep.subr.mxu0 0.0
  %6637 = vmatpush1.xpose.msra.mxu0 0.0
  %6638 = vmatprep.subr.mxu0 0.0
  %6639 = vmatpush1.xpose.msra.mxu0 0.0
  %6640 = vmatprep.subr.mxu0 0.0
  %6641 = vmatpush1.xpose.msra.mxu0 0.0
  %6642 = vmatprep.mubr.f32.mxu0 0.0
  %6643 = vmatmul.mubr.f32.gmra.mrb[0].mxu0 %v6552
  %v6644 = vpop.f32.mrb[0].mxu0
  %v6645 = vadd.f32 0.0, %v6644
  %v6646 = vpop.f32.mrb[0].mxu0
  %6647 = vdwg.mxu0
  %v6649 = vunpack.c.l.s4 1983009808
  %v6650 = vunpack.c.0.s8 %v6649
  %v6651 = vlaneseq
  %v6652 = vshrl.u32 %v6651, 7
  %v6653 = vsub.s32 %v6650, %v6652
  %v6654 = vrot.slane %v3903, %v6653
  %6655 = vrot.lane.b32.xlu0 %v6654, 64
  %v6656 = vpop.permute.xlu0 %6655
  %v6657 = vsel %vm998, %v6656, 0
  %v6660 = vsel %vm998, %v6422, 0
  %v6663 = vsel %vm998, %v6423, 0
  %v6666 = vsel %vm998, %v6424, 0
  %v6669 = vsel %vm998, %v6425, 0
  %v6672 = vsel %vm998, %v6426, 0
  %v6675 = vsel %vm998, %v6427, 0
  %v6678 = vsel %vm998, %v6428, 0
  %v6681 = vsel %vm998, %v6429, 0
  %6683 = vmatprep.subr.mxu0 0.0
  %6684 = vmatpush1.xpose.msra.mxu0 %v6660
  %6685 = vmatprep.subr.mxu0 0.0
  %6686 = vmatpush1.xpose.msra.mxu0 %v6663
  %6687 = vmatprep.subr.mxu0 0.0
  %6688 = vmatpush1.xpose.msra.mxu0 %v6666
  %6689 = vmatprep.subr.mxu0 0.0
  %6690 = vmatpush1.xpose.msra.mxu0 %v6669
  %6691 = vmatprep.subr.mxu0 0.0
  %6692 = vmatpush1.xpose.msra.mxu0 %v6672
  %6693 = vmatprep.subr.mxu0 0.0
  %6694 = vmatpush1.xpose.msra.mxu0 %v6675
  %6695 = vmatprep.subr.mxu0 0.0
  %6696 = vmatpush1.xpose.msra.mxu0 %v6678
  %6697 = vmatprep.subr.mxu0 0.0
  %6698 = vmatpush1.xpose.msra.mxu0 %v6681
  %6699 = vmatprep.subr.mxu0 0.0
  %6700 = vmatpush1.xpose.msra.mxu0 0.0
  %6701 = vmatprep.subr.mxu0 0.0
  %6702 = vmatpush1.xpose.msra.mxu0 0.0
  %6703 = vmatprep.subr.mxu0 0.0
  %6704 = vmatpush1.xpose.msra.mxu0 0.0
  %6705 = vmatprep.subr.mxu0 0.0
  %6706 = vmatpush1.xpose.msra.mxu0 0.0
  %6707 = vmatprep.subr.mxu0 0.0
  %6708 = vmatpush1.xpose.msra.mxu0 0.0
  %6709 = vmatprep.subr.mxu0 0.0
  %6710 = vmatpush1.xpose.msra.mxu0 0.0
  %6711 = vmatprep.subr.mxu0 0.0
  %6712 = vmatpush1.xpose.msra.mxu0 0.0
  %6713 = vmatprep.subr.mxu0 0.0
  %6714 = vmatpush1.xpose.msra.mxu0 0.0
  %6715 = vmatprep.subr.mxu0 0.0
  %6716 = vmatpush1.xpose.msra.mxu0 0.0
  %6717 = vmatprep.subr.mxu0 0.0
  %6718 = vmatpush1.xpose.msra.mxu0 0.0
  %6719 = vmatprep.subr.mxu0 0.0
  %6720 = vmatpush1.xpose.msra.mxu0 0.0
  %6721 = vmatprep.subr.mxu0 0.0
  %6722 = vmatpush1.xpose.msra.mxu0 0.0
  %6723 = vmatprep.subr.mxu0 0.0
  %6724 = vmatpush1.xpose.msra.mxu0 0.0
  %6725 = vmatprep.subr.mxu0 0.0
  %6726 = vmatpush1.xpose.msra.mxu0 0.0
  %6727 = vmatprep.subr.mxu0 0.0
  %6728 = vmatpush1.xpose.msra.mxu0 0.0
  %6729 = vmatprep.subr.mxu0 0.0
  %6730 = vmatpush1.xpose.msra.mxu0 0.0
  %6731 = vmatprep.subr.mxu0 0.0
  %6732 = vmatpush1.xpose.msra.mxu0 0.0
  %6733 = vmatprep.subr.mxu0 0.0
  %6734 = vmatpush1.xpose.msra.mxu0 0.0
  %6735 = vmatprep.subr.mxu0 0.0
  %6736 = vmatpush1.xpose.msra.mxu0 0.0
  %6737 = vmatprep.subr.mxu0 0.0
  %6738 = vmatpush1.xpose.msra.mxu0 0.0
  %6739 = vmatprep.subr.mxu0 0.0
  %6740 = vmatpush1.xpose.msra.mxu0 0.0
  %6741 = vmatprep.subr.mxu0 0.0
  %6742 = vmatpush1.xpose.msra.mxu0 0.0
  %6743 = vmatprep.subr.mxu0 0.0
  %6744 = vmatpush1.xpose.msra.mxu0 0.0
  %6745 = vmatprep.subr.mxu0 0.0
  %6746 = vmatpush1.xpose.msra.mxu0 0.0
  %6747 = vmatprep.mubr.f32.mxu0 0.0
  %6748 = vmatmul.mubr.f32.gmra.mrb[0].mxu0 %v6657
  %v6749 = vpop.f32.mrb[0].mxu0
  %v6750 = vadd.f32 0.0, %v6749
  %v6751 = vpop.f32.mrb[0].mxu0
  %6752 = vdwg.mxu0
  %v6754 = vunpack.c.l.s4 1983009808
  %v6755 = vunpack.c.0.s8 %v6754
  %v6756 = vlaneseq
  %v6757 = vshrl.u32 %v6756, 7
  %v6758 = vsub.s32 %v6755, %v6757
  %v6759 = vrot.slane %v3905, %v6758
  %6760 = vrot.lane.b32.xlu0 %v6759, 64
  %v6761 = vpop.permute.xlu0 %6760
  %v6762 = vsel %vm998, %v6761, 0
  %v6765 = vsel %vm998, %v6430, 0
  %v6768 = vsel %vm998, %v6431, 0
  %v6771 = vsel %vm998, %v6432, 0
  %v6774 = vsel %vm998, %v6433, 0
  %v6777 = vsel %vm998, %v6434, 0
  %v6780 = vsel %vm998, %v6435, 0
  %v6783 = vsel %vm998, %v6436, 0
  %v6786 = vsel %vm998, %v6437, 0
  %6788 = vmatprep.subr.mxu0 0.0
  %6789 = vmatpush1.xpose.msra.mxu0 %v6765
  %6790 = vmatprep.subr.mxu0 0.0
  %6791 = vmatpush1.xpose.msra.mxu0 %v6768
  %6792 = vmatprep.subr.mxu0 0.0
  %6793 = vmatpush1.xpose.msra.mxu0 %v6771
  %6794 = vmatprep.subr.mxu0 0.0
  %6795 = vmatpush1.xpose.msra.mxu0 %v6774
  %6796 = vmatprep.subr.mxu0 0.0
  %6797 = vmatpush1.xpose.msra.mxu0 %v6777
  %6798 = vmatprep.subr.mxu0 0.0
  %6799 = vmatpush1.xpose.msra.mxu0 %v6780
  %6800 = vmatprep.subr.mxu0 0.0
  %6801 = vmatpush1.xpose.msra.mxu0 %v6783
  %6802 = vmatprep.subr.mxu0 0.0
  %6803 = vmatpush1.xpose.msra.mxu0 %v6786
  %6804 = vmatprep.subr.mxu0 0.0
  %6805 = vmatpush1.xpose.msra.mxu0 0.0
  %6806 = vmatprep.subr.mxu0 0.0
  %6807 = vmatpush1.xpose.msra.mxu0 0.0
  %6808 = vmatprep.subr.mxu0 0.0
  %6809 = vmatpush1.xpose.msra.mxu0 0.0
  %6810 = vmatprep.subr.mxu0 0.0
  %6811 = vmatpush1.xpose.msra.mxu0 0.0
  %6812 = vmatprep.subr.mxu0 0.0
  %6813 = vmatpush1.xpose.msra.mxu0 0.0
  %6814 = vmatprep.subr.mxu0 0.0
  %6815 = vmatpush1.xpose.msra.mxu0 0.0
  %6816 = vmatprep.subr.mxu0 0.0
  %6817 = vmatpush1.xpose.msra.mxu0 0.0
  %6818 = vmatprep.subr.mxu0 0.0
  %6819 = vmatpush1.xpose.msra.mxu0 0.0
  %6820 = vmatprep.subr.mxu0 0.0
  %6821 = vmatpush1.xpose.msra.mxu0 0.0
  %6822 = vmatprep.subr.mxu0 0.0
  %6823 = vmatpush1.xpose.msra.mxu0 0.0
  %6824 = vmatprep.subr.mxu0 0.0
  %6825 = vmatpush1.xpose.msra.mxu0 0.0
  %6826 = vmatprep.subr.mxu0 0.0
  %6827 = vmatpush1.xpose.msra.mxu0 0.0
  %6828 = vmatprep.subr.mxu0 0.0
  %6829 = vmatpush1.xpose.msra.mxu0 0.0
  %6830 = vmatprep.subr.mxu0 0.0
  %6831 = vmatpush1.xpose.msra.mxu0 0.0
  %6832 = vmatprep.subr.mxu0 0.0
  %6833 = vmatpush1.xpose.msra.mxu0 0.0
  %6834 = vmatprep.subr.mxu0 0.0
  %6835 = vmatpush1.xpose.msra.mxu0 0.0
  %6836 = vmatprep.subr.mxu0 0.0
  %6837 = vmatpush1.xpose.msra.mxu0 0.0
  %6838 = vmatprep.subr.mxu0 0.0
  %6839 = vmatpush1.xpose.msra.mxu0 0.0
  %6840 = vmatprep.subr.mxu0 0.0
  %6841 = vmatpush1.xpose.msra.mxu0 0.0
  %6842 = vmatprep.subr.mxu0 0.0
  %6843 = vmatpush1.xpose.msra.mxu0 0.0
  %6844 = vmatprep.subr.mxu0 0.0
  %6845 = vmatpush1.xpose.msra.mxu0 0.0
  %6846 = vmatprep.subr.mxu0 0.0
  %6847 = vmatpush1.xpose.msra.mxu0 0.0
  %6848 = vmatprep.subr.mxu0 0.0
  %6849 = vmatpush1.xpose.msra.mxu0 0.0
  %6850 = vmatprep.subr.mxu0 0.0
  %6851 = vmatpush1.xpose.msra.mxu0 0.0
  %6852 = vmatprep.mubr.f32.mxu0 0.0
  %6853 = vmatmul.mubr.f32.gmra.mrb[0].mxu0 %v6762
  %v6854 = vpop.f32.mrb[0].mxu0
  %v6855 = vadd.f32 0.0, %v6854
  %v6856 = vpop.f32.mrb[0].mxu0
  %6857 = vdwg.mxu0
  %v6862 = vcombine.low %v5035, %v5131
  %v6863 = vcombine.low %v5227, %v5323
  %v6865 = vunpack.c.l.s4 1983009808
  %v6866 = vunpack.c.0.s8 %v6865
  %v6867 = vlaneseq
  %v6868 = vshrl.u32 %v6867, 7
  %v6869 = vsub.s32 %v6866, %v6868
  %v6870 = vrot.slane %v6862, %v6869
  %v6872 = vunpack.c.l.s4 1983009808
  %v6873 = vunpack.c.0.s8 %v6872
  %v6874 = vlaneseq
  %v6875 = vshrl.u32 %v6874, 7
  %v6876 = vsub.s32 %v6873, %v6875
  %v6877 = vrot.slane %v6863, %v6876
  %v6878 = vcombine.low %v6870, %v6877
  %v6884 = vcombine.low %v6540, %v6645
  %v6885 = vcombine.low %v6750, %v6855
  %v6887 = vunpack.c.l.s4 1983009808
  %v6888 = vunpack.c.0.s8 %v6887
  %v6889 = vlaneseq
  %v6890 = vshrl.u32 %v6889, 7
  %v6891 = vsub.s32 %v6888, %v6890
  %v6892 = vrot.slane %v6884, %v6891
  %v6894 = vunpack.c.l.s4 1983009808
  %v6895 = vunpack.c.0.s8 %v6894
  %v6896 = vlaneseq
  %v6897 = vshrl.u32 %v6896, 7
  %v6898 = vsub.s32 %v6895, %v6897
  %v6899 = vrot.slane %v6885, %v6898
  %v6900 = vcombine.low %v6892, %v6899
  %6901 = vrot.lane.b32.xlu0 %v6900, 64
  %v6902 = vpop.permute.xlu0 %6901
  %v6904 = vsel %vm998, %v6878, %v6902
  %s6905 = scalar_lea.vmem %s5, 8
  %v6906 = vld [vmem:[%s6905] sm:$0xff]
  %s6907 = scalar_lea.vmem %s6, 8
  %v6908 = vld [vmem:[%s6907] sm:$0xff]
  %6910 = vset.pattern.permute.xlu0 0
  %6911 = vperm.xlu0 %6910, %v6908
  %v6912 = vpop.permute.xlu0 %6911
  %v6915 = vsel %vm164, %v6906, 0
  %6917 = vmatprep.subr.mxu0 0.0
  %6918 = vmatpush1.msra.mxu0 %v6904
  %6919 = vmatprep.subr.mxu0 0.0
  %6920 = vmatpush1.msra.mxu0 0.0
  %6921 = vmatprep.subr.mxu0 0.0
  %6922 = vmatpush1.msra.mxu0 0.0
  %6923 = vmatprep.subr.mxu0 0.0
  %6924 = vmatpush1.msra.mxu0 0.0
  %6925 = vmatprep.subr.mxu0 0.0
  %6926 = vmatpush1.msra.mxu0 0.0
  %6927 = vmatprep.subr.mxu0 0.0
  %6928 = vmatpush1.msra.mxu0 0.0
  %6929 = vmatprep.subr.mxu0 0.0
  %6930 = vmatpush1.msra.mxu0 0.0
  %6931 = vmatprep.subr.mxu0 0.0
  %6932 = vmatpush1.msra.mxu0 0.0
  %6933 = vmatprep.subr.mxu0 0.0
  %6934 = vmatpush1.msra.mxu0 0.0
  %6935 = vmatprep.subr.mxu0 0.0
  %6936 = vmatpush1.msra.mxu0 0.0
  %6937 = vmatprep.subr.mxu0 0.0
  %6938 = vmatpush1.msra.mxu0 0.0
  %6939 = vmatprep.subr.mxu0 0.0
  %6940 = vmatpush1.msra.mxu0 0.0
  %6941 = vmatprep.subr.mxu0 0.0
  %6942 = vmatpush1.msra.mxu0 0.0
  %6943 = vmatprep.subr.mxu0 0.0
  %6944 = vmatpush1.msra.mxu0 0.0
  %6945 = vmatprep.subr.mxu0 0.0
  %6946 = vmatpush1.msra.mxu0 0.0
  %6947 = vmatprep.subr.mxu0 0.0
  %6948 = vmatpush1.msra.mxu0 0.0
  %6949 = vmatprep.subr.mxu0 0.0
  %6950 = vmatpush1.msra.mxu0 0.0
  %6951 = vmatprep.subr.mxu0 0.0
  %6952 = vmatpush1.msra.mxu0 0.0
  %6953 = vmatprep.subr.mxu0 0.0
  %6954 = vmatpush1.msra.mxu0 0.0
  %6955 = vmatprep.subr.mxu0 0.0
  %6956 = vmatpush1.msra.mxu0 0.0
  %6957 = vmatprep.subr.mxu0 0.0
  %6958 = vmatpush1.msra.mxu0 0.0
  %6959 = vmatprep.subr.mxu0 0.0
  %6960 = vmatpush1.msra.mxu0 0.0
  %6961 = vmatprep.subr.mxu0 0.0
  %6962 = vmatpush1.msra.mxu0 0.0
  %6963 = vmatprep.subr.mxu0 0.0
  %6964 = vmatpush1.msra.mxu0 0.0
  %6965 = vmatprep.subr.mxu0 0.0
  %6966 = vmatpush1.msra.mxu0 0.0
  %6967 = vmatprep.subr.mxu0 0.0
  %6968 = vmatpush1.msra.mxu0 0.0
  %6969 = vmatprep.subr.mxu0 0.0
  %6970 = vmatpush1.msra.mxu0 0.0
  %6971 = vmatprep.subr.mxu0 0.0
  %6972 = vmatpush1.msra.mxu0 0.0
  %6973 = vmatprep.subr.mxu0 0.0
  %6974 = vmatpush1.msra.mxu0 0.0
  %6975 = vmatprep.subr.mxu0 0.0
  %6976 = vmatpush1.msra.mxu0 0.0
  %6977 = vmatprep.subr.mxu0 0.0
  %6978 = vmatpush1.msra.mxu0 0.0
  %6979 = vmatprep.subr.mxu0 0.0
  %6980 = vmatpush1.msra.mxu0 0.0
  %6981 = vmatprep.mubr.f32.mxu0 0.0
  %6982 = vmatmul.mubr.f32.gmra.mrb[0].mxu0 %v6915
  %v6983 = vpop.f32.mrb[0].mxu0
  %v6984 = vadd.f32 %v6912, %v6983
  %v6985 = vpop.f32.mrb[0].mxu0
  %6986 = vdwg.mxu0
  %v6987 = vadd.f32 %v3735, %v6984
  %s6988 = scalar_lea.vmem %s7, 8
  %v6989 = vld [vmem:[%s6988] sm:$0xff]
  %s6990 = scalar_lea.vmem %s8, 8
  %v6991 = vld [vmem:[%s6990] sm:$0xff]
  %v6992 = vrot.slane %v6987, 4
  %v6993 = vadd.f32 %v6987, %v6992
  %v6994 = vrot.slane %v6993, 2
  %v6995 = vadd.f32 %v6993, %v6994
  %v6996 = vrot.slane %v6995, 1
  %v6997 = vadd.f32 %v6995, %v6996
  %v6998 = vmul.f32 %v6997, %v3403
  %v6999 = vsub.f32 %v6987, %v6998
  %v7000 = vmul.f32 %v6999, %v6999
  %v7001 = vrot.slane %v7000, 4
  %v7002 = vadd.f32 %v7000, %v7001
  %v7003 = vrot.slane %v7002, 2
  %v7004 = vadd.f32 %v7002, %v7003
  %v7005 = vrot.slane %v7004, 1
  %v7006 = vadd.f32 %v7004, %v7005
  %v7007 = vmul.f32 %v7006, %v3403
  %v7008 = vadd.f32 %v7007, 1e-05
  %v7009 = vrsqrt.pop %v7008
  %v7010 = vmul.f32 %v6999, %v7009
  %7012 = vset.pattern.permute.xlu0 0
  %7013 = vperm.xlu0 %7012, %v6989
  %v7014 = vpop.permute.xlu0 %7013
  %v7016 = vmul.f32 %v7010, %v7014
  %7018 = vset.pattern.permute.xlu0 0
  %7019 = vperm.xlu0 %7018, %v6991
  %v7020 = vpop.permute.xlu0 %7019
  %v7022 = vadd.f32 %v7016, %v7020
  %s7023 = scalar_lea.vmem %s9, 64
  %v7024 = vld [vmem:[%s7023] sm:$0xff]
  %v7025 = vld [vmem:[%s7023 + $0x8] sm:$0xff]
  %v7026 = vld [vmem:[%s7023 + $0x10] sm:$0xff]
  %v7027 = vld [vmem:[%s7023 + $0x18] sm:$0xff]
  %v7028 = vld [vmem:[%s7023 + $0x20] sm:$0xff]
  %v7029 = vld [vmem:[%s7023 + $0x28] sm:$0xff]
  %v7030 = vld [vmem:[%s7023 + $0x30] sm:$0xff]
  %v7031 = vld [vmem:[%s7023 + $0x38] sm:$0xff]
  %s7032 = scalar_lea.vmem %s10, 64
  %v7033 = vld [vmem:[%s7032] sm:$0xff]
  %v7034 = vld [vmem:[%s7032 + $0x8] sm:$0xff]
  %v7035 = vld [vmem:[%s7032 + $0x10] sm:$0xff]
  %v7036 = vld [vmem:[%s7032 + $0x18] sm:$0xff]
  %v7037 = vld [vmem:[%s7032 + $0x20] sm:$0xff]
  %v7038 = vld [vmem:[%s7032 + $0x28] sm:$0xff]
  %v7039 = vld [vmem:[%s7032 + $0x30] sm:$0xff]
  %v7040 = vld [vmem:[%s7032 + $0x38] sm:$0xff]
  %7042 = vset.pattern.permute.xlu0 0
  %7043 = vperm.xlu0 %7042, %v7033
  %v7044 = vpop.permute.xlu0 %7043
  %7047 = vset.pattern.permute.xlu0 0
  %7048 = vperm.xlu0 %7047, %v7034
  %v7049 = vpop.permute.xlu0 %7048
  %7052 = vset.pattern.permute.xlu0 0
  %7053 = vperm.xlu0 %7052, %v7035
  %v7054 = vpop.permute.xlu0 %7053
  %7057 = vset.pattern.permute.xlu0 0
  %7058 = vperm.xlu0 %7057, %v7036
  %v7059 = vpop.permute.xlu0 %7058
  %7062 = vset.pattern.permute.xlu0 0
  %7063 = vperm.xlu0 %7062, %v7037
  %v7064 = vpop.permute.xlu0 %7063
  %7067 = vset.pattern.permute.xlu0 0
  %7068 = vperm.xlu0 %7067, %v7038
  %v7069 = vpop.permute.xlu0 %7068
  %7072 = vset.pattern.permute.xlu0 0
  %7073 = vperm.xlu0 %7072, %v7039
  %v7074 = vpop.permute.xlu0 %7073
  %7077 = vset.pattern.permute.xlu0 0
  %7078 = vperm.xlu0 %7077, %v7040
  %v7079 = vpop.permute.xlu0 %7078
  %v7082 = vsel %vm164, %v7024, 0
  %v7085 = vsel %vm164, %v7025, 0
  %v7088 = vsel %vm164, %v7026, 0
  %v7091 = vsel %vm164, %v7027, 0
  %v7094 = vsel %vm164, %v7028, 0
  %v7097 = vsel %vm164, %v7029, 0
  %v7100 = vsel %vm164, %v7030, 0
  %v7103 = vsel %vm164, %v7031, 0
  %7105 = vmatprep.subr.mxu0 0.0
  %7106 = vmatpush1.msra.mxu0 %v7022
  %7107 = vmatprep.subr.mxu0 0.0
  %7108 = vmatpush1.msra.mxu0 0.0
  %7109 = vmatprep.subr.mxu0 0.0
  %7110 = vmatpush1.msra.mxu0 0.0
  %7111 = vmatprep.subr.mxu0 0.0
  %7112 = vmatpush1.msra.mxu0 0.0
  %7113 = vmatprep.subr.mxu0 0.0
  %7114 = vmatpush1.msra.mxu0 0.0
  %7115 = vmatprep.subr.mxu0 0.0
  %7116 = vmatpush1.msra.mxu0 0.0
  %7117 = vmatprep.subr.mxu0 0.0
  %7118 = vmatpush1.msra.mxu0 0.0
  %7119 = vmatprep.subr.mxu0 0.0
  %7120 = vmatpush1.msra.mxu0 0.0
  %7121 = vmatprep.subr.mxu0 0.0
  %7122 = vmatpush1.msra.mxu0 0.0
  %7123 = vmatprep.subr.mxu0 0.0
  %7124 = vmatpush1.msra.mxu0 0.0
  %7125 = vmatprep.subr.mxu0 0.0
  %7126 = vmatpush1.msra.mxu0 0.0
  %7127 = vmatprep.subr.mxu0 0.0
  %7128 = vmatpush1.msra.mxu0 0.0
  %7129 = vmatprep.subr.mxu0 0.0
  %7130 = vmatpush1.msra.mxu0 0.0
  %7131 = vmatprep.subr.mxu0 0.0
  %7132 = vmatpush1.msra.mxu0 0.0
  %7133 = vmatprep.subr.mxu0 0.0
  %7134 = vmatpush1.msra.mxu0 0.0
  %7135 = vmatprep.subr.mxu0 0.0
  %7136 = vmatpush1.msra.mxu0 0.0
  %7137 = vmatprep.subr.mxu0 0.0
  %7138 = vmatpush1.msra.mxu0 0.0
  %7139 = vmatprep.subr.mxu0 0.0
  %7140 = vmatpush1.msra.mxu0 0.0
  %7141 = vmatprep.subr.mxu0 0.0
  %7142 = vmatpush1.msra.mxu0 0.0
  %7143 = vmatprep.subr.mxu0 0.0
  %7144 = vmatpush1.msra.mxu0 0.0
  %7145 = vmatprep.subr.mxu0 0.0
  %7146 = vmatpush1.msra.mxu0 0.0
  %7147 = vmatprep.subr.mxu0 0.0
  %7148 = vmatpush1.msra.mxu0 0.0
  %7149 = vmatprep.subr.mxu0 0.0
  %7150 = vmatpush1.msra.mxu0 0.0
  %7151 = vmatprep.subr.mxu0 0.0
  %7152 = vmatpush1.msra.mxu0 0.0
  %7153 = vmatprep.subr.mxu0 0.0
  %7154 = vmatpush1.msra.mxu0 0.0
  %7155 = vmatprep.subr.mxu0 0.0
  %7156 = vmatpush1.msra.mxu0 0.0
  %7157 = vmatprep.subr.mxu0 0.0
  %7158 = vmatpush1.msra.mxu0 0.0
  %7159 = vmatprep.subr.mxu0 0.0
  %7160 = vmatpush1.msra.mxu0 0.0
  %7161 = vmatprep.subr.mxu0 0.0
  %7162 = vmatpush1.msra.mxu0 0.0
  %7163 = vmatprep.subr.mxu0 0.0
  %7164 = vmatpush1.msra.mxu0 0.0
  %7165 = vmatprep.subr.mxu0 0.0
  %7166 = vmatpush1.msra.mxu0 0.0
  %7167 = vmatprep.subr.mxu0 0.0
  %7168 = vmatpush1.msra.mxu0 0.0
  %7169 = vmatprep.mubr.f32.mxu0 0.0
  %7170 = vmatmul.mubr.f32.gmra.mrb[0].mxu0 %v7082
  %v7171 = vpop.f32.mrb[0].mxu0
  %v7172 = vadd.f32 %v7044, %v7171
  %v7173 = vpop.f32.mrb[0].mxu0
  %7174 = vmatprep.mubr.f32.mxu0 0.0
  %7175 = vmatmul.mubr.f32.gmra.mrb[0].mxu0 %v7085
  %v7176 = vpop.f32.mrb[0].mxu0
  %v7177 = vadd.f32 %v7049, %v7176
  %v7178 = vpop.f32.mrb[0].mxu0
  %7179 = vmatprep.mubr.f32.mxu0 0.0
  %7180 = vmatmul.mubr.f32.gmra.mrb[0].mxu0 %v7088
  %v7181 = vpop.f32.mrb[0].mxu0
  %v7182 = vadd.f32 %v7054, %v7181
  %v7183 = vpop.f32.mrb[0].mxu0
  %7184 = vmatprep.mubr.f32.mxu0 0.0
  %7185 = vmatmul.mubr.f32.gmra.mrb[0].mxu0 %v7091
  %v7186 = vpop.f32.mrb[0].mxu0
  %v7187 = vadd.f32 %v7059, %v7186
  %v7188 = vpop.f32.mrb[0].mxu0
  %7189 = vmatprep.mubr.f32.mxu0 0.0
  %7190 = vmatmul.mubr.f32.gmra.mrb[0].mxu0 %v7094
  %v7191 = vpop.f32.mrb[0].mxu0
  %v7192 = vadd.f32 %v7064, %v7191
  %v7193 = vpop.f32.mrb[0].mxu0
  %7194 = vmatprep.mubr.f32.mxu0 0.0
  %7195 = vmatmul.mubr.f32.gmra.mrb[0].mxu0 %v7097
  %v7196 = vpop.f32.mrb[0].mxu0
  %v7197 = vadd.f32 %v7069, %v7196
  %v7198 = vpop.f32.mrb[0].mxu0
  %7199 = vmatprep.mubr.f32.mxu0 0.0
  %7200 = vmatmul.mubr.f32.gmra.mrb[0].mxu0 %v7100
  %v7201 = vpop.f32.mrb[0].mxu0
  %v7202 = vadd.f32 %v7074, %v7201
  %v7203 = vpop.f32.mrb[0].mxu0
  %7204 = vmatprep.mubr.f32.mxu0 0.0
  %7205 = vmatmul.mubr.f32.gmra.mrb[0].mxu0 %v7103
  %v7206 = vpop.f32.mrb[0].mxu0
  %v7207 = vadd.f32 %v7079, %v7206
  %v7208 = vpop.f32.mrb[0].mxu0
  %7209 = vdwg.mxu0
  %v7210 = vmax.f32 %v7172, 0.0
  %v7211 = vmax.f32 %v7177, 0.0
  %v7212 = vmax.f32 %v7182, 0.0
  %v7213 = vmax.f32 %v7187, 0.0
  %v7214 = vmax.f32 %v7192, 0.0
  %v7215 = vmax.f32 %v7197, 0.0
  %v7216 = vmax.f32 %v7202, 0.0
  %v7217 = vmax.f32 %v7207, 0.0
  %s7218 = scalar_lea.vmem %s11, 8
  %v7219 = vld [vmem:[%s7218] sm:$0xff]
  %s7220 = scalar_lea.vmem %s12, 8
  %v7221 = vld [vmem:[%s7220] sm:$0xff]
  %7223 = vset.pattern.permute.xlu0 0
  %7224 = vperm.xlu0 %7223, %v7221
  %v7225 = vpop.permute.xlu0 %7224
  %v7228 = vsel %vm998, %v7219, 0
  %7230 = vmatprep.subr.mxu0 0.0
  %7231 = vmatpush1.msra.mxu0 %v7210
  %7232 = vmatprep.subr.mxu0 0.0
  %7233 = vmatpush1.msra.mxu0 %v7211
  %7234 = vmatprep.subr.mxu0 0.0
  %7235 = vmatpush1.msra.mxu0 %v7212
  %7236 = vmatprep.subr.mxu0 0.0
  %7237 = vmatpush1.msra.mxu0 %v7213
  %7238 = vmatprep.subr.mxu0 0.0
  %7239 = vmatpush1.msra.mxu0 %v7214
  %7240 = vmatprep.subr.mxu0 0.0
  %7241 = vmatpush1.msra.mxu0 %v7215
  %7242 = vmatprep.subr.mxu0 0.0
  %7243 = vmatpush1.msra.mxu0 %v7216
  %7244 = vmatprep.subr.mxu0 0.0
  %7245 = vmatpush1.msra.mxu0 %v7217
  %7246 = vmatprep.subr.mxu0 0.0
  %7247 = vmatpush1.msra.mxu0 0.0
  %7248 = vmatprep.subr.mxu0 0.0
  %7249 = vmatpush1.msra.mxu0 0.0
  %7250 = vmatprep.subr.mxu0 0.0
  %7251 = vmatpush1.msra.mxu0 0.0
  %7252 = vmatprep.subr.mxu0 0.0
  %7253 = vmatpush1.msra.mxu0 0.0
  %7254 = vmatprep.subr.mxu0 0.0
  %7255 = vmatpush1.msra.mxu0 0.0
  %7256 = vmatprep.subr.mxu0 0.0
  %7257 = vmatpush1.msra.mxu0 0.0
  %7258 = vmatprep.subr.mxu0 0.0
  %7259 = vmatpush1.msra.mxu0 0.0
  %7260 = vmatprep.subr.mxu0 0.0
  %7261 = vmatpush1.msra.mxu0 0.0
  %7262 = vmatprep.subr.mxu0 0.0
  %7263 = vmatpush1.msra.mxu0 0.0
  %7264 = vmatprep.subr.mxu0 0.0
  %7265 = vmatpush1.msra.mxu0 0.0
  %7266 = vmatprep.subr.mxu0 0.0
  %7267 = vmatpush1.msra.mxu0 0.0
  %7268 = vmatprep.subr.mxu0 0.0
  %7269 = vmatpush1.msra.mxu0 0.0
  %7270 = vmatprep.subr.mxu0 0.0
  %7271 = vmatpush1.msra.mxu0 0.0
  %7272 = vmatprep.subr.mxu0 0.0
  %7273 = vmatpush1.msra.mxu0 0.0
  %7274 = vmatprep.subr.mxu0 0.0
  %7275 = vmatpush1.msra.mxu0 0.0
  %7276 = vmatprep.subr.mxu0 0.0
  %7277 = vmatpush1.msra.mxu0 0.0
  %7278 = vmatprep.subr.mxu0 0.0
  %7279 = vmatpush1.msra.mxu0 0.0
  %7280 = vmatprep.subr.mxu0 0.0
  %7281 = vmatpush1.msra.mxu0 0.0
  %7282 = vmatprep.subr.mxu0 0.0
  %7283 = vmatpush1.msra.mxu0 0.0
  %7284 = vmatprep.subr.mxu0 0.0
  %7285 = vmatpush1.msra.mxu0 0.0
  %7286 = vmatprep.subr.mxu0 0.0
  %7287 = vmatpush1.msra.mxu0 0.0
  %7288 = vmatprep.subr.mxu0 0.0
  %7289 = vmatpush1.msra.mxu0 0.0
  %7290 = vmatprep.subr.mxu0 0.0
  %7291 = vmatpush1.msra.mxu0 0.0
  %7292 = vmatprep.subr.mxu0 0.0
  %7293 = vmatpush1.msra.mxu0 0.0
  %7294 = vmatprep.mubr.f32.mxu0 0.0
  %7295 = vmatmul.mubr.f32.gmra.mrb[0].mxu0 %v7228
  %v7296 = vpop.f32.mrb[0].mxu0
  %v7297 = vadd.f32 %v7225, %v7296
  %v7298 = vpop.f32.mrb[0].mxu0
  %7299 = vdwg.mxu0
  %v7300 = vadd.f32 %v7022, %v7297
  %s7301 = scalar_lea.vmem %s13, 8
  %v7302 = vld [vmem:[%s7301] sm:$0xff]
  %s7303 = scalar_lea.vmem %s14, 8
  %v7304 = vld [vmem:[%s7303] sm:$0xff]
  %v7305 = vrot.slane %v7300, 4
  %v7306 = vadd.f32 %v7300, %v7305
  %v7307 = vrot.slane %v7306, 2
  %v7308 = vadd.f32 %v7306, %v7307
  %v7309 = vrot.slane %v7308, 1
  %v7310 = vadd.f32 %v7308, %v7309
  %v7311 = vmul.f32 %v7310, %v3403
  %v7312 = vsub.f32 %v7300, %v7311
  %v7313 = vmul.f32 %v7312, %v7312
  %v7314 = vrot.slane %v7313, 4
  %v7315 = vadd.f32 %v7313, %v7314
  %v7316 = vrot.slane %v7315, 2
  %v7317 = vadd.f32 %v7315, %v7316
  %v7318 = vrot.slane %v7317, 1
  %v7319 = vadd.f32 %v7317, %v7318
  %v7320 = vmul.f32 %v7319, %v3403
  %v7321 = vadd.f32 %v7320, 1e-05
  %v7322 = vrsqrt.pop %v7321
  %v7323 = vmul.f32 %v7312, %v7322
  %7325 = vset.pattern.permute.xlu0 0
  %7326 = vperm.xlu0 %7325, %v7302
  %v7327 = vpop.permute.xlu0 %7326
  %v7329 = vmul.f32 %v7323, %v7327
  %7331 = vset.pattern.permute.xlu0 0
  %7332 = vperm.xlu0 %7331, %v7304
  %v7333 = vpop.permute.xlu0 %7332
  %v7335 = vadd.f32 %v7329, %v7333
  %s7336 = scalar_lea.vmem %s3, 48
  %v7337 = vld [vmem:[%s7336] sm:$0xff]
  %v7338 = vld [vmem:[%s7336 + $0x8] sm:$0xff]
  %v7339 = vld [vmem:[%s7336 + $0x10] sm:$0xff]
  %s7340 = scalar_lea.vmem %s4, 48
  %v7341 = vld [vmem:[%s7340] sm:$0xff]
  %v7342 = vld [vmem:[%s7340 + $0x8] sm:$0xff]
  %v7343 = vld [vmem:[%s7340 + $0x10] sm:$0xff]
  %7345 = vset.pattern.permute.xlu0 0
  %7346 = vperm.xlu0 %7345, %v7341
  %v7347 = vpop.permute.xlu0 %7346
  %7350 = vset.pattern.permute.xlu0 0
  %7351 = vperm.xlu0 %7350, %v7342
  %v7352 = vpop.permute.xlu0 %7351
  %7355 = vset.pattern.permute.xlu0 0
  %7356 = vperm.xlu0 %7355, %v7343
  %v7357 = vpop.permute.xlu0 %7356
  %v7360 = vsel %vm164, %v7337, 0
  %v7363 = vsel %vm164, %v7338, 0
  %v7366 = vsel %vm164, %v7339, 0
  %7368 = vmatprep.subr.mxu0 0.0
  %7369 = vmatpush1.msra.mxu0 %v7335
  %7370 = vmatprep.subr.mxu0 0.0
  %7371 = vmatpush1.msra.mxu0 0.0
  %7372 = vmatprep.subr.mxu0 0.0
  %7373 = vmatpush1.msra.mxu0 0.0
  %7374 = vmatprep.subr.mxu0 0.0
  %7375 = vmatpush1.msra.mxu0 0.0
  %7376 = vmatprep.subr.mxu0 0.0
  %7377 = vmatpush1.msra.mxu0 0.0
  %7378 = vmatprep.subr.mxu0 0.0
  %7379 = vmatpush1.msra.mxu0 0.0
  %7380 = vmatprep.subr.mxu0 0.0
  %7381 = vmatpush1.msra.mxu0 0.0
  %7382 = vmatprep.subr.mxu0 0.0
  %7383 = vmatpush1.msra.mxu0 0.0
  %7384 = vmatprep.subr.mxu0 0.0
  %7385 = vmatpush1.msra.mxu0 0.0
  %7386 = vmatprep.subr.mxu0 0.0
  %7387 = vmatpush1.msra.mxu0 0.0
  %7388 = vmatprep.subr.mxu0 0.0
  %7389 = vmatpush1.msra.mxu0 0.0
  %7390 = vmatprep.subr.mxu0 0.0
  %7391 = vmatpush1.msra.mxu0 0.0
  %7392 = vmatprep.subr.mxu0 0.0
  %7393 = vmatpush1.msra.mxu0 0.0
  %7394 = vmatprep.subr.mxu0 0.0
  %7395 = vmatpush1.msra.mxu0 0.0
  %7396 = vmatprep.subr.mxu0 0.0
  %7397 = vmatpush1.msra.mxu0 0.0
  %7398 = vmatprep.subr.mxu0 0.0
  %7399 = vmatpush1.msra.mxu0 0.0
  %7400 = vmatprep.subr.mxu0 0.0
  %7401 = vmatpush1.msra.mxu0 0.0
  %7402 = vmatprep.subr.mxu0 0.0
  %7403 = vmatpush1.msra.mxu0 0.0
  %7404 = vmatprep.subr.mxu0 0.0
  %7405 = vmatpush1.msra.mxu0 0.0
  %7406 = vmatprep.subr.mxu0 0.0
  %7407 = vmatpush1.msra.mxu0 0.0
  %7408 = vmatprep.subr.mxu0 0.0
  %7409 = vmatpush1.msra.mxu0 0.0
  %7410 = vmatprep.subr.mxu0 0.0
  %7411 = vmatpush1.msra.mxu0 0.0
  %7412 = vmatprep.subr.mxu0 0.0
  %7413 = vmatpush1.msra.mxu0 0.0
  %7414 = vmatprep.subr.mxu0 0.0
  %7415 = vmatpush1.msra.mxu0 0.0
  %7416 = vmatprep.subr.mxu0 0.0
  %7417 = vmatpush1.msra.mxu0 0.0
  %7418 = vmatprep.subr.mxu0 0.0
  %7419 = vmatpush1.msra.mxu0 0.0
  %7420 = vmatprep.subr.mxu0 0.0
  %7421 = vmatpush1.msra.mxu0 0.0
  %7422 = vmatprep.subr.mxu0 0.0
  %7423 = vmatpush1.msra.mxu0 0.0
  %7424 = vmatprep.subr.mxu0 0.0
  %7425 = vmatpush1.msra.mxu0 0.0
  %7426 = vmatprep.subr.mxu0 0.0
  %7427 = vmatpush1.msra.mxu0 0.0
  %7428 = vmatprep.subr.mxu0 0.0
  %7429 = vmatpush1.msra.mxu0 0.0
  %7430 = vmatprep.subr.mxu0 0.0
  %7431 = vmatpush1.msra.mxu0 0.0
  %7432 = vmatprep.mubr.f32.mxu0 0.0
  %7433 = vmatmul.mubr.f32.gmra.mrb[0].mxu0 %v7360
  %v7434 = vpop.f32.mrb[0].mxu0
  %v7435 = vadd.f32 %v7347, %v7434
  %v7436 = vpop.f32.mrb[0].mxu0
  %7437 = vmatprep.mubr.f32.mxu0 0.0
  %7438 = vmatmul.mubr.f32.gmra.mrb[0].mxu0 %v7363
  %v7439 = vpop.f32.mrb[0].mxu0
  %v7440 = vadd.f32 %v7352, %v7439
  %v7441 = vpop.f32.mrb[0].mxu0
  %7442 = vmatprep.mubr.f32.mxu0 0.0
  %7443 = vmatmul.mubr.f32.gmra.mrb[0].mxu0 %v7366
  %v7444 = vpop.f32.mrb[0].mxu0
  %v7445 = vadd.f32 %v7357, %v7444
  %v7446 = vpop.f32.mrb[0].mxu0
  %7447 = vdwg.mxu0
  %v7449 = vcombine.high %v7435, %v7435
  %v7451 = vunpack.c.l.s4 1983009808
  %v7452 = vunpack.c.0.s8 %v7451
  %v7453 = vlaneseq
  %v7454 = vshrl.u32 %v7453, 7
  %v7455 = vsub.s32 %v7452, %v7454
  %v7456 = vrot.slane %v7435, %v7455
  %v7458 = vunpack.c.l.s4 1983009808
  %v7459 = vunpack.c.0.s8 %v7458
  %v7460 = vlaneseq
  %v7461 = vshrl.u32 %v7460, 7
  %v7462 = vsub.s32 %v7459, %v7461
  %v7463 = vrot.slane %v7449, %v7462
  %v7464 = vcombine.high %v7456, %v7456
  %v7465 = vcombine.high %v7463, %v7463
  %v7471 = vcombine.high %v7440, %v7440
  %v7473 = vunpack.c.l.s4 1983009808
  %v7474 = vunpack.c.0.s8 %v7473
  %v7475 = vlaneseq
  %v7476 = vshrl.u32 %v7475, 7
  %v7477 = vsub.s32 %v7474, %v7476
  %v7478 = vrot.slane %v7440, %v7477
  %v7480 = vunpack.c.l.s4 1983009808
  %v7481 = vunpack.c.0.s8 %v7480
  %v7482 = vlaneseq
  %v7483 = vshrl.u32 %v7482, 7
  %v7484 = vsub.s32 %v7481, %v7483
  %v7485 = vrot.slane %v7471, %v7484
  %v7486 = vcombine.high %v7478, %v7478
  %v7487 = vcombine.high %v7485, %v7485
  %v7489 = vcombine.high %v7445, %v7445
  %v7491 = vunpack.c.l.s4 1983009808
  %v7492 = vunpack.c.0.s8 %v7491
  %v7493 = vlaneseq
  %v7494 = vshrl.u32 %v7493, 7
  %v7495 = vsub.s32 %v7492, %v7494
  %v7496 = vrot.slane %v7445, %v7495
  %v7498 = vunpack.c.l.s4 1983009808
  %v7499 = vunpack.c.0.s8 %v7498
  %v7500 = vlaneseq
  %v7501 = vshrl.u32 %v7500, 7
  %v7502 = vsub.s32 %v7499, %v7501
  %v7503 = vrot.slane %v7489, %v7502
  %v7504 = vcombine.high %v7496, %v7496
  %v7505 = vcombine.high %v7503, %v7503
  %7506 = vxpose.xlu0.b32.start [1/16] %v7456, 128
  %7507 = vxpose.xlu0.b32.cont [2/16] 0.0, 128
  %7508 = vxpose.xlu0.b32.cont [3/16] 0.0, 128
  %7509 = vxpose.xlu0.b32.cont [4/16] 0.0, 128
  %7510 = vxpose.xlu0.b32.cont [5/16] 0.0, 128
  %7511 = vxpose.xlu0.b32.cont [6/16] 0.0, 128
  %7512 = vxpose.xlu0.b32.cont [7/16] 0.0, 128
  %7513 = vxpose.xlu0.b32.cont [8/16] 0.0, 128
  %7514 = vxpose.xlu0.b32.cont [9/16] 0.0, 128
  %7515 = vxpose.xlu0.b32.cont [10/16] 0.0, 128
  %7516 = vxpose.xlu0.b32.cont [11/16] 0.0, 128
  %7517 = vxpose.xlu0.b32.cont [12/16] 0.0, 128
  %7518 = vxpose.xlu0.b32.cont [13/16] 0.0, 128
  %7519 = vxpose.xlu0.b32.cont [14/16] 0.0, 128
  %7520 = vxpose.xlu0.b32.cont [15/16] 0.0, 128
  %7521 = vxpose.xlu0.b32.end [16/16] 0.0, 128
  %v7522 = vpop.trf.xlu0
  %v7523 = vpop.trf.xlu0
  %v7524 = vpop.trf.xlu0
  %v7525 = vpop.trf.xlu0
  %v7526 = vpop.trf.xlu0
  %v7527 = vpop.trf.xlu0
  %v7528 = vpop.trf.xlu0
  %v7529 = vpop.trf.xlu0
  %v7530 = vpop.trf.xlu0
  %v7531 = vpop.trf.xlu0
  %v7532 = vpop.trf.xlu0
  %v7533 = vpop.trf.xlu0
  %v7534 = vpop.trf.xlu0
  %v7535 = vpop.trf.xlu0
  %v7536 = vpop.trf.xlu0
  %v7537 = vpop.trf.xlu0
  %v7539 = vsel %vm344, %v7522, 0
  %v7542 = vsel %vm344, %v7523, 0
  %v7545 = vsel %vm344, %v7524, 0
  %v7548 = vsel %vm344, %v7525, 0
  %v7551 = vsel %vm344, %v7526, 0
  %v7554 = vsel %vm344, %v7527, 0
  %v7557 = vsel %vm344, %v7528, 0
  %v7560 = vsel %vm344, %v7529, 0
  %v7562 = vsel %vm369, %v7478, 0
  %7564 = vmatprep.subr.mxu0 0.0
  %7565 = vmatpush1.msra.mxu0 %v7562
  %7566 = vmatprep.subr.mxu0 0.0
  %7567 = vmatpush1.msra.mxu0 0.0
  %7568 = vmatprep.subr.mxu0 0.0
  %7569 = vmatpush1.msra.mxu0 0.0
  %7570 = vmatprep.subr.mxu0 0.0
  %7571 = vmatpush1.msra.mxu0 0.0
  %7572 = vmatprep.subr.mxu0 0.0
  %7573 = vmatpush1.msra.mxu0 0.0
  %7574 = vmatprep.subr.mxu0 0.0
  %7575 = vmatpush1.msra.mxu0 0.0
  %7576 = vmatprep.subr.mxu0 0.0
  %7577 = vmatpush1.msra.mxu0 0.0
  %7578 = vmatprep.subr.mxu0 0.0
  %7579 = vmatpush1.msra.mxu0 0.0
  %7580 = vmatprep.subr.mxu0 0.0
  %7581 = vmatpush1.msra.mxu0 0.0
  %7582 = vmatprep.subr.mxu0 0.0
  %7583 = vmatpush1.msra.mxu0 0.0
  %7584 = vmatprep.subr.mxu0 0.0
  %7585 = vmatpush1.msra.mxu0 0.0
  %7586 = vmatprep.subr.mxu0 0.0
  %7587 = vmatpush1.msra.mxu0 0.0
  %7588 = vmatprep.subr.mxu0 0.0
  %7589 = vmatpush1.msra.mxu0 0.0
  %7590 = vmatprep.subr.mxu0 0.0
  %7591 = vmatpush1.msra.mxu0 0.0
  %7592 = vmatprep.subr.mxu0 0.0
  %7593 = vmatpush1.msra.mxu0 0.0
  %7594 = vmatprep.subr.mxu0 0.0
  %7595 = vmatpush1.msra.mxu0 0.0
  %7596 = vmatprep.subr.mxu0 0.0
  %7597 = vmatpush1.msra.mxu0 0.0
  %7598 = vmatprep.subr.mxu0 0.0
  %7599 = vmatpush1.msra.mxu0 0.0
  %7600 = vmatprep.subr.mxu0 0.0
  %7601 = vmatpush1.msra.mxu0 0.0
  %7602 = vmatprep.subr.mxu0 0.0
  %7603 = vmatpush1.msra.mxu0 0.0
  %7604 = vmatprep.subr.mxu0 0.0
  %7605 = vmatpush1.msra.mxu0 0.0
  %7606 = vmatprep.subr.mxu0 0.0
  %7607 = vmatpush1.msra.mxu0 0.0
  %7608 = vmatprep.subr.mxu0 0.0
  %7609 = vmatpush1.msra.mxu0 0.0
  %7610 = vmatprep.subr.mxu0 0.0
  %7611 = vmatpush1.msra.mxu0 0.0
  %7612 = vmatprep.subr.mxu0 0.0
  %7613 = vmatpush1.msra.mxu0 0.0
  %7614 = vmatprep.subr.mxu0 0.0
  %7615 = vmatpush1.msra.mxu0 0.0
  %7616 = vmatprep.subr.mxu0 0.0
  %7617 = vmatpush1.msra.mxu0 0.0
  %7618 = vmatprep.subr.mxu0 0.0
  %7619 = vmatpush1.msra.mxu0 0.0
  %7620 = vmatprep.subr.mxu0 0.0
  %7621 = vmatpush1.msra.mxu0 0.0
  %7622 = vmatprep.subr.mxu0 0.0
  %7623 = vmatpush1.msra.mxu0 0.0
  %7624 = vmatprep.subr.mxu0 0.0
  %7625 = vmatpush1.msra.mxu0 0.0
  %7626 = vmatprep.subr.mxu0 0.0
  %7627 = vmatpush1.msra.mxu0 0.0
  %7628 = vmatprep.mubr.f32.mxu0 0.0
  %7629 = vmatmul.mubr.f32.gmra.mrb[0].mxu0 %v7539
  %v7630 = vpop.f32.mrb[0].mxu0
  %v7631 = vadd.f32 0.0, %v7630
  %v7632 = vpop.f32.mrb[0].mxu0
  %7633 = vmatprep.mubr.f32.mxu0 0.0
  %7634 = vmatmul.mubr.f32.gmra.mrb[0].mxu0 %v7542
  %v7635 = vpop.f32.mrb[0].mxu0
  %v7636 = vadd.f32 0.0, %v7635
  %v7637 = vpop.f32.mrb[0].mxu0
  %7638 = vmatprep.mubr.f32.mxu0 0.0
  %7639 = vmatmul.mubr.f32.gmra.mrb[0].mxu0 %v7545
  %v7640 = vpop.f32.mrb[0].mxu0
  %v7641 = vadd.f32 0.0, %v7640
  %v7642 = vpop.f32.mrb[0].mxu0
  %7643 = vmatprep.mubr.f32.mxu0 0.0
  %7644 = vmatmul.mubr.f32.gmra.mrb[0].mxu0 %v7548
  %v7645 = vpop.f32.mrb[0].mxu0
  %v7646 = vadd.f32 0.0, %v7645
  %v7647 = vpop.f32.mrb[0].mxu0
  %7648 = vmatprep.mubr.f32.mxu0 0.0
  %7649 = vmatmul.mubr.f32.gmra.mrb[0].mxu0 %v7551
  %v7650 = vpop.f32.mrb[0].mxu0
  %v7651 = vadd.f32 0.0, %v7650
  %v7652 = vpop.f32.mrb[0].mxu0
  %7653 = vmatprep.mubr.f32.mxu0 0.0
  %7654 = vmatmul.mubr.f32.gmra.mrb[0].mxu0 %v7554
  %v7655 = vpop.f32.mrb[0].mxu0
  %v7656 = vadd.f32 0.0, %v7655
  %v7657 = vpop.f32.mrb[0].mxu0
  %7658 = vmatprep.mubr.f32.mxu0 0.0
  %7659 = vmatmul.mubr.f32.gmra.mrb[0].mxu0 %v7557
  %v7660 = vpop.f32.mrb[0].mxu0
  %v7661 = vadd.f32 0.0, %v7660
  %v7662 = vpop.f32.mrb[0].mxu0
  %7663 = vmatprep.mubr.f32.mxu0 0.0
  %7664 = vmatmul.mubr.f32.gmra.mrb[0].mxu0 %v7560
  %v7665 = vpop.f32.mrb[0].mxu0
  %v7666 = vadd.f32 0.0, %v7665
  %v7667 = vpop.f32.mrb[0].mxu0
  %7668 = vdwg.mxu0
  %7669 = vxpose.xlu0.b32.start [1/16] %v7464, 128
  %7670 = vxpose.xlu0.b32.cont [2/16] 0.0, 128
  %7671 = vxpose.xlu0.b32.cont [3/16] 0.0, 128
  %7672 = vxpose.xlu0.b32.cont [4/16] 0.0, 128
  %7673 = vxpose.xlu0.b32.cont [5/16] 0.0, 128
  %7674 = vxpose.xlu0.b32.cont [6/16] 0.0, 128
  %7675 = vxpose.xlu0.b32.cont [7/16] 0.0, 128
  %7676 = vxpose.xlu0.b32.cont [8/16] 0.0, 128
  %7677 = vxpose.xlu0.b32.cont [9/16] 0.0, 128
  %7678 = vxpose.xlu0.b32.cont [10/16] 0.0, 128
  %7679 = vxpose.xlu0.b32.cont [11/16] 0.0, 128
  %7680 = vxpose.xlu0.b32.cont [12/16] 0.0, 128
  %7681 = vxpose.xlu0.b32.cont [13/16] 0.0, 128
  %7682 = vxpose.xlu0.b32.cont [14/16] 0.0, 128
  %7683 = vxpose.xlu0.b32.cont [15/16] 0.0, 128
  %7684 = vxpose.xlu0.b32.end [16/16] 0.0, 128
  %v7685 = vpop.trf.xlu0
  %v7686 = vpop.trf.xlu0
  %v7687 = vpop.trf.xlu0
  %v7688 = vpop.trf.xlu0
  %v7689 = vpop.trf.xlu0
  %v7690 = vpop.trf.xlu0
  %v7691 = vpop.trf.xlu0
  %v7692 = vpop.trf.xlu0
  %v7693 = vpop.trf.xlu0
  %v7694 = vpop.trf.xlu0
  %v7695 = vpop.trf.xlu0
  %v7696 = vpop.trf.xlu0
  %v7697 = vpop.trf.xlu0
  %v7698 = vpop.trf.xlu0
  %v7699 = vpop.trf.xlu0
  %v7700 = vpop.trf.xlu0
  %v7702 = vsel %vm344, %v7685, 0
  %v7705 = vsel %vm344, %v7686, 0
  %v7708 = vsel %vm344, %v7687, 0
  %v7711 = vsel %vm344, %v7688, 0
  %v7714 = vsel %vm344, %v7689, 0
  %v7717 = vsel %vm344, %v7690, 0
  %v7720 = vsel %vm344, %v7691, 0
  %v7723 = vsel %vm344, %v7692, 0
  %v7725 = vsel %vm369, %v7486, 0
  %7727 = vmatprep.subr.mxu0 0.0
  %7728 = vmatpush1.msra.mxu0 %v7725
  %7729 = vmatprep.subr.mxu0 0.0
  %7730 = vmatpush1.msra.mxu0 0.0
  %7731 = vmatprep.subr.mxu0 0.0
  %7732 = vmatpush1.msra.mxu0 0.0
  %7733 = vmatprep.subr.mxu0 0.0
  %7734 = vmatpush1.msra.mxu0 0.0
  %7735 = vmatprep.subr.mxu0 0.0
  %7736 = vmatpush1.msra.mxu0 0.0
  %7737 = vmatprep.subr.mxu0 0.0
  %7738 = vmatpush1.msra.mxu0 0.0
  %7739 = vmatprep.subr.mxu0 0.0
  %7740 = vmatpush1.msra.mxu0 0.0
  %7741 = vmatprep.subr.mxu0 0.0
  %7742 = vmatpush1.msra.mxu0 0.0
  %7743 = vmatprep.subr.mxu0 0.0
  %7744 = vmatpush1.msra.mxu0 0.0
  %7745 = vmatprep.subr.mxu0 0.0
  %7746 = vmatpush1.msra.mxu0 0.0
  %7747 = vmatprep.subr.mxu0 0.0
  %7748 = vmatpush1.msra.mxu0 0.0
  %7749 = vmatprep.subr.mxu0 0.0
  %7750 = vmatpush1.msra.mxu0 0.0
  %7751 = vmatprep.subr.mxu0 0.0
  %7752 = vmatpush1.msra.mxu0 0.0
  %7753 = vmatprep.subr.mxu0 0.0
  %7754 = vmatpush1.msra.mxu0 0.0
  %7755 = vmatprep.subr.mxu0 0.0
  %7756 = vmatpush1.msra.mxu0 0.0
  %7757 = vmatprep.subr.mxu0 0.0
  %7758 = vmatpush1.msra.mxu0 0.0
  %7759 = vmatprep.subr.mxu0 0.0
  %7760 = vmatpush1.msra.mxu0 0.0
  %7761 = vmatprep.subr.mxu0 0.0
  %7762 = vmatpush1.msra.mxu0 0.0
  %7763 = vmatprep.subr.mxu0 0.0
  %7764 = vmatpush1.msra.mxu0 0.0
  %7765 = vmatprep.subr.mxu0 0.0
  %7766 = vmatpush1.msra.mxu0 0.0
  %7767 = vmatprep.subr.mxu0 0.0
  %7768 = vmatpush1.msra.mxu0 0.0
  %7769 = vmatprep.subr.mxu0 0.0
  %7770 = vmatpush1.msra.mxu0 0.0
  %7771 = vmatprep.subr.mxu0 0.0
  %7772 = vmatpush1.msra.mxu0 0.0
  %7773 = vmatprep.subr.mxu0 0.0
  %7774 = vmatpush1.msra.mxu0 0.0
  %7775 = vmatprep.subr.mxu0 0.0
  %7776 = vmatpush1.msra.mxu0 0.0
  %7777 = vmatprep.subr.mxu0 0.0
  %7778 = vmatpush1.msra.mxu0 0.0
  %7779 = vmatprep.subr.mxu0 0.0
  %7780 = vmatpush1.msra.mxu0 0.0
  %7781 = vmatprep.subr.mxu0 0.0
  %7782 = vmatpush1.msra.mxu0 0.0
  %7783 = vmatprep.subr.mxu0 0.0
  %7784 = vmatpush1.msra.mxu0 0.0
  %7785 = vmatprep.subr.mxu0 0.0
  %7786 = vmatpush1.msra.mxu0 0.0
  %7787 = vmatprep.subr.mxu0 0.0
  %7788 = vmatpush1.msra.mxu0 0.0
  %7789 = vmatprep.subr.mxu0 0.0
  %7790 = vmatpush1.msra.mxu0 0.0
  %7791 = vmatprep.mubr.f32.mxu0 0.0
  %7792 = vmatmul.mubr.f32.gmra.mrb[0].mxu0 %v7702
  %v7793 = vpop.f32.mrb[0].mxu0
  %v7794 = vadd.f32 0.0, %v7793
  %v7795 = vpop.f32.mrb[0].mxu0
  %7796 = vmatprep.mubr.f32.mxu0 0.0
  %7797 = vmatmul.mubr.f32.gmra.mrb[0].mxu0 %v7705
  %v7798 = vpop.f32.mrb[0].mxu0
  %v7799 = vadd.f32 0.0, %v7798
  %v7800 = vpop.f32.mrb[0].mxu0
  %7801 = vmatprep.mubr.f32.mxu0 0.0
  %7802 = vmatmul.mubr.f32.gmra.mrb[0].mxu0 %v7708
  %v7803 = vpop.f32.mrb[0].mxu0
  %v7804 = vadd.f32 0.0, %v7803
  %v7805 = vpop.f32.mrb[0].mxu0
  %7806 = vmatprep.mubr.f32.mxu0 0.0
  %7807 = vmatmul.mubr.f32.gmra.mrb[0].mxu0 %v7711
  %v7808 = vpop.f32.mrb[0].mxu0
  %v7809 = vadd.f32 0.0, %v7808
  %v7810 = vpop.f32.mrb[0].mxu0
  %7811 = vmatprep.mubr.f32.mxu0 0.0
  %7812 = vmatmul.mubr.f32.gmra.mrb[0].mxu0 %v7714
  %v7813 = vpop.f32.mrb[0].mxu0
  %v7814 = vadd.f32 0.0, %v7813
  %v7815 = vpop.f32.mrb[0].mxu0
  %7816 = vmatprep.mubr.f32.mxu0 0.0
  %7817 = vmatmul.mubr.f32.gmra.mrb[0].mxu0 %v7717
  %v7818 = vpop.f32.mrb[0].mxu0
  %v7819 = vadd.f32 0.0, %v7818
  %v7820 = vpop.f32.mrb[0].mxu0
  %7821 = vmatprep.mubr.f32.mxu0 0.0
  %7822 = vmatmul.mubr.f32.gmra.mrb[0].mxu0 %v7720
  %v7823 = vpop.f32.mrb[0].mxu0
  %v7824 = vadd.f32 0.0, %v7823
  %v7825 = vpop.f32.mrb[0].mxu0
  %7826 = vmatprep.mubr.f32.mxu0 0.0
  %7827 = vmatmul.mubr.f32.gmra.mrb[0].mxu0 %v7723
  %v7828 = vpop.f32.mrb[0].mxu0
  %v7829 = vadd.f32 0.0, %v7828
  %v7830 = vpop.f32.mrb[0].mxu0
  %7831 = vdwg.mxu0
  %7832 = vxpose.xlu0.b32.start [1/16] %v7463, 128
  %7833 = vxpose.xlu0.b32.cont [2/16] 0.0, 128
  %7834 = vxpose.xlu0.b32.cont [3/16] 0.0, 128
  %7835 = vxpose.xlu0.b32.cont [4/16] 0.0, 128
  %7836 = vxpose.xlu0.b32.cont [5/16] 0.0, 128
  %7837 = vxpose.xlu0.b32.cont [6/16] 0.0, 128
  %7838 = vxpose.xlu0.b32.cont [7/16] 0.0, 128
  %7839 = vxpose.xlu0.b32.cont [8/16] 0.0, 128
  %7840 = vxpose.xlu0.b32.cont [9/16] 0.0, 128
  %7841 = vxpose.xlu0.b32.cont [10/16] 0.0, 128
  %7842 = vxpose.xlu0.b32.cont [11/16] 0.0, 128
  %7843 = vxpose.xlu0.b32.cont [12/16] 0.0, 128
  %7844 = vxpose.xlu0.b32.cont [13/16] 0.0, 128
  %7845 = vxpose.xlu0.b32.cont [14/16] 0.0, 128
  %7846 = vxpose.xlu0.b32.cont [15/16] 0.0, 128
  %7847 = vxpose.xlu0.b32.end [16/16] 0.0, 128
  %v7848 = vpop.trf.xlu0
  %v7849 = vpop.trf.xlu0
  %v7850 = vpop.trf.xlu0
  %v7851 = vpop.trf.xlu0
  %v7852 = vpop.trf.xlu0
  %v7853 = vpop.trf.xlu0
  %v7854 = vpop.trf.xlu0
  %v7855 = vpop.trf.xlu0
  %v7856 = vpop.trf.xlu0
  %v7857 = vpop.trf.xlu0
  %v7858 = vpop.trf.xlu0
  %v7859 = vpop.trf.xlu0
  %v7860 = vpop.trf.xlu0
  %v7861 = vpop.trf.xlu0
  %v7862 = vpop.trf.xlu0
  %v7863 = vpop.trf.xlu0
  %v7865 = vsel %vm344, %v7848, 0
  %v7868 = vsel %vm344, %v7849, 0
  %v7871 = vsel %vm344, %v7850, 0
  %v7874 = vsel %vm344, %v7851, 0
  %v7877 = vsel %vm344, %v7852, 0
  %v7880 = vsel %vm344, %v7853, 0
  %v7883 = vsel %vm344, %v7854, 0
  %v7886 = vsel %vm344, %v7855, 0
  %v7888 = vsel %vm369, %v7485, 0
  %7890 = vmatprep.subr.mxu0 0.0
  %7891 = vmatpush1.msra.mxu0 %v7888
  %7892 = vmatprep.subr.mxu0 0.0
  %7893 = vmatpush1.msra.mxu0 0.0
  %7894 = vmatprep.subr.mxu0 0.0
  %7895 = vmatpush1.msra.mxu0 0.0
  %7896 = vmatprep.subr.mxu0 0.0
  %7897 = vmatpush1.msra.mxu0 0.0
  %7898 = vmatprep.subr.mxu0 0.0
  %7899 = vmatpush1.msra.mxu0 0.0
  %7900 = vmatprep.subr.mxu0 0.0
  %7901 = vmatpush1.msra.mxu0 0.0
  %7902 = vmatprep.subr.mxu0 0.0
  %7903 = vmatpush1.msra.mxu0 0.0
  %7904 = vmatprep.subr.mxu0 0.0
  %7905 = vmatpush1.msra.mxu0 0.0
  %7906 = vmatprep.subr.mxu0 0.0
  %7907 = vmatpush1.msra.mxu0 0.0
  %7908 = vmatprep.subr.mxu0 0.0
  %7909 = vmatpush1.msra.mxu0 0.0
  %7910 = vmatprep.subr.mxu0 0.0
  %7911 = vmatpush1.msra.mxu0 0.0
  %7912 = vmatprep.subr.mxu0 0.0
  %7913 = vmatpush1.msra.mxu0 0.0
  %7914 = vmatprep.subr.mxu0 0.0
  %7915 = vmatpush1.msra.mxu0 0.0
  %7916 = vmatprep.subr.mxu0 0.0
  %7917 = vmatpush1.msra.mxu0 0.0
  %7918 = vmatprep.subr.mxu0 0.0
  %7919 = vmatpush1.msra.mxu0 0.0
  %7920 = vmatprep.subr.mxu0 0.0
  %7921 = vmatpush1.msra.mxu0 0.0
  %7922 = vmatprep.subr.mxu0 0.0
  %7923 = vmatpush1.msra.mxu0 0.0
  %7924 = vmatprep.subr.mxu0 0.0
  %7925 = vmatpush1.msra.mxu0 0.0
  %7926 = vmatprep.subr.mxu0 0.0
  %7927 = vmatpush1.msra.mxu0 0.0
  %7928 = vmatprep.subr.mxu0 0.0
  %7929 = vmatpush1.msra.mxu0 0.0
  %7930 = vmatprep.subr.mxu0 0.0
  %7931 = vmatpush1.msra.mxu0 0.0
  %7932 = vmatprep.subr.mxu0 0.0
  %7933 = vmatpush1.msra.mxu0 0.0
  %7934 = vmatprep.subr.mxu0 0.0
  %7935 = vmatpush1.msra.mxu0 0.0
  %7936 = vmatprep.subr.mxu0 0.0
  %7937 = vmatpush1.msra.mxu0 0.0
  %7938 = vmatprep.subr.mxu0 0.0
  %7939 = vmatpush1.msra.mxu0 0.0
  %7940 = vmatprep.subr.mxu0 0.0
  %7941 = vmatpush1.msra.mxu0 0.0
  %7942 = vmatprep.subr.mxu0 0.0
  %7943 = vmatpush1.msra.mxu0 0.0
  %7944 = vmatprep.subr.mxu0 0.0
  %7945 = vmatpush1.msra.mxu0 0.0
  %7946 = vmatprep.subr.mxu0 0.0
  %7947 = vmatpush1.msra.mxu0 0.0
  %7948 = vmatprep.subr.mxu0 0.0
  %7949 = vmatpush1.msra.mxu0 0.0
  %7950 = vmatprep.subr.mxu0 0.0
  %7951 = vmatpush1.msra.mxu0 0.0
  %7952 = vmatprep.subr.mxu0 0.0
  %7953 = vmatpush1.msra.mxu0 0.0
  %7954 = vmatprep.mubr.f32.mxu0 0.0
  %7955 = vmatmul.mubr.f32.gmra.mrb[0].mxu0 %v7865
  %v7956 = vpop.f32.mrb[0].mxu0
  %v7957 = vadd.f32 0.0, %v7956
  %v7958 = vpop.f32.mrb[0].mxu0
  %7959 = vmatprep.mubr.f32.mxu0 0.0
  %7960 = vmatmul.mubr.f32.gmra.mrb[0].mxu0 %v7868
  %v7961 = vpop.f32.mrb[0].mxu0
  %v7962 = vadd.f32 0.0, %v7961
  %v7963 = vpop.f32.mrb[0].mxu0
  %7964 = vmatprep.mubr.f32.mxu0 0.0
  %7965 = vmatmul.mubr.f32.gmra.mrb[0].mxu0 %v7871
  %v7966 = vpop.f32.mrb[0].mxu0
  %v7967 = vadd.f32 0.0, %v7966
  %v7968 = vpop.f32.mrb[0].mxu0
  %7969 = vmatprep.mubr.f32.mxu0 0.0
  %7970 = vmatmul.mubr.f32.gmra.mrb[0].mxu0 %v7874
  %v7971 = vpop.f32.mrb[0].mxu0
  %v7972 = vadd.f32 0.0, %v7971
  %v7973 = vpop.f32.mrb[0].mxu0
  %7974 = vmatprep.mubr.f32.mxu0 0.0
  %7975 = vmatmul.mubr.f32.gmra.mrb[0].mxu0 %v7877
  %v7976 = vpop.f32.mrb[0].mxu0
  %v7977 = vadd.f32 0.0, %v7976
  %v7978 = vpop.f32.mrb[0].mxu0
  %7979 = vmatprep.mubr.f32.mxu0 0.0
  %7980 = vmatmul.mubr.f32.gmra.mrb[0].mxu0 %v7880
  %v7981 = vpop.f32.mrb[0].mxu0
  %v7982 = vadd.f32 0.0, %v7981
  %v7983 = vpop.f32.mrb[0].mxu0
  %7984 = vmatprep.mubr.f32.mxu0 0.0
  %7985 = vmatmul.mubr.f32.gmra.mrb[0].mxu0 %v7883
  %v7986 = vpop.f32.mrb[0].mxu0
  %v7987 = vadd.f32 0.0, %v7986
  %v7988 = vpop.f32.mrb[0].mxu0
  %7989 = vmatprep.mubr.f32.mxu0 0.0
  %7990 = vmatmul.mubr.f32.gmra.mrb[0].mxu0 %v7886
  %v7991 = vpop.f32.mrb[0].mxu0
  %v7992 = vadd.f32 0.0, %v7991
  %v7993 = vpop.f32.mrb[0].mxu0
  %7994 = vdwg.mxu0
  %7995 = vxpose.xlu0.b32.start [1/16] %v7465, 128
  %7996 = vxpose.xlu0.b32.cont [2/16] 0.0, 128
  %7997 = vxpose.xlu0.b32.cont [3/16] 0.0, 128
  %7998 = vxpose.xlu0.b32.cont [4/16] 0.0, 128
  %7999 = vxpose.xlu0.b32.cont [5/16] 0.0, 128
  %8000 = vxpose.xlu0.b32.cont [6/16] 0.0, 128
  %8001 = vxpose.xlu0.b32.cont [7/16] 0.0, 128
  %8002 = vxpose.xlu0.b32.cont [8/16] 0.0, 128
  %8003 = vxpose.xlu0.b32.cont [9/16] 0.0, 128
  %8004 = vxpose.xlu0.b32.cont [10/16] 0.0, 128
  %8005 = vxpose.xlu0.b32.cont [11/16] 0.0, 128
  %8006 = vxpose.xlu0.b32.cont [12/16] 0.0, 128
  %8007 = vxpose.xlu0.b32.cont [13/16] 0.0, 128
  %8008 = vxpose.xlu0.b32.cont [14/16] 0.0, 128
  %8009 = vxpose.xlu0.b32.cont [15/16] 0.0, 128
  %8010 = vxpose.xlu0.b32.end [16/16] 0.0, 128
  %v8011 = vpop.trf.xlu0
  %v8012 = vpop.trf.xlu0
  %v8013 = vpop.trf.xlu0
  %v8014 = vpop.trf.xlu0
  %v8015 = vpop.trf.xlu0
  %v8016 = vpop.trf.xlu0
  %v8017 = vpop.trf.xlu0
  %v8018 = vpop.trf.xlu0
  %v8019 = vpop.trf.xlu0
  %v8020 = vpop.trf.xlu0
  %v8021 = vpop.trf.xlu0
  %v8022 = vpop.trf.xlu0
  %v8023 = vpop.trf.xlu0
  %v8024 = vpop.trf.xlu0
  %v8025 = vpop.trf.xlu0
  %v8026 = vpop.trf.xlu0
  %v8028 = vsel %vm344, %v8011, 0
  %v8031 = vsel %vm344, %v8012, 0
  %v8034 = vsel %vm344, %v8013, 0
  %v8037 = vsel %vm344, %v8014, 0
  %v8040 = vsel %vm344, %v8015, 0
  %v8043 = vsel %vm344, %v8016, 0
  %v8046 = vsel %vm344, %v8017, 0
  %v8049 = vsel %vm344, %v8018, 0
  %v8051 = vsel %vm369, %v7487, 0
  %8053 = vmatprep.subr.mxu0 0.0
  %8054 = vmatpush1.msra.mxu0 %v8051
  %8055 = vmatprep.subr.mxu0 0.0
  %8056 = vmatpush1.msra.mxu0 0.0
  %8057 = vmatprep.subr.mxu0 0.0
  %8058 = vmatpush1.msra.mxu0 0.0
  %8059 = vmatprep.subr.mxu0 0.0
  %8060 = vmatpush1.msra.mxu0 0.0
  %8061 = vmatprep.subr.mxu0 0.0
  %8062 = vmatpush1.msra.mxu0 0.0
  %8063 = vmatprep.subr.mxu0 0.0
  %8064 = vmatpush1.msra.mxu0 0.0
  %8065 = vmatprep.subr.mxu0 0.0
  %8066 = vmatpush1.msra.mxu0 0.0
  %8067 = vmatprep.subr.mxu0 0.0
  %8068 = vmatpush1.msra.mxu0 0.0
  %8069 = vmatprep.subr.mxu0 0.0
  %8070 = vmatpush1.msra.mxu0 0.0
  %8071 = vmatprep.subr.mxu0 0.0
  %8072 = vmatpush1.msra.mxu0 0.0
  %8073 = vmatprep.subr.mxu0 0.0
  %8074 = vmatpush1.msra.mxu0 0.0
  %8075 = vmatprep.subr.mxu0 0.0
  %8076 = vmatpush1.msra.mxu0 0.0
  %8077 = vmatprep.subr.mxu0 0.0
  %8078 = vmatpush1.msra.mxu0 0.0
  %8079 = vmatprep.subr.mxu0 0.0
  %8080 = vmatpush1.msra.mxu0 0.0
  %8081 = vmatprep.subr.mxu0 0.0
  %8082 = vmatpush1.msra.mxu0 0.0
  %8083 = vmatprep.subr.mxu0 0.0
  %8084 = vmatpush1.msra.mxu0 0.0
  %8085 = vmatprep.subr.mxu0 0.0
  %8086 = vmatpush1.msra.mxu0 0.0
  %8087 = vmatprep.subr.mxu0 0.0
  %8088 = vmatpush1.msra.mxu0 0.0
  %8089 = vmatprep.subr.mxu0 0.0
  %8090 = vmatpush1.msra.mxu0 0.0
  %8091 = vmatprep.subr.mxu0 0.0
  %8092 = vmatpush1.msra.mxu0 0.0
  %8093 = vmatprep.subr.mxu0 0.0
  %8094 = vmatpush1.msra.mxu0 0.0
  %8095 = vmatprep.subr.mxu0 0.0
  %8096 = vmatpush1.msra.mxu0 0.0
  %8097 = vmatprep.subr.mxu0 0.0
  %8098 = vmatpush1.msra.mxu0 0.0
  %8099 = vmatprep.subr.mxu0 0.0
  %8100 = vmatpush1.msra.mxu0 0.0
  %8101 = vmatprep.subr.mxu0 0.0
  %8102 = vmatpush1.msra.mxu0 0.0
  %8103 = vmatprep.subr.mxu0 0.0
  %8104 = vmatpush1.msra.mxu0 0.0
  %8105 = vmatprep.subr.mxu0 0.0
  %8106 = vmatpush1.msra.mxu0 0.0
  %8107 = vmatprep.subr.mxu0 0.0
  %8108 = vmatpush1.msra.mxu0 0.0
  %8109 = vmatprep.subr.mxu0 0.0
  %8110 = vmatpush1.msra.mxu0 0.0
  %8111 = vmatprep.subr.mxu0 0.0
  %8112 = vmatpush1.msra.mxu0 0.0
  %8113 = vmatprep.subr.mxu0 0.0
  %8114 = vmatpush1.msra.mxu0 0.0
  %8115 = vmatprep.subr.mxu0 0.0
  %8116 = vmatpush1.msra.mxu0 0.0
  %8117 = vmatprep.mubr.f32.mxu0 0.0
  %8118 = vmatmul.mubr.f32.gmra.mrb[0].mxu0 %v8028
  %v8119 = vpop.f32.mrb[0].mxu0
  %v8120 = vadd.f32 0.0, %v8119
  %v8121 = vpop.f32.mrb[0].mxu0
  %8122 = vmatprep.mubr.f32.mxu0 0.0
  %8123 = vmatmul.mubr.f32.gmra.mrb[0].mxu0 %v8031
  %v8124 = vpop.f32.mrb[0].mxu0
  %v8125 = vadd.f32 0.0, %v8124
  %v8126 = vpop.f32.mrb[0].mxu0
  %8127 = vmatprep.mubr.f32.mxu0 0.0
  %8128 = vmatmul.mubr.f32.gmra.mrb[0].mxu0 %v8034
  %v8129 = vpop.f32.mrb[0].mxu0
  %v8130 = vadd.f32 0.0, %v8129
  %v8131 = vpop.f32.mrb[0].mxu0
  %8132 = vmatprep.mubr.f32.mxu0 0.0
  %8133 = vmatmul.mubr.f32.gmra.mrb[0].mxu0 %v8037
  %v8134 = vpop.f32.mrb[0].mxu0
  %v8135 = vadd.f32 0.0, %v8134
  %v8136 = vpop.f32.mrb[0].mxu0
  %8137 = vmatprep.mubr.f32.mxu0 0.0
  %8138 = vmatmul.mubr.f32.gmra.mrb[0].mxu0 %v8040
  %v8139 = vpop.f32.mrb[0].mxu0
  %v8140 = vadd.f32 0.0, %v8139
  %v8141 = vpop.f32.mrb[0].mxu0
  %8142 = vmatprep.mubr.f32.mxu0 0.0
  %8143 = vmatmul.mubr.f32.gmra.mrb[0].mxu0 %v8043
  %v8144 = vpop.f32.mrb[0].mxu0
  %v8145 = vadd.f32 0.0, %v8144
  %v8146 = vpop.f32.mrb[0].mxu0
  %8147 = vmatprep.mubr.f32.mxu0 0.0
  %8148 = vmatmul.mubr.f32.gmra.mrb[0].mxu0 %v8046
  %v8149 = vpop.f32.mrb[0].mxu0
  %v8150 = vadd.f32 0.0, %v8149
  %v8151 = vpop.f32.mrb[0].mxu0
  %8152 = vmatprep.mubr.f32.mxu0 0.0
  %8153 = vmatmul.mubr.f32.gmra.mrb[0].mxu0 %v8049
  %v8154 = vpop.f32.mrb[0].mxu0
  %v8155 = vadd.f32 0.0, %v8154
  %v8156 = vpop.f32.mrb[0].mxu0
  %8157 = vdwg.mxu0
  %v8158 = vmul.f32 %v7631, 0.70710677
  %v8159 = vmul.f32 %v7636, 0.70710677
  %v8160 = vmul.f32 %v7641, 0.70710677
  %v8161 = vmul.f32 %v7646, 0.70710677
  %v8162 = vmul.f32 %v7651, 0.70710677
  %v8163 = vmul.f32 %v7656, 0.70710677
  %v8164 = vmul.f32 %v7661, 0.70710677
  %v8165 = vmul.f32 %v7666, 0.70710677
  %v8166 = vmul.f32 %v7794, 0.70710677
  %v8167 = vmul.f32 %v7799, 0.70710677
  %v8168 = vmul.f32 %v7804, 0.70710677
  %v8169 = vmul.f32 %v7809, 0.70710677
  %v8170 = vmul.f32 %v7814, 0.70710677
  %v8171 = vmul.f32 %v7819, 0.70710677
  %v8172 = vmul.f32 %v7824, 0.70710677
  %v8173 = vmul.f32 %v7829, 0.70710677
  %v8174 = vmul.f32 %v7957, 0.70710677
  %v8175 = vmul.f32 %v7962, 0.70710677
  %v8176 = vmul.f32 %v7967, 0.70710677
  %v8177 = vmul.f32 %v7972, 0.70710677
  %v8178 = vmul.f32 %v7977, 0.70710677
  %v8179 = vmul.f32 %v7982, 0.70710677
  %v8180 = vmul.f32 %v7987, 0.70710677
  %v8181 = vmul.f32 %v7992, 0.70710677
  %v8182 = vmul.f32 %v8120, 0.70710677
  %v8183 = vmul.f32 %v8125, 0.70710677
  %v8184 = vmul.f32 %v8130, 0.70710677
  %v8185 = vmul.f32 %v8135, 0.70710677
  %v8186 = vmul.f32 %v8140, 0.70710677
  %v8187 = vmul.f32 %v8145, 0.70710677
  %v8188 = vmul.f32 %v8150, 0.70710677
  %v8189 = vmul.f32 %v8155, 0.70710677
  %v8190 = vsel %vm998, %v8158, -inf
  %8191 = vmax.xlane.f32.xlu0 %v8190
  %v8192 = vpop.xlane.xlu0 %8191
  %v8193 = vsel %vm998, %v8159, -inf
  %8194 = vmax.xlane.f32.xlu0 %v8193
  %v8195 = vpop.xlane.xlu0 %8194
  %v8196 = vsel %vm998, %v8160, -inf
  %8197 = vmax.xlane.f32.xlu0 %v8196
  %v8198 = vpop.xlane.xlu0 %8197
  %v8199 = vsel %vm998, %v8161, -inf
  %8200 = vmax.xlane.f32.xlu0 %v8199
  %v8201 = vpop.xlane.xlu0 %8200
  %v8202 = vsel %vm998, %v8162, -inf
  %8203 = vmax.xlane.f32.xlu0 %v8202
  %v8204 = vpop.xlane.xlu0 %8203
  %v8205 = vsel %vm998, %v8163, -inf
  %8206 = vmax.xlane.f32.xlu0 %v8205
  %v8207 = vpop.xlane.xlu0 %8206
  %v8208 = vsel %vm998, %v8164, -inf
  %8209 = vmax.xlane.f32.xlu0 %v8208
  %v8210 = vpop.xlane.xlu0 %8209
  %v8211 = vsel %vm998, %v8165, -inf
  %8212 = vmax.xlane.f32.xlu0 %v8211
  %v8213 = vpop.xlane.xlu0 %8212
  %v8214 = vsel %vm998, %v8166, -inf
  %8215 = vmax.xlane.f32.xlu0 %v8214
  %v8216 = vpop.xlane.xlu0 %8215
  %v8217 = vsel %vm998, %v8167, -inf
  %8218 = vmax.xlane.f32.xlu0 %v8217
  %v8219 = vpop.xlane.xlu0 %8218
  %v8220 = vsel %vm998, %v8168, -inf
  %8221 = vmax.xlane.f32.xlu0 %v8220
  %v8222 = vpop.xlane.xlu0 %8221
  %v8223 = vsel %vm998, %v8169, -inf
  %8224 = vmax.xlane.f32.xlu0 %v8223
  %v8225 = vpop.xlane.xlu0 %8224
  %v8226 = vsel %vm998, %v8170, -inf
  %8227 = vmax.xlane.f32.xlu0 %v8226
  %v8228 = vpop.xlane.xlu0 %8227
  %v8229 = vsel %vm998, %v8171, -inf
  %8230 = vmax.xlane.f32.xlu0 %v8229
  %v8231 = vpop.xlane.xlu0 %8230
  %v8232 = vsel %vm998, %v8172, -inf
  %8233 = vmax.xlane.f32.xlu0 %v8232
  %v8234 = vpop.xlane.xlu0 %8233
  %v8235 = vsel %vm998, %v8173, -inf
  %8236 = vmax.xlane.f32.xlu0 %v8235
  %v8237 = vpop.xlane.xlu0 %8236
  %v8238 = vsel %vm998, %v8174, -inf
  %8239 = vmax.xlane.f32.xlu0 %v8238
  %v8240 = vpop.xlane.xlu0 %8239
  %v8241 = vsel %vm998, %v8175, -inf
  %8242 = vmax.xlane.f32.xlu0 %v8241
  %v8243 = vpop.xlane.xlu0 %8242
  %v8244 = vsel %vm998, %v8176, -inf
  %8245 = vmax.xlane.f32.xlu0 %v8244
  %v8246 = vpop.xlane.xlu0 %8245
  %v8247 = vsel %vm998, %v8177, -inf
  %8248 = vmax.xlane.f32.xlu0 %v8247
  %v8249 = vpop.xlane.xlu0 %8248
  %v8250 = vsel %vm998, %v8178, -inf
  %8251 = vmax.xlane.f32.xlu0 %v8250
  %v8252 = vpop.xlane.xlu0 %8251
  %v8253 = vsel %vm998, %v8179, -inf
  %8254 = vmax.xlane.f32.xlu0 %v8253
  %v8255 = vpop.xlane.xlu0 %8254
  %v8256 = vsel %vm998, %v8180, -inf
  %8257 = vmax.xlane.f32.xlu0 %v8256
  %v8258 = vpop.xlane.xlu0 %8257
  %v8259 = vsel %vm998, %v8181, -inf
  %8260 = vmax.xlane.f32.xlu0 %v8259
  %v8261 = vpop.xlane.xlu0 %8260
  %v8262 = vsel %vm998, %v8182, -inf
  %8263 = vmax.xlane.f32.xlu0 %v8262
  %v8264 = vpop.xlane.xlu0 %8263
  %v8265 = vsel %vm998, %v8183, -inf
  %8266 = vmax.xlane.f32.xlu0 %v8265
  %v8267 = vpop.xlane.xlu0 %8266
  %v8268 = vsel %vm998, %v8184, -inf
  %8269 = vmax.xlane.f32.xlu0 %v8268
  %v8270 = vpop.xlane.xlu0 %8269
  %v8271 = vsel %vm998, %v8185, -inf
  %8272 = vmax.xlane.f32.xlu0 %v8271
  %v8273 = vpop.xlane.xlu0 %8272
  %v8274 = vsel %vm998, %v8186, -inf
  %8275 = vmax.xlane.f32.xlu0 %v8274
  %v8276 = vpop.xlane.xlu0 %8275
  %v8277 = vsel %vm998, %v8187, -inf
  %8278 = vmax.xlane.f32.xlu0 %v8277
  %v8279 = vpop.xlane.xlu0 %8278
  %v8280 = vsel %vm998, %v8188, -inf
  %8281 = vmax.xlane.f32.xlu0 %v8280
  %v8282 = vpop.xlane.xlu0 %8281
  %v8283 = vsel %vm998, %v8189, -inf
  %8284 = vmax.xlane.f32.xlu0 %v8283
  %v8285 = vpop.xlane.xlu0 %8284
  %v8286 = vsub.f32 %v8158, %v8192
  %v8287 = vsub.f32 %v8159, %v8195
  %v8288 = vsub.f32 %v8160, %v8198
  %v8289 = vsub.f32 %v8161, %v8201
  %v8290 = vsub.f32 %v8162, %v8204
  %v8291 = vsub.f32 %v8163, %v8207
  %v8292 = vsub.f32 %v8164, %v8210
  %v8293 = vsub.f32 %v8165, %v8213
  %v8294 = vsub.f32 %v8166, %v8216
  %v8295 = vsub.f32 %v8167, %v8219
  %v8296 = vsub.f32 %v8168, %v8222
  %v8297 = vsub.f32 %v8169, %v8225
  %v8298 = vsub.f32 %v8170, %v8228
  %v8299 = vsub.f32 %v8171, %v8231
  %v8300 = vsub.f32 %v8172, %v8234
  %v8301 = vsub.f32 %v8173, %v8237
  %v8302 = vsub.f32 %v8174, %v8240
  %v8303 = vsub.f32 %v8175, %v8243
  %v8304 = vsub.f32 %v8176, %v8246
  %v8305 = vsub.f32 %v8177, %v8249
  %v8306 = vsub.f32 %v8178, %v8252
  %v8307 = vsub.f32 %v8179, %v8255
  %v8308 = vsub.f32 %v8180, %v8258
  %v8309 = vsub.f32 %v8181, %v8261
  %v8310 = vsub.f32 %v8182, %v8264
  %v8311 = vsub.f32 %v8183, %v8267
  %v8312 = vsub.f32 %v8184, %v8270
  %v8313 = vsub.f32 %v8185, %v8273
  %v8314 = vsub.f32 %v8186, %v8276
  %v8315 = vsub.f32 %v8187, %v8279
  %v8316 = vsub.f32 %v8188, %v8282
  %v8317 = vsub.f32 %v8189, %v8285
  %v8318 = vmul.f32 %v8286, 1.442695
  %v8319 = vpow.pop %v8318
  %v8320 = vmul.f32 %v8287, 1.442695
  %v8321 = vpow.pop %v8320
  %v8322 = vmul.f32 %v8288, 1.442695
  %v8323 = vpow.pop %v8322
  %v8324 = vmul.f32 %v8289, 1.442695
  %v8325 = vpow.pop %v8324
  %v8326 = vmul.f32 %v8290, 1.442695
  %v8327 = vpow.pop %v8326
  %v8328 = vmul.f32 %v8291, 1.442695
  %v8329 = vpow.pop %v8328
  %v8330 = vmul.f32 %v8292, 1.442695
  %v8331 = vpow.pop %v8330
  %v8332 = vmul.f32 %v8293, 1.442695
  %v8333 = vpow.pop %v8332
  %v8334 = vmul.f32 %v8294, 1.442695
  %v8335 = vpow.pop %v8334
  %v8336 = vmul.f32 %v8295, 1.442695
  %v8337 = vpow.pop %v8336
  %v8338 = vmul.f32 %v8296, 1.442695
  %v8339 = vpow.pop %v8338
  %v8340 = vmul.f32 %v8297, 1.442695
  %v8341 = vpow.pop %v8340
  %v8342 = vmul.f32 %v8298, 1.442695
  %v8343 = vpow.pop %v8342
  %v8344 = vmul.f32 %v8299, 1.442695
  %v8345 = vpow.pop %v8344
  %v8346 = vmul.f32 %v8300, 1.442695
  %v8347 = vpow.pop %v8346
  %v8348 = vmul.f32 %v8301, 1.442695
  %v8349 = vpow.pop %v8348
  %v8350 = vmul.f32 %v8302, 1.442695
  %v8351 = vpow.pop %v8350
  %v8352 = vmul.f32 %v8303, 1.442695
  %v8353 = vpow.pop %v8352
  %v8354 = vmul.f32 %v8304, 1.442695
  %v8355 = vpow.pop %v8354
  %v8356 = vmul.f32 %v8305, 1.442695
  %v8357 = vpow.pop %v8356
  %v8358 = vmul.f32 %v8306, 1.442695
  %v8359 = vpow.pop %v8358
  %v8360 = vmul.f32 %v8307, 1.442695
  %v8361 = vpow.pop %v8360
  %v8362 = vmul.f32 %v8308, 1.442695
  %v8363 = vpow.pop %v8362
  %v8364 = vmul.f32 %v8309, 1.442695
  %v8365 = vpow.pop %v8364
  %v8366 = vmul.f32 %v8310, 1.442695
  %v8367 = vpow.pop %v8366
  %v8368 = vmul.f32 %v8311, 1.442695
  %v8369 = vpow.pop %v8368
  %v8370 = vmul.f32 %v8312, 1.442695
  %v8371 = vpow.pop %v8370
  %v8372 = vmul.f32 %v8313, 1.442695
  %v8373 = vpow.pop %v8372
  %v8374 = vmul.f32 %v8314, 1.442695
  %v8375 = vpow.pop %v8374
  %v8376 = vmul.f32 %v8315, 1.442695
  %v8377 = vpow.pop %v8376
  %v8378 = vmul.f32 %v8316, 1.442695
  %v8379 = vpow.pop %v8378
  %v8380 = vmul.f32 %v8317, 1.442695
  %v8381 = vpow.pop %v8380
  %v8382 = vsel %vm998, %v8319, 0.0
  %8383 = vadd.xlane.f32.xlu0 %v8382
  %v8384 = vpop.xlane.xlu0 %8383
  %v8385 = vsel %vm998, %v8321, 0.0
  %8386 = vadd.xlane.f32.xlu0 %v8385
  %v8387 = vpop.xlane.xlu0 %8386
  %v8388 = vsel %vm998, %v8323, 0.0
  %8389 = vadd.xlane.f32.xlu0 %v8388
  %v8390 = vpop.xlane.xlu0 %8389
  %v8391 = vsel %vm998, %v8325, 0.0
  %8392 = vadd.xlane.f32.xlu0 %v8391
  %v8393 = vpop.xlane.xlu0 %8392
  %v8394 = vsel %vm998, %v8327, 0.0
  %8395 = vadd.xlane.f32.xlu0 %v8394
  %v8396 = vpop.xlane.xlu0 %8395
  %v8397 = vsel %vm998, %v8329, 0.0
  %8398 = vadd.xlane.f32.xlu0 %v8397
  %v8399 = vpop.xlane.xlu0 %8398
  %v8400 = vsel %vm998, %v8331, 0.0
  %8401 = vadd.xlane.f32.xlu0 %v8400
  %v8402 = vpop.xlane.xlu0 %8401
  %v8403 = vsel %vm998, %v8333, 0.0
  %8404 = vadd.xlane.f32.xlu0 %v8403
  %v8405 = vpop.xlane.xlu0 %8404
  %v8406 = vsel %vm998, %v8335, 0.0
  %8407 = vadd.xlane.f32.xlu0 %v8406
  %v8408 = vpop.xlane.xlu0 %8407
  %v8409 = vsel %vm998, %v8337, 0.0
  %8410 = vadd.xlane.f32.xlu0 %v8409
  %v8411 = vpop.xlane.xlu0 %8410
  %v8412 = vsel %vm998, %v8339, 0.0
  %8413 = vadd.xlane.f32.xlu0 %v8412
  %v8414 = vpop.xlane.xlu0 %8413
  %v8415 = vsel %vm998, %v8341, 0.0
  %8416 = vadd.xlane.f32.xlu0 %v8415
  %v8417 = vpop.xlane.xlu0 %8416
  %v8418 = vsel %vm998, %v8343, 0.0
  %8419 = vadd.xlane.f32.xlu0 %v8418
  %v8420 = vpop.xlane.xlu0 %8419
  %v8421 = vsel %vm998, %v8345, 0.0
  %8422 = vadd.xlane.f32.xlu0 %v8421
  %v8423 = vpop.xlane.xlu0 %8422
  %v8424 = vsel %vm998, %v8347, 0.0
  %8425 = vadd.xlane.f32.xlu0 %v8424
  %v8426 = vpop.xlane.xlu0 %8425
  %v8427 = vsel %vm998, %v8349, 0.0
  %8428 = vadd.xlane.f32.xlu0 %v8427
  %v8429 = vpop.xlane.xlu0 %8428
  %v8430 = vsel %vm998, %v8351, 0.0
  %8431 = vadd.xlane.f32.xlu0 %v8430
  %v8432 = vpop.xlane.xlu0 %8431
  %v8433 = vsel %vm998, %v8353, 0.0
  %8434 = vadd.xlane.f32.xlu0 %v8433
  %v8435 = vpop.xlane.xlu0 %8434
  %v8436 = vsel %vm998, %v8355, 0.0
  %8437 = vadd.xlane.f32.xlu0 %v8436
  %v8438 = vpop.xlane.xlu0 %8437
  %v8439 = vsel %vm998, %v8357, 0.0
  %8440 = vadd.xlane.f32.xlu0 %v8439
  %v8441 = vpop.xlane.xlu0 %8440
  %v8442 = vsel %vm998, %v8359, 0.0
  %8443 = vadd.xlane.f32.xlu0 %v8442
  %v8444 = vpop.xlane.xlu0 %8443
  %v8445 = vsel %vm998, %v8361, 0.0
  %8446 = vadd.xlane.f32.xlu0 %v8445
  %v8447 = vpop.xlane.xlu0 %8446
  %v8448 = vsel %vm998, %v8363, 0.0
  %8449 = vadd.xlane.f32.xlu0 %v8448
  %v8450 = vpop.xlane.xlu0 %8449
  %v8451 = vsel %vm998, %v8365, 0.0
  %8452 = vadd.xlane.f32.xlu0 %v8451
  %v8453 = vpop.xlane.xlu0 %8452
  %v8454 = vsel %vm998, %v8367, 0.0
  %8455 = vadd.xlane.f32.xlu0 %v8454
  %v8456 = vpop.xlane.xlu0 %8455
  %v8457 = vsel %vm998, %v8369, 0.0
  %8458 = vadd.xlane.f32.xlu0 %v8457
  %v8459 = vpop.xlane.xlu0 %8458
  %v8460 = vsel %vm998, %v8371, 0.0
  %8461 = vadd.xlane.f32.xlu0 %v8460
  %v8462 = vpop.xlane.xlu0 %8461
  %v8463 = vsel %vm998, %v8373, 0.0
  %8464 = vadd.xlane.f32.xlu0 %v8463
  %v8465 = vpop.xlane.xlu0 %8464
  %v8466 = vsel %vm998, %v8375, 0.0
  %8467 = vadd.xlane.f32.xlu0 %v8466
  %v8468 = vpop.xlane.xlu0 %8467
  %v8469 = vsel %vm998, %v8377, 0.0
  %8470 = vadd.xlane.f32.xlu0 %v8469
  %v8471 = vpop.xlane.xlu0 %8470
  %v8472 = vsel %vm998, %v8379, 0.0
  %8473 = vadd.xlane.f32.xlu0 %v8472
  %v8474 = vpop.xlane.xlu0 %8473
  %v8475 = vsel %vm998, %v8381, 0.0
  %8476 = vadd.xlane.f32.xlu0 %v8475
  %v8477 = vpop.xlane.xlu0 %8476
  %v8478 = vrcp.pop %v8384
  %v8479 = vrcp.pop %v8387
  %v8480 = vrcp.pop %v8390
  %v8481 = vrcp.pop %v8393
  %v8482 = vrcp.pop %v8396
  %v8483 = vrcp.pop %v8399
  %v8484 = vrcp.pop %v8402
  %v8485 = vrcp.pop %v8405
  %v8486 = vrcp.pop %v8408
  %v8487 = vrcp.pop %v8411
  %v8488 = vrcp.pop %v8414
  %v8489 = vrcp.pop %v8417
  %v8490 = vrcp.pop %v8420
  %v8491 = vrcp.pop %v8423
  %v8492 = vrcp.pop %v8426
  %v8493 = vrcp.pop %v8429
  %v8494 = vrcp.pop %v8432
  %v8495 = vrcp.pop %v8435
  %v8496 = vrcp.pop %v8438
  %v8497 = vrcp.pop %v8441
  %v8498 = vrcp.pop %v8444
  %v8499 = vrcp.pop %v8447
  %v8500 = vrcp.pop %v8450
  %v8501 = vrcp.pop %v8453
  %v8502 = vrcp.pop %v8456
  %v8503 = vrcp.pop %v8459
  %v8504 = vrcp.pop %v8462
  %v8505 = vrcp.pop %v8465
  %v8506 = vrcp.pop %v8468
  %v8507 = vrcp.pop %v8471
  %v8508 = vrcp.pop %v8474
  %v8509 = vrcp.pop %v8477
  %v8510 = vmul.f32 %v8319, %v8478
  %v8511 = vmul.f32 %v8321, %v8479
  %v8512 = vmul.f32 %v8323, %v8480
  %v8513 = vmul.f32 %v8325, %v8481
  %v8514 = vmul.f32 %v8327, %v8482
  %v8515 = vmul.f32 %v8329, %v8483
  %v8516 = vmul.f32 %v8331, %v8484
  %v8517 = vmul.f32 %v8333, %v8485
  %v8518 = vmul.f32 %v8335, %v8486
  %v8519 = vmul.f32 %v8337, %v8487
  %v8520 = vmul.f32 %v8339, %v8488
  %v8521 = vmul.f32 %v8341, %v8489
  %v8522 = vmul.f32 %v8343, %v8490
  %v8523 = vmul.f32 %v8345, %v8491
  %v8524 = vmul.f32 %v8347, %v8492
  %v8525 = vmul.f32 %v8349, %v8493
  %v8526 = vmul.f32 %v8351, %v8494
  %v8527 = vmul.f32 %v8353, %v8495
  %v8528 = vmul.f32 %v8355, %v8496
  %v8529 = vmul.f32 %v8357, %v8497
  %v8530 = vmul.f32 %v8359, %v8498
  %v8531 = vmul.f32 %v8361, %v8499
  %v8532 = vmul.f32 %v8363, %v8500
  %v8533 = vmul.f32 %v8365, %v8501
  %v8534 = vmul.f32 %v8367, %v8502
  %v8535 = vmul.f32 %v8369, %v8503
  %v8536 = vmul.f32 %v8371, %v8504
  %v8537 = vmul.f32 %v8373, %v8505
  %v8538 = vmul.f32 %v8375, %v8506
  %v8539 = vmul.f32 %v8377, %v8507
  %v8540 = vmul.f32 %v8379, %v8508
  %v8541 = vmul.f32 %v8381, %v8509
  %v8542 = vsel %vm998, %v7496, 0
  %v8545 = vsel %vm998, %v8510, 0
  %v8548 = vsel %vm998, %v8511, 0
  %v8551 = vsel %vm998, %v8512, 0
  %v8554 = vsel %vm998, %v8513, 0
  %v8557 = vsel %vm998, %v8514, 0
  %v8560 = vsel %vm998, %v8515, 0
  %v8563 = vsel %vm998, %v8516, 0
  %v8566 = vsel %vm998, %v8517, 0
  %8568 = vmatprep.subr.mxu0 0.0
  %8569 = vmatpush1.xpose.msra.mxu0 %v8545
  %8570 = vmatprep.subr.mxu0 0.0
  %8571 = vmatpush1.xpose.msra.mxu0 %v8548
  %8572 = vmatprep.subr.mxu0 0.0
  %8573 = vmatpush1.xpose.msra.mxu0 %v8551
  %8574 = vmatprep.subr.mxu0 0.0
  %8575 = vmatpush1.xpose.msra.mxu0 %v8554
  %8576 = vmatprep.subr.mxu0 0.0
  %8577 = vmatpush1.xpose.msra.mxu0 %v8557
  %8578 = vmatprep.subr.mxu0 0.0
  %8579 = vmatpush1.xpose.msra.mxu0 %v8560
  %8580 = vmatprep.subr.mxu0 0.0
  %8581 = vmatpush1.xpose.msra.mxu0 %v8563
  %8582 = vmatprep.subr.mxu0 0.0
  %8583 = vmatpush1.xpose.msra.mxu0 %v8566
  %8584 = vmatprep.subr.mxu0 0.0
  %8585 = vmatpush1.xpose.msra.mxu0 0.0
  %8586 = vmatprep.subr.mxu0 0.0
  %8587 = vmatpush1.xpose.msra.mxu0 0.0
  %8588 = vmatprep.subr.mxu0 0.0
  %8589 = vmatpush1.xpose.msra.mxu0 0.0
  %8590 = vmatprep.subr.mxu0 0.0
  %8591 = vmatpush1.xpose.msra.mxu0 0.0
  %8592 = vmatprep.subr.mxu0 0.0
  %8593 = vmatpush1.xpose.msra.mxu0 0.0
  %8594 = vmatprep.subr.mxu0 0.0
  %8595 = vmatpush1.xpose.msra.mxu0 0.0
  %8596 = vmatprep.subr.mxu0 0.0
  %8597 = vmatpush1.xpose.msra.mxu0 0.0
  %8598 = vmatprep.subr.mxu0 0.0
  %8599 = vmatpush1.xpose.msra.mxu0 0.0
  %8600 = vmatprep.subr.mxu0 0.0
  %8601 = vmatpush1.xpose.msra.mxu0 0.0
  %8602 = vmatprep.subr.mxu0 0.0
  %8603 = vmatpush1.xpose.msra.mxu0 0.0
  %8604 = vmatprep.subr.mxu0 0.0
  %8605 = vmatpush1.xpose.msra.mxu0 0.0
  %8606 = vmatprep.subr.mxu0 0.0
  %8607 = vmatpush1.xpose.msra.mxu0 0.0
  %8608 = vmatprep.subr.mxu0 0.0
  %8609 = vmatpush1.xpose.msra.mxu0 0.0
  %8610 = vmatprep.subr.mxu0 0.0
  %8611 = vmatpush1.xpose.msra.mxu0 0.0
  %8612 = vmatprep.subr.mxu0 0.0
  %8613 = vmatpush1.xpose.msra.mxu0 0.0
  %8614 = vmatprep.subr.mxu0 0.0
  %8615 = vmatpush1.xpose.msra.mxu0 0.0
  %8616 = vmatprep.subr.mxu0 0.0
  %8617 = vmatpush1.xpose.msra.mxu0 0.0
  %8618 = vmatprep.subr.mxu0 0.0
  %8619 = vmatpush1.xpose.msra.mxu0 0.0
  %8620 = vmatprep.subr.mxu0 0.0
  %8621 = vmatpush1.xpose.msra.mxu0 0.0
  %8622 = vmatprep.subr.mxu0 0.0
  %8623 = vmatpush1.xpose.msra.mxu0 0.0
  %8624 = vmatprep.subr.mxu0 0.0
  %8625 = vmatpush1.xpose.msra.mxu0 0.0
  %8626 = vmatprep.subr.mxu0 0.0
  %8627 = vmatpush1.xpose.msra.mxu0 0.0
  %8628 = vmatprep.subr.mxu0 0.0
  %8629 = vmatpush1.xpose.msra.mxu0 0.0
  %8630 = vmatprep.subr.mxu0 0.0
  %8631 = vmatpush1.xpose.msra.mxu0 0.0
  %8632 = vmatprep.mubr.f32.mxu0 0.0
  %8633 = vmatmul.mubr.f32.gmra.mrb[0].mxu0 %v8542
  %v8634 = vpop.f32.mrb[0].mxu0
  %v8635 = vadd.f32 0.0, %v8634
  %v8636 = vpop.f32.mrb[0].mxu0
  %8637 = vdwg.mxu0
  %v8638 = vsel %vm998, %v7504, 0
  %v8641 = vsel %vm998, %v8518, 0
  %v8644 = vsel %vm998, %v8519, 0
  %v8647 = vsel %vm998, %v8520, 0
  %v8650 = vsel %vm998, %v8521, 0
  %v8653 = vsel %vm998, %v8522, 0
  %v8656 = vsel %vm998, %v8523, 0
  %v8659 = vsel %vm998, %v8524, 0
  %v8662 = vsel %vm998, %v8525, 0
  %8664 = vmatprep.subr.mxu0 0.0
  %8665 = vmatpush1.xpose.msra.mxu0 %v8641
  %8666 = vmatprep.subr.mxu0 0.0
  %8667 = vmatpush1.xpose.msra.mxu0 %v8644
  %8668 = vmatprep.subr.mxu0 0.0
  %8669 = vmatpush1.xpose.msra.mxu0 %v8647
  %8670 = vmatprep.subr.mxu0 0.0
  %8671 = vmatpush1.xpose.msra.mxu0 %v8650
  %8672 = vmatprep.subr.mxu0 0.0
  %8673 = vmatpush1.xpose.msra.mxu0 %v8653
  %8674 = vmatprep.subr.mxu0 0.0
  %8675 = vmatpush1.xpose.msra.mxu0 %v8656
  %8676 = vmatprep.subr.mxu0 0.0
  %8677 = vmatpush1.xpose.msra.mxu0 %v8659
  %8678 = vmatprep.subr.mxu0 0.0
  %8679 = vmatpush1.xpose.msra.mxu0 %v8662
  %8680 = vmatprep.subr.mxu0 0.0
  %8681 = vmatpush1.xpose.msra.mxu0 0.0
  %8682 = vmatprep.subr.mxu0 0.0
  %8683 = vmatpush1.xpose.msra.mxu0 0.0
  %8684 = vmatprep.subr.mxu0 0.0
  %8685 = vmatpush1.xpose.msra.mxu0 0.0
  %8686 = vmatprep.subr.mxu0 0.0
  %8687 = vmatpush1.xpose.msra.mxu0 0.0
  %8688 = vmatprep.subr.mxu0 0.0
  %8689 = vmatpush1.xpose.msra.mxu0 0.0
  %8690 = vmatprep.subr.mxu0 0.0
  %8691 = vmatpush1.xpose.msra.mxu0 0.0
  %8692 = vmatprep.subr.mxu0 0.0
  %8693 = vmatpush1.xpose.msra.mxu0 0.0
  %8694 = vmatprep.subr.mxu0 0.0
  %8695 = vmatpush1.xpose.msra.mxu0 0.0
  %8696 = vmatprep.subr.mxu0 0.0
  %8697 = vmatpush1.xpose.msra.mxu0 0.0
  %8698 = vmatprep.subr.mxu0 0.0
  %8699 = vmatpush1.xpose.msra.mxu0 0.0
  %8700 = vmatprep.subr.mxu0 0.0
  %8701 = vmatpush1.xpose.msra.mxu0 0.0
  %8702 = vmatprep.subr.mxu0 0.0
  %8703 = vmatpush1.xpose.msra.mxu0 0.0
  %8704 = vmatprep.subr.mxu0 0.0
  %8705 = vmatpush1.xpose.msra.mxu0 0.0
  %8706 = vmatprep.subr.mxu0 0.0
  %8707 = vmatpush1.xpose.msra.mxu0 0.0
  %8708 = vmatprep.subr.mxu0 0.0
  %8709 = vmatpush1.xpose.msra.mxu0 0.0
  %8710 = vmatprep.subr.mxu0 0.0
  %8711 = vmatpush1.xpose.msra.mxu0 0.0
  %8712 = vmatprep.subr.mxu0 0.0
  %8713 = vmatpush1.xpose.msra.mxu0 0.0
  %8714 = vmatprep.subr.mxu0 0.0
  %8715 = vmatpush1.xpose.msra.mxu0 0.0
  %8716 = vmatprep.subr.mxu0 0.0
  %8717 = vmatpush1.xpose.msra.mxu0 0.0
  %8718 = vmatprep.subr.mxu0 0.0
  %8719 = vmatpush1.xpose.msra.mxu0 0.0
  %8720 = vmatprep.subr.mxu0 0.0
  %8721 = vmatpush1.xpose.msra.mxu0 0.0
  %8722 = vmatprep.subr.mxu0 0.0
  %8723 = vmatpush1.xpose.msra.mxu0 0.0
  %8724 = vmatprep.subr.mxu0 0.0
  %8725 = vmatpush1.xpose.msra.mxu0 0.0
  %8726 = vmatprep.subr.mxu0 0.0
  %8727 = vmatpush1.xpose.msra.mxu0 0.0
  %8728 = vmatprep.mubr.f32.mxu0 0.0
  %8729 = vmatmul.mubr.f32.gmra.mrb[0].mxu0 %v8638
  %v8730 = vpop.f32.mrb[0].mxu0
  %v8731 = vadd.f32 0.0, %v8730
  %v8732 = vpop.f32.mrb[0].mxu0
  %8733 = vdwg.mxu0
  %v8734 = vsel %vm998, %v7503, 0
  %v8737 = vsel %vm998, %v8526, 0
  %v8740 = vsel %vm998, %v8527, 0
  %v8743 = vsel %vm998, %v8528, 0
  %v8746 = vsel %vm998, %v8529, 0
  %v8749 = vsel %vm998, %v8530, 0
  %v8752 = vsel %vm998, %v8531, 0
  %v8755 = vsel %vm998, %v8532, 0
  %v8758 = vsel %vm998, %v8533, 0
  %8760 = vmatprep.subr.mxu0 0.0
  %8761 = vmatpush1.xpose.msra.mxu0 %v8737
  %8762 = vmatprep.subr.mxu0 0.0
  %8763 = vmatpush1.xpose.msra.mxu0 %v8740
  %8764 = vmatprep.subr.mxu0 0.0
  %8765 = vmatpush1.xpose.msra.mxu0 %v8743
  %8766 = vmatprep.subr.mxu0 0.0
  %8767 = vmatpush1.xpose.msra.mxu0 %v8746
  %8768 = vmatprep.subr.mxu0 0.0
  %8769 = vmatpush1.xpose.msra.mxu0 %v8749
  %8770 = vmatprep.subr.mxu0 0.0
  %8771 = vmatpush1.xpose.msra.mxu0 %v8752
  %8772 = vmatprep.subr.mxu0 0.0
  %8773 = vmatpush1.xpose.msra.mxu0 %v8755
  %8774 = vmatprep.subr.mxu0 0.0
  %8775 = vmatpush1.xpose.msra.mxu0 %v8758
  %8776 = vmatprep.subr.mxu0 0.0
  %8777 = vmatpush1.xpose.msra.mxu0 0.0
  %8778 = vmatprep.subr.mxu0 0.0
  %8779 = vmatpush1.xpose.msra.mxu0 0.0
  %8780 = vmatprep.subr.mxu0 0.0
  %8781 = vmatpush1.xpose.msra.mxu0 0.0
  %8782 = vmatprep.subr.mxu0 0.0
  %8783 = vmatpush1.xpose.msra.mxu0 0.0
  %8784 = vmatprep.subr.mxu0 0.0
  %8785 = vmatpush1.xpose.msra.mxu0 0.0
  %8786 = vmatprep.subr.mxu0 0.0
  %8787 = vmatpush1.xpose.msra.mxu0 0.0
  %8788 = vmatprep.subr.mxu0 0.0
  %8789 = vmatpush1.xpose.msra.mxu0 0.0
  %8790 = vmatprep.subr.mxu0 0.0
  %8791 = vmatpush1.xpose.msra.mxu0 0.0
  %8792 = vmatprep.subr.mxu0 0.0
  %8793 = vmatpush1.xpose.msra.mxu0 0.0
  %8794 = vmatprep.subr.mxu0 0.0
  %8795 = vmatpush1.xpose.msra.mxu0 0.0
  %8796 = vmatprep.subr.mxu0 0.0
  %8797 = vmatpush1.xpose.msra.mxu0 0.0
  %8798 = vmatprep.subr.mxu0 0.0
  %8799 = vmatpush1.xpose.msra.mxu0 0.0
  %8800 = vmatprep.subr.mxu0 0.0
  %8801 = vmatpush1.xpose.msra.mxu0 0.0
  %8802 = vmatprep.subr.mxu0 0.0
  %8803 = vmatpush1.xpose.msra.mxu0 0.0
  %8804 = vmatprep.subr.mxu0 0.0
  %8805 = vmatpush1.xpose.msra.mxu0 0.0
  %8806 = vmatprep.subr.mxu0 0.0
  %8807 = vmatpush1.xpose.msra.mxu0 0.0
  %8808 = vmatprep.subr.mxu0 0.0
  %8809 = vmatpush1.xpose.msra.mxu0 0.0
  %8810 = vmatprep.subr.mxu0 0.0
  %8811 = vmatpush1.xpose.msra.mxu0 0.0
  %8812 = vmatprep.subr.mxu0 0.0
  %8813 = vmatpush1.xpose.msra.mxu0 0.0
  %8814 = vmatprep.subr.mxu0 0.0
  %8815 = vmatpush1.xpose.msra.mxu0 0.0
  %8816 = vmatprep.subr.mxu0 0.0
  %8817 = vmatpush1.xpose.msra.mxu0 0.0
  %8818 = vmatprep.subr.mxu0 0.0
  %8819 = vmatpush1.xpose.msra.mxu0 0.0
  %8820 = vmatprep.subr.mxu0 0.0
  %8821 = vmatpush1.xpose.msra.mxu0 0.0
  %8822 = vmatprep.subr.mxu0 0.0
  %8823 = vmatpush1.xpose.msra.mxu0 0.0
  %8824 = vmatprep.mubr.f32.mxu0 0.0
  %8825 = vmatmul.mubr.f32.gmra.mrb[0].mxu0 %v8734
  %v8826 = vpop.f32.mrb[0].mxu0
  %v8827 = vadd.f32 0.0, %v8826
  %v8828 = vpop.f32.mrb[0].mxu0
  %8829 = vdwg.mxu0
  %v8830 = vsel %vm998, %v7505, 0
  %v8833 = vsel %vm998, %v8534, 0
  %v8836 = vsel %vm998, %v8535, 0
  %v8839 = vsel %vm998, %v8536, 0
  %v8842 = vsel %vm998, %v8537, 0
  %v8845 = vsel %vm998, %v8538, 0
  %v8848 = vsel %vm998, %v8539, 0
  %v8851 = vsel %vm998, %v8540, 0
  %v8854 = vsel %vm998, %v8541, 0
  %8856 = vmatprep.subr.mxu0 0.0
  %8857 = vmatpush1.xpose.msra.mxu0 %v8833
  %8858 = vmatprep.subr.mxu0 0.0
  %8859 = vmatpush1.xpose.msra.mxu0 %v8836
  %8860 = vmatprep.subr.mxu0 0.0
  %8861 = vmatpush1.xpose.msra.mxu0 %v8839
  %8862 = vmatprep.subr.mxu0 0.0
  %8863 = vmatpush1.xpose.msra.mxu0 %v8842
  %8864 = vmatprep.subr.mxu0 0.0
  %8865 = vmatpush1.xpose.msra.mxu0 %v8845
  %8866 = vmatprep.subr.mxu0 0.0
  %8867 = vmatpush1.xpose.msra.mxu0 %v8848
  %8868 = vmatprep.subr.mxu0 0.0
  %8869 = vmatpush1.xpose.msra.mxu0 %v8851
  %8870 = vmatprep.subr.mxu0 0.0
  %8871 = vmatpush1.xpose.msra.mxu0 %v8854
  %8872 = vmatprep.subr.mxu0 0.0
  %8873 = vmatpush1.xpose.msra.mxu0 0.0
  %8874 = vmatprep.subr.mxu0 0.0
  %8875 = vmatpush1.xpose.msra.mxu0 0.0
  %8876 = vmatprep.subr.mxu0 0.0
  %8877 = vmatpush1.xpose.msra.mxu0 0.0
  %8878 = vmatprep.subr.mxu0 0.0
  %8879 = vmatpush1.xpose.msra.mxu0 0.0
  %8880 = vmatprep.subr.mxu0 0.0
  %8881 = vmatpush1.xpose.msra.mxu0 0.0
  %8882 = vmatprep.subr.mxu0 0.0
  %8883 = vmatpush1.xpose.msra.mxu0 0.0
  %8884 = vmatprep.subr.mxu0 0.0
  %8885 = vmatpush1.xpose.msra.mxu0 0.0
  %8886 = vmatprep.subr.mxu0 0.0
  %8887 = vmatpush1.xpose.msra.mxu0 0.0
  %8888 = vmatprep.subr.mxu0 0.0
  %8889 = vmatpush1.xpose.msra.mxu0 0.0
  %8890 = vmatprep.subr.mxu0 0.0
  %8891 = vmatpush1.xpose.msra.mxu0 0.0
  %8892 = vmatprep.subr.mxu0 0.0
  %8893 = vmatpush1.xpose.msra.mxu0 0.0
  %8894 = vmatprep.subr.mxu0 0.0
  %8895 = vmatpush1.xpose.msra.mxu0 0.0
  %8896 = vmatprep.subr.mxu0 0.0
  %8897 = vmatpush1.xpose.msra.mxu0 0.0
  %8898 = vmatprep.subr.mxu0 0.0
  %8899 = vmatpush1.xpose.msra.mxu0 0.0
  %8900 = vmatprep.subr.mxu0 0.0
  %8901 = vmatpush1.xpose.msra.mxu0 0.0
  %8902 = vmatprep.subr.mxu0 0.0
  %8903 = vmatpush1.xpose.msra.mxu0 0.0
  %8904 = vmatprep.subr.mxu0 0.0
  %8905 = vmatpush1.xpose.msra.mxu0 0.0
  %8906 = vmatprep.subr.mxu0 0.0
  %8907 = vmatpush1.xpose.msra.mxu0 0.0
  %8908 = vmatprep.subr.mxu0 0.0
  %8909 = vmatpush1.xpose.msra.mxu0 0.0
  %8910 = vmatprep.subr.mxu0 0.0
  %8911 = vmatpush1.xpose.msra.mxu0 0.0
  %8912 = vmatprep.subr.mxu0 0.0
  %8913 = vmatpush1.xpose.msra.mxu0 0.0
  %8914 = vmatprep.subr.mxu0 0.0
  %8915 = vmatpush1.xpose.msra.mxu0 0.0
  %8916 = vmatprep.subr.mxu0 0.0
  %8917 = vmatpush1.xpose.msra.mxu0 0.0
  %8918 = vmatprep.subr.mxu0 0.0
  %8919 = vmatpush1.xpose.msra.mxu0 0.0
  %8920 = vmatprep.mubr.f32.mxu0 0.0
  %8921 = vmatmul.mubr.f32.gmra.mrb[0].mxu0 %v8830
  %v8922 = vpop.f32.mrb[0].mxu0
  %v8923 = vadd.f32 0.0, %v8922
  %v8924 = vpop.f32.mrb[0].mxu0
  %8925 = vdwg.mxu0
  %v8927 = vunpack.c.l.s4 1983009808
  %v8928 = vunpack.c.0.s8 %v8927
  %v8929 = vlaneseq
  %v8930 = vshrl.u32 %v8929, 7
  %v8931 = vsub.s32 %v8928, %v8930
  %v8932 = vrot.slane %v7456, %v8931
  %8933 = vrot.lane.b32.xlu0 %v8932, 64
  %v8934 = vpop.permute.xlu0 %8933
  %8936 = vxpose.xlu0.b32.start [1/16] %v8934, 128
  %8937 = vxpose.xlu0.b32.cont [2/16] 0.0, 128
  %8938 = vxpose.xlu0.b32.cont [3/16] 0.0, 128
  %8939 = vxpose.xlu0.b32.cont [4/16] 0.0, 128
  %8940 = vxpose.xlu0.b32.cont [5/16] 0.0, 128
  %8941 = vxpose.xlu0.b32.cont [6/16] 0.0, 128
  %8942 = vxpose.xlu0.b32.cont [7/16] 0.0, 128
  %8943 = vxpose.xlu0.b32.cont [8/16] 0.0, 128
  %8944 = vxpose.xlu0.b32.cont [9/16] 0.0, 128
  %8945 = vxpose.xlu0.b32.cont [10/16] 0.0, 128
  %8946 = vxpose.xlu0.b32.cont [11/16] 0.0, 128
  %8947 = vxpose.xlu0.b32.cont [12/16] 0.0, 128
  %8948 = vxpose.xlu0.b32.cont [13/16] 0.0, 128
  %8949 = vxpose.xlu0.b32.cont [14/16] 0.0, 128
  %8950 = vxpose.xlu0.b32.cont [15/16] 0.0, 128
  %8951 = vxpose.xlu0.b32.end [16/16] 0.0, 128
  %v8952 = vpop.trf.xlu0
  %v8953 = vpop.trf.xlu0
  %v8954 = vpop.trf.xlu0
  %v8955 = vpop.trf.xlu0
  %v8956 = vpop.trf.xlu0
  %v8957 = vpop.trf.xlu0
  %v8958 = vpop.trf.xlu0
  %v8959 = vpop.trf.xlu0
  %v8960 = vpop.trf.xlu0
  %v8961 = vpop.trf.xlu0
  %v8962 = vpop.trf.xlu0
  %v8963 = vpop.trf.xlu0
  %v8964 = vpop.trf.xlu0
  %v8965 = vpop.trf.xlu0
  %v8966 = vpop.trf.xlu0
  %v8967 = vpop.trf.xlu0
  %v8969 = vunpack.c.l.s4 1983009808
  %v8970 = vunpack.c.0.s8 %v8969
  %v8971 = vlaneseq
  %v8972 = vshrl.u32 %v8971, 7
  %v8973 = vsub.s32 %v8970, %v8972
  %v8974 = vrot.slane %v7478, %v8973
  %8975 = vrot.lane.b32.xlu0 %v8974, 64
  %v8976 = vpop.permute.xlu0 %8975
  %v8978 = vsel %vm344, %v8952, 0
  %v8981 = vsel %vm344, %v8953, 0
  %v8984 = vsel %vm344, %v8954, 0
  %v8987 = vsel %vm344, %v8955, 0
  %v8990 = vsel %vm344, %v8956, 0
  %v8993 = vsel %vm344, %v8957, 0
  %v8996 = vsel %vm344, %v8958, 0
  %v8999 = vsel %vm344, %v8959, 0
  %v9001 = vsel %vm369, %v8976, 0
  %9003 = vmatprep.subr.mxu0 0.0
  %9004 = vmatpush1.msra.mxu0 %v9001
  %9005 = vmatprep.subr.mxu0 0.0
  %9006 = vmatpush1.msra.mxu0 0.0
  %9007 = vmatprep.subr.mxu0 0.0
  %9008 = vmatpush1.msra.mxu0 0.0
  %9009 = vmatprep.subr.mxu0 0.0
  %9010 = vmatpush1.msra.mxu0 0.0
  %9011 = vmatprep.subr.mxu0 0.0
  %9012 = vmatpush1.msra.mxu0 0.0
  %9013 = vmatprep.subr.mxu0 0.0
  %9014 = vmatpush1.msra.mxu0 0.0
  %9015 = vmatprep.subr.mxu0 0.0
  %9016 = vmatpush1.msra.mxu0 0.0
  %9017 = vmatprep.subr.mxu0 0.0
  %9018 = vmatpush1.msra.mxu0 0.0
  %9019 = vmatprep.subr.mxu0 0.0
  %9020 = vmatpush1.msra.mxu0 0.0
  %9021 = vmatprep.subr.mxu0 0.0
  %9022 = vmatpush1.msra.mxu0 0.0
  %9023 = vmatprep.subr.mxu0 0.0
  %9024 = vmatpush1.msra.mxu0 0.0
  %9025 = vmatprep.subr.mxu0 0.0
  %9026 = vmatpush1.msra.mxu0 0.0
  %9027 = vmatprep.subr.mxu0 0.0
  %9028 = vmatpush1.msra.mxu0 0.0
  %9029 = vmatprep.subr.mxu0 0.0
  %9030 = vmatpush1.msra.mxu0 0.0
  %9031 = vmatprep.subr.mxu0 0.0
  %9032 = vmatpush1.msra.mxu0 0.0
  %9033 = vmatprep.subr.mxu0 0.0
  %9034 = vmatpush1.msra.mxu0 0.0
  %9035 = vmatprep.subr.mxu0 0.0
  %9036 = vmatpush1.msra.mxu0 0.0
  %9037 = vmatprep.subr.mxu0 0.0
  %9038 = vmatpush1.msra.mxu0 0.0
  %9039 = vmatprep.subr.mxu0 0.0
  %9040 = vmatpush1.msra.mxu0 0.0
  %9041 = vmatprep.subr.mxu0 0.0
  %9042 = vmatpush1.msra.mxu0 0.0
  %9043 = vmatprep.subr.mxu0 0.0
  %9044 = vmatpush1.msra.mxu0 0.0
  %9045 = vmatprep.subr.mxu0 0.0
  %9046 = vmatpush1.msra.mxu0 0.0
  %9047 = vmatprep.subr.mxu0 0.0
  %9048 = vmatpush1.msra.mxu0 0.0
  %9049 = vmatprep.subr.mxu0 0.0
  %9050 = vmatpush1.msra.mxu0 0.0
  %9051 = vmatprep.subr.mxu0 0.0
  %9052 = vmatpush1.msra.mxu0 0.0
  %9053 = vmatprep.subr.mxu0 0.0
  %9054 = vmatpush1.msra.mxu0 0.0
  %9055 = vmatprep.subr.mxu0 0.0
  %9056 = vmatpush1.msra.mxu0 0.0
  %9057 = vmatprep.subr.mxu0 0.0
  %9058 = vmatpush1.msra.mxu0 0.0
  %9059 = vmatprep.subr.mxu0 0.0
  %9060 = vmatpush1.msra.mxu0 0.0
  %9061 = vmatprep.subr.mxu0 0.0
  %9062 = vmatpush1.msra.mxu0 0.0
  %9063 = vmatprep.subr.mxu0 0.0
  %9064 = vmatpush1.msra.mxu0 0.0
  %9065 = vmatprep.subr.mxu0 0.0
  %9066 = vmatpush1.msra.mxu0 0.0
  %9067 = vmatprep.mubr.f32.mxu0 0.0
  %9068 = vmatmul.mubr.f32.gmra.mrb[0].mxu0 %v8978
  %v9069 = vpop.f32.mrb[0].mxu0
  %v9070 = vadd.f32 0.0, %v9069
  %v9071 = vpop.f32.mrb[0].mxu0
  %9072 = vmatprep.mubr.f32.mxu0 0.0
  %9073 = vmatmul.mubr.f32.gmra.mrb[0].mxu0 %v8981
  %v9074 = vpop.f32.mrb[0].mxu0
  %v9075 = vadd.f32 0.0, %v9074
  %v9076 = vpop.f32.mrb[0].mxu0
  %9077 = vmatprep.mubr.f32.mxu0 0.0
  %9078 = vmatmul.mubr.f32.gmra.mrb[0].mxu0 %v8984
  %v9079 = vpop.f32.mrb[0].mxu0
  %v9080 = vadd.f32 0.0, %v9079
  %v9081 = vpop.f32.mrb[0].mxu0
  %9082 = vmatprep.mubr.f32.mxu0 0.0
  %9083 = vmatmul.mubr.f32.gmra.mrb[0].mxu0 %v8987
  %v9084 = vpop.f32.mrb[0].mxu0
  %v9085 = vadd.f32 0.0, %v9084
  %v9086 = vpop.f32.mrb[0].mxu0
  %9087 = vmatprep.mubr.f32.mxu0 0.0
  %9088 = vmatmul.mubr.f32.gmra.mrb[0].mxu0 %v8990
  %v9089 = vpop.f32.mrb[0].mxu0
  %v9090 = vadd.f32 0.0, %v9089
  %v9091 = vpop.f32.mrb[0].mxu0
  %9092 = vmatprep.mubr.f32.mxu0 0.0
  %9093 = vmatmul.mubr.f32.gmra.mrb[0].mxu0 %v8993
  %v9094 = vpop.f32.mrb[0].mxu0
  %v9095 = vadd.f32 0.0, %v9094
  %v9096 = vpop.f32.mrb[0].mxu0
  %9097 = vmatprep.mubr.f32.mxu0 0.0
  %9098 = vmatmul.mubr.f32.gmra.mrb[0].mxu0 %v8996
  %v9099 = vpop.f32.mrb[0].mxu0
  %v9100 = vadd.f32 0.0, %v9099
  %v9101 = vpop.f32.mrb[0].mxu0
  %9102 = vmatprep.mubr.f32.mxu0 0.0
  %9103 = vmatmul.mubr.f32.gmra.mrb[0].mxu0 %v8999
  %v9104 = vpop.f32.mrb[0].mxu0
  %v9105 = vadd.f32 0.0, %v9104
  %v9106 = vpop.f32.mrb[0].mxu0
  %9107 = vdwg.mxu0
  %v9109 = vunpack.c.l.s4 1983009808
  %v9110 = vunpack.c.0.s8 %v9109
  %v9111 = vlaneseq
  %v9112 = vshrl.u32 %v9111, 7
  %v9113 = vsub.s32 %v9110, %v9112
  %v9114 = vrot.slane %v7464, %v9113
  %9115 = vrot.lane.b32.xlu0 %v9114, 64
  %v9116 = vpop.permute.xlu0 %9115
  %9118 = vxpose.xlu0.b32.start [1/16] %v9116, 128
  %9119 = vxpose.xlu0.b32.cont [2/16] 0.0, 128
  %9120 = vxpose.xlu0.b32.cont [3/16] 0.0, 128
  %9121 = vxpose.xlu0.b32.cont [4/16] 0.0, 128
  %9122 = vxpose.xlu0.b32.cont [5/16] 0.0, 128
  %9123 = vxpose.xlu0.b32.cont [6/16] 0.0, 128
  %9124 = vxpose.xlu0.b32.cont [7/16] 0.0, 128
  %9125 = vxpose.xlu0.b32.cont [8/16] 0.0, 128
  %9126 = vxpose.xlu0.b32.cont [9/16] 0.0, 128
  %9127 = vxpose.xlu0.b32.cont [10/16] 0.0, 128
  %9128 = vxpose.xlu0.b32.cont [11/16] 0.0, 128
  %9129 = vxpose.xlu0.b32.cont [12/16] 0.0, 128
  %9130 = vxpose.xlu0.b32.cont [13/16] 0.0, 128
  %9131 = vxpose.xlu0.b32.cont [14/16] 0.0, 128
  %9132 = vxpose.xlu0.b32.cont [15/16] 0.0, 128
  %9133 = vxpose.xlu0.b32.end [16/16] 0.0, 128
  %v9134 = vpop.trf.xlu0
  %v9135 = vpop.trf.xlu0
  %v9136 = vpop.trf.xlu0
  %v9137 = vpop.trf.xlu0
  %v9138 = vpop.trf.xlu0
  %v9139 = vpop.trf.xlu0
  %v9140 = vpop.trf.xlu0
  %v9141 = vpop.trf.xlu0
  %v9142 = vpop.trf.xlu0
  %v9143 = vpop.trf.xlu0
  %v9144 = vpop.trf.xlu0
  %v9145 = vpop.trf.xlu0
  %v9146 = vpop.trf.xlu0
  %v9147 = vpop.trf.xlu0
  %v9148 = vpop.trf.xlu0
  %v9149 = vpop.trf.xlu0
  %v9151 = vunpack.c.l.s4 1983009808
  %v9152 = vunpack.c.0.s8 %v9151
  %v9153 = vlaneseq
  %v9154 = vshrl.u32 %v9153, 7
  %v9155 = vsub.s32 %v9152, %v9154
  %v9156 = vrot.slane %v7486, %v9155
  %9157 = vrot.lane.b32.xlu0 %v9156, 64
  %v9158 = vpop.permute.xlu0 %9157
  %v9160 = vsel %vm344, %v9134, 0
  %v9163 = vsel %vm344, %v9135, 0
  %v9166 = vsel %vm344, %v9136, 0
  %v9169 = vsel %vm344, %v9137, 0
  %v9172 = vsel %vm344, %v9138, 0
  %v9175 = vsel %vm344, %v9139, 0
  %v9178 = vsel %vm344, %v9140, 0
  %v9181 = vsel %vm344, %v9141, 0
  %v9183 = vsel %vm369, %v9158, 0
  %9185 = vmatprep.subr.mxu0 0.0
  %9186 = vmatpush1.msra.mxu0 %v9183
  %9187 = vmatprep.subr.mxu0 0.0
  %9188 = vmatpush1.msra.mxu0 0.0
  %9189 = vmatprep.subr.mxu0 0.0
  %9190 = vmatpush1.msra.mxu0 0.0
  %9191 = vmatprep.subr.mxu0 0.0
  %9192 = vmatpush1.msra.mxu0 0.0
  %9193 = vmatprep.subr.mxu0 0.0
  %9194 = vmatpush1.msra.mxu0 0.0
  %9195 = vmatprep.subr.mxu0 0.0
  %9196 = vmatpush1.msra.mxu0 0.0
  %9197 = vmatprep.subr.mxu0 0.0
  %9198 = vmatpush1.msra.mxu0 0.0
  %9199 = vmatprep.subr.mxu0 0.0
  %9200 = vmatpush1.msra.mxu0 0.0
  %9201 = vmatprep.subr.mxu0 0.0
  %9202 = vmatpush1.msra.mxu0 0.0
  %9203 = vmatprep.subr.mxu0 0.0
  %9204 = vmatpush1.msra.mxu0 0.0
  %9205 = vmatprep.subr.mxu0 0.0
  %9206 = vmatpush1.msra.mxu0 0.0
  %9207 = vmatprep.subr.mxu0 0.0
  %9208 = vmatpush1.msra.mxu0 0.0
  %9209 = vmatprep.subr.mxu0 0.0
  %9210 = vmatpush1.msra.mxu0 0.0
  %9211 = vmatprep.subr.mxu0 0.0
  %9212 = vmatpush1.msra.mxu0 0.0
  %9213 = vmatprep.subr.mxu0 0.0
  %9214 = vmatpush1.msra.mxu0 0.0
  %9215 = vmatprep.subr.mxu0 0.0
  %9216 = vmatpush1.msra.mxu0 0.0
  %9217 = vmatprep.subr.mxu0 0.0
  %9218 = vmatpush1.msra.mxu0 0.0
  %9219 = vmatprep.subr.mxu0 0.0
  %9220 = vmatpush1.msra.mxu0 0.0
  %9221 = vmatprep.subr.mxu0 0.0
  %9222 = vmatpush1.msra.mxu0 0.0
  %9223 = vmatprep.subr.mxu0 0.0
  %9224 = vmatpush1.msra.mxu0 0.0
  %9225 = vmatprep.subr.mxu0 0.0
  %9226 = vmatpush1.msra.mxu0 0.0
  %9227 = vmatprep.subr.mxu0 0.0
  %9228 = vmatpush1.msra.mxu0 0.0
  %9229 = vmatprep.subr.mxu0 0.0
  %9230 = vmatpush1.msra.mxu0 0.0
  %9231 = vmatprep.subr.mxu0 0.0
  %9232 = vmatpush1.msra.mxu0 0.0
  %9233 = vmatprep.subr.mxu0 0.0
  %9234 = vmatpush1.msra.mxu0 0.0
  %9235 = vmatprep.subr.mxu0 0.0
  %9236 = vmatpush1.msra.mxu0 0.0
  %9237 = vmatprep.subr.mxu0 0.0
  %9238 = vmatpush1.msra.mxu0 0.0
  %9239 = vmatprep.subr.mxu0 0.0
  %9240 = vmatpush1.msra.mxu0 0.0
  %9241 = vmatprep.subr.mxu0 0.0
  %9242 = vmatpush1.msra.mxu0 0.0
  %9243 = vmatprep.subr.mxu0 0.0
  %9244 = vmatpush1.msra.mxu0 0.0
  %9245 = vmatprep.subr.mxu0 0.0
  %9246 = vmatpush1.msra.mxu0 0.0
  %9247 = vmatprep.subr.mxu0 0.0
  %9248 = vmatpush1.msra.mxu0 0.0
  %9249 = vmatprep.mubr.f32.mxu0 0.0
  %9250 = vmatmul.mubr.f32.gmra.mrb[0].mxu0 %v9160
  %v9251 = vpop.f32.mrb[0].mxu0
  %v9252 = vadd.f32 0.0, %v9251
  %v9253 = vpop.f32.mrb[0].mxu0
  %9254 = vmatprep.mubr.f32.mxu0 0.0
  %9255 = vmatmul.mubr.f32.gmra.mrb[0].mxu0 %v9163
  %v9256 = vpop.f32.mrb[0].mxu0
  %v9257 = vadd.f32 0.0, %v9256
  %v9258 = vpop.f32.mrb[0].mxu0
  %9259 = vmatprep.mubr.f32.mxu0 0.0
  %9260 = vmatmul.mubr.f32.gmra.mrb[0].mxu0 %v9166
  %v9261 = vpop.f32.mrb[0].mxu0
  %v9262 = vadd.f32 0.0, %v9261
  %v9263 = vpop.f32.mrb[0].mxu0
  %9264 = vmatprep.mubr.f32.mxu0 0.0
  %9265 = vmatmul.mubr.f32.gmra.mrb[0].mxu0 %v9169
  %v9266 = vpop.f32.mrb[0].mxu0
  %v9267 = vadd.f32 0.0, %v9266
  %v9268 = vpop.f32.mrb[0].mxu0
  %9269 = vmatprep.mubr.f32.mxu0 0.0
  %9270 = vmatmul.mubr.f32.gmra.mrb[0].mxu0 %v9172
  %v9271 = vpop.f32.mrb[0].mxu0
  %v9272 = vadd.f32 0.0, %v9271
  %v9273 = vpop.f32.mrb[0].mxu0
  %9274 = vmatprep.mubr.f32.mxu0 0.0
  %9275 = vmatmul.mubr.f32.gmra.mrb[0].mxu0 %v9175
  %v9276 = vpop.f32.mrb[0].mxu0
  %v9277 = vadd.f32 0.0, %v9276
  %v9278 = vpop.f32.mrb[0].mxu0
  %9279 = vmatprep.mubr.f32.mxu0 0.0
  %9280 = vmatmul.mubr.f32.gmra.mrb[0].mxu0 %v9178
  %v9281 = vpop.f32.mrb[0].mxu0
  %v9282 = vadd.f32 0.0, %v9281
  %v9283 = vpop.f32.mrb[0].mxu0
  %9284 = vmatprep.mubr.f32.mxu0 0.0
  %9285 = vmatmul.mubr.f32.gmra.mrb[0].mxu0 %v9181
  %v9286 = vpop.f32.mrb[0].mxu0
  %v9287 = vadd.f32 0.0, %v9286
  %v9288 = vpop.f32.mrb[0].mxu0
  %9289 = vdwg.mxu0
  %v9291 = vunpack.c.l.s4 1983009808
  %v9292 = vunpack.c.0.s8 %v9291
  %v9293 = vlaneseq
  %v9294 = vshrl.u32 %v9293, 7
  %v9295 = vsub.s32 %v9292, %v9294
  %v9296 = vrot.slane %v7463, %v9295
  %9297 = vrot.lane.b32.xlu0 %v9296, 64
  %v9298 = vpop.permute.xlu0 %9297
  %9300 = vxpose.xlu0.b32.start [1/16] %v9298, 128
  %9301 = vxpose.xlu0.b32.cont [2/16] 0.0, 128
  %9302 = vxpose.xlu0.b32.cont [3/16] 0.0, 128
  %9303 = vxpose.xlu0.b32.cont [4/16] 0.0, 128
  %9304 = vxpose.xlu0.b32.cont [5/16] 0.0, 128
  %9305 = vxpose.xlu0.b32.cont [6/16] 0.0, 128
  %9306 = vxpose.xlu0.b32.cont [7/16] 0.0, 128
  %9307 = vxpose.xlu0.b32.cont [8/16] 0.0, 128
  %9308 = vxpose.xlu0.b32.cont [9/16] 0.0, 128
  %9309 = vxpose.xlu0.b32.cont [10/16] 0.0, 128
  %9310 = vxpose.xlu0.b32.cont [11/16] 0.0, 128
  %9311 = vxpose.xlu0.b32.cont [12/16] 0.0, 128
  %9312 = vxpose.xlu0.b32.cont [13/16] 0.0, 128
  %9313 = vxpose.xlu0.b32.cont [14/16] 0.0, 128
  %9314 = vxpose.xlu0.b32.cont [15/16] 0.0, 128
  %9315 = vxpose.xlu0.b32.end [16/16] 0.0, 128
  %v9316 = vpop.trf.xlu0
  %v9317 = vpop.trf.xlu0
  %v9318 = vpop.trf.xlu0
  %v9319 = vpop.trf.xlu0
  %v9320 = vpop.trf.xlu0
  %v9321 = vpop.trf.xlu0
  %v9322 = vpop.trf.xlu0
  %v9323 = vpop.trf.xlu0
  %v9324 = vpop.trf.xlu0
  %v9325 = vpop.trf.xlu0
  %v9326 = vpop.trf.xlu0
  %v9327 = vpop.trf.xlu0
  %v9328 = vpop.trf.xlu0
  %v9329 = vpop.trf.xlu0
  %v9330 = vpop.trf.xlu0
  %v9331 = vpop.trf.xlu0
  %v9333 = vunpack.c.l.s4 1983009808
  %v9334 = vunpack.c.0.s8 %v9333
  %v9335 = vlaneseq
  %v9336 = vshrl.u32 %v9335, 7
  %v9337 = vsub.s32 %v9334, %v9336
  %v9338 = vrot.slane %v7485, %v9337
  %9339 = vrot.lane.b32.xlu0 %v9338, 64
  %v9340 = vpop.permute.xlu0 %9339
  %v9342 = vsel %vm344, %v9316, 0
  %v9345 = vsel %vm344, %v9317, 0
  %v9348 = vsel %vm344, %v9318, 0
  %v9351 = vsel %vm344, %v9319, 0
  %v9354 = vsel %vm344, %v9320, 0
  %v9357 = vsel %vm344, %v9321, 0
  %v9360 = vsel %vm344, %v9322, 0
  %v9363 = vsel %vm344, %v9323, 0
  %v9365 = vsel %vm369, %v9340, 0
  %9367 = vmatprep.subr.mxu0 0.0
  %9368 = vmatpush1.msra.mxu0 %v9365
  %9369 = vmatprep.subr.mxu0 0.0
  %9370 = vmatpush1.msra.mxu0 0.0
  %9371 = vmatprep.subr.mxu0 0.0
  %9372 = vmatpush1.msra.mxu0 0.0
  %9373 = vmatprep.subr.mxu0 0.0
  %9374 = vmatpush1.msra.mxu0 0.0
  %9375 = vmatprep.subr.mxu0 0.0
  %9376 = vmatpush1.msra.mxu0 0.0
  %9377 = vmatprep.subr.mxu0 0.0
  %9378 = vmatpush1.msra.mxu0 0.0
  %9379 = vmatprep.subr.mxu0 0.0
  %9380 = vmatpush1.msra.mxu0 0.0
  %9381 = vmatprep.subr.mxu0 0.0
  %9382 = vmatpush1.msra.mxu0 0.0
  %9383 = vmatprep.subr.mxu0 0.0
  %9384 = vmatpush1.msra.mxu0 0.0
  %9385 = vmatprep.subr.mxu0 0.0
  %9386 = vmatpush1.msra.mxu0 0.0
  %9387 = vmatprep.subr.mxu0 0.0
  %9388 = vmatpush1.msra.mxu0 0.0
  %9389 = vmatprep.subr.mxu0 0.0
  %9390 = vmatpush1.msra.mxu0 0.0
  %9391 = vmatprep.subr.mxu0 0.0
  %9392 = vmatpush1.msra.mxu0 0.0
  %9393 = vmatprep.subr.mxu0 0.0
  %9394 = vmatpush1.msra.mxu0 0.0
  %9395 = vmatprep.subr.mxu0 0.0
  %9396 = vmatpush1.msra.mxu0 0.0
  %9397 = vmatprep.subr.mxu0 0.0
  %9398 = vmatpush1.msra.mxu0 0.0
  %9399 = vmatprep.subr.mxu0 0.0
  %9400 = vmatpush1.msra.mxu0 0.0
  %9401 = vmatprep.subr.mxu0 0.0
  %9402 = vmatpush1.msra.mxu0 0.0
  %9403 = vmatprep.subr.mxu0 0.0
  %9404 = vmatpush1.msra.mxu0 0.0
  %9405 = vmatprep.subr.mxu0 0.0
  %9406 = vmatpush1.msra.mxu0 0.0
  %9407 = vmatprep.subr.mxu0 0.0
  %9408 = vmatpush1.msra.mxu0 0.0
  %9409 = vmatprep.subr.mxu0 0.0
  %9410 = vmatpush1.msra.mxu0 0.0
  %9411 = vmatprep.subr.mxu0 0.0
  %9412 = vmatpush1.msra.mxu0 0.0
  %9413 = vmatprep.subr.mxu0 0.0
  %9414 = vmatpush1.msra.mxu0 0.0
  %9415 = vmatprep.subr.mxu0 0.0
  %9416 = vmatpush1.msra.mxu0 0.0
  %9417 = vmatprep.subr.mxu0 0.0
  %9418 = vmatpush1.msra.mxu0 0.0
  %9419 = vmatprep.subr.mxu0 0.0
  %9420 = vmatpush1.msra.mxu0 0.0
  %9421 = vmatprep.subr.mxu0 0.0
  %9422 = vmatpush1.msra.mxu0 0.0
  %9423 = vmatprep.subr.mxu0 0.0
  %9424 = vmatpush1.msra.mxu0 0.0
  %9425 = vmatprep.subr.mxu0 0.0
  %9426 = vmatpush1.msra.mxu0 0.0
  %9427 = vmatprep.subr.mxu0 0.0
  %9428 = vmatpush1.msra.mxu0 0.0
  %9429 = vmatprep.subr.mxu0 0.0
  %9430 = vmatpush1.msra.mxu0 0.0
  %9431 = vmatprep.mubr.f32.mxu0 0.0
  %9432 = vmatmul.mubr.f32.gmra.mrb[0].mxu0 %v9342
  %v9433 = vpop.f32.mrb[0].mxu0
  %v9434 = vadd.f32 0.0, %v9433
  %v9435 = vpop.f32.mrb[0].mxu0
  %9436 = vmatprep.mubr.f32.mxu0 0.0
  %9437 = vmatmul.mubr.f32.gmra.mrb[0].mxu0 %v9345
  %v9438 = vpop.f32.mrb[0].mxu0
  %v9439 = vadd.f32 0.0, %v9438
  %v9440 = vpop.f32.mrb[0].mxu0
  %9441 = vmatprep.mubr.f32.mxu0 0.0
  %9442 = vmatmul.mubr.f32.gmra.mrb[0].mxu0 %v9348
  %v9443 = vpop.f32.mrb[0].mxu0
  %v9444 = vadd.f32 0.0, %v9443
  %v9445 = vpop.f32.mrb[0].mxu0
  %9446 = vmatprep.mubr.f32.mxu0 0.0
  %9447 = vmatmul.mubr.f32.gmra.mrb[0].mxu0 %v9351
  %v9448 = vpop.f32.mrb[0].mxu0
  %v9449 = vadd.f32 0.0, %v9448
  %v9450 = vpop.f32.mrb[0].mxu0
  %9451 = vmatprep.mubr.f32.mxu0 0.0
  %9452 = vmatmul.mubr.f32.gmra.mrb[0].mxu0 %v9354
  %v9453 = vpop.f32.mrb[0].mxu0
  %v9454 = vadd.f32 0.0, %v9453
  %v9455 = vpop.f32.mrb[0].mxu0
  %9456 = vmatprep.mubr.f32.mxu0 0.0
  %9457 = vmatmul.mubr.f32.gmra.mrb[0].mxu0 %v9357
  %v9458 = vpop.f32.mrb[0].mxu0
  %v9459 = vadd.f32 0.0, %v9458
  %v9460 = vpop.f32.mrb[0].mxu0
  %9461 = vmatprep.mubr.f32.mxu0 0.0
  %9462 = vmatmul.mubr.f32.gmra.mrb[0].mxu0 %v9360
  %v9463 = vpop.f32.mrb[0].mxu0
  %v9464 = vadd.f32 0.0, %v9463
  %v9465 = vpop.f32.mrb[0].mxu0
  %9466 = vmatprep.mubr.f32.mxu0 0.0
  %9467 = vmatmul.mubr.f32.gmra.mrb[0].mxu0 %v9363
  %v9468 = vpop.f32.mrb[0].mxu0
  %v9469 = vadd.f32 0.0, %v9468
  %v9470 = vpop.f32.mrb[0].mxu0
  %9471 = vdwg.mxu0
  %v9473 = vunpack.c.l.s4 1983009808
  %v9474 = vunpack.c.0.s8 %v9473
  %v9475 = vlaneseq
  %v9476 = vshrl.u32 %v9475, 7
  %v9477 = vsub.s32 %v9474, %v9476
  %v9478 = vrot.slane %v7465, %v9477
  %9479 = vrot.lane.b32.xlu0 %v9478, 64
  %v9480 = vpop.permute.xlu0 %9479
  %9482 = vxpose.xlu0.b32.start [1/16] %v9480, 128
  %9483 = vxpose.xlu0.b32.cont [2/16] 0.0, 128
  %9484 = vxpose.xlu0.b32.cont [3/16] 0.0, 128
  %9485 = vxpose.xlu0.b32.cont [4/16] 0.0, 128
  %9486 = vxpose.xlu0.b32.cont [5/16] 0.0, 128
  %9487 = vxpose.xlu0.b32.cont [6/16] 0.0, 128
  %9488 = vxpose.xlu0.b32.cont [7/16] 0.0, 128
  %9489 = vxpose.xlu0.b32.cont [8/16] 0.0, 128
  %9490 = vxpose.xlu0.b32.cont [9/16] 0.0, 128
  %9491 = vxpose.xlu0.b32.cont [10/16] 0.0, 128
  %9492 = vxpose.xlu0.b32.cont [11/16] 0.0, 128
  %9493 = vxpose.xlu0.b32.cont [12/16] 0.0, 128
  %9494 = vxpose.xlu0.b32.cont [13/16] 0.0, 128
  %9495 = vxpose.xlu0.b32.cont [14/16] 0.0, 128
  %9496 = vxpose.xlu0.b32.cont [15/16] 0.0, 128
  %9497 = vxpose.xlu0.b32.end [16/16] 0.0, 128
  %v9498 = vpop.trf.xlu0
  %v9499 = vpop.trf.xlu0
  %v9500 = vpop.trf.xlu0
  %v9501 = vpop.trf.xlu0
  %v9502 = vpop.trf.xlu0
  %v9503 = vpop.trf.xlu0
  %v9504 = vpop.trf.xlu0
  %v9505 = vpop.trf.xlu0
  %v9506 = vpop.trf.xlu0
  %v9507 = vpop.trf.xlu0
  %v9508 = vpop.trf.xlu0
  %v9509 = vpop.trf.xlu0
  %v9510 = vpop.trf.xlu0
  %v9511 = vpop.trf.xlu0
  %v9512 = vpop.trf.xlu0
  %v9513 = vpop.trf.xlu0
  %v9515 = vunpack.c.l.s4 1983009808
  %v9516 = vunpack.c.0.s8 %v9515
  %v9517 = vlaneseq
  %v9518 = vshrl.u32 %v9517, 7
  %v9519 = vsub.s32 %v9516, %v9518
  %v9520 = vrot.slane %v7487, %v9519
  %9521 = vrot.lane.b32.xlu0 %v9520, 64
  %v9522 = vpop.permute.xlu0 %9521
  %v9524 = vsel %vm344, %v9498, 0
  %v9527 = vsel %vm344, %v9499, 0
  %v9530 = vsel %vm344, %v9500, 0
  %v9533 = vsel %vm344, %v9501, 0
  %v9536 = vsel %vm344, %v9502, 0
  %v9539 = vsel %vm344, %v9503, 0
  %v9542 = vsel %vm344, %v9504, 0
  %v9545 = vsel %vm344, %v9505, 0
  %v9547 = vsel %vm369, %v9522, 0
  %9549 = vmatprep.subr.mxu0 0.0
  %9550 = vmatpush1.msra.mxu0 %v9547
  %9551 = vmatprep.subr.mxu0 0.0
  %9552 = vmatpush1.msra.mxu0 0.0
  %9553 = vmatprep.subr.mxu0 0.0
  %9554 = vmatpush1.msra.mxu0 0.0
  %9555 = vmatprep.subr.mxu0 0.0
  %9556 = vmatpush1.msra.mxu0 0.0
  %9557 = vmatprep.subr.mxu0 0.0
  %9558 = vmatpush1.msra.mxu0 0.0
  %9559 = vmatprep.subr.mxu0 0.0
  %9560 = vmatpush1.msra.mxu0 0.0
  %9561 = vmatprep.subr.mxu0 0.0
  %9562 = vmatpush1.msra.mxu0 0.0
  %9563 = vmatprep.subr.mxu0 0.0
  %9564 = vmatpush1.msra.mxu0 0.0
  %9565 = vmatprep.subr.mxu0 0.0
  %9566 = vmatpush1.msra.mxu0 0.0
  %9567 = vmatprep.subr.mxu0 0.0
  %9568 = vmatpush1.msra.mxu0 0.0
  %9569 = vmatprep.subr.mxu0 0.0
  %9570 = vmatpush1.msra.mxu0 0.0
  %9571 = vmatprep.subr.mxu0 0.0
  %9572 = vmatpush1.msra.mxu0 0.0
  %9573 = vmatprep.subr.mxu0 0.0
  %9574 = vmatpush1.msra.mxu0 0.0
  %9575 = vmatprep.subr.mxu0 0.0
  %9576 = vmatpush1.msra.mxu0 0.0
  %9577 = vmatprep.subr.mxu0 0.0
  %9578 = vmatpush1.msra.mxu0 0.0
  %9579 = vmatprep.subr.mxu0 0.0
  %9580 = vmatpush1.msra.mxu0 0.0
  %9581 = vmatprep.subr.mxu0 0.0
  %9582 = vmatpush1.msra.mxu0 0.0
  %9583 = vmatprep.subr.mxu0 0.0
  %9584 = vmatpush1.msra.mxu0 0.0
  %9585 = vmatprep.subr.mxu0 0.0
  %9586 = vmatpush1.msra.mxu0 0.0
  %9587 = vmatprep.subr.mxu0 0.0
  %9588 = vmatpush1.msra.mxu0 0.0
  %9589 = vmatprep.subr.mxu0 0.0
  %9590 = vmatpush1.msra.mxu0 0.0
  %9591 = vmatprep.subr.mxu0 0.0
  %9592 = vmatpush1.msra.mxu0 0.0
  %9593 = vmatprep.subr.mxu0 0.0
  %9594 = vmatpush1.msra.mxu0 0.0
  %9595 = vmatprep.subr.mxu0 0.0
  %9596 = vmatpush1.msra.mxu0 0.0
  %9597 = vmatprep.subr.mxu0 0.0
  %9598 = vmatpush1.msra.mxu0 0.0
  %9599 = vmatprep.subr.mxu0 0.0
  %9600 = vmatpush1.msra.mxu0 0.0
  %9601 = vmatprep.subr.mxu0 0.0
  %9602 = vmatpush1.msra.mxu0 0.0
  %9603 = vmatprep.subr.mxu0 0.0
  %9604 = vmatpush1.msra.mxu0 0.0
  %9605 = vmatprep.subr.mxu0 0.0
  %9606 = vmatpush1.msra.mxu0 0.0
  %9607 = vmatprep.subr.mxu0 0.0
  %9608 = vmatpush1.msra.mxu0 0.0
  %9609 = vmatprep.subr.mxu0 0.0
  %9610 = vmatpush1.msra.mxu0 0.0
  %9611 = vmatprep.subr.mxu0 0.0
  %9612 = vmatpush1.msra.mxu0 0.0
  %9613 = vmatprep.mubr.f32.mxu0 0.0
  %9614 = vmatmul.mubr.f32.gmra.mrb[0].mxu0 %v9524
  %v9615 = vpop.f32.mrb[0].mxu0
  %v9616 = vadd.f32 0.0, %v9615
  %v9617 = vpop.f32.mrb[0].mxu0
  %9618 = vmatprep.mubr.f32.mxu0 0.0
  %9619 = vmatmul.mubr.f32.gmra.mrb[0].mxu0 %v9527
  %v9620 = vpop.f32.mrb[0].mxu0
  %v9621 = vadd.f32 0.0, %v9620
  %v9622 = vpop.f32.mrb[0].mxu0
  %9623 = vmatprep.mubr.f32.mxu0 0.0
  %9624 = vmatmul.mubr.f32.gmra.mrb[0].mxu0 %v9530
  %v9625 = vpop.f32.mrb[0].mxu0
  %v9626 = vadd.f32 0.0, %v9625
  %v9627 = vpop.f32.mrb[0].mxu0
  %9628 = vmatprep.mubr.f32.mxu0 0.0
  %9629 = vmatmul.mubr.f32.gmra.mrb[0].mxu0 %v9533
  %v9630 = vpop.f32.mrb[0].mxu0
  %v9631 = vadd.f32 0.0, %v9630
  %v9632 = vpop.f32.mrb[0].mxu0
  %9633 = vmatprep.mubr.f32.mxu0 0.0
  %9634 = vmatmul.mubr.f32.gmra.mrb[0].mxu0 %v9536
  %v9635 = vpop.f32.mrb[0].mxu0
  %v9636 = vadd.f32 0.0, %v9635
  %v9637 = vpop.f32.mrb[0].mxu0
  %9638 = vmatprep.mubr.f32.mxu0 0.0
  %9639 = vmatmul.mubr.f32.gmra.mrb[0].mxu0 %v9539
  %v9640 = vpop.f32.mrb[0].mxu0
  %v9641 = vadd.f32 0.0, %v9640
  %v9642 = vpop.f32.mrb[0].mxu0
  %9643 = vmatprep.mubr.f32.mxu0 0.0
  %9644 = vmatmul.mubr.f32.gmra.mrb[0].mxu0 %v9542
  %v9645 = vpop.f32.mrb[0].mxu0
  %v9646 = vadd.f32 0.0, %v9645
  %v9647 = vpop.f32.mrb[0].mxu0
  %9648 = vmatprep.mubr.f32.mxu0 0.0
  %9649 = vmatmul.mubr.f32.gmra.mrb[0].mxu0 %v9545
  %v9650 = vpop.f32.mrb[0].mxu0
  %v9651 = vadd.f32 0.0, %v9650
  %v9652 = vpop.f32.mrb[0].mxu0
  %9653 = vdwg.mxu0
  %v9654 = vmul.f32 %v9070, 0.70710677
  %v9655 = vmul.f32 %v9075, 0.70710677
  %v9656 = vmul.f32 %v9080, 0.70710677
  %v9657 = vmul.f32 %v9085, 0.70710677
  %v9658 = vmul.f32 %v9090, 0.70710677
  %v9659 = vmul.f32 %v9095, 0.70710677
  %v9660 = vmul.f32 %v9100, 0.70710677
  %v9661 = vmul.f32 %v9105, 0.70710677
  %v9662 = vmul.f32 %v9252, 0.70710677
  %v9663 = vmul.f32 %v9257, 0.70710677
  %v9664 = vmul.f32 %v9262, 0.70710677
  %v9665 = vmul.f32 %v9267, 0.70710677
  %v9666 = vmul.f32 %v9272, 0.70710677
  %v9667 = vmul.f32 %v9277, 0.70710677
  %v9668 = vmul.f32 %v9282, 0.70710677
  %v9669 = vmul.f32 %v9287, 0.70710677
  %v9670 = vmul.f32 %v9434, 0.70710677
  %v9671 = vmul.f32 %v9439, 0.70710677
  %v9672 = vmul.f32 %v9444, 0.70710677
  %v9673 = vmul.f32 %v9449, 0.70710677
  %v9674 = vmul.f32 %v9454, 0.70710677
  %v9675 = vmul.f32 %v9459, 0.70710677
  %v9676 = vmul.f32 %v9464, 0.70710677
  %v9677 = vmul.f32 %v9469, 0.70710677
  %v9678 = vmul.f32 %v9616, 0.70710677
  %v9679 = vmul.f32 %v9621, 0.70710677
  %v9680 = vmul.f32 %v9626, 0.70710677
  %v9681 = vmul.f32 %v9631, 0.70710677
  %v9682 = vmul.f32 %v9636, 0.70710677
  %v9683 = vmul.f32 %v9641, 0.70710677
  %v9684 = vmul.f32 %v9646, 0.70710677
  %v9685 = vmul.f32 %v9651, 0.70710677
  %v9686 = vsel %vm998, %v9654, -inf
  %9687 = vmax.xlane.f32.xlu0 %v9686
  %v9688 = vpop.xlane.xlu0 %9687
  %v9689 = vsel %vm998, %v9655, -inf
  %9690 = vmax.xlane.f32.xlu0 %v9689
  %v9691 = vpop.xlane.xlu0 %9690
  %v9692 = vsel %vm998, %v9656, -inf
  %9693 = vmax.xlane.f32.xlu0 %v9692
  %v9694 = vpop.xlane.xlu0 %9693
  %v9695 = vsel %vm998, %v9657, -inf
  %9696 = vmax.xlane.f32.xlu0 %v9695
  %v9697 = vpop.xlane.xlu0 %9696
  %v9698 = vsel %vm998, %v9658, -inf
  %9699 = vmax.xlane.f32.xlu0 %v9698
  %v9700 = vpop.xlane.xlu0 %9699
  %v9701 = vsel %vm998, %v9659, -inf
  %9702 = vmax.xlane.f32.xlu0 %v9701
  %v9703 = vpop.xlane.xlu0 %9702
  %v9704 = vsel %vm998, %v9660, -inf
  %9705 = vmax.xlane.f32.xlu0 %v9704
  %v9706 = vpop.xlane.xlu0 %9705
  %v9707 = vsel %vm998, %v9661, -inf
  %9708 = vmax.xlane.f32.xlu0 %v9707
  %v9709 = vpop.xlane.xlu0 %9708
  %v9710 = vsel %vm998, %v9662, -inf
  %9711 = vmax.xlane.f32.xlu0 %v9710
  %v9712 = vpop.xlane.xlu0 %9711
  %v9713 = vsel %vm998, %v9663, -inf
  %9714 = vmax.xlane.f32.xlu0 %v9713
  %v9715 = vpop.xlane.xlu0 %9714
  %v9716 = vsel %vm998, %v9664, -inf
  %9717 = vmax.xlane.f32.xlu0 %v9716
  %v9718 = vpop.xlane.xlu0 %9717
  %v9719 = vsel %vm998, %v9665, -inf
  %9720 = vmax.xlane.f32.xlu0 %v9719
  %v9721 = vpop.xlane.xlu0 %9720
  %v9722 = vsel %vm998, %v9666, -inf
  %9723 = vmax.xlane.f32.xlu0 %v9722
  %v9724 = vpop.xlane.xlu0 %9723
  %v9725 = vsel %vm998, %v9667, -inf
  %9726 = vmax.xlane.f32.xlu0 %v9725
  %v9727 = vpop.xlane.xlu0 %9726
  %v9728 = vsel %vm998, %v9668, -inf
  %9729 = vmax.xlane.f32.xlu0 %v9728
  %v9730 = vpop.xlane.xlu0 %9729
  %v9731 = vsel %vm998, %v9669, -inf
  %9732 = vmax.xlane.f32.xlu0 %v9731
  %v9733 = vpop.xlane.xlu0 %9732
  %v9734 = vsel %vm998, %v9670, -inf
  %9735 = vmax.xlane.f32.xlu0 %v9734
  %v9736 = vpop.xlane.xlu0 %9735
  %v9737 = vsel %vm998, %v9671, -inf
  %9738 = vmax.xlane.f32.xlu0 %v9737
  %v9739 = vpop.xlane.xlu0 %9738
  %v9740 = vsel %vm998, %v9672, -inf
  %9741 = vmax.xlane.f32.xlu0 %v9740
  %v9742 = vpop.xlane.xlu0 %9741
  %v9743 = vsel %vm998, %v9673, -inf
  %9744 = vmax.xlane.f32.xlu0 %v9743
  %v9745 = vpop.xlane.xlu0 %9744
  %v9746 = vsel %vm998, %v9674, -inf
  %9747 = vmax.xlane.f32.xlu0 %v9746
  %v9748 = vpop.xlane.xlu0 %9747
  %v9749 = vsel %vm998, %v9675, -inf
  %9750 = vmax.xlane.f32.xlu0 %v9749
  %v9751 = vpop.xlane.xlu0 %9750
  %v9752 = vsel %vm998, %v9676, -inf
  %9753 = vmax.xlane.f32.xlu0 %v9752
  %v9754 = vpop.xlane.xlu0 %9753
  %v9755 = vsel %vm998, %v9677, -inf
  %9756 = vmax.xlane.f32.xlu0 %v9755
  %v9757 = vpop.xlane.xlu0 %9756
  %v9758 = vsel %vm998, %v9678, -inf
  %9759 = vmax.xlane.f32.xlu0 %v9758
  %v9760 = vpop.xlane.xlu0 %9759
  %v9761 = vsel %vm998, %v9679, -inf
  %9762 = vmax.xlane.f32.xlu0 %v9761
  %v9763 = vpop.xlane.xlu0 %9762
  %v9764 = vsel %vm998, %v9680, -inf
  %9765 = vmax.xlane.f32.xlu0 %v9764
  %v9766 = vpop.xlane.xlu0 %9765
  %v9767 = vsel %vm998, %v9681, -inf
  %9768 = vmax.xlane.f32.xlu0 %v9767
  %v9769 = vpop.xlane.xlu0 %9768
  %v9770 = vsel %vm998, %v9682, -inf
  %9771 = vmax.xlane.f32.xlu0 %v9770
  %v9772 = vpop.xlane.xlu0 %9771
  %v9773 = vsel %vm998, %v9683, -inf
  %9774 = vmax.xlane.f32.xlu0 %v9773
  %v9775 = vpop.xlane.xlu0 %9774
  %v9776 = vsel %vm998, %v9684, -inf
  %9777 = vmax.xlane.f32.xlu0 %v9776
  %v9778 = vpop.xlane.xlu0 %9777
  %v9779 = vsel %vm998, %v9685, -inf
  %9780 = vmax.xlane.f32.xlu0 %v9779
  %v9781 = vpop.xlane.xlu0 %9780
  %v9782 = vsub.f32 %v9654, %v9688
  %v9783 = vsub.f32 %v9655, %v9691
  %v9784 = vsub.f32 %v9656, %v9694
  %v9785 = vsub.f32 %v9657, %v9697
  %v9786 = vsub.f32 %v9658, %v9700
  %v9787 = vsub.f32 %v9659, %v9703
  %v9788 = vsub.f32 %v9660, %v9706
  %v9789 = vsub.f32 %v9661, %v9709
  %v9790 = vsub.f32 %v9662, %v9712
  %v9791 = vsub.f32 %v9663, %v9715
  %v9792 = vsub.f32 %v9664, %v9718
  %v9793 = vsub.f32 %v9665, %v9721
  %v9794 = vsub.f32 %v9666, %v9724
  %v9795 = vsub.f32 %v9667, %v9727
  %v9796 = vsub.f32 %v9668, %v9730
  %v9797 = vsub.f32 %v9669, %v9733
  %v9798 = vsub.f32 %v9670, %v9736
  %v9799 = vsub.f32 %v9671, %v9739
  %v9800 = vsub.f32 %v9672, %v9742
  %v9801 = vsub.f32 %v9673, %v9745
  %v9802 = vsub.f32 %v9674, %v9748
  %v9803 = vsub.f32 %v9675, %v9751
  %v9804 = vsub.f32 %v9676, %v9754
  %v9805 = vsub.f32 %v9677, %v9757
  %v9806 = vsub.f32 %v9678, %v9760
  %v9807 = vsub.f32 %v9679, %v9763
  %v9808 = vsub.f32 %v9680, %v9766
  %v9809 = vsub.f32 %v9681, %v9769
  %v9810 = vsub.f32 %v9682, %v9772
  %v9811 = vsub.f32 %v9683, %v9775
  %v9812 = vsub.f32 %v9684, %v9778
  %v9813 = vsub.f32 %v9685, %v9781
  %v9814 = vmul.f32 %v9782, 1.442695
  %v9815 = vpow.pop %v9814
  %v9816 = vmul.f32 %v9783, 1.442695
  %v9817 = vpow.pop %v9816
  %v9818 = vmul.f32 %v9784, 1.442695
  %v9819 = vpow.pop %v9818
  %v9820 = vmul.f32 %v9785, 1.442695
  %v9821 = vpow.pop %v9820
  %v9822 = vmul.f32 %v9786, 1.442695
  %v9823 = vpow.pop %v9822
  %v9824 = vmul.f32 %v9787, 1.442695
  %v9825 = vpow.pop %v9824
  %v9826 = vmul.f32 %v9788, 1.442695
  %v9827 = vpow.pop %v9826
  %v9828 = vmul.f32 %v9789, 1.442695
  %v9829 = vpow.pop %v9828
  %v9830 = vmul.f32 %v9790, 1.442695
  %v9831 = vpow.pop %v9830
  %v9832 = vmul.f32 %v9791, 1.442695
  %v9833 = vpow.pop %v9832
  %v9834 = vmul.f32 %v9792, 1.442695
  %v9835 = vpow.pop %v9834
  %v9836 = vmul.f32 %v9793, 1.442695
  %v9837 = vpow.pop %v9836
  %v9838 = vmul.f32 %v9794, 1.442695
  %v9839 = vpow.pop %v9838
  %v9840 = vmul.f32 %v9795, 1.442695
  %v9841 = vpow.pop %v9840
  %v9842 = vmul.f32 %v9796, 1.442695
  %v9843 = vpow.pop %v9842
  %v9844 = vmul.f32 %v9797, 1.442695
  %v9845 = vpow.pop %v9844
  %v9846 = vmul.f32 %v9798, 1.442695
  %v9847 = vpow.pop %v9846
  %v9848 = vmul.f32 %v9799, 1.442695
  %v9849 = vpow.pop %v9848
  %v9850 = vmul.f32 %v9800, 1.442695
  %v9851 = vpow.pop %v9850
  %v9852 = vmul.f32 %v9801, 1.442695
  %v9853 = vpow.pop %v9852
  %v9854 = vmul.f32 %v9802, 1.442695
  %v9855 = vpow.pop %v9854
  %v9856 = vmul.f32 %v9803, 1.442695
  %v9857 = vpow.pop %v9856
  %v9858 = vmul.f32 %v9804, 1.442695
  %v9859 = vpow.pop %v9858
  %v9860 = vmul.f32 %v9805, 1.442695
  %v9861 = vpow.pop %v9860
  %v9862 = vmul.f32 %v9806, 1.442695
  %v9863 = vpow.pop %v9862
  %v9864 = vmul.f32 %v9807, 1.442695
  %v9865 = vpow.pop %v9864
  %v9866 = vmul.f32 %v9808, 1.442695
  %v9867 = vpow.pop %v9866
  %v9868 = vmul.f32 %v9809, 1.442695
  %v9869 = vpow.pop %v9868
  %v9870 = vmul.f32 %v9810, 1.442695
  %v9871 = vpow.pop %v9870
  %v9872 = vmul.f32 %v9811, 1.442695
  %v9873 = vpow.pop %v9872
  %v9874 = vmul.f32 %v9812, 1.442695
  %v9875 = vpow.pop %v9874
  %v9876 = vmul.f32 %v9813, 1.442695
  %v9877 = vpow.pop %v9876
  %v9878 = vsel %vm998, %v9815, 0.0
  %9879 = vadd.xlane.f32.xlu0 %v9878
  %v9880 = vpop.xlane.xlu0 %9879
  %v9881 = vsel %vm998, %v9817, 0.0
  %9882 = vadd.xlane.f32.xlu0 %v9881
  %v9883 = vpop.xlane.xlu0 %9882
  %v9884 = vsel %vm998, %v9819, 0.0
  %9885 = vadd.xlane.f32.xlu0 %v9884
  %v9886 = vpop.xlane.xlu0 %9885
  %v9887 = vsel %vm998, %v9821, 0.0
  %9888 = vadd.xlane.f32.xlu0 %v9887
  %v9889 = vpop.xlane.xlu0 %9888
  %v9890 = vsel %vm998, %v9823, 0.0
  %9891 = vadd.xlane.f32.xlu0 %v9890
  %v9892 = vpop.xlane.xlu0 %9891
  %v9893 = vsel %vm998, %v9825, 0.0
  %9894 = vadd.xlane.f32.xlu0 %v9893
  %v9895 = vpop.xlane.xlu0 %9894
  %v9896 = vsel %vm998, %v9827, 0.0
  %9897 = vadd.xlane.f32.xlu0 %v9896
  %v9898 = vpop.xlane.xlu0 %9897
  %v9899 = vsel %vm998, %v9829, 0.0
  %9900 = vadd.xlane.f32.xlu0 %v9899
  %v9901 = vpop.xlane.xlu0 %9900
  %v9902 = vsel %vm998, %v9831, 0.0
  %9903 = vadd.xlane.f32.xlu0 %v9902
  %v9904 = vpop.xlane.xlu0 %9903
  %v9905 = vsel %vm998, %v9833, 0.0
  %9906 = vadd.xlane.f32.xlu0 %v9905
  %v9907 = vpop.xlane.xlu0 %9906
  %v9908 = vsel %vm998, %v9835, 0.0
  %9909 = vadd.xlane.f32.xlu0 %v9908
  %v9910 = vpop.xlane.xlu0 %9909
  %v9911 = vsel %vm998, %v9837, 0.0
  %9912 = vadd.xlane.f32.xlu0 %v9911
  %v9913 = vpop.xlane.xlu0 %9912
  %v9914 = vsel %vm998, %v9839, 0.0
  %9915 = vadd.xlane.f32.xlu0 %v9914
  %v9916 = vpop.xlane.xlu0 %9915
  %v9917 = vsel %vm998, %v9841, 0.0
  %9918 = vadd.xlane.f32.xlu0 %v9917
  %v9919 = vpop.xlane.xlu0 %9918
  %v9920 = vsel %vm998, %v9843, 0.0
  %9921 = vadd.xlane.f32.xlu0 %v9920
  %v9922 = vpop.xlane.xlu0 %9921
  %v9923 = vsel %vm998, %v9845, 0.0
  %9924 = vadd.xlane.f32.xlu0 %v9923
  %v9925 = vpop.xlane.xlu0 %9924
  %v9926 = vsel %vm998, %v9847, 0.0
  %9927 = vadd.xlane.f32.xlu0 %v9926
  %v9928 = vpop.xlane.xlu0 %9927
  %v9929 = vsel %vm998, %v9849, 0.0
  %9930 = vadd.xlane.f32.xlu0 %v9929
  %v9931 = vpop.xlane.xlu0 %9930
  %v9932 = vsel %vm998, %v9851, 0.0
  %9933 = vadd.xlane.f32.xlu0 %v9932
  %v9934 = vpop.xlane.xlu0 %9933
  %v9935 = vsel %vm998, %v9853, 0.0
  %9936 = vadd.xlane.f32.xlu0 %v9935
  %v9937 = vpop.xlane.xlu0 %9936
  %v9938 = vsel %vm998, %v9855, 0.0
  %9939 = vadd.xlane.f32.xlu0 %v9938
  %v9940 = vpop.xlane.xlu0 %9939
  %v9941 = vsel %vm998, %v9857, 0.0
  %9942 = vadd.xlane.f32.xlu0 %v9941
  %v9943 = vpop.xlane.xlu0 %9942
  %v9944 = vsel %vm998, %v9859, 0.0
  %9945 = vadd.xlane.f32.xlu0 %v9944
  %v9946 = vpop.xlane.xlu0 %9945
  %v9947 = vsel %vm998, %v9861, 0.0
  %9948 = vadd.xlane.f32.xlu0 %v9947
  %v9949 = vpop.xlane.xlu0 %9948
  %v9950 = vsel %vm998, %v9863, 0.0
  %9951 = vadd.xlane.f32.xlu0 %v9950
  %v9952 = vpop.xlane.xlu0 %9951
  %v9953 = vsel %vm998, %v9865, 0.0
  %9954 = vadd.xlane.f32.xlu0 %v9953
  %v9955 = vpop.xlane.xlu0 %9954
  %v9956 = vsel %vm998, %v9867, 0.0
  %9957 = vadd.xlane.f32.xlu0 %v9956
  %v9958 = vpop.xlane.xlu0 %9957
  %v9959 = vsel %vm998, %v9869, 0.0
  %9960 = vadd.xlane.f32.xlu0 %v9959
  %v9961 = vpop.xlane.xlu0 %9960
  %v9962 = vsel %vm998, %v9871, 0.0
  %9963 = vadd.xlane.f32.xlu0 %v9962
  %v9964 = vpop.xlane.xlu0 %9963
  %v9965 = vsel %vm998, %v9873, 0.0
  %9966 = vadd.xlane.f32.xlu0 %v9965
  %v9967 = vpop.xlane.xlu0 %9966
  %v9968 = vsel %vm998, %v9875, 0.0
  %9969 = vadd.xlane.f32.xlu0 %v9968
  %v9970 = vpop.xlane.xlu0 %9969
  %v9971 = vsel %vm998, %v9877, 0.0
  %9972 = vadd.xlane.f32.xlu0 %v9971
  %v9973 = vpop.xlane.xlu0 %9972
  %v9974 = vrcp.pop %v9880
  %v9975 = vrcp.pop %v9883
  %v9976 = vrcp.pop %v9886
  %v9977 = vrcp.pop %v9889
  %v9978 = vrcp.pop %v9892
  %v9979 = vrcp.pop %v9895
  %v9980 = vrcp.pop %v9898
  %v9981 = vrcp.pop %v9901
  %v9982 = vrcp.pop %v9904
  %v9983 = vrcp.pop %v9907
  %v9984 = vrcp.pop %v9910
  %v9985 = vrcp.pop %v9913
  %v9986 = vrcp.pop %v9916
  %v9987 = vrcp.pop %v9919
  %v9988 = vrcp.pop %v9922
  %v9989 = vrcp.pop %v9925
  %v9990 = vrcp.pop %v9928
  %v9991 = vrcp.pop %v9931
  %v9992 = vrcp.pop %v9934
  %v9993 = vrcp.pop %v9937
  %v9994 = vrcp.pop %v9940
  %v9995 = vrcp.pop %v9943
  %v9996 = vrcp.pop %v9946
  %v9997 = vrcp.pop %v9949
  %v9998 = vrcp.pop %v9952
  %v9999 = vrcp.pop %v9955
  %v10000 = vrcp.pop %v9958
  %v10001 = vrcp.pop %v9961
  %v10002 = vrcp.pop %v9964
  %v10003 = vrcp.pop %v9967
  %v10004 = vrcp.pop %v9970
  %v10005 = vrcp.pop %v9973
  %v10006 = vmul.f32 %v9815, %v9974
  %v10007 = vmul.f32 %v9817, %v9975
  %v10008 = vmul.f32 %v9819, %v9976
  %v10009 = vmul.f32 %v9821, %v9977
  %v10010 = vmul.f32 %v9823, %v9978
  %v10011 = vmul.f32 %v9825, %v9979
  %v10012 = vmul.f32 %v9827, %v9980
  %v10013 = vmul.f32 %v9829, %v9981
  %v10014 = vmul.f32 %v9831, %v9982
  %v10015 = vmul.f32 %v9833, %v9983
  %v10016 = vmul.f32 %v9835, %v9984
  %v10017 = vmul.f32 %v9837, %v9985
  %v10018 = vmul.f32 %v9839, %v9986
  %v10019 = vmul.f32 %v9841, %v9987
  %v10020 = vmul.f32 %v9843, %v9988
  %v10021 = vmul.f32 %v9845, %v9989
  %v10022 = vmul.f32 %v9847, %v9990
  %v10023 = vmul.f32 %v9849, %v9991
  %v10024 = vmul.f32 %v9851, %v9992
  %v10025 = vmul.f32 %v9853, %v9993
  %v10026 = vmul.f32 %v9855, %v9994
  %v10027 = vmul.f32 %v9857, %v9995
  %v10028 = vmul.f32 %v9859, %v9996
  %v10029 = vmul.f32 %v9861, %v9997
  %v10030 = vmul.f32 %v9863, %v9998
  %v10031 = vmul.f32 %v9865, %v9999
  %v10032 = vmul.f32 %v9867, %v10000
  %v10033 = vmul.f32 %v9869, %v10001
  %v10034 = vmul.f32 %v9871, %v10002
  %v10035 = vmul.f32 %v9873, %v10003
  %v10036 = vmul.f32 %v9875, %v10004
  %v10037 = vmul.f32 %v9877, %v10005
  %v10039 = vunpack.c.l.s4 1983009808
  %v10040 = vunpack.c.0.s8 %v10039
  %v10041 = vlaneseq
  %v10042 = vshrl.u32 %v10041, 7
  %v10043 = vsub.s32 %v10040, %v10042
  %v10044 = vrot.slane %v7496, %v10043
  %10045 = vrot.lane.b32.xlu0 %v10044, 64
  %v10046 = vpop.permute.xlu0 %10045
  %v10047 = vsel %vm998, %v10046, 0
  %v10050 = vsel %vm998, %v10006, 0
  %v10053 = vsel %vm998, %v10007, 0
  %v10056 = vsel %vm998, %v10008, 0
  %v10059 = vsel %vm998, %v10009, 0
  %v10062 = vsel %vm998, %v10010, 0
  %v10065 = vsel %vm998, %v10011, 0
  %v10068 = vsel %vm998, %v10012, 0
  %v10071 = vsel %vm998, %v10013, 0
  %10073 = vmatprep.subr.mxu0 0.0
  %10074 = vmatpush1.xpose.msra.mxu0 %v10050
  %10075 = vmatprep.subr.mxu0 0.0
  %10076 = vmatpush1.xpose.msra.mxu0 %v10053
  %10077 = vmatprep.subr.mxu0 0.0
  %10078 = vmatpush1.xpose.msra.mxu0 %v10056
  %10079 = vmatprep.subr.mxu0 0.0
  %10080 = vmatpush1.xpose.msra.mxu0 %v10059
  %10081 = vmatprep.subr.mxu0 0.0
  %10082 = vmatpush1.xpose.msra.mxu0 %v10062
  %10083 = vmatprep.subr.mxu0 0.0
  %10084 = vmatpush1.xpose.msra.mxu0 %v10065
  %10085 = vmatprep.subr.mxu0 0.0
  %10086 = vmatpush1.xpose.msra.mxu0 %v10068
  %10087 = vmatprep.subr.mxu0 0.0
  %10088 = vmatpush1.xpose.msra.mxu0 %v10071
  %10089 = vmatprep.subr.mxu0 0.0
  %10090 = vmatpush1.xpose.msra.mxu0 0.0
  %10091 = vmatprep.subr.mxu0 0.0
  %10092 = vmatpush1.xpose.msra.mxu0 0.0
  %10093 = vmatprep.subr.mxu0 0.0
  %10094 = vmatpush1.xpose.msra.mxu0 0.0
  %10095 = vmatprep.subr.mxu0 0.0
  %10096 = vmatpush1.xpose.msra.mxu0 0.0
  %10097 = vmatprep.subr.mxu0 0.0
  %10098 = vmatpush1.xpose.msra.mxu0 0.0
  %10099 = vmatprep.subr.mxu0 0.0
  %10100 = vmatpush1.xpose.msra.mxu0 0.0
  %10101 = vmatprep.subr.mxu0 0.0
  %10102 = vmatpush1.xpose.msra.mxu0 0.0
  %10103 = vmatprep.subr.mxu0 0.0
  %10104 = vmatpush1.xpose.msra.mxu0 0.0
  %10105 = vmatprep.subr.mxu0 0.0
  %10106 = vmatpush1.xpose.msra.mxu0 0.0
  %10107 = vmatprep.subr.mxu0 0.0
  %10108 = vmatpush1.xpose.msra.mxu0 0.0
  %10109 = vmatprep.subr.mxu0 0.0
  %10110 = vmatpush1.xpose.msra.mxu0 0.0
  %10111 = vmatprep.subr.mxu0 0.0
  %10112 = vmatpush1.xpose.msra.mxu0 0.0
  %10113 = vmatprep.subr.mxu0 0.0
  %10114 = vmatpush1.xpose.msra.mxu0 0.0
  %10115 = vmatprep.subr.mxu0 0.0
  %10116 = vmatpush1.xpose.msra.mxu0 0.0
  %10117 = vmatprep.subr.mxu0 0.0
  %10118 = vmatpush1.xpose.msra.mxu0 0.0
  %10119 = vmatprep.subr.mxu0 0.0
  %10120 = vmatpush1.xpose.msra.mxu0 0.0
  %10121 = vmatprep.subr.mxu0 0.0
  %10122 = vmatpush1.xpose.msra.mxu0 0.0
  %10123 = vmatprep.subr.mxu0 0.0
  %10124 = vmatpush1.xpose.msra.mxu0 0.0
  %10125 = vmatprep.subr.mxu0 0.0
  %10126 = vmatpush1.xpose.msra.mxu0 0.0
  %10127 = vmatprep.subr.mxu0 0.0
  %10128 = vmatpush1.xpose.msra.mxu0 0.0
  %10129 = vmatprep.subr.mxu0 0.0
  %10130 = vmatpush1.xpose.msra.mxu0 0.0
  %10131 = vmatprep.subr.mxu0 0.0
  %10132 = vmatpush1.xpose.msra.mxu0 0.0
  %10133 = vmatprep.subr.mxu0 0.0
  %10134 = vmatpush1.xpose.msra.mxu0 0.0
  %10135 = vmatprep.subr.mxu0 0.0
  %10136 = vmatpush1.xpose.msra.mxu0 0.0
  %10137 = vmatprep.mubr.f32.mxu0 0.0
  %10138 = vmatmul.mubr.f32.gmra.mrb[0].mxu0 %v10047
  %v10139 = vpop.f32.mrb[0].mxu0
  %v10140 = vadd.f32 0.0, %v10139
  %v10141 = vpop.f32.mrb[0].mxu0
  %10142 = vdwg.mxu0
  %v10144 = vunpack.c.l.s4 1983009808
  %v10145 = vunpack.c.0.s8 %v10144
  %v10146 = vlaneseq
  %v10147 = vshrl.u32 %v10146, 7
  %v10148 = vsub.s32 %v10145, %v10147
  %v10149 = vrot.slane %v7504, %v10148
  %10150 = vrot.lane.b32.xlu0 %v10149, 64
  %v10151 = vpop.permute.xlu0 %10150
  %v10152 = vsel %vm998, %v10151, 0
  %v10155 = vsel %vm998, %v10014, 0
  %v10158 = vsel %vm998, %v10015, 0
  %v10161 = vsel %vm998, %v10016, 0
  %v10164 = vsel %vm998, %v10017, 0
  %v10167 = vsel %vm998, %v10018, 0
  %v10170 = vsel %vm998, %v10019, 0
  %v10173 = vsel %vm998, %v10020, 0
  %v10176 = vsel %vm998, %v10021, 0
  %10178 = vmatprep.subr.mxu0 0.0
  %10179 = vmatpush1.xpose.msra.mxu0 %v10155
  %10180 = vmatprep.subr.mxu0 0.0
  %10181 = vmatpush1.xpose.msra.mxu0 %v10158
  %10182 = vmatprep.subr.mxu0 0.0
  %10183 = vmatpush1.xpose.msra.mxu0 %v10161
  %10184 = vmatprep.subr.mxu0 0.0
  %10185 = vmatpush1.xpose.msra.mxu0 %v10164
  %10186 = vmatprep.subr.mxu0 0.0
  %10187 = vmatpush1.xpose.msra.mxu0 %v10167
  %10188 = vmatprep.subr.mxu0 0.0
  %10189 = vmatpush1.xpose.msra.mxu0 %v10170
  %10190 = vmatprep.subr.mxu0 0.0
  %10191 = vmatpush1.xpose.msra.mxu0 %v10173
  %10192 = vmatprep.subr.mxu0 0.0
  %10193 = vmatpush1.xpose.msra.mxu0 %v10176
  %10194 = vmatprep.subr.mxu0 0.0
  %10195 = vmatpush1.xpose.msra.mxu0 0.0
  %10196 = vmatprep.subr.mxu0 0.0
  %10197 = vmatpush1.xpose.msra.mxu0 0.0
  %10198 = vmatprep.subr.mxu0 0.0
  %10199 = vmatpush1.xpose.msra.mxu0 0.0
  %10200 = vmatprep.subr.mxu0 0.0
  %10201 = vmatpush1.xpose.msra.mxu0 0.0
  %10202 = vmatprep.subr.mxu0 0.0
  %10203 = vmatpush1.xpose.msra.mxu0 0.0
  %10204 = vmatprep.subr.mxu0 0.0
  %10205 = vmatpush1.xpose.msra.mxu0 0.0
  %10206 = vmatprep.subr.mxu0 0.0
  %10207 = vmatpush1.xpose.msra.mxu0 0.0
  %10208 = vmatprep.subr.mxu0 0.0
  %10209 = vmatpush1.xpose.msra.mxu0 0.0
  %10210 = vmatprep.subr.mxu0 0.0
  %10211 = vmatpush1.xpose.msra.mxu0 0.0
  %10212 = vmatprep.subr.mxu0 0.0
  %10213 = vmatpush1.xpose.msra.mxu0 0.0
  %10214 = vmatprep.subr.mxu0 0.0
  %10215 = vmatpush1.xpose.msra.mxu0 0.0
  %10216 = vmatprep.subr.mxu0 0.0
  %10217 = vmatpush1.xpose.msra.mxu0 0.0
  %10218 = vmatprep.subr.mxu0 0.0
  %10219 = vmatpush1.xpose.msra.mxu0 0.0
  %10220 = vmatprep.subr.mxu0 0.0
  %10221 = vmatpush1.xpose.msra.mxu0 0.0
  %10222 = vmatprep.subr.mxu0 0.0
  %10223 = vmatpush1.xpose.msra.mxu0 0.0
  %10224 = vmatprep.subr.mxu0 0.0
  %10225 = vmatpush1.xpose.msra.mxu0 0.0
  %10226 = vmatprep.subr.mxu0 0.0
  %10227 = vmatpush1.xpose.msra.mxu0 0.0
  %10228 = vmatprep.subr.mxu0 0.0
  %10229 = vmatpush1.xpose.msra.mxu0 0.0
  %10230 = vmatprep.subr.mxu0 0.0
  %10231 = vmatpush1.xpose.msra.mxu0 0.0
  %10232 = vmatprep.subr.mxu0 0.0
  %10233 = vmatpush1.xpose.msra.mxu0 0.0
  %10234 = vmatprep.subr.mxu0 0.0
  %10235 = vmatpush1.xpose.msra.mxu0 0.0
  %10236 = vmatprep.subr.mxu0 0.0
  %10237 = vmatpush1.xpose.msra.mxu0 0.0
  %10238 = vmatprep.subr.mxu0 0.0
  %10239 = vmatpush1.xpose.msra.mxu0 0.0
  %10240 = vmatprep.subr.mxu0 0.0
  %10241 = vmatpush1.xpose.msra.mxu0 0.0
  %10242 = vmatprep.mubr.f32.mxu0 0.0
  %10243 = vmatmul.mubr.f32.gmra.mrb[0].mxu0 %v10152
  %v10244 = vpop.f32.mrb[0].mxu0
  %v10245 = vadd.f32 0.0, %v10244
  %v10246 = vpop.f32.mrb[0].mxu0
  %10247 = vdwg.mxu0
  %v10249 = vunpack.c.l.s4 1983009808
  %v10250 = vunpack.c.0.s8 %v10249
  %v10251 = vlaneseq
  %v10252 = vshrl.u32 %v10251, 7
  %v10253 = vsub.s32 %v10250, %v10252
  %v10254 = vrot.slane %v7503, %v10253
  %10255 = vrot.lane.b32.xlu0 %v10254, 64
  %v10256 = vpop.permute.xlu0 %10255
  %v10257 = vsel %vm998, %v10256, 0
  %v10260 = vsel %vm998, %v10022, 0
  %v10263 = vsel %vm998, %v10023, 0
  %v10266 = vsel %vm998, %v10024, 0
  %v10269 = vsel %vm998, %v10025, 0
  %v10272 = vsel %vm998, %v10026, 0
  %v10275 = vsel %vm998, %v10027, 0
  %v10278 = vsel %vm998, %v10028, 0
  %v10281 = vsel %vm998, %v10029, 0
  %10283 = vmatprep.subr.mxu0 0.0
  %10284 = vmatpush1.xpose.msra.mxu0 %v10260
  %10285 = vmatprep.subr.mxu0 0.0
  %10286 = vmatpush1.xpose.msra.mxu0 %v10263
  %10287 = vmatprep.subr.mxu0 0.0
  %10288 = vmatpush1.xpose.msra.mxu0 %v10266
  %10289 = vmatprep.subr.mxu0 0.0
  %10290 = vmatpush1.xpose.msra.mxu0 %v10269
  %10291 = vmatprep.subr.mxu0 0.0
  %10292 = vmatpush1.xpose.msra.mxu0 %v10272
  %10293 = vmatprep.subr.mxu0 0.0
  %10294 = vmatpush1.xpose.msra.mxu0 %v10275
  %10295 = vmatprep.subr.mxu0 0.0
  %10296 = vmatpush1.xpose.msra.mxu0 %v10278
  %10297 = vmatprep.subr.mxu0 0.0
  %10298 = vmatpush1.xpose.msra.mxu0 %v10281
  %10299 = vmatprep.subr.mxu0 0.0
  %10300 = vmatpush1.xpose.msra.mxu0 0.0
  %10301 = vmatprep.subr.mxu0 0.0
  %10302 = vmatpush1.xpose.msra.mxu0 0.0
  %10303 = vmatprep.subr.mxu0 0.0
  %10304 = vmatpush1.xpose.msra.mxu0 0.0
  %10305 = vmatprep.subr.mxu0 0.0
  %10306 = vmatpush1.xpose.msra.mxu0 0.0
  %10307 = vmatprep.subr.mxu0 0.0
  %10308 = vmatpush1.xpose.msra.mxu0 0.0
  %10309 = vmatprep.subr.mxu0 0.0
  %10310 = vmatpush1.xpose.msra.mxu0 0.0
  %10311 = vmatprep.subr.mxu0 0.0
  %10312 = vmatpush1.xpose.msra.mxu0 0.0
  %10313 = vmatprep.subr.mxu0 0.0
  %10314 = vmatpush1.xpose.msra.mxu0 0.0
  %10315 = vmatprep.subr.mxu0 0.0
  %10316 = vmatpush1.xpose.msra.mxu0 0.0
  %10317 = vmatprep.subr.mxu0 0.0
  %10318 = vmatpush1.xpose.msra.mxu0 0.0
  %10319 = vmatprep.subr.mxu0 0.0
  %10320 = vmatpush1.xpose.msra.mxu0 0.0
  %10321 = vmatprep.subr.mxu0 0.0
  %10322 = vmatpush1.xpose.msra.mxu0 0.0
  %10323 = vmatprep.subr.mxu0 0.0
  %10324 = vmatpush1.xpose.msra.mxu0 0.0
  %10325 = vmatprep.subr.mxu0 0.0
  %10326 = vmatpush1.xpose.msra.mxu0 0.0
  %10327 = vmatprep.subr.mxu0 0.0
  %10328 = vmatpush1.xpose.msra.mxu0 0.0
  %10329 = vmatprep.subr.mxu0 0.0
  %10330 = vmatpush1.xpose.msra.mxu0 0.0
  %10331 = vmatprep.subr.mxu0 0.0
  %10332 = vmatpush1.xpose.msra.mxu0 0.0
  %10333 = vmatprep.subr.mxu0 0.0
  %10334 = vmatpush1.xpose.msra.mxu0 0.0
  %10335 = vmatprep.subr.mxu0 0.0
  %10336 = vmatpush1.xpose.msra.mxu0 0.0
  %10337 = vmatprep.subr.mxu0 0.0
  %10338 = vmatpush1.xpose.msra.mxu0 0.0
  %10339 = vmatprep.subr.mxu0 0.0
  %10340 = vmatpush1.xpose.msra.mxu0 0.0
  %10341 = vmatprep.subr.mxu0 0.0
  %10342 = vmatpush1.xpose.msra.mxu0 0.0
  %10343 = vmatprep.subr.mxu0 0.0
  %10344 = vmatpush1.xpose.msra.mxu0 0.0
  %10345 = vmatprep.subr.mxu0 0.0
  %10346 = vmatpush1.xpose.msra.mxu0 0.0
  %10347 = vmatprep.mubr.f32.mxu0 0.0
  %10348 = vmatmul.mubr.f32.gmra.mrb[0].mxu0 %v10257
  %v10349 = vpop.f32.mrb[0].mxu0
  %v10350 = vadd.f32 0.0, %v10349
  %v10351 = vpop.f32.mrb[0].mxu0
  %10352 = vdwg.mxu0
  %v10354 = vunpack.c.l.s4 1983009808
  %v10355 = vunpack.c.0.s8 %v10354
  %v10356 = vlaneseq
  %v10357 = vshrl.u32 %v10356, 7
  %v10358 = vsub.s32 %v10355, %v10357
  %v10359 = vrot.slane %v7505, %v10358
  %10360 = vrot.lane.b32.xlu0 %v10359, 64
  %v10361 = vpop.permute.xlu0 %10360
  %v10362 = vsel %vm998, %v10361, 0
  %v10365 = vsel %vm998, %v10030, 0
  %v10368 = vsel %vm998, %v10031, 0
  %v10371 = vsel %vm998, %v10032, 0
  %v10374 = vsel %vm998, %v10033, 0
  %v10377 = vsel %vm998, %v10034, 0
  %v10380 = vsel %vm998, %v10035, 0
  %v10383 = vsel %vm998, %v10036, 0
  %v10386 = vsel %vm998, %v10037, 0
  %10388 = vmatprep.subr.mxu0 0.0
  %10389 = vmatpush1.xpose.msra.mxu0 %v10365
  %10390 = vmatprep.subr.mxu0 0.0
  %10391 = vmatpush1.xpose.msra.mxu0 %v10368
  %10392 = vmatprep.subr.mxu0 0.0
  %10393 = vmatpush1.xpose.msra.mxu0 %v10371
  %10394 = vmatprep.subr.mxu0 0.0
  %10395 = vmatpush1.xpose.msra.mxu0 %v10374
  %10396 = vmatprep.subr.mxu0 0.0
  %10397 = vmatpush1.xpose.msra.mxu0 %v10377
  %10398 = vmatprep.subr.mxu0 0.0
  %10399 = vmatpush1.xpose.msra.mxu0 %v10380
  %10400 = vmatprep.subr.mxu0 0.0
  %10401 = vmatpush1.xpose.msra.mxu0 %v10383
  %10402 = vmatprep.subr.mxu0 0.0
  %10403 = vmatpush1.xpose.msra.mxu0 %v10386
  %10404 = vmatprep.subr.mxu0 0.0
  %10405 = vmatpush1.xpose.msra.mxu0 0.0
  %10406 = vmatprep.subr.mxu0 0.0
  %10407 = vmatpush1.xpose.msra.mxu0 0.0
  %10408 = vmatprep.subr.mxu0 0.0
  %10409 = vmatpush1.xpose.msra.mxu0 0.0
  %10410 = vmatprep.subr.mxu0 0.0
  %10411 = vmatpush1.xpose.msra.mxu0 0.0
  %10412 = vmatprep.subr.mxu0 0.0
  %10413 = vmatpush1.xpose.msra.mxu0 0.0
  %10414 = vmatprep.subr.mxu0 0.0
  %10415 = vmatpush1.xpose.msra.mxu0 0.0
  %10416 = vmatprep.subr.mxu0 0.0
  %10417 = vmatpush1.xpose.msra.mxu0 0.0
  %10418 = vmatprep.subr.mxu0 0.0
  %10419 = vmatpush1.xpose.msra.mxu0 0.0
  %10420 = vmatprep.subr.mxu0 0.0
  %10421 = vmatpush1.xpose.msra.mxu0 0.0
  %10422 = vmatprep.subr.mxu0 0.0
  %10423 = vmatpush1.xpose.msra.mxu0 0.0
  %10424 = vmatprep.subr.mxu0 0.0
  %10425 = vmatpush1.xpose.msra.mxu0 0.0
  %10426 = vmatprep.subr.mxu0 0.0
  %10427 = vmatpush1.xpose.msra.mxu0 0.0
  %10428 = vmatprep.subr.mxu0 0.0
  %10429 = vmatpush1.xpose.msra.mxu0 0.0
  %10430 = vmatprep.subr.mxu0 0.0
  %10431 = vmatpush1.xpose.msra.mxu0 0.0
  %10432 = vmatprep.subr.mxu0 0.0
  %10433 = vmatpush1.xpose.msra.mxu0 0.0
  %10434 = vmatprep.subr.mxu0 0.0
  %10435 = vmatpush1.xpose.msra.mxu0 0.0
  %10436 = vmatprep.subr.mxu0 0.0
  %10437 = vmatpush1.xpose.msra.mxu0 0.0
  %10438 = vmatprep.subr.mxu0 0.0
  %10439 = vmatpush1.xpose.msra.mxu0 0.0
  %10440 = vmatprep.subr.mxu0 0.0
  %10441 = vmatpush1.xpose.msra.mxu0 0.0
  %10442 = vmatprep.subr.mxu0 0.0
  %10443 = vmatpush1.xpose.msra.mxu0 0.0
  %10444 = vmatprep.subr.mxu0 0.0
  %10445 = vmatpush1.xpose.msra.mxu0 0.0
  %10446 = vmatprep.subr.mxu0 0.0
  %10447 = vmatpush1.xpose.msra.mxu0 0.0
  %10448 = vmatprep.subr.mxu0 0.0
  %10449 = vmatpush1.xpose.msra.mxu0 0.0
  %10450 = vmatprep.subr.mxu0 0.0
  %10451 = vmatpush1.xpose.msra.mxu0 0.0
  %10452 = vmatprep.mubr.f32.mxu0 0.0
  %10453 = vmatmul.mubr.f32.gmra.mrb[0].mxu0 %v10362
  %v10454 = vpop.f32.mrb[0].mxu0
  %v10455 = vadd.f32 0.0, %v10454
  %v10456 = vpop.f32.mrb[0].mxu0
  %10457 = vdwg.mxu0
  %v10462 = vcombine.low %v8635, %v8731
  %v10463 = vcombine.low %v8827, %v8923
  %v10465 = vunpack.c.l.s4 1983009808
  %v10466 = vunpack.c.0.s8 %v10465
  %v10467 = vlaneseq
  %v10468 = vshrl.u32 %v10467, 7
  %v10469 = vsub.s32 %v10466, %v10468
  %v10470 = vrot.slane %v10462, %v10469
  %v10472 = vunpack.c.l.s4 1983009808
  %v10473 = vunpack.c.0.s8 %v10472
  %v10474 = vlaneseq
  %v10475 = vshrl.u32 %v10474, 7
  %v10476 = vsub.s32 %v10473, %v10475
  %v10477 = vrot.slane %v10463, %v10476
  %v10478 = vcombine.low %v10470, %v10477
  %v10484 = vcombine.low %v10140, %v10245
  %v10485 = vcombine.low %v10350, %v10455
  %v10487 = vunpack.c.l.s4 1983009808
  %v10488 = vunpack.c.0.s8 %v10487
  %v10489 = vlaneseq
  %v10490 = vshrl.u32 %v10489, 7
  %v10491 = vsub.s32 %v10488, %v10490
  %v10492 = vrot.slane %v10484, %v10491
  %v10494 = vunpack.c.l.s4 1983009808
  %v10495 = vunpack.c.0.s8 %v10494
  %v10496 = vlaneseq
  %v10497 = vshrl.u32 %v10496, 7
  %v10498 = vsub.s32 %v10495, %v10497
  %v10499 = vrot.slane %v10485, %v10498
  %v10500 = vcombine.low %v10492, %v10499
  %10501 = vrot.lane.b32.xlu0 %v10500, 64
  %v10502 = vpop.permute.xlu0 %10501
  %v10504 = vsel %vm998, %v10478, %v10502
  %s10505 = scalar_lea.vmem %s5, 16
  %v10506 = vld [vmem:[%s10505] sm:$0xff]
  %s10507 = scalar_lea.vmem %s6, 16
  %v10508 = vld [vmem:[%s10507] sm:$0xff]
  %10510 = vset.pattern.permute.xlu0 0
  %10511 = vperm.xlu0 %10510, %v10508
  %v10512 = vpop.permute.xlu0 %10511
  %v10515 = vsel %vm164, %v10506, 0
  %10517 = vmatprep.subr.mxu0 0.0
  %10518 = vmatpush1.msra.mxu0 %v10504
  %10519 = vmatprep.subr.mxu0 0.0
  %10520 = vmatpush1.msra.mxu0 0.0
  %10521 = vmatprep.subr.mxu0 0.0
  %10522 = vmatpush1.msra.mxu0 0.0
  %10523 = vmatprep.subr.mxu0 0.0
  %10524 = vmatpush1.msra.mxu0 0.0
  %10525 = vmatprep.subr.mxu0 0.0
  %10526 = vmatpush1.msra.mxu0 0.0
  %10527 = vmatprep.subr.mxu0 0.0
  %10528 = vmatpush1.msra.mxu0 0.0
  %10529 = vmatprep.subr.mxu0 0.0
  %10530 = vmatpush1.msra.mxu0 0.0
  %10531 = vmatprep.subr.mxu0 0.0
  %10532 = vmatpush1.msra.mxu0 0.0
  %10533 = vmatprep.subr.mxu0 0.0
  %10534 = vmatpush1.msra.mxu0 0.0
  %10535 = vmatprep.subr.mxu0 0.0
  %10536 = vmatpush1.msra.mxu0 0.0
  %10537 = vmatprep.subr.mxu0 0.0
  %10538 = vmatpush1.msra.mxu0 0.0
  %10539 = vmatprep.subr.mxu0 0.0
  %10540 = vmatpush1.msra.mxu0 0.0
  %10541 = vmatprep.subr.mxu0 0.0
  %10542 = vmatpush1.msra.mxu0 0.0
  %10543 = vmatprep.subr.mxu0 0.0
  %10544 = vmatpush1.msra.mxu0 0.0
  %10545 = vmatprep.subr.mxu0 0.0
  %10546 = vmatpush1.msra.mxu0 0.0
  %10547 = vmatprep.subr.mxu0 0.0
  %10548 = vmatpush1.msra.mxu0 0.0
  %10549 = vmatprep.subr.mxu0 0.0
  %10550 = vmatpush1.msra.mxu0 0.0
  %10551 = vmatprep.subr.mxu0 0.0
  %10552 = vmatpush1.msra.mxu0 0.0
  %10553 = vmatprep.subr.mxu0 0.0
  %10554 = vmatpush1.msra.mxu0 0.0
  %10555 = vmatprep.subr.mxu0 0.0
  %10556 = vmatpush1.msra.mxu0 0.0
  %10557 = vmatprep.subr.mxu0 0.0
  %10558 = vmatpush1.msra.mxu0 0.0
  %10559 = vmatprep.subr.mxu0 0.0
  %10560 = vmatpush1.msra.mxu0 0.0
  %10561 = vmatprep.subr.mxu0 0.0
  %10562 = vmatpush1.msra.mxu0 0.0
  %10563 = vmatprep.subr.mxu0 0.0
  %10564 = vmatpush1.msra.mxu0 0.0
  %10565 = vmatprep.subr.mxu0 0.0
  %10566 = vmatpush1.msra.mxu0 0.0
  %10567 = vmatprep.subr.mxu0 0.0
  %10568 = vmatpush1.msra.mxu0 0.0
  %10569 = vmatprep.subr.mxu0 0.0
  %10570 = vmatpush1.msra.mxu0 0.0
  %10571 = vmatprep.subr.mxu0 0.0
  %10572 = vmatpush1.msra.mxu0 0.0
  %10573 = vmatprep.subr.mxu0 0.0
  %10574 = vmatpush1.msra.mxu0 0.0
  %10575 = vmatprep.subr.mxu0 0.0
  %10576 = vmatpush1.msra.mxu0 0.0
  %10577 = vmatprep.subr.mxu0 0.0
  %10578 = vmatpush1.msra.mxu0 0.0
  %10579 = vmatprep.subr.mxu0 0.0
  %10580 = vmatpush1.msra.mxu0 0.0
  %10581 = vmatprep.mubr.f32.mxu0 0.0
  %10582 = vmatmul.mubr.f32.gmra.mrb[0].mxu0 %v10515
  %v10583 = vpop.f32.mrb[0].mxu0
  %v10584 = vadd.f32 %v10512, %v10583
  %v10585 = vpop.f32.mrb[0].mxu0
  %10586 = vdwg.mxu0
  %v10587 = vadd.f32 %v7335, %v10584
  %s10588 = scalar_lea.vmem %s7, 16
  %v10589 = vld [vmem:[%s10588] sm:$0xff]
  %s10590 = scalar_lea.vmem %s8, 16
  %v10591 = vld [vmem:[%s10590] sm:$0xff]
  %v10592 = vrot.slane %v10587, 4
  %v10593 = vadd.f32 %v10587, %v10592
  %v10594 = vrot.slane %v10593, 2
  %v10595 = vadd.f32 %v10593, %v10594
  %v10596 = vrot.slane %v10595, 1
  %v10597 = vadd.f32 %v10595, %v10596
  %v10598 = vmul.f32 %v10597, %v3403
  %v10599 = vsub.f32 %v10587, %v10598
  %v10600 = vmul.f32 %v10599, %v10599
  %v10601 = vrot.slane %v10600, 4
  %v10602 = vadd.f32 %v10600, %v10601
  %v10603 = vrot.slane %v10602, 2
  %v10604 = vadd.f32 %v10602, %v10603
  %v10605 = vrot.slane %v10604, 1
  %v10606 = vadd.f32 %v10604, %v10605
  %v10607 = vmul.f32 %v10606, %v3403
  %v10608 = vadd.f32 %v10607, 1e-05
  %v10609 = vrsqrt.pop %v10608
  %v10610 = vmul.f32 %v10599, %v10609
  %10612 = vset.pattern.permute.xlu0 0
  %10613 = vperm.xlu0 %10612, %v10589
  %v10614 = vpop.permute.xlu0 %10613
  %v10616 = vmul.f32 %v10610, %v10614
  %10618 = vset.pattern.permute.xlu0 0
  %10619 = vperm.xlu0 %10618, %v10591
  %v10620 = vpop.permute.xlu0 %10619
  %v10622 = vadd.f32 %v10616, %v10620
  %s10623 = scalar_lea.vmem %s9, 128
  %v10624 = vld [vmem:[%s10623] sm:$0xff]
  %v10625 = vld [vmem:[%s10623 + $0x8] sm:$0xff]
  %v10626 = vld [vmem:[%s10623 + $0x10] sm:$0xff]
  %v10627 = vld [vmem:[%s10623 + $0x18] sm:$0xff]
  %v10628 = vld [vmem:[%s10623 + $0x20] sm:$0xff]
  %v10629 = vld [vmem:[%s10623 + $0x28] sm:$0xff]
  %v10630 = vld [vmem:[%s10623 + $0x30] sm:$0xff]
  %v10631 = vld [vmem:[%s10623 + $0x38] sm:$0xff]
  %s10632 = scalar_lea.vmem %s10, 128
  %v10633 = vld [vmem:[%s10632] sm:$0xff]
  %v10634 = vld [vmem:[%s10632 + $0x8] sm:$0xff]
  %v10635 = vld [vmem:[%s10632 + $0x10] sm:$0xff]
  %v10636 = vld [vmem:[%s10632 + $0x18] sm:$0xff]
  %v10637 = vld [vmem:[%s10632 + $0x20] sm:$0xff]
  %v10638 = vld [vmem:[%s10632 + $0x28] sm:$0xff]
  %v10639 = vld [vmem:[%s10632 + $0x30] sm:$0xff]
  %v10640 = vld [vmem:[%s10632 + $0x38] sm:$0xff]
  %10642 = vset.pattern.permute.xlu0 0
  %10643 = vperm.xlu0 %10642, %v10633
  %v10644 = vpop.permute.xlu0 %10643
  %10647 = vset.pattern.permute.xlu0 0
  %10648 = vperm.xlu0 %10647, %v10634
  %v10649 = vpop.permute.xlu0 %10648
  %10652 = vset.pattern.permute.xlu0 0
  %10653 = vperm.xlu0 %10652, %v10635
  %v10654 = vpop.permute.xlu0 %10653
  %10657 = vset.pattern.permute.xlu0 0
  %10658 = vperm.xlu0 %10657, %v10636
  %v10659 = vpop.permute.xlu0 %10658
  %10662 = vset.pattern.permute.xlu0 0
  %10663 = vperm.xlu0 %10662, %v10637
  %v10664 = vpop.permute.xlu0 %10663
  %10667 = vset.pattern.permute.xlu0 0
  %10668 = vperm.xlu0 %10667, %v10638
  %v10669 = vpop.permute.xlu0 %10668
  %10672 = vset.pattern.permute.xlu0 0
  %10673 = vperm.xlu0 %10672, %v10639
  %v10674 = vpop.permute.xlu0 %10673
  %10677 = vset.pattern.permute.xlu0 0
  %10678 = vperm.xlu0 %10677, %v10640
  %v10679 = vpop.permute.xlu0 %10678
  %v10682 = vsel %vm164, %v10624, 0
  %v10685 = vsel %vm164, %v10625, 0
  %v10688 = vsel %vm164, %v10626, 0
  %v10691 = vsel %vm164, %v10627, 0
  %v10694 = vsel %vm164, %v10628, 0
  %v10697 = vsel %vm164, %v10629, 0
  %v10700 = vsel %vm164, %v10630, 0
  %v10703 = vsel %vm164, %v10631, 0
  %10705 = vmatprep.subr.mxu0 0.0
  %10706 = vmatpush1.msra.mxu0 %v10622
  %10707 = vmatprep.subr.mxu0 0.0
  %10708 = vmatpush1.msra.mxu0 0.0
  %10709 = vmatprep.subr.mxu0 0.0
  %10710 = vmatpush1.msra.mxu0 0.0
  %10711 = vmatprep.subr.mxu0 0.0
  %10712 = vmatpush1.msra.mxu0 0.0
  %10713 = vmatprep.subr.mxu0 0.0
  %10714 = vmatpush1.msra.mxu0 0.0
  %10715 = vmatprep.subr.mxu0 0.0
  %10716 = vmatpush1.msra.mxu0 0.0
  %10717 = vmatprep.subr.mxu0 0.0
  %10718 = vmatpush1.msra.mxu0 0.0
  %10719 = vmatprep.subr.mxu0 0.0
  %10720 = vmatpush1.msra.mxu0 0.0
  %10721 = vmatprep.subr.mxu0 0.0
  %10722 = vmatpush1.msra.mxu0 0.0
  %10723 = vmatprep.subr.mxu0 0.0
  %10724 = vmatpush1.msra.mxu0 0.0
  %10725 = vmatprep.subr.mxu0 0.0
  %10726 = vmatpush1.msra.mxu0 0.0
  %10727 = vmatprep.subr.mxu0 0.0
  %10728 = vmatpush1.msra.mxu0 0.0
  %10729 = vmatprep.subr.mxu0 0.0
  %10730 = vmatpush1.msra.mxu0 0.0
  %10731 = vmatprep.subr.mxu0 0.0
  %10732 = vmatpush1.msra.mxu0 0.0
  %10733 = vmatprep.subr.mxu0 0.0
  %10734 = vmatpush1.msra.mxu0 0.0
  %10735 = vmatprep.subr.mxu0 0.0
  %10736 = vmatpush1.msra.mxu0 0.0
  %10737 = vmatprep.subr.mxu0 0.0
  %10738 = vmatpush1.msra.mxu0 0.0
  %10739 = vmatprep.subr.mxu0 0.0
  %10740 = vmatpush1.msra.mxu0 0.0
  %10741 = vmatprep.subr.mxu0 0.0
  %10742 = vmatpush1.msra.mxu0 0.0
  %10743 = vmatprep.subr.mxu0 0.0
  %10744 = vmatpush1.msra.mxu0 0.0
  %10745 = vmatprep.subr.mxu0 0.0
  %10746 = vmatpush1.msra.mxu0 0.0
  %10747 = vmatprep.subr.mxu0 0.0
  %10748 = vmatpush1.msra.mxu0 0.0
  %10749 = vmatprep.subr.mxu0 0.0
  %10750 = vmatpush1.msra.mxu0 0.0
  %10751 = vmatprep.subr.mxu0 0.0
  %10752 = vmatpush1.msra.mxu0 0.0
  %10753 = vmatprep.subr.mxu0 0.0
  %10754 = vmatpush1.msra.mxu0 0.0
  %10755 = vmatprep.subr.mxu0 0.0
  %10756 = vmatpush1.msra.mxu0 0.0
  %10757 = vmatprep.subr.mxu0 0.0
  %10758 = vmatpush1.msra.mxu0 0.0
  %10759 = vmatprep.subr.mxu0 0.0
  %10760 = vmatpush1.msra.mxu0 0.0
  %10761 = vmatprep.subr.mxu0 0.0
  %10762 = vmatpush1.msra.mxu0 0.0
  %10763 = vmatprep.subr.mxu0 0.0
  %10764 = vmatpush1.msra.mxu0 0.0
  %10765 = vmatprep.subr.mxu0 0.0
  %10766 = vmatpush1.msra.mxu0 0.0
  %10767 = vmatprep.subr.mxu0 0.0
  %10768 = vmatpush1.msra.mxu0 0.0
  %10769 = vmatprep.mubr.f32.mxu0 0.0
  %10770 = vmatmul.mubr.f32.gmra.mrb[0].mxu0 %v10682
  %v10771 = vpop.f32.mrb[0].mxu0
  %v10772 = vadd.f32 %v10644, %v10771
  %v10773 = vpop.f32.mrb[0].mxu0
  %10774 = vmatprep.mubr.f32.mxu0 0.0
  %10775 = vmatmul.mubr.f32.gmra.mrb[0].mxu0 %v10685
  %v10776 = vpop.f32.mrb[0].mxu0
  %v10777 = vadd.f32 %v10649, %v10776
  %v10778 = vpop.f32.mrb[0].mxu0
  %10779 = vmatprep.mubr.f32.mxu0 0.0
  %10780 = vmatmul.mubr.f32.gmra.mrb[0].mxu0 %v10688
  %v10781 = vpop.f32.mrb[0].mxu0
  %v10782 = vadd.f32 %v10654, %v10781
  %v10783 = vpop.f32.mrb[0].mxu0
  %10784 = vmatprep.mubr.f32.mxu0 0.0
  %10785 = vmatmul.mubr.f32.gmra.mrb[0].mxu0 %v10691
  %v10786 = vpop.f32.mrb[0].mxu0
  %v10787 = vadd.f32 %v10659, %v10786
  %v10788 = vpop.f32.mrb[0].mxu0
  %10789 = vmatprep.mubr.f32.mxu0 0.0
  %10790 = vmatmul.mubr.f32.gmra.mrb[0].mxu0 %v10694
  %v10791 = vpop.f32.mrb[0].mxu0
  %v10792 = vadd.f32 %v10664, %v10791
  %v10793 = vpop.f32.mrb[0].mxu0
  %10794 = vmatprep.mubr.f32.mxu0 0.0
  %10795 = vmatmul.mubr.f32.gmra.mrb[0].mxu0 %v10697
  %v10796 = vpop.f32.mrb[0].mxu0
  %v10797 = vadd.f32 %v10669, %v10796
  %v10798 = vpop.f32.mrb[0].mxu0
  %10799 = vmatprep.mubr.f32.mxu0 0.0
  %10800 = vmatmul.mubr.f32.gmra.mrb[0].mxu0 %v10700
  %v10801 = vpop.f32.mrb[0].mxu0
  %v10802 = vadd.f32 %v10674, %v10801
  %v10803 = vpop.f32.mrb[0].mxu0
  %10804 = vmatprep.mubr.f32.mxu0 0.0
  %10805 = vmatmul.mubr.f32.gmra.mrb[0].mxu0 %v10703
  %v10806 = vpop.f32.mrb[0].mxu0
  %v10807 = vadd.f32 %v10679, %v10806
  %v10808 = vpop.f32.mrb[0].mxu0
  %10809 = vdwg.mxu0
  %v10810 = vmax.f32 %v10772, 0.0
  %v10811 = vmax.f32 %v10777, 0.0
  %v10812 = vmax.f32 %v10782, 0.0
  %v10813 = vmax.f32 %v10787, 0.0
  %v10814 = vmax.f32 %v10792, 0.0
  %v10815 = vmax.f32 %v10797, 0.0
  %v10816 = vmax.f32 %v10802, 0.0
  %v10817 = vmax.f32 %v10807, 0.0
  %s10818 = scalar_lea.vmem %s11, 16
  %v10819 = vld [vmem:[%s10818] sm:$0xff]
  %s10820 = scalar_lea.vmem %s12, 16
  %v10821 = vld [vmem:[%s10820] sm:$0xff]
  %10823 = vset.pattern.permute.xlu0 0
  %10824 = vperm.xlu0 %10823, %v10821
  %v10825 = vpop.permute.xlu0 %10824
  %v10828 = vsel %vm998, %v10819, 0
  %10830 = vmatprep.subr.mxu0 0.0
  %10831 = vmatpush1.msra.mxu0 %v10810
  %10832 = vmatprep.subr.mxu0 0.0
  %10833 = vmatpush1.msra.mxu0 %v10811
  %10834 = vmatprep.subr.mxu0 0.0
  %10835 = vmatpush1.msra.mxu0 %v10812
  %10836 = vmatprep.subr.mxu0 0.0
  %10837 = vmatpush1.msra.mxu0 %v10813
  %10838 = vmatprep.subr.mxu0 0.0
  %10839 = vmatpush1.msra.mxu0 %v10814
  %10840 = vmatprep.subr.mxu0 0.0
  %10841 = vmatpush1.msra.mxu0 %v10815
  %10842 = vmatprep.subr.mxu0 0.0
  %10843 = vmatpush1.msra.mxu0 %v10816
  %10844 = vmatprep.subr.mxu0 0.0
  %10845 = vmatpush1.msra.mxu0 %v10817
  %10846 = vmatprep.subr.mxu0 0.0
  %10847 = vmatpush1.msra.mxu0 0.0
  %10848 = vmatprep.subr.mxu0 0.0
  %10849 = vmatpush1.msra.mxu0 0.0
  %10850 = vmatprep.subr.mxu0 0.0
  %10851 = vmatpush1.msra.mxu0 0.0
  %10852 = vmatprep.subr.mxu0 0.0
  %10853 = vmatpush1.msra.mxu0 0.0
  %10854 = vmatprep.subr.mxu0 0.0
  %10855 = vmatpush1.msra.mxu0 0.0
  %10856 = vmatprep.subr.mxu0 0.0
  %10857 = vmatpush1.msra.mxu0 0.0
  %10858 = vmatprep.subr.mxu0 0.0
  %10859 = vmatpush1.msra.mxu0 0.0
  %10860 = vmatprep.subr.mxu0 0.0
  %10861 = vmatpush1.msra.mxu0 0.0
  %10862 = vmatprep.subr.mxu0 0.0
  %10863 = vmatpush1.msra.mxu0 0.0
  %10864 = vmatprep.subr.mxu0 0.0
  %10865 = vmatpush1.msra.mxu0 0.0
  %10866 = vmatprep.subr.mxu0 0.0
  %10867 = vmatpush1.msra.mxu0 0.0
  %10868 = vmatprep.subr.mxu0 0.0
  %10869 = vmatpush1.msra.mxu0 0.0
  %10870 = vmatprep.subr.mxu0 0.0
  %10871 = vmatpush1.msra.mxu0 0.0
  %10872 = vmatprep.subr.mxu0 0.0
  %10873 = vmatpush1.msra.mxu0 0.0
  %10874 = vmatprep.subr.mxu0 0.0
  %10875 = vmatpush1.msra.mxu0 0.0
  %10876 = vmatprep.subr.mxu0 0.0
  %10877 = vmatpush1.msra.mxu0 0.0
  %10878 = vmatprep.subr.mxu0 0.0
  %10879 = vmatpush1.msra.mxu0 0.0
  %10880 = vmatprep.subr.mxu0 0.0
  %10881 = vmatpush1.msra.mxu0 0.0
  %10882 = vmatprep.subr.mxu0 0.0
  %10883 = vmatpush1.msra.mxu0 0.0
  %10884 = vmatprep.subr.mxu0 0.0
  %10885 = vmatpush1.msra.mxu0 0.0
  %10886 = vmatprep.subr.mxu0 0.0
  %10887 = vmatpush1.msra.mxu0 0.0
  %10888 = vmatprep.subr.mxu0 0.0
  %10889 = vmatpush1.msra.mxu0 0.0
  %10890 = vmatprep.subr.mxu0 0.0
  %10891 = vmatpush1.msra.mxu0 0.0
  %10892 = vmatprep.subr.mxu0 0.0
  %10893 = vmatpush1.msra.mxu0 0.0
  %10894 = vmatprep.mubr.f32.mxu0 0.0
  %10895 = vmatmul.mubr.f32.gmra.mrb[0].mxu0 %v10828
  %v10896 = vpop.f32.mrb[0].mxu0
  %v10897 = vadd.f32 %v10825, %v10896
  %v10898 = vpop.f32.mrb[0].mxu0
  %10899 = vdwg.mxu0
  %v10900 = vadd.f32 %v10622, %v10897
  %s10901 = scalar_lea.vmem %s13, 16
  %v10902 = vld [vmem:[%s10901] sm:$0xff]
  %s10903 = scalar_lea.vmem %s14, 16
  %v10904 = vld [vmem:[%s10903] sm:$0xff]
  %v10905 = vrot.slane %v10900, 4
  %v10906 = vadd.f32 %v10900, %v10905
  %v10907 = vrot.slane %v10906, 2
  %v10908 = vadd.f32 %v10906, %v10907
  %v10909 = vrot.slane %v10908, 1
  %v10910 = vadd.f32 %v10908, %v10909
  %v10911 = vmul.f32 %v10910, %v3403
  %v10912 = vsub.f32 %v10900, %v10911
  %v10913 = vmul.f32 %v10912, %v10912
  %v10914 = vrot.slane %v10913, 4
  %v10915 = vadd.f32 %v10913, %v10914
  %v10916 = vrot.slane %v10915, 2
  %v10917 = vadd.f32 %v10915, %v10916
  %v10918 = vrot.slane %v10917, 1
  %v10919 = vadd.f32 %v10917, %v10918
  %v10920 = vmul.f32 %v10919, %v3403
  %v10921 = vadd.f32 %v10920, 1e-05
  %v10922 = vrsqrt.pop %v10921
  %v10923 = vmul.f32 %v10912, %v10922
  %10925 = vset.pattern.permute.xlu0 0
  %10926 = vperm.xlu0 %10925, %v10902
  %v10927 = vpop.permute.xlu0 %10926
  %v10929 = vmul.f32 %v10923, %v10927
  %10931 = vset.pattern.permute.xlu0 0
  %10932 = vperm.xlu0 %10931, %v10904
  %v10933 = vpop.permute.xlu0 %10932
  %v10935 = vadd.f32 %v10929, %v10933
  %v10936 = vld [vmem:[%s15] sm:$0xff]
  %v10937 = vld [vmem:[%s16] sm:$0xff]
  %10939 = vset.pattern.permute.xlu0 0
  %10940 = vperm.xlu0 %10939, %v10937
  %v10941 = vpop.permute.xlu0 %10940
  %v10944 = vsel %vm164, %v10936, 0
  %10946 = vmatprep.subr.mxu0 0.0
  %10947 = vmatpush1.msra.mxu0 %v10935
  %10948 = vmatprep.subr.mxu0 0.0
  %10949 = vmatpush1.msra.mxu0 0.0
  %10950 = vmatprep.subr.mxu0 0.0
  %10951 = vmatpush1.msra.mxu0 0.0
  %10952 = vmatprep.subr.mxu0 0.0
  %10953 = vmatpush1.msra.mxu0 0.0
  %10954 = vmatprep.subr.mxu0 0.0
  %10955 = vmatpush1.msra.mxu0 0.0
  %10956 = vmatprep.subr.mxu0 0.0
  %10957 = vmatpush1.msra.mxu0 0.0
  %10958 = vmatprep.subr.mxu0 0.0
  %10959 = vmatpush1.msra.mxu0 0.0
  %10960 = vmatprep.subr.mxu0 0.0
  %10961 = vmatpush1.msra.mxu0 0.0
  %10962 = vmatprep.subr.mxu0 0.0
  %10963 = vmatpush1.msra.mxu0 0.0
  %10964 = vmatprep.subr.mxu0 0.0
  %10965 = vmatpush1.msra.mxu0 0.0
  %10966 = vmatprep.subr.mxu0 0.0
  %10967 = vmatpush1.msra.mxu0 0.0
  %10968 = vmatprep.subr.mxu0 0.0
  %10969 = vmatpush1.msra.mxu0 0.0
  %10970 = vmatprep.subr.mxu0 0.0
  %10971 = vmatpush1.msra.mxu0 0.0
  %10972 = vmatprep.subr.mxu0 0.0
  %10973 = vmatpush1.msra.mxu0 0.0
  %10974 = vmatprep.subr.mxu0 0.0
  %10975 = vmatpush1.msra.mxu0 0.0
  %10976 = vmatprep.subr.mxu0 0.0
  %10977 = vmatpush1.msra.mxu0 0.0
  %10978 = vmatprep.subr.mxu0 0.0
  %10979 = vmatpush1.msra.mxu0 0.0
  %10980 = vmatprep.subr.mxu0 0.0
  %10981 = vmatpush1.msra.mxu0 0.0
  %10982 = vmatprep.subr.mxu0 0.0
  %10983 = vmatpush1.msra.mxu0 0.0
  %10984 = vmatprep.subr.mxu0 0.0
  %10985 = vmatpush1.msra.mxu0 0.0
  %10986 = vmatprep.subr.mxu0 0.0
  %10987 = vmatpush1.msra.mxu0 0.0
  %10988 = vmatprep.subr.mxu0 0.0
  %10989 = vmatpush1.msra.mxu0 0.0
  %10990 = vmatprep.subr.mxu0 0.0
  %10991 = vmatpush1.msra.mxu0 0.0
  %10992 = vmatprep.subr.mxu0 0.0
  %10993 = vmatpush1.msra.mxu0 0.0
  %10994 = vmatprep.subr.mxu0 0.0
  %10995 = vmatpush1.msra.mxu0 0.0
  %10996 = vmatprep.subr.mxu0 0.0
  %10997 = vmatpush1.msra.mxu0 0.0
  %10998 = vmatprep.subr.mxu0 0.0
  %10999 = vmatpush1.msra.mxu0 0.0
  %11000 = vmatprep.subr.mxu0 0.0
  %11001 = vmatpush1.msra.mxu0 0.0
  %11002 = vmatprep.subr.mxu0 0.0
  %11003 = vmatpush1.msra.mxu0 0.0
  %11004 = vmatprep.subr.mxu0 0.0
  %11005 = vmatpush1.msra.mxu0 0.0
  %11006 = vmatprep.subr.mxu0 0.0
  %11007 = vmatpush1.msra.mxu0 0.0
  %11008 = vmatprep.subr.mxu0 0.0
  %11009 = vmatpush1.msra.mxu0 0.0
  %11010 = vmatprep.mubr.f32.mxu0 0.0
  %11011 = vmatmul.mubr.f32.gmra.mrb[0].mxu0 %v10944
  %v11012 = vpop.f32.mrb[0].mxu0
  %v11013 = vadd.f32 %v10941, %v11012
  %v11014 = vpop.f32.mrb[0].mxu0
  %11015 = vdwg.mxu0
  %v11016 = vrot.slane %v11013, 4
  %v11017 = vmax.f32 %v11013, %v11016
  %v11018 = vrot.slane %v11017, 2
  %v11019 = vmax.f32 %v11017, %v11018
  %v11020 = vrot.slane %v11019, 1
  %v11021 = vmax.f32 %v11019, %v11020
  %v11022 = vsub.f32 %v11013, %v11021
  %v11023 = vmul.f32 %v11022, 1.442695
  %v11024 = vpow.pop %v11023
  %v11025 = vrot.slane %v11024, 4
  %v11026 = vadd.f32 %v11024, %v11025
  %v11027 = vrot.slane %v11026, 2
  %v11028 = vadd.f32 %v11026, %v11027
  %v11029 = vrot.slane %v11028, 1
  %v11030 = vadd.f32 %v11028, %v11029
  %v11031 = vrcp.pop %v11030
  %v11032 = vmul.f32 %v11024, %v11031
  %v11033 = vld [vmem:[#allocation2] sm:$0x1]
  %v11034 = vld [vmem:[%s17] sm:$0xff]
  %v11035 = vld [vmem:[%s17 + $0x8] sm:$0xff]
  %v11036 = vld [vmem:[%s17 + $0x10] sm:$0xff]
  %v11037 = vld [vmem:[%s17 + $0x18] sm:$0xff]
  %v11038 = vld [vmem:[%s17 + $0x20] sm:$0xff]
  %v11039 = vld [vmem:[%s17 + $0x28] sm:$0xff]
  %v11040 = vld [vmem:[%s17 + $0x30] sm:$0xff]
  %v11041 = vld [vmem:[%s17 + $0x38] sm:$0xff]
  %v11042 = vld [vmem:[%s17 + $0x40] sm:$0xff]
  %v11043 = vld [vmem:[%s17 + $0x48] sm:$0xff]
  %v11044 = vld [vmem:[%s17 + $0x50] sm:$0xff]
  %v11045 = vld [vmem:[%s17 + $0x58] sm:$0xff]
  %v11046 = vld [vmem:[%s17 + $0x60] sm:$0xff]
  %v11047 = vld [vmem:[%s17 + $0x68] sm:$0xff]
  %v11048 = vld [vmem:[%s17 + $0x70] sm:$0xff]
  %v11049 = vld [vmem:[%s17 + $0x78] sm:$0xff]
  %v11051 = vsel %vm998, %v11032, 0
  %11053 = vmatprep.subr.mxu0 %v11035
  %11054 = vmatpush1.msra.mxu0 %v11034
  %11055 = vmatprep.subr.mxu0 %v11037
  %11056 = vmatpush1.msra.mxu0 %v11036
  %11057 = vmatprep.subr.mxu0 %v11039
  %11058 = vmatpush1.msra.mxu0 %v11038
  %11059 = vmatprep.subr.mxu0 %v11041
  %11060 = vmatpush1.msra.mxu0 %v11040
  %11061 = vmatprep.subr.mxu0 %v11043
  %11062 = vmatpush1.msra.mxu0 %v11042
  %11063 = vmatprep.subr.mxu0 %v11045
  %11064 = vmatpush1.msra.mxu0 %v11044
  %11065 = vmatprep.subr.mxu0 %v11047
  %11066 = vmatpush1.msra.mxu0 %v11046
  %11067 = vmatprep.subr.mxu0 %v11049
  %11068 = vmatpush1.msra.mxu0 %v11048
  %11069 = vmatprep.subr.mxu0 0.0
  %11070 = vmatpush1.msra.mxu0 0.0
  %11071 = vmatprep.subr.mxu0 0.0
  %11072 = vmatpush1.msra.mxu0 0.0
  %11073 = vmatprep.subr.mxu0 0.0
  %11074 = vmatpush1.msra.mxu0 0.0
  %11075 = vmatprep.subr.mxu0 0.0
  %11076 = vmatpush1.msra.mxu0 0.0
  %11077 = vmatprep.subr.mxu0 0.0
  %11078 = vmatpush1.msra.mxu0 0.0
  %11079 = vmatprep.subr.mxu0 0.0
  %11080 = vmatpush1.msra.mxu0 0.0
  %11081 = vmatprep.subr.mxu0 0.0
  %11082 = vmatpush1.msra.mxu0 0.0
  %11083 = vmatprep.subr.mxu0 0.0
  %11084 = vmatpush1.msra.mxu0 0.0
  %11085 = vmatprep.subr.mxu0 0.0
  %11086 = vmatpush1.msra.mxu0 0.0
  %11087 = vmatprep.subr.mxu0 0.0
  %11088 = vmatpush1.msra.mxu0 0.0
  %11089 = vmatprep.subr.mxu0 0.0
  %11090 = vmatpush1.msra.mxu0 0.0
  %11091 = vmatprep.subr.mxu0 0.0
  %11092 = vmatpush1.msra.mxu0 0.0
  %11093 = vmatprep.subr.mxu0 0.0
  %11094 = vmatpush1.msra.mxu0 0.0
  %11095 = vmatprep.subr.mxu0 0.0
  %11096 = vmatpush1.msra.mxu0 0.0
  %11097 = vmatprep.subr.mxu0 0.0
  %11098 = vmatpush1.msra.mxu0 0.0
  %11099 = vmatprep.subr.mxu0 0.0
  %11100 = vmatpush1.msra.mxu0 0.0
  %11101 = vmatprep.subr.mxu0 0.0
  %11102 = vmatpush1.msra.mxu0 0.0
  %11103 = vmatprep.subr.mxu0 0.0
  %11104 = vmatpush1.msra.mxu0 0.0
  %11105 = vmatprep.subr.mxu0 0.0
  %11106 = vmatpush1.msra.mxu0 0.0
  %11107 = vmatprep.subr.mxu0 0.0
  %11108 = vmatpush1.msra.mxu0 0.0
  %11109 = vmatprep.subr.mxu0 0.0
  %11110 = vmatpush1.msra.mxu0 0.0
  %11111 = vmatprep.subr.mxu0 0.0
  %11112 = vmatpush1.msra.mxu0 0.0
  %11113 = vmatprep.subr.mxu0 0.0
  %11114 = vmatpush1.msra.mxu0 0.0
  %11115 = vmatprep.subr.mxu0 0.0
  %11116 = vmatpush1.msra.mxu0 0.0
  %11117 = vmatprep.mubr.f32.mxu0 0.0
  %11118 = vmatmul.mubr.f32.gmra.mrb[0].mxu0 %v11051
  %v11119 = vpop.f32.mrb[0].mxu0
  %v11120 = vadd.f32 0.0, %v11119
  %v11121 = vpop.f32.mrb[0].mxu0
  %v11122 = vadd.f32 0.0, %v11121
  %11123 = vdwg.mxu0
  %v11124 = vld [vmem:[%s1] sm:$0xff]
  %v11125 = vld [vmem:[%s1 + $0x8] sm:$0xff]
  %v11127 = vlaneseq
  %v11128 = vshrl.u32 %v11127, 7
  %v11129 = vsub.s32 0, %v11128
  %v11130 = vrot.slane %v11033, %v11129
  %11131 = vset.pattern.permute.xlu0 0
  %11132 = vperm.xlu0 %11131, %v11130
  %v11133 = vpop.permute.xlu0 %11132
  %v11135 = vmul.f32 %v11133, %v11120
  %v11136 = vmul.f32 %v11133, %v11122
  %v11137 = vadd.f32 %v11135, 1.0
  %v11138 = vadd.f32 %v11136, 1.0
  %v11139 = vmul.f32 %v11124, %v11137
  %v11140 = vmul.f32 %v11125, %v11138
  %11141 = vst [vmem:[%s19] sm:$0xff] %v11139
  %11142 = vst [vmem:[%s19 + $0x8] sm:$0xff] %v11140
  %v11143 = vld [vmem:[%s17] sm:$0xff]
  %v11144 = vld [vmem:[%s17 + $0x8] sm:$0xff]
  %v11145 = vld [vmem:[%s17 + $0x10] sm:$0xff]
  %v11146 = vld [vmem:[%s17 + $0x18] sm:$0xff]
  %v11147 = vld [vmem:[%s17 + $0x20] sm:$0xff]
  %v11148 = vld [vmem:[%s17 + $0x28] sm:$0xff]
  %v11149 = vld [vmem:[%s17 + $0x30] sm:$0xff]
  %v11150 = vld [vmem:[%s17 + $0x38] sm:$0xff]
  %v11151 = vld [vmem:[%s17 + $0x40] sm:$0xff]
  %v11152 = vld [vmem:[%s17 + $0x48] sm:$0xff]
  %v11153 = vld [vmem:[%s17 + $0x50] sm:$0xff]
  %v11154 = vld [vmem:[%s17 + $0x58] sm:$0xff]
  %v11155 = vld [vmem:[%s17 + $0x60] sm:$0xff]
  %v11156 = vld [vmem:[%s17 + $0x68] sm:$0xff]
  %v11157 = vld [vmem:[%s17 + $0x70] sm:$0xff]
  %v11158 = vld [vmem:[%s17 + $0x78] sm:$0xff]
  %11159 = vrot.lane.b32.xlu0 %v11032, 64
  %v11160 = vpop.permute.xlu0 %11159
  %v11161 = vsel %vm998, %v11160, 0
  %11163 = vmatprep.subr.mxu0 %v11144
  %11164 = vmatpush1.msra.mxu0 %v11143
  %11165 = vmatprep.subr.mxu0 %v11146
  %11166 = vmatpush1.msra.mxu0 %v11145
  %11167 = vmatprep.subr.mxu0 %v11148
  %11168 = vmatpush1.msra.mxu0 %v11147
  %11169 = vmatprep.subr.mxu0 %v11150
  %11170 = vmatpush1.msra.mxu0 %v11149
  %11171 = vmatprep.subr.mxu0 %v11152
  %11172 = vmatpush1.msra.mxu0 %v11151
  %11173 = vmatprep.subr.mxu0 %v11154
  %11174 = vmatpush1.msra.mxu0 %v11153
  %11175 = vmatprep.subr.mxu0 %v11156
  %11176 = vmatpush1.msra.mxu0 %v11155
  %11177 = vmatprep.subr.mxu0 %v11158
  %11178 = vmatpush1.msra.mxu0 %v11157
  %11179 = vmatprep.subr.mxu0 0.0
  %11180 = vmatpush1.msra.mxu0 0.0
  %11181 = vmatprep.subr.mxu0 0.0
  %11182 = vmatpush1.msra.mxu0 0.0
  %11183 = vmatprep.subr.mxu0 0.0
  %11184 = vmatpush1.msra.mxu0 0.0
  %11185 = vmatprep.subr.mxu0 0.0
  %11186 = vmatpush1.msra.mxu0 0.0
  %11187 = vmatprep.subr.mxu0 0.0
  %11188 = vmatpush1.msra.mxu0 0.0
  %11189 = vmatprep.subr.mxu0 0.0
  %11190 = vmatpush1.msra.mxu0 0.0
  %11191 = vmatprep.subr.mxu0 0.0
  %11192 = vmatpush1.msra.mxu0 0.0
  %11193 = vmatprep.subr.mxu0 0.0
  %11194 = vmatpush1.msra.mxu0 0.0
  %11195 = vmatprep.subr.mxu0 0.0
  %11196 = vmatpush1.msra.mxu0 0.0
  %11197 = vmatprep.subr.mxu0 0.0
  %11198 = vmatpush1.msra.mxu0 0.0
  %11199 = vmatprep.subr.mxu0 0.0
  %11200 = vmatpush1.msra.mxu0 0.0
  %11201 = vmatprep.subr.mxu0 0.0
  %11202 = vmatpush1.msra.mxu0 0.0
  %11203 = vmatprep.subr.mxu0 0.0
  %11204 = vmatpush1.msra.mxu0 0.0
  %11205 = vmatprep.subr.mxu0 0.0
  %11206 = vmatpush1.msra.mxu0 0.0
  %11207 = vmatprep.subr.mxu0 0.0
  %11208 = vmatpush1.msra.mxu0 0.0
  %11209 = vmatprep.subr.mxu0 0.0
  %11210 = vmatpush1.msra.mxu0 0.0
  %11211 = vmatprep.subr.mxu0 0.0
  %11212 = vmatpush1.msra.mxu0 0.0
  %11213 = vmatprep.subr.mxu0 0.0
  %11214 = vmatpush1.msra.mxu0 0.0
  %11215 = vmatprep.subr.mxu0 0.0
  %11216 = vmatpush1.msra.mxu0 0.0
  %11217 = vmatprep.subr.mxu0 0.0
  %11218 = vmatpush1.msra.mxu0 0.0
  %11219 = vmatprep.subr.mxu0 0.0
  %11220 = vmatpush1.msra.mxu0 0.0
  %11221 = vmatprep.subr.mxu0 0.0
  %11222 = vmatpush1.msra.mxu0 0.0
  %11223 = vmatprep.subr.mxu0 0.0
  %11224 = vmatpush1.msra.mxu0 0.0
  %11225 = vmatprep.subr.mxu0 0.0
  %11226 = vmatpush1.msra.mxu0 0.0
  %11227 = vmatprep.mubr.f32.mxu0 0.0
  %11228 = vmatmul.mubr.f32.gmra.mrb[0].mxu0 %v11161
  %v11229 = vpop.f32.mrb[0].mxu0
  %v11230 = vadd.f32 0.0, %v11229
  %v11231 = vpop.f32.mrb[0].mxu0
  %v11232 = vadd.f32 0.0, %v11231
  %11233 = vdwg.mxu0
  %s11234 = scalar_lea.vmem %s1, 16
  %v11235 = vld [vmem:[%s11234] sm:$0xff]
  %v11236 = vld [vmem:[%s11234 + $0x8] sm:$0xff]
  %v11237 = vmul.f32 %v11133, %v11230
  %v11238 = vmul.f32 %v11133, %v11232
  %v11239 = vadd.f32 %v11237, 1.0
  %v11240 = vadd.f32 %v11238, 1.0
  %v11241 = vmul.f32 %v11235, %v11239
  %v11242 = vmul.f32 %v11236, %v11240
  %s11243 = scalar_lea.vmem %s19, 16
  %11244 = vst [vmem:[%s11243] sm:$0xff] %v11241
  %11245 = vst [vmem:[%s11243 + $0x8] sm:$0xff] %v11242
  // Predicated region
  $region78: #{forward.1} parent=0 // pred_check
    _
  $region79: #{forward.1} parent=0 // pred_check_branch
    %11247 = sbr.rel (0) target = $region81
  $region80: #{forward.1} parent=0 // pred_region
    _
  $region81: #{forward.1} parent=0 // pred_fallthru
    _
  // Predicated region
  $region82: #{forward.1} parent=0 // pred_check
    _
  $region83: #{forward.1} parent=0 // pred_check_branch
    %11249 = sbr.rel (0) target = $region85
  $region84: #{forward.1} parent=0 // pred_region
    _
  $region85: #{forward.1} parent=0 // pred_fallthru
    _

</llo_original>
